<compile_context>
chip_gen: v7x
topology: tpu7x:2x2x1
jax: 0.10.0
libtpu: 0.0.40
codegen_flags: <defaults>
</compile_context>

<pallas_src>
import functools

import jax
import jax.numpy as jnp
from jax import lax
from jax.experimental import pallas as pl
from jax.experimental.pallas import tpu as pltpu


_FIRST_K = 27
_FIRST_K_PAD = 32  # pad the 3-channel first layer's im2col K to 32

_STAGE_CFG = [
    [(3, 64), (64, 64)],
    [(64, 128), (128, 128)],
    [(128, 256), (256, 256), (256, 256)],
    [(256, 512), (512, 512), (512, 512)],
    [(512, 512), (512, 512), (512, 512)],
]


# ---------------------------------------------------------------------------
# Fused per-stage kernel: L x (3x3 conv pad=1 + folded BN + ReLU) followed by
# a 2x2/stride-2 max-pool with PyTorch flat (row*W + col) argmax indices.
#
# Activation layout inside the kernel: zero-padded rows flattened to (rows, C)
# with row pitch wp = W + 2, so the nine 3x3 taps of every conv are contiguous
# sublane ranges at offsets ky*wp + kx.  They are copied into a (H*wp, 9*Cin)
# im2col scratch and contracted with a single big-K MXU matmul (f32 acc).
# ---------------------------------------------------------------------------
def _stage_kernel(*refs, h, w, cins, cout, n_layers, first_from_patches):
    L = n_layers
    x_ref = refs[0]
    w_refs = refs[1:1 + L]
    s_ref = refs[1 + L]          # (L, cout) f32 folded-BN scale
    b_ref = refs[2 + L]          # (L, cout) f32 folded-BN bias
    vals_ref = refs[3 + L]       # (h//2, w//2, cout) bf16 pooled values
    idx_ref = refs[4 + L]        # (h//2, w//2, cout) int32 pooled flat indices
    act_ref = refs[5 + L]        # ((h+4)*wp, cout) bf16 padded activation scratch
    col_ref = refs[6 + L]        # (h*wp, 9*cout)   bf16 im2col scratch
    y_ref = refs[7 + L]          # (h*wp, cout)     f32 last-layer pre-pool output

    wp = w + 2
    m2 = h * wp                  # conv rows per layer (incl. 2 junk cols per row)

    # Zero the padded activation scratch once.  Later writes only touch the
    # interior, so the zero border (and the 2 slack rows) persists across
    # layers and across the serial batch grid steps.
    @pl.when(pl.program_id(0) == 0)
    def _init():
        act_ref[...] = jnp.zeros_like(act_ref)

    def conv_from(src_ref, cin, w_l):
        # In-VMEM im2col: 9 contiguous sublane-range copies (tap offset
        # ky*wp + kx), then one K = 9*cin matmul on the MXU.
        for k in range(9):
            ky, kx = divmod(k, 3)
            col_ref[:, k * cin:(k + 1) * cin] = src_ref[pl.ds(ky * wp + kx, m2), :]
        return jnp.dot(col_ref[:, :9 * cin], w_l[...],
                       preferred_element_type=jnp.float32)

    for l in range(L):
        if l == 0 and first_from_patches:
            # First network layer: host-built im2col patches (K padded to 32).
            y = jnp.dot(x_ref[...], w_refs[0][...],
                        preferred_element_type=jnp.float32)
            pitch = w            # patches carry no junk columns
        elif l == 0:
            y = conv_from(x_ref, cins[0], w_refs[0])
            pitch = wp
        else:
            y = conv_from(act_ref, cins[l], w_refs[l])
            pitch = wp
        y = jnp.maximum(y * s_ref[l:l + 1, :] + b_ref[l:l + 1, :], 0.0)
        if l < L - 1:
            yb = y.astype(jnp.bfloat16)
            for r in range(h):   # store valid columns only -> padding stays zero
                act_ref[pl.ds((r + 1) * wp + 1, w), :] = \
                    yb[r * pitch:r * pitch + w, :]
        else:
            y_ref[...] = y       # junk columns are never read by the pool below

    # Fused 2x2 / stride-2 max-pool with PyTorch flat (row*W + col) indices.
    ho, wo = h // 2, w // 2
    pc = lax.broadcasted_iota(jnp.int32, (wo, cout), 0)
    for ph in range(ho):
        best_v = y_ref[pl.ds((2 * ph) * wp, wo, stride=2), :]
        best_i = (2 * ph) * w + 2 * pc
        for dy, dx in ((0, 1), (1, 0), (1, 1)):
            v = y_ref[pl.ds((2 * ph + dy) * wp + dx, wo, stride=2), :]
            cand_i = (2 * ph + dy) * w + 2 * pc + dx
            upd = v > best_v     # strict '>' keeps the earliest tap on ties
            best_v = jnp.where(upd, v, best_v)
            best_i = jnp.where(upd, cand_i, best_i)
        vals_ref[ph, :, :] = best_v.astype(vals_ref.dtype)
        idx_ref[ph, :, :] = best_i


def _stage_call(x_in, weights, scales, biases, *, h, w, cins, cout,
                first_from_patches):
    """One fused SegNet stage.  Returns (pooled values bf16, flat indices int32)."""
    assert h % 2 == 0 and w % 2 == 0
    n = x_in.shape[0]
    L = len(weights)
    assert L == len(cins) and L >= 2
    wp = w + 2
    m2 = h * wp
    rows_in = (h + 4) * wp       # +2 slack rows so every tap slice stays in bounds
    ho, wo = h // 2, w // 2

    if first_from_patches:
        x_spec = pl.BlockSpec((None, x_in.shape[1], x_in.shape[2]),
                              lambda b: (b, 0, 0))
    else:
        x_spec = pl.BlockSpec((None, rows_in, cins[0]), lambda b: (b, 0, 0))
    w_specs = [pl.BlockSpec(wt.shape, lambda b: (0, 0)) for wt in weights]
    sb_spec = pl.BlockSpec((L, cout), lambda b: (0, 0))
    out_spec = pl.BlockSpec((None, ho, wo, cout), lambda b: (b, 0, 0, 0))

    scratch = [
        pltpu.VMEM(((h + 4) * wp, cout), jnp.bfloat16),   # padded activations
        pltpu.VMEM((m2, 9 * cout), jnp.bfloat16),         # im2col
        pltpu.VMEM((m2, cout), jnp.float32),              # pre-pool output
    ]

    # VMEM budget: double-buffered inputs/outputs + scratch + slack.
    w_bytes = sum(int(wt.size) * 2 for wt in weights)
    x_blk_bytes = int(x_in.size // n) * 2
    out_blk_bytes = ho * wo * cout * (2 + 4)
    scratch_bytes = ((h + 4) * wp * cout * 2 + m2 * 9 * cout * 2 + m2 * cout * 4)
    vmem_limit = 2 * (x_blk_bytes + w_bytes + out_blk_bytes) + scratch_bytes
    vmem_limit = max(int(vmem_limit) + (8 << 20), 32 << 20)

    flops = 0
    for l in range(L):
        kdim = x_in.shape[2] if (l == 0 and first_from_patches) else 9 * cins[l]
        rows = h * w if (l == 0 and first_from_patches) else m2
        flops += 2 * n * rows * kdim * cout
    bytes_accessed = (n * x_blk_bytes + w_bytes + 2 * L * cout * 4
                      + n * out_blk_bytes)

    kernel = functools.partial(
        _stage_kernel, h=h, w=w, cins=tuple(cins), cout=cout, n_layers=L,
        first_from_patches=first_from_patches)

    vals, idx = pl.pallas_call(
        kernel,
        out_shape=(
            jax.ShapeDtypeStruct((n, ho, wo, cout), jnp.bfloat16),
            jax.ShapeDtypeStruct((n, ho, wo, cout), jnp.int32),
        ),
        grid_spec=pltpu.PrefetchScalarGridSpec(
            num_scalar_prefetch=0,
            grid=(n,),
            in_specs=[x_spec] + w_specs + [sb_spec, sb_spec],
            out_specs=[out_spec, out_spec],
            scratch_shapes=scratch,
        ),
        compiler_params=pltpu.CompilerParams(
            dimension_semantics=("arbitrary",),
            vmem_limit_bytes=vmem_limit),
        cost_estimate=pl.CostEstimate(
            flops=int(flops), transcendentals=0,
            bytes_accessed=int(bytes_accessed)),
    )(x_in, *weights, scales, biases)
    return vals, idx


# ---------------------------------------------------------------------------
# Host-side layout helpers (one cheap pad/reshape per stage boundary).
# ---------------------------------------------------------------------------
def _im2col_first(x_nhwc):
    """Host im2col for the 3-channel first layer, K padded 27 -> 32 (bf16)."""
    n, h, w, c = x_nhwc.shape
    xp = jnp.pad(x_nhwc, ((0, 0), (1, 1), (1, 1), (0, 0)))
    cols = [xp[:, ky:ky + h, kx:kx + w, :] for ky in range(3) for kx in range(3)]
    p = jnp.concatenate(cols, axis=-1)
    p = jnp.pad(p, ((0, 0), (0, 0), (0, 0), (0, _FIRST_K_PAD - 9 * c)))
    return p.reshape(n, h * w, _FIRST_K_PAD).astype(jnp.bfloat16)


def _pad_flat(x_nhwc):
    """Zero-pad (conv pad=1 plus 2 slack rows) and flatten to (rows, C) bf16."""
    n, h, w, c = x_nhwc.shape
    xp = jnp.pad(x_nhwc, ((0, 0), (1, 3), (1, 1), (0, 0)))
    return xp.reshape(n, (h + 4) * (w + 2), c).astype(jnp.bfloat16)


# ---------------------------------------------------------------------------
# Parameters (synthetic Conv + BatchNorm(eval), BN folded into scale / bias).
# Weights are stored bf16 as (9*Cin, Cout) -- (32, 64) for the first layer.
# ---------------------------------------------------------------------------
def init_params(key):
    eps = 1e-5
    params = []
    for s_idx, stage in enumerate(_STAGE_CFG):
        weights, scales, biases = [], [], []
        for l_idx, (cin, cout) in enumerate(stage):
            key, k1, k2, k3, k4, k5, k6 = jax.random.split(key, 7)
            wt = jax.random.normal(k1, (3, 3, cin, cout), jnp.float32)
            wt = wt * (1.0 / jnp.sqrt(9.0 * cin))
            conv_b = 0.01 * jax.random.normal(k2, (cout,), jnp.float32)
            gamma = 1.0 + 0.1 * jax.random.normal(k3, (cout,), jnp.float32)
            beta = 0.1 * jax.random.normal(k4, (cout,), jnp.float32)
            r_mean = 0.05 * jax.random.normal(k5, (cout,), jnp.float32)
            r_var = 1.0 + 0.1 * jax.random.uniform(k6, (cout,), jnp.float32)
            scale = gamma / jnp.sqrt(r_var + eps)
            bias = (conv_b - r_mean) * scale + beta
            wk = wt.reshape(9 * cin, cout)
            if s_idx == 0 and l_idx == 0:
                wk = jnp.pad(wk, ((0, _FIRST_K_PAD - 9 * cin), (0, 0)))
            weights.append(wk.astype(jnp.bfloat16))
            scales.append(scale)
            biases.append(bias)
        params.append((weights, jnp.stack(scales), jnp.stack(biases)))
    return params


# ---------------------------------------------------------------------------
# Encoder (SegNet) forward
# ---------------------------------------------------------------------------
def encoder_forward(x_nchw, params):
    """Matches Encoder.forward: returns (x, x1, pool_indices) in NCHW layout.
    Pool indices are int32 (PyTorch returns int64) with value row*W + col."""
    x_nhwc = jnp.transpose(x_nchw.astype(jnp.float32), (0, 2, 3, 1))
    n, h, w, _ = x_nhwc.shape
    pool_indices = []
    x1 = None
    vals = None
    for s_idx, (weights, scales, biases) in enumerate(params):
        cfg = _STAGE_CFG[s_idx]
        cins = tuple(ci for ci, _ in cfg)
        cout = cfg[0][1]
        if s_idx == 0:
            x_in = _im2col_first(x_nhwc)
        else:
            x_in = _pad_flat(vals)
        vals, idx = _stage_call(
            x_in, weights, scales, biases, h=h, w=w, cins=cins, cout=cout,
            first_from_patches=(s_idx == 0))
        pool_indices.append(jnp.transpose(idx, (0, 3, 1, 2)))  # NHWC -> NCHW
        if s_idx == 2:
            x1 = jnp.transpose(vals.astype(jnp.float32), (0, 3, 1, 2))
        h, w = h // 2, w // 2
        # nn.Dropout in eval mode is the identity; nothing to do.
        # TODO(synk): training-mode dropout (pltpu PRNG mask) not implemented.
    x_out = jnp.transpose(vals.astype(jnp.float32), (0, 3, 1, 2))
    return x_out, x1, pool_indices


# ---------------------------------------------------------------------------
# Lightweight correctness checks against pure-JAX references
# ---------------------------------------------------------------------------
def _ref_stage_prepool(x, weights_hwio, scales, biases):
    y = x
    for wt, s, b in zip(weights_hwio, scales, biases):
        y = lax.conv_general_dilated(
            y.astype(jnp.bfloat16).astype(jnp.float32),
            wt.astype(jnp.bfloat16).astype(jnp.float32),
            window_strides=(1, 1), padding="SAME",
            dimension_numbers=("NHWC", "HWIO", "NHWC"))
        y = jnp.maximum(y * s + b, 0.0)
    return y


def _run_unit_checks(key):
    atol = rtol = 5e-2
    k = jax.random.split(key, 8)

    # (a) generic fused stage: two 64->64 convs + pool vs lax.conv reference.
    h = w = 16
    x = jax.random.normal(k[0], (2, h, w, 64), jnp.float32)
    w1 = jax.random.normal(k[1], (3, 3, 64, 64), jnp.float32) / jnp.sqrt(9.0 * 64)
    w2 = jax.random.normal(k[2], (3, 3, 64, 64), jnp.float32) / jnp.sqrt(9.0 * 64)
    scales = 1.0 + 0.1 * jax.random.normal(k[3], (2, 64), jnp.float32)
    biases = 0.1 * jax.random.normal(k[4], (2, 64), jnp.float32)
    weights = [w1.reshape(576, 64).astype(jnp.bfloat16),
               w2.reshape(576, 64).astype(jnp.bfloat16)]
    vals, idx = _stage_call(_pad_flat(x), weights, scales, biases,
                            h=h, w=w, cins=(64, 64), cout=64,
                            first_from_patches=False)
    pre = _ref_stage_prepool(x, [w1, w2], [scales[0], scales[1]],
                             [biases[0], biases[1]])
    want = pre.reshape(2, h // 2, 2, w // 2, 2, 64).max(axis=(2, 4))
    got = vals.astype(jnp.float32)
    assert jnp.allclose(got, want, atol=atol, rtol=rtol), "fused stage mismatch"
    gathered = jnp.take_along_axis(
        pre.reshape(2, h * w, 64), idx.reshape(2, (h // 2) * (w // 2), 64), axis=1
    ).reshape(2, h // 2, w // 2, 64)
    assert jnp.allclose(gathered, got, atol=atol, rtol=rtol), "pool index mismatch"

    # (b) first-stage path (host im2col, K padded to 32).
    h = w = 8
    x = jax.random.normal(k[5], (2, h, w, 3), jnp.float32)
    w1 = jax.random.normal(k[6], (3, 3, 3, 64), jnp.float32) / jnp.sqrt(27.0)
    w2 = jax.random.normal(k[7], (3, 3, 64, 64), jnp.float32) / jnp.sqrt(9.0 * 64)
    scales = jnp.ones((2, 64), jnp.float32)
    biases = jnp.zeros((2, 64), jnp.float32)
    weights = [
        jnp.pad(w1.reshape(27, 64),
                ((0, _FIRST_K_PAD - 27), (0, 0))).astype(jnp.bfloat16),
        w2.reshape(576, 64).astype(jnp.bfloat16),
    ]
    vals, _ = _stage_call(_im2col_first(x), weights, scales, biases,
                          h=h, w=w, cins=(3, 64), cout=64,
                          first_from_patches=True)
    pre = _ref_stage_prepool(x, [w1, w2], [scales[0], scales[1]],
                             [biases[0], biases[1]])
    want = pre.reshape(2, h // 2, 2, w // 2, 2, 64).max(axis=(2, 4))
    got = vals.astype(jnp.float32)
    assert jnp.allclose(got, want, atol=atol, rtol=rtol), "first-stage mismatch"


if __name__ == "__main__":
    key = jax.random.PRNGKey(0)
    k_in, k_par, k_chk = jax.random.split(key, 3)

    _run_unit_checks(k_chk)

    # NCHW input; 32x32 so the five 2x2 pools are valid (32->16->8->4->2->1).
    x = jax.random.normal(k_in, (2, 3, 32, 32), jnp.float32)
    params = init_params(k_par)

    fwd = jax.jit(encoder_forward)
    out, x1, pool_indices = fwd(x, params)
    out = jax.block_until_ready(out)
    x1 = jax.block_until_ready(x1)
    pool_indices = [jax.block_until_ready(i) for i in pool_indices]

    # Sanity checks on shapes / dtypes / values implied by the PyTorch forward.
    assert out.shape == (2, 512, 1, 1) and out.dtype == jnp.float32
    assert x1.shape == (2, 256, 4, 4) and x1.dtype == jnp.float32
    assert bool(jnp.all(jnp.isfinite(out))) and bool(jnp.all(jnp.isfinite(x1)))
    expected_idx_shapes = [
        (2, 64, 16, 16),
        (2, 128, 8, 8),
        (2, 256, 4, 4),
        (2, 512, 2, 2),
        (2, 512, 1, 1),
    ]
    pre_pool_hw = [32 * 32, 16 * 16, 8 * 8, 4 * 4, 2 * 2]
    assert len(pool_indices) == 5
    for idx, shp, hw in zip(pool_indices, expected_idx_shapes, pre_pool_hw):
        assert idx.shape == shp and idx.dtype == jnp.int32
        assert bool(jnp.all((idx >= 0) & (idx < hw)))

    print("KERNEL_OK")
</pallas_src>

<mosaic_0001>
module attributes {stable_mosaic.version = 11 : i64} {
  func.func @_stage_kernel(%arg0: i32, %arg1: memref<1x360x64xbf16, #tpu.memory_space<vmem>>, %arg2: memref<576x64xbf16, #tpu.memory_space<vmem>>, %arg3: memref<576x64xbf16, #tpu.memory_space<vmem>>, %arg4: memref<2x64xf32, #tpu.memory_space<vmem>>, %arg5: memref<2x64xf32, #tpu.memory_space<vmem>>, %arg6: memref<1x8x8x64xbf16, #tpu.memory_space<vmem>>, %arg7: memref<1x8x8x64xi32, #tpu.memory_space<vmem>>, %arg8: memref<360x64xbf16, #tpu.memory_space<vmem>>, %arg9: memref<288x576xbf16, #tpu.memory_space<vmem>>, %arg10: memref<288x64xf32, #tpu.memory_space<vmem>>) attributes {dimension_semantics = [#tpu.dimension_semantics<arbitrary>], iteration_bounds = array<i64: 2>, scalar_prefetch = 0 : i64, scratch_operands = 3 : i64, tpu.core_type = #tpu.core_type<tc>, window_params = [{transform_indices = @transform_0, window_bounds = array<i64: 1, 360, 64>}, {pipeline_mode = #tpu.pipeline_mode<synchronous>, transform_indices = @transform_1, window_bounds = array<i64: 576, 64>}, {pipeline_mode = #tpu.pipeline_mode<synchronous>, transform_indices = @transform_2, window_bounds = array<i64: 576, 64>}, {pipeline_mode = #tpu.pipeline_mode<synchronous>, transform_indices = @transform_3, window_bounds = array<i64: 2, 64>}, {pipeline_mode = #tpu.pipeline_mode<synchronous>, transform_indices = @transform_4, window_bounds = array<i64: 2, 64>}, {transform_indices = @transform_5, window_bounds = array<i64: 1, 8, 8, 64>}, {transform_indices = @transform_6, window_bounds = array<i64: 1, 8, 8, 64>}]} {
    %c0_i32 = arith.constant 0 : i32
    %0 = arith.cmpi eq, %arg0, %c0_i32 : i32
    %1 = arith.extui %0 : i1 to i32
    %c0_i32_0 = arith.constant 0 : i32
    %2 = arith.cmpi ne, %1, %c0_i32_0 : i32
    scf.if %2 {
      %cst_285 = arith.constant 0.000000e+00 : bf16
      %441 = vector.broadcast %cst_285 : bf16 to vector<360x64xbf16>
      %c0_286 = arith.constant 0 : index
      %c0_287 = arith.constant 0 : index
      %442 = vector.load %arg8[%c0_286, %c0_287] : memref<360x64xbf16, #tpu.memory_space<vmem>>, vector<360x64xbf16>
      tpu.vector_store %arg8[%c0_286, %c0_287], %441 {strides = array<i32>} : memref<360x64xbf16, #tpu.memory_space<vmem>>, vector<360x64xbf16>,
    } else {
    }
    %c0 = arith.constant 0 : index
    %c0_1 = arith.constant 0 : index
    %c0_2 = arith.constant 0 : index
    %3 = vector.load %arg1[%c0, %c0_1, %c0_2] : memref<1x360x64xbf16, #tpu.memory_space<vmem>>, vector<1x288x64xbf16>
    %4 = vector.shape_cast %3 : vector<1x288x64xbf16> to vector<288x64xbf16>
    %c0_3 = arith.constant 0 : index
    %c0_4 = arith.constant 0 : index
    %5 = vector.load %arg9[%c0_3, %c0_4] : memref<288x576xbf16, #tpu.memory_space<vmem>>, vector<288x64xbf16>
    tpu.vector_store %arg9[%c0_3, %c0_4], %4 {strides = array<i32>} : memref<288x576xbf16, #tpu.memory_space<vmem>>, vector<288x64xbf16>,
    %c0_5 = arith.constant 0 : index
    %c1 = arith.constant 1 : index
    %c0_6 = arith.constant 0 : index
    %6 = vector.load %arg1[%c0_5, %c1, %c0_6] : memref<1x360x64xbf16, #tpu.memory_space<vmem>>, vector<1x288x64xbf16>
    %7 = vector.shape_cast %6 : vector<1x288x64xbf16> to vector<288x64xbf16>
    %c0_7 = arith.constant 0 : index
    %c64 = arith.constant 64 : index
    %8 = vector.load %arg9[%c0_7, %c64] : memref<288x576xbf16, #tpu.memory_space<vmem>>, vector<288x64xbf16>
    tpu.vector_store %arg9[%c0_7, %c64], %7 {strides = array<i32>} : memref<288x576xbf16, #tpu.memory_space<vmem>>, vector<288x64xbf16>,
    %c0_8 = arith.constant 0 : index
    %c2 = arith.constant 2 : index
    %c0_9 = arith.constant 0 : index
    %9 = vector.load %arg1[%c0_8, %c2, %c0_9] : memref<1x360x64xbf16, #tpu.memory_space<vmem>>, vector<1x288x64xbf16>
    %10 = vector.shape_cast %9 : vector<1x288x64xbf16> to vector<288x64xbf16>
    %c0_10 = arith.constant 0 : index
    %c128 = arith.constant 128 : index
    %11 = vector.load %arg9[%c0_10, %c128] : memref<288x576xbf16, #tpu.memory_space<vmem>>, vector<288x64xbf16>
    tpu.vector_store %arg9[%c0_10, %c128], %10 {strides = array<i32>} : memref<288x576xbf16, #tpu.memory_space<vmem>>, vector<288x64xbf16>,
    %c0_11 = arith.constant 0 : index
    %c18 = arith.constant 18 : index
    %c0_12 = arith.constant 0 : index
    %12 = vector.load %arg1[%c0_11, %c18, %c0_12] : memref<1x360x64xbf16, #tpu.memory_space<vmem>>, vector<1x288x64xbf16>
    %13 = vector.shape_cast %12 : vector<1x288x64xbf16> to vector<288x64xbf16>
    %c0_13 = arith.constant 0 : index
    %c192 = arith.constant 192 : index
    %14 = vector.load %arg9[%c0_13, %c192] : memref<288x576xbf16, #tpu.memory_space<vmem>>, vector<288x64xbf16>
    tpu.vector_store %arg9[%c0_13, %c192], %13 {strides = array<i32>} : memref<288x576xbf16, #tpu.memory_space<vmem>>, vector<288x64xbf16>,
    %c0_14 = arith.constant 0 : index
    %c19 = arith.constant 19 : index
    %c0_15 = arith.constant 0 : index
    %15 = vector.load %arg1[%c0_14, %c19, %c0_15] : memref<1x360x64xbf16, #tpu.memory_space<vmem>>, vector<1x288x64xbf16>
    %16 = vector.shape_cast %15 : vector<1x288x64xbf16> to vector<288x64xbf16>
    %c0_16 = arith.constant 0 : index
    %c256 = arith.constant 256 : index
    %17 = vector.load %arg9[%c0_16, %c256] : memref<288x576xbf16, #tpu.memory_space<vmem>>, vector<288x64xbf16>
    tpu.vector_store %arg9[%c0_16, %c256], %16 {strides = array<i32>} : memref<288x576xbf16, #tpu.memory_space<vmem>>, vector<288x64xbf16>,
    %c0_17 = arith.constant 0 : index
    %c20 = arith.constant 20 : index
    %c0_18 = arith.constant 0 : index
    %18 = vector.load %arg1[%c0_17, %c20, %c0_18] : memref<1x360x64xbf16, #tpu.memory_space<vmem>>, vector<1x288x64xbf16>
    %19 = vector.shape_cast %18 : vector<1x288x64xbf16> to vector<288x64xbf16>
    %c0_19 = arith.constant 0 : index
    %c320 = arith.constant 320 : index
    %20 = vector.load %arg9[%c0_19, %c320] : memref<288x576xbf16, #tpu.memory_space<vmem>>, vector<288x64xbf16>
    tpu.vector_store %arg9[%c0_19, %c320], %19 {strides = array<i32>} : memref<288x576xbf16, #tpu.memory_space<vmem>>, vector<288x64xbf16>,
    %c0_20 = arith.constant 0 : index
    %c36 = arith.constant 36 : index
    %c0_21 = arith.constant 0 : index
    %21 = vector.load %arg1[%c0_20, %c36, %c0_21] : memref<1x360x64xbf16, #tpu.memory_space<vmem>>, vector<1x288x64xbf16>
    %22 = vector.shape_cast %21 : vector<1x288x64xbf16> to vector<288x64xbf16>
    %c0_22 = arith.constant 0 : index
    %c384 = arith.constant 384 : index
    %23 = vector.load %arg9[%c0_22, %c384] : memref<288x576xbf16, #tpu.memory_space<vmem>>, vector<288x64xbf16>
    tpu.vector_store %arg9[%c0_22, %c384], %22 {strides = array<i32>} : memref<288x576xbf16, #tpu.memory_space<vmem>>, vector<288x64xbf16>,
    %c0_23 = arith.constant 0 : index
    %c37 = arith.constant 37 : index
    %c0_24 = arith.constant 0 : index
    %24 = vector.load %arg1[%c0_23, %c37, %c0_24] : memref<1x360x64xbf16, #tpu.memory_space<vmem>>, vector<1x288x64xbf16>
    %25 = vector.shape_cast %24 : vector<1x288x64xbf16> to vector<288x64xbf16>
    %c0_25 = arith.constant 0 : index
    %c448 = arith.constant 448 : index
    %26 = vector.load %arg9[%c0_25, %c448] : memref<288x576xbf16, #tpu.memory_space<vmem>>, vector<288x64xbf16>
    tpu.vector_store %arg9[%c0_25, %c448], %25 {strides = array<i32>} : memref<288x576xbf16, #tpu.memory_space<vmem>>, vector<288x64xbf16>,
    %c0_26 = arith.constant 0 : index
    %c38 = arith.constant 38 : index
    %c0_27 = arith.constant 0 : index
    %27 = vector.load %arg1[%c0_26, %c38, %c0_27] : memref<1x360x64xbf16, #tpu.memory_space<vmem>>, vector<1x288x64xbf16>
    %28 = vector.shape_cast %27 : vector<1x288x64xbf16> to vector<288x64xbf16>
    %c0_28 = arith.constant 0 : index
    %c512 = arith.constant 512 : index
    %29 = vector.load %arg9[%c0_28, %c512] : memref<288x576xbf16, #tpu.memory_space<vmem>>, vector<288x64xbf16>
    tpu.vector_store %arg9[%c0_28, %c512], %28 {strides = array<i32>} : memref<288x576xbf16, #tpu.memory_space<vmem>>, vector<288x64xbf16>,
    %c0_29 = arith.constant 0 : index
    %c0_30 = arith.constant 0 : index
    %30 = vector.load %arg9[%c0_29, %c0_30] : memref<288x576xbf16, #tpu.memory_space<vmem>>, vector<288x576xbf16>
    %c0_31 = arith.constant 0 : index
    %c0_32 = arith.constant 0 : index
    %31 = vector.load %arg2[%c0_31, %c0_32] : memref<576x64xbf16, #tpu.memory_space<vmem>>, vector<576x64xbf16>
    %cst = arith.constant dense<0.000000e+00> : vector<288x64xf32>
    %32 = tpu.matmul %30, %31, %cst {dimension_numbers = #tpu.dot_dimension_numbers<[1], [0], [0], [1], [0, 0, 1, 1], [], []>} : vector<288x576xbf16>, vector<576x64xbf16>, vector<288x64xf32> -> vector<288x64xf32>
    %c0_33 = arith.constant 0 : index
    %c0_34 = arith.constant 0 : index
    %33 = vector.load %arg4[%c0_33, %c0_34] : memref<2x64xf32, #tpu.memory_space<vmem>>, vector<1x64xf32>
    %34 = vector.broadcast %33 : vector<1x64xf32> to vector<288x64xf32>
    %35 = arith.mulf %32, %34 : vector<288x64xf32>
    %c0_35 = arith.constant 0 : index
    %c0_36 = arith.constant 0 : index
    %36 = vector.load %arg5[%c0_35, %c0_36] : memref<2x64xf32, #tpu.memory_space<vmem>>, vector<1x64xf32>
    %37 = vector.broadcast %36 : vector<1x64xf32> to vector<288x64xf32>
    %38 = arith.addf %35, %37 : vector<288x64xf32>
    %cst_37 = arith.constant 0.000000e+00 : f32
    %39 = vector.broadcast %cst_37 : f32 to vector<288x64xf32>
    %40 = arith.maximumf %38, %39 : vector<288x64xf32>
    %41 = arith.truncf %40 : vector<288x64xf32> to vector<288x64xbf16>
    %42 = vector.extract_strided_slice %41 {offsets = [0, 0], sizes = [16, 64], strides = [1, 1]} : vector<288x64xbf16> to vector<16x64xbf16>
    %c19_38 = arith.constant 19 : index
    %c0_39 = arith.constant 0 : index
    %43 = vector.load %arg8[%c19_38, %c0_39] : memref<360x64xbf16, #tpu.memory_space<vmem>>, vector<16x64xbf16>
    tpu.vector_store %arg8[%c19_38, %c0_39], %42 {strides = array<i32>} : memref<360x64xbf16, #tpu.memory_space<vmem>>, vector<16x64xbf16>,
    %44 = vector.extract_strided_slice %41 {offsets = [18, 0], sizes = [16, 64], strides = [1, 1]} : vector<288x64xbf16> to vector<16x64xbf16>
    %c37_40 = arith.constant 37 : index
    %c0_41 = arith.constant 0 : index
    %45 = vector.load %arg8[%c37_40, %c0_41] : memref<360x64xbf16, #tpu.memory_space<vmem>>, vector<16x64xbf16>
    tpu.vector_store %arg8[%c37_40, %c0_41], %44 {strides = array<i32>} : memref<360x64xbf16, #tpu.memory_space<vmem>>, vector<16x64xbf16>,
    %46 = vector.extract_strided_slice %41 {offsets = [36, 0], sizes = [16, 64], strides = [1, 1]} : vector<288x64xbf16> to vector<16x64xbf16>
    %c55 = arith.constant 55 : index
    %c0_42 = arith.constant 0 : index
    %47 = vector.load %arg8[%c55, %c0_42] : memref<360x64xbf16, #tpu.memory_space<vmem>>, vector<16x64xbf16>
    tpu.vector_store %arg8[%c55, %c0_42], %46 {strides = array<i32>} : memref<360x64xbf16, #tpu.memory_space<vmem>>, vector<16x64xbf16>,
    %48 = vector.extract_strided_slice %41 {offsets = [54, 0], sizes = [16, 64], strides = [1, 1]} : vector<288x64xbf16> to vector<16x64xbf16>
    %c73 = arith.constant 73 : index
    %c0_43 = arith.constant 0 : index
    %49 = vector.load %arg8[%c73, %c0_43] : memref<360x64xbf16, #tpu.memory_space<vmem>>, vector<16x64xbf16>
    tpu.vector_store %arg8[%c73, %c0_43], %48 {strides = array<i32>} : memref<360x64xbf16, #tpu.memory_space<vmem>>, vector<16x64xbf16>,
    %50 = vector.extract_strided_slice %41 {offsets = [72, 0], sizes = [16, 64], strides = [1, 1]} : vector<288x64xbf16> to vector<16x64xbf16>
    %c91 = arith.constant 91 : index
    %c0_44 = arith.constant 0 : index
    %51 = vector.load %arg8[%c91, %c0_44] : memref<360x64xbf16, #tpu.memory_space<vmem>>, vector<16x64xbf16>
    tpu.vector_store %arg8[%c91, %c0_44], %50 {strides = array<i32>} : memref<360x64xbf16, #tpu.memory_space<vmem>>, vector<16x64xbf16>,
    %52 = vector.extract_strided_slice %41 {offsets = [90, 0], sizes = [16, 64], strides = [1, 1]} : vector<288x64xbf16> to vector<16x64xbf16>
    %c109 = arith.constant 109 : index
    %c0_45 = arith.constant 0 : index
    %53 = vector.load %arg8[%c109, %c0_45] : memref<360x64xbf16, #tpu.memory_space<vmem>>, vector<16x64xbf16>
    tpu.vector_store %arg8[%c109, %c0_45], %52 {strides = array<i32>} : memref<360x64xbf16, #tpu.memory_space<vmem>>, vector<16x64xbf16>,
    %54 = vector.extract_strided_slice %41 {offsets = [108, 0], sizes = [16, 64], strides = [1, 1]} : vector<288x64xbf16> to vector<16x64xbf16>
    %c127 = arith.constant 127 : index
    %c0_46 = arith.constant 0 : index
    %55 = vector.load %arg8[%c127, %c0_46] : memref<360x64xbf16, #tpu.memory_space<vmem>>, vector<16x64xbf16>
    tpu.vector_store %arg8[%c127, %c0_46], %54 {strides = array<i32>} : memref<360x64xbf16, #tpu.memory_space<vmem>>, vector<16x64xbf16>,
    %56 = vector.extract_strided_slice %41 {offsets = [126, 0], sizes = [16, 64], strides = [1, 1]} : vector<288x64xbf16> to vector<16x64xbf16>
    %c145 = arith.constant 145 : index
    %c0_47 = arith.constant 0 : index
    %57 = vector.load %arg8[%c145, %c0_47] : memref<360x64xbf16, #tpu.memory_space<vmem>>, vector<16x64xbf16>
    tpu.vector_store %arg8[%c145, %c0_47], %56 {strides = array<i32>} : memref<360x64xbf16, #tpu.memory_space<vmem>>, vector<16x64xbf16>,
    %58 = vector.extract_strided_slice %41 {offsets = [144, 0], sizes = [16, 64], strides = [1, 1]} : vector<288x64xbf16> to vector<16x64xbf16>
    %c163 = arith.constant 163 : index
    %c0_48 = arith.constant 0 : index
    %59 = vector.load %arg8[%c163, %c0_48] : memref<360x64xbf16, #tpu.memory_space<vmem>>, vector<16x64xbf16>
    tpu.vector_store %arg8[%c163, %c0_48], %58 {strides = array<i32>} : memref<360x64xbf16, #tpu.memory_space<vmem>>, vector<16x64xbf16>,
    %60 = vector.extract_strided_slice %41 {offsets = [162, 0], sizes = [16, 64], strides = [1, 1]} : vector<288x64xbf16> to vector<16x64xbf16>
    %c181 = arith.constant 181 : index
    %c0_49 = arith.constant 0 : index
    %61 = vector.load %arg8[%c181, %c0_49] : memref<360x64xbf16, #tpu.memory_space<vmem>>, vector<16x64xbf16>
    tpu.vector_store %arg8[%c181, %c0_49], %60 {strides = array<i32>} : memref<360x64xbf16, #tpu.memory_space<vmem>>, vector<16x64xbf16>,
    %62 = vector.extract_strided_slice %41 {offsets = [180, 0], sizes = [16, 64], strides = [1, 1]} : vector<288x64xbf16> to vector<16x64xbf16>
    %c199 = arith.constant 199 : index
    %c0_50 = arith.constant 0 : index
    %63 = vector.load %arg8[%c199, %c0_50] : memref<360x64xbf16, #tpu.memory_space<vmem>>, vector<16x64xbf16>
    tpu.vector_store %arg8[%c199, %c0_50], %62 {strides = array<i32>} : memref<360x64xbf16, #tpu.memory_space<vmem>>, vector<16x64xbf16>,
    %64 = vector.extract_strided_slice %41 {offsets = [198, 0], sizes = [16, 64], strides = [1, 1]} : vector<288x64xbf16> to vector<16x64xbf16>
    %c217 = arith.constant 217 : index
    %c0_51 = arith.constant 0 : index
    %65 = vector.load %arg8[%c217, %c0_51] : memref<360x64xbf16, #tpu.memory_space<vmem>>, vector<16x64xbf16>
    tpu.vector_store %arg8[%c217, %c0_51], %64 {strides = array<i32>} : memref<360x64xbf16, #tpu.memory_space<vmem>>, vector<16x64xbf16>,
    %66 = vector.extract_strided_slice %41 {offsets = [216, 0], sizes = [16, 64], strides = [1, 1]} : vector<288x64xbf16> to vector<16x64xbf16>
    %c235 = arith.constant 235 : index
    %c0_52 = arith.constant 0 : index
    %67 = vector.load %arg8[%c235, %c0_52] : memref<360x64xbf16, #tpu.memory_space<vmem>>, vector<16x64xbf16>
    tpu.vector_store %arg8[%c235, %c0_52], %66 {strides = array<i32>} : memref<360x64xbf16, #tpu.memory_space<vmem>>, vector<16x64xbf16>,
    %68 = vector.extract_strided_slice %41 {offsets = [234, 0], sizes = [16, 64], strides = [1, 1]} : vector<288x64xbf16> to vector<16x64xbf16>
    %c253 = arith.constant 253 : index
    %c0_53 = arith.constant 0 : index
    %69 = vector.load %arg8[%c253, %c0_53] : memref<360x64xbf16, #tpu.memory_space<vmem>>, vector<16x64xbf16>
    tpu.vector_store %arg8[%c253, %c0_53], %68 {strides = array<i32>} : memref<360x64xbf16, #tpu.memory_space<vmem>>, vector<16x64xbf16>,
    %70 = vector.extract_strided_slice %41 {offsets = [252, 0], sizes = [16, 64], strides = [1, 1]} : vector<288x64xbf16> to vector<16x64xbf16>
    %c271 = arith.constant 271 : index
    %c0_54 = arith.constant 0 : index
    %71 = vector.load %arg8[%c271, %c0_54] : memref<360x64xbf16, #tpu.memory_space<vmem>>, vector<16x64xbf16>
    tpu.vector_store %arg8[%c271, %c0_54], %70 {strides = array<i32>} : memref<360x64xbf16, #tpu.memory_space<vmem>>, vector<16x64xbf16>,
    %72 = vector.extract_strided_slice %41 {offsets = [270, 0], sizes = [16, 64], strides = [1, 1]} : vector<288x64xbf16> to vector<16x64xbf16>
    %c289 = arith.constant 289 : index
    %c0_55 = arith.constant 0 : index
    %73 = vector.load %arg8[%c289, %c0_55] : memref<360x64xbf16, #tpu.memory_space<vmem>>, vector<16x64xbf16>
    tpu.vector_store %arg8[%c289, %c0_55], %72 {strides = array<i32>} : memref<360x64xbf16, #tpu.memory_space<vmem>>, vector<16x64xbf16>,
    %c0_56 = arith.constant 0 : index
    %c0_57 = arith.constant 0 : index
    %74 = vector.load %arg8[%c0_56, %c0_57] : memref<360x64xbf16, #tpu.memory_space<vmem>>, vector<288x64xbf16>
    %c0_58 = arith.constant 0 : index
    %c0_59 = arith.constant 0 : index
    %75 = vector.load %arg9[%c0_58, %c0_59] : memref<288x576xbf16, #tpu.memory_space<vmem>>, vector<288x64xbf16>
    tpu.vector_store %arg9[%c0_58, %c0_59], %74 {strides = array<i32>} : memref<288x576xbf16, #tpu.memory_space<vmem>>, vector<288x64xbf16>,
    %c1_60 = arith.constant 1 : index
    %c0_61 = arith.constant 0 : index
    %76 = vector.load %arg8[%c1_60, %c0_61] : memref<360x64xbf16, #tpu.memory_space<vmem>>, vector<288x64xbf16>
    %c0_62 = arith.constant 0 : index
    %c64_63 = arith.constant 64 : index
    %77 = vector.load %arg9[%c0_62, %c64_63] : memref<288x576xbf16, #tpu.memory_space<vmem>>, vector<288x64xbf16>
    tpu.vector_store %arg9[%c0_62, %c64_63], %76 {strides = array<i32>} : memref<288x576xbf16, #tpu.memory_space<vmem>>, vector<288x64xbf16>,
    %c2_64 = arith.constant 2 : index
    %c0_65 = arith.constant 0 : index
    %78 = vector.load %arg8[%c2_64, %c0_65] : memref<360x64xbf16, #tpu.memory_space<vmem>>, vector<288x64xbf16>
    %c0_66 = arith.constant 0 : index
    %c128_67 = arith.constant 128 : index
    %79 = vector.load %arg9[%c0_66, %c128_67] : memref<288x576xbf16, #tpu.memory_space<vmem>>, vector<288x64xbf16>
    tpu.vector_store %arg9[%c0_66, %c128_67], %78 {strides = array<i32>} : memref<288x576xbf16, #tpu.memory_space<vmem>>, vector<288x64xbf16>,
    %c18_68 = arith.constant 18 : index
    %c0_69 = arith.constant 0 : index
    %80 = vector.load %arg8[%c18_68, %c0_69] : memref<360x64xbf16, #tpu.memory_space<vmem>>, vector<288x64xbf16>
    %c0_70 = arith.constant 0 : index
    %c192_71 = arith.constant 192 : index
    %81 = vector.load %arg9[%c0_70, %c192_71] : memref<288x576xbf16, #tpu.memory_space<vmem>>, vector<288x64xbf16>
    tpu.vector_store %arg9[%c0_70, %c192_71], %80 {strides = array<i32>} : memref<288x576xbf16, #tpu.memory_space<vmem>>, vector<288x64xbf16>,
    %c19_72 = arith.constant 19 : index
    %c0_73 = arith.constant 0 : index
    %82 = vector.load %arg8[%c19_72, %c0_73] : memref<360x64xbf16, #tpu.memory_space<vmem>>, vector<288x64xbf16>
    %c0_74 = arith.constant 0 : index
    %c256_75 = arith.constant 256 : index
    %83 = vector.load %arg9[%c0_74, %c256_75] : memref<288x576xbf16, #tpu.memory_space<vmem>>, vector<288x64xbf16>
    tpu.vector_store %arg9[%c0_74, %c256_75], %82 {strides = array<i32>} : memref<288x576xbf16, #tpu.memory_space<vmem>>, vector<288x64xbf16>,
    %c20_76 = arith.constant 20 : index
    %c0_77 = arith.constant 0 : index
    %84 = vector.load %arg8[%c20_76, %c0_77] : memref<360x64xbf16, #tpu.memory_space<vmem>>, vector<288x64xbf16>
    %c0_78 = arith.constant 0 : index
    %c320_79 = arith.constant 320 : index
    %85 = vector.load %arg9[%c0_78, %c320_79] : memref<288x576xbf16, #tpu.memory_space<vmem>>, vector<288x64xbf16>
    tpu.vector_store %arg9[%c0_78, %c320_79], %84 {strides = array<i32>} : memref<288x576xbf16, #tpu.memory_space<vmem>>, vector<288x64xbf16>,
    %c36_80 = arith.constant 36 : index
    %c0_81 = arith.constant 0 : index
    %86 = vector.load %arg8[%c36_80, %c0_81] : memref<360x64xbf16, #tpu.memory_space<vmem>>, vector<288x64xbf16>
    %c0_82 = arith.constant 0 : index
    %c384_83 = arith.constant 384 : index
    %87 = vector.load %arg9[%c0_82, %c384_83] : memref<288x576xbf16, #tpu.memory_space<vmem>>, vector<288x64xbf16>
    tpu.vector_store %arg9[%c0_82, %c384_83], %86 {strides = array<i32>} : memref<288x576xbf16, #tpu.memory_space<vmem>>, vector<288x64xbf16>,
    %c37_84 = arith.constant 37 : index
    %c0_85 = arith.constant 0 : index
    %88 = vector.load %arg8[%c37_84, %c0_85] : memref<360x64xbf16, #tpu.memory_space<vmem>>, vector<288x64xbf16>
    %c0_86 = arith.constant 0 : index
    %c448_87 = arith.constant 448 : index
    %89 = vector.load %arg9[%c0_86, %c448_87] : memref<288x576xbf16, #tpu.memory_space<vmem>>, vector<288x64xbf16>
    tpu.vector_store %arg9[%c0_86, %c448_87], %88 {strides = array<i32>} : memref<288x576xbf16, #tpu.memory_space<vmem>>, vector<288x64xbf16>,
    %c38_88 = arith.constant 38 : index
    %c0_89 = arith.constant 0 : index
    %90 = vector.load %arg8[%c38_88, %c0_89] : memref<360x64xbf16, #tpu.memory_space<vmem>>, vector<288x64xbf16>
    %c0_90 = arith.constant 0 : index
    %c512_91 = arith.constant 512 : index
    %91 = vector.load %arg9[%c0_90, %c512_91] : memref<288x576xbf16, #tpu.memory_space<vmem>>, vector<288x64xbf16>
    tpu.vector_store %arg9[%c0_90, %c512_91], %90 {strides = array<i32>} : memref<288x576xbf16, #tpu.memory_space<vmem>>, vector<288x64xbf16>,
    %c0_92 = arith.constant 0 : index
    %c0_93 = arith.constant 0 : index
    %92 = vector.load %arg9[%c0_92, %c0_93] : memref<288x576xbf16, #tpu.memory_space<vmem>>, vector<288x576xbf16>
    %c0_94 = arith.constant 0 : index
    %c0_95 = arith.constant 0 : index
    %93 = vector.load %arg3[%c0_94, %c0_95] : memref<576x64xbf16, #tpu.memory_space<vmem>>, vector<576x64xbf16>
    %cst_96 = arith.constant dense<0.000000e+00> : vector<288x64xf32>
    %94 = tpu.matmul %92, %93, %cst_96 {dimension_numbers = #tpu.dot_dimension_numbers<[1], [0], [0], [1], [0, 0, 1, 1], [], []>} : vector<288x576xbf16>, vector<576x64xbf16>, vector<288x64xf32> -> vector<288x64xf32>
    %c1_97 = arith.constant 1 : index
    %c0_98 = arith.constant 0 : index
    %95 = vector.load %arg4[%c1_97, %c0_98] : memref<2x64xf32, #tpu.memory_space<vmem>>, vector<1x64xf32>
    %96 = vector.broadcast %95 : vector<1x64xf32> to vector<288x64xf32>
    %97 = arith.mulf %94, %96 : vector<288x64xf32>
    %c1_99 = arith.constant 1 : index
    %c0_100 = arith.constant 0 : index
    %98 = vector.load %arg5[%c1_99, %c0_100] : memref<2x64xf32, #tpu.memory_space<vmem>>, vector<1x64xf32>
    %99 = vector.broadcast %98 : vector<1x64xf32> to vector<288x64xf32>
    %100 = arith.addf %97, %99 : vector<288x64xf32>
    %cst_101 = arith.constant 0.000000e+00 : f32
    %101 = vector.broadcast %cst_101 : f32 to vector<288x64xf32>
    %102 = arith.maximumf %100, %101 : vector<288x64xf32>
    %c0_102 = arith.constant 0 : index
    %c0_103 = arith.constant 0 : index
    %103 = vector.load %arg10[%c0_102, %c0_103] : memref<288x64xf32, #tpu.memory_space<vmem>>, vector<288x64xf32>
    tpu.vector_store %arg10[%c0_102, %c0_103], %102 {strides = array<i32>} : memref<288x64xf32, #tpu.memory_space<vmem>>, vector<288x64xf32>,
    %104 = tpu.iota {dimensions = array<i32: 0>} : vector<8x64xi32>
    %c0_104 = arith.constant 0 : index
    %c0_105 = arith.constant 0 : index
    %105 = tpu.strided_load %arg10[%c0_104, %c0_105] {strides = array<i32: 2, 1>} : memref<288x64xf32, #tpu.memory_space<vmem>>, vector<8x64xf32>
    %c2_i32 = arith.constant 2 : i32
    %106 = vector.broadcast %c2_i32 : i32 to vector<8x64xi32>
    %107 = arith.muli %106, %104 : vector<8x64xi32>
    %c0_i32_106 = arith.constant 0 : i32
    %108 = vector.broadcast %c0_i32_106 : i32 to vector<8x64xi32>
    %109 = arith.addi %108, %107 : vector<8x64xi32>
    %c1_107 = arith.constant 1 : index
    %c0_108 = arith.constant 0 : index
    %110 = tpu.strided_load %arg10[%c1_107, %c0_108] {strides = array<i32: 2, 1>} : memref<288x64xf32, #tpu.memory_space<vmem>>, vector<8x64xf32>
    %c2_i32_109 = arith.constant 2 : i32
    %111 = vector.broadcast %c2_i32_109 : i32 to vector<8x64xi32>
    %112 = arith.muli %111, %104 : vector<8x64xi32>
    %c0_i32_110 = arith.constant 0 : i32
    %113 = vector.broadcast %c0_i32_110 : i32 to vector<8x64xi32>
    %114 = arith.addi %113, %112 : vector<8x64xi32>
    %c1_i32 = arith.constant 1 : i32
    %115 = vector.broadcast %c1_i32 : i32 to vector<8x64xi32>
    %116 = arith.addi %114, %115 : vector<8x64xi32>
    %117 = arith.cmpf ogt, %110, %105 : vector<8x64xf32>
    %118 = arith.select %117, %110, %105 : vector<8x64xi1>, vector<8x64xf32>
    %119 = arith.select %117, %116, %109 : vector<8x64xi1>, vector<8x64xi32>
    %c18_111 = arith.constant 18 : index
    %c0_112 = arith.constant 0 : index
    %120 = tpu.strided_load %arg10[%c18_111, %c0_112] {strides = array<i32: 2, 1>} : memref<288x64xf32, #tpu.memory_space<vmem>>, vector<8x64xf32>
    %c2_i32_113 = arith.constant 2 : i32
    %121 = vector.broadcast %c2_i32_113 : i32 to vector<8x64xi32>
    %122 = arith.muli %121, %104 : vector<8x64xi32>
    %c16_i32 = arith.constant 16 : i32
    %123 = vector.broadcast %c16_i32 : i32 to vector<8x64xi32>
    %124 = arith.addi %123, %122 : vector<8x64xi32>
    %c0_i32_114 = arith.constant 0 : i32
    %125 = vector.broadcast %c0_i32_114 : i32 to vector<8x64xi32>
    %126 = arith.addi %124, %125 : vector<8x64xi32>
    %127 = arith.cmpf ogt, %120, %118 : vector<8x64xf32>
    %128 = arith.select %127, %120, %118 : vector<8x64xi1>, vector<8x64xf32>
    %129 = arith.select %127, %126, %119 : vector<8x64xi1>, vector<8x64xi32>
    %c19_115 = arith.constant 19 : index
    %c0_116 = arith.constant 0 : index
    %130 = tpu.strided_load %arg10[%c19_115, %c0_116] {strides = array<i32: 2, 1>} : memref<288x64xf32, #tpu.memory_space<vmem>>, vector<8x64xf32>
    %c2_i32_117 = arith.constant 2 : i32
    %131 = vector.broadcast %c2_i32_117 : i32 to vector<8x64xi32>
    %132 = arith.muli %131, %104 : vector<8x64xi32>
    %c16_i32_118 = arith.constant 16 : i32
    %133 = vector.broadcast %c16_i32_118 : i32 to vector<8x64xi32>
    %134 = arith.addi %133, %132 : vector<8x64xi32>
    %c1_i32_119 = arith.constant 1 : i32
    %135 = vector.broadcast %c1_i32_119 : i32 to vector<8x64xi32>
    %136 = arith.addi %134, %135 : vector<8x64xi32>
    %137 = arith.cmpf ogt, %130, %128 : vector<8x64xf32>
    %138 = arith.select %137, %130, %128 : vector<8x64xi1>, vector<8x64xf32>
    %139 = arith.select %137, %136, %129 : vector<8x64xi1>, vector<8x64xi32>
    %140 = arith.truncf %138 : vector<8x64xf32> to vector<8x64xbf16>
    %c0_120 = arith.constant 0 : index
    %c0_121 = arith.constant 0 : index
    %c0_122 = arith.constant 0 : index
    %c0_123 = arith.constant 0 : index
    %141 = vector.load %arg6[%c0_120, %c0_121, %c0_122, %c0_123] : memref<1x8x8x64xbf16, #tpu.memory_space<vmem>>, vector<1x1x8x64xbf16>
    %142 = vector.shape_cast %141 : vector<1x1x8x64xbf16> to vector<8x64xbf16>
    %143 = vector.shape_cast %140 : vector<8x64xbf16> to vector<1x1x8x64xbf16>
    tpu.vector_store %arg6[%c0_120, %c0_121, %c0_122, %c0_123], %143 {strides = array<i32>} : memref<1x8x8x64xbf16, #tpu.memory_space<vmem>>, vector<1x1x8x64xbf16>,
    %c0_124 = arith.constant 0 : index
    %c0_125 = arith.constant 0 : index
    %c0_126 = arith.constant 0 : index
    %c0_127 = arith.constant 0 : index
    %144 = vector.load %arg7[%c0_124, %c0_125, %c0_126, %c0_127] : memref<1x8x8x64xi32, #tpu.memory_space<vmem>>, vector<1x1x8x64xi32>
    %145 = vector.shape_cast %144 : vector<1x1x8x64xi32> to vector<8x64xi32>
    %146 = vector.shape_cast %139 : vector<8x64xi32> to vector<1x1x8x64xi32>
    tpu.vector_store %arg7[%c0_124, %c0_125, %c0_126, %c0_127], %146 {strides = array<i32>} : memref<1x8x8x64xi32, #tpu.memory_space<vmem>>, vector<1x1x8x64xi32>,
    %c36_128 = arith.constant 36 : index
    %c0_129 = arith.constant 0 : index
    %147 = tpu.strided_load %arg10[%c36_128, %c0_129] {strides = array<i32: 2, 1>} : memref<288x64xf32, #tpu.memory_space<vmem>>, vector<8x64xf32>
    %c2_i32_130 = arith.constant 2 : i32
    %148 = vector.broadcast %c2_i32_130 : i32 to vector<8x64xi32>
    %149 = arith.muli %148, %104 : vector<8x64xi32>
    %c32_i32 = arith.constant 32 : i32
    %150 = vector.broadcast %c32_i32 : i32 to vector<8x64xi32>
    %151 = arith.addi %150, %149 : vector<8x64xi32>
    %c37_131 = arith.constant 37 : index
    %c0_132 = arith.constant 0 : index
    %152 = tpu.strided_load %arg10[%c37_131, %c0_132] {strides = array<i32: 2, 1>} : memref<288x64xf32, #tpu.memory_space<vmem>>, vector<8x64xf32>
    %c2_i32_133 = arith.constant 2 : i32
    %153 = vector.broadcast %c2_i32_133 : i32 to vector<8x64xi32>
    %154 = arith.muli %153, %104 : vector<8x64xi32>
    %c32_i32_134 = arith.constant 32 : i32
    %155 = vector.broadcast %c32_i32_134 : i32 to vector<8x64xi32>
    %156 = arith.addi %155, %154 : vector<8x64xi32>
    %c1_i32_135 = arith.constant 1 : i32
    %157 = vector.broadcast %c1_i32_135 : i32 to vector<8x64xi32>
    %158 = arith.addi %156, %157 : vector<8x64xi32>
    %159 = arith.cmpf ogt, %152, %147 : vector<8x64xf32>
    %160 = arith.select %159, %152, %147 : vector<8x64xi1>, vector<8x64xf32>
    %161 = arith.select %159, %158, %151 : vector<8x64xi1>, vector<8x64xi32>
    %c54 = arith.constant 54 : index
    %c0_136 = arith.constant 0 : index
    %162 = tpu.strided_load %arg10[%c54, %c0_136] {strides = array<i32: 2, 1>} : memref<288x64xf32, #tpu.memory_space<vmem>>, vector<8x64xf32>
    %c2_i32_137 = arith.constant 2 : i32
    %163 = vector.broadcast %c2_i32_137 : i32 to vector<8x64xi32>
    %164 = arith.muli %163, %104 : vector<8x64xi32>
    %c48_i32 = arith.constant 48 : i32
    %165 = vector.broadcast %c48_i32 : i32 to vector<8x64xi32>
    %166 = arith.addi %165, %164 : vector<8x64xi32>
    %c0_i32_138 = arith.constant 0 : i32
    %167 = vector.broadcast %c0_i32_138 : i32 to vector<8x64xi32>
    %168 = arith.addi %166, %167 : vector<8x64xi32>
    %169 = arith.cmpf ogt, %162, %160 : vector<8x64xf32>
    %170 = arith.select %169, %162, %160 : vector<8x64xi1>, vector<8x64xf32>
    %171 = arith.select %169, %168, %161 : vector<8x64xi1>, vector<8x64xi32>
    %c55_139 = arith.constant 55 : index
    %c0_140 = arith.constant 0 : index
    %172 = tpu.strided_load %arg10[%c55_139, %c0_140] {strides = array<i32: 2, 1>} : memref<288x64xf32, #tpu.memory_space<vmem>>, vector<8x64xf32>
    %c2_i32_141 = arith.constant 2 : i32
    %173 = vector.broadcast %c2_i32_141 : i32 to vector<8x64xi32>
    %174 = arith.muli %173, %104 : vector<8x64xi32>
    %c48_i32_142 = arith.constant 48 : i32
    %175 = vector.broadcast %c48_i32_142 : i32 to vector<8x64xi32>
    %176 = arith.addi %175, %174 : vector<8x64xi32>
    %c1_i32_143 = arith.constant 1 : i32
    %177 = vector.broadcast %c1_i32_143 : i32 to vector<8x64xi32>
    %178 = arith.addi %176, %177 : vector<8x64xi32>
    %179 = arith.cmpf ogt, %172, %170 : vector<8x64xf32>
    %180 = arith.select %179, %172, %170 : vector<8x64xi1>, vector<8x64xf32>
    %181 = arith.select %179, %178, %171 : vector<8x64xi1>, vector<8x64xi32>
    %182 = arith.truncf %180 : vector<8x64xf32> to vector<8x64xbf16>
    %c0_144 = arith.constant 0 : index
    %c1_145 = arith.constant 1 : index
    %c0_146 = arith.constant 0 : index
    %c0_147 = arith.constant 0 : index
    %183 = vector.load %arg6[%c0_144, %c1_145, %c0_146, %c0_147] : memref<1x8x8x64xbf16, #tpu.memory_space<vmem>>, vector<1x1x8x64xbf16>
    %184 = vector.shape_cast %183 : vector<1x1x8x64xbf16> to vector<8x64xbf16>
    %185 = vector.shape_cast %182 : vector<8x64xbf16> to vector<1x1x8x64xbf16>
    tpu.vector_store %arg6[%c0_144, %c1_145, %c0_146, %c0_147], %185 {strides = array<i32>} : memref<1x8x8x64xbf16, #tpu.memory_space<vmem>>, vector<1x1x8x64xbf16>,
    %c0_148 = arith.constant 0 : index
    %c1_149 = arith.constant 1 : index
    %c0_150 = arith.constant 0 : index
    %c0_151 = arith.constant 0 : index
    %186 = vector.load %arg7[%c0_148, %c1_149, %c0_150, %c0_151] : memref<1x8x8x64xi32, #tpu.memory_space<vmem>>, vector<1x1x8x64xi32>
    %187 = vector.shape_cast %186 : vector<1x1x8x64xi32> to vector<8x64xi32>
    %188 = vector.shape_cast %181 : vector<8x64xi32> to vector<1x1x8x64xi32>
    tpu.vector_store %arg7[%c0_148, %c1_149, %c0_150, %c0_151], %188 {strides = array<i32>} : memref<1x8x8x64xi32, #tpu.memory_space<vmem>>, vector<1x1x8x64xi32>,
    %c72 = arith.constant 72 : index
    %c0_152 = arith.constant 0 : index
    %189 = tpu.strided_load %arg10[%c72, %c0_152] {strides = array<i32: 2, 1>} : memref<288x64xf32, #tpu.memory_space<vmem>>, vector<8x64xf32>
    %c2_i32_153 = arith.constant 2 : i32
    %190 = vector.broadcast %c2_i32_153 : i32 to vector<8x64xi32>
    %191 = arith.muli %190, %104 : vector<8x64xi32>
    %c64_i32 = arith.constant 64 : i32
    %192 = vector.broadcast %c64_i32 : i32 to vector<8x64xi32>
    %193 = arith.addi %192, %191 : vector<8x64xi32>
    %c73_154 = arith.constant 73 : index
    %c0_155 = arith.constant 0 : index
    %194 = tpu.strided_load %arg10[%c73_154, %c0_155] {strides = array<i32: 2, 1>} : memref<288x64xf32, #tpu.memory_space<vmem>>, vector<8x64xf32>
    %c2_i32_156 = arith.constant 2 : i32
    %195 = vector.broadcast %c2_i32_156 : i32 to vector<8x64xi32>
    %196 = arith.muli %195, %104 : vector<8x64xi32>
    %c64_i32_157 = arith.constant 64 : i32
    %197 = vector.broadcast %c64_i32_157 : i32 to vector<8x64xi32>
    %198 = arith.addi %197, %196 : vector<8x64xi32>
    %c1_i32_158 = arith.constant 1 : i32
    %199 = vector.broadcast %c1_i32_158 : i32 to vector<8x64xi32>
    %200 = arith.addi %198, %199 : vector<8x64xi32>
    %201 = arith.cmpf ogt, %194, %189 : vector<8x64xf32>
    %202 = arith.select %201, %194, %189 : vector<8x64xi1>, vector<8x64xf32>
    %203 = arith.select %201, %200, %193 : vector<8x64xi1>, vector<8x64xi32>
    %c90 = arith.constant 90 : index
    %c0_159 = arith.constant 0 : index
    %204 = tpu.strided_load %arg10[%c90, %c0_159] {strides = array<i32: 2, 1>} : memref<288x64xf32, #tpu.memory_space<vmem>>, vector<8x64xf32>
    %c2_i32_160 = arith.constant 2 : i32
    %205 = vector.broadcast %c2_i32_160 : i32 to vector<8x64xi32>
    %206 = arith.muli %205, %104 : vector<8x64xi32>
    %c80_i32 = arith.constant 80 : i32
    %207 = vector.broadcast %c80_i32 : i32 to vector<8x64xi32>
    %208 = arith.addi %207, %206 : vector<8x64xi32>
    %c0_i32_161 = arith.constant 0 : i32
    %209 = vector.broadcast %c0_i32_161 : i32 to vector<8x64xi32>
    %210 = arith.addi %208, %209 : vector<8x64xi32>
    %211 = arith.cmpf ogt, %204, %202 : vector<8x64xf32>
    %212 = arith.select %211, %204, %202 : vector<8x64xi1>, vector<8x64xf32>
    %213 = arith.select %211, %210, %203 : vector<8x64xi1>, vector<8x64xi32>
    %c91_162 = arith.constant 91 : index
    %c0_163 = arith.constant 0 : index
    %214 = tpu.strided_load %arg10[%c91_162, %c0_163] {strides = array<i32: 2, 1>} : memref<288x64xf32, #tpu.memory_space<vmem>>, vector<8x64xf32>
    %c2_i32_164 = arith.constant 2 : i32
    %215 = vector.broadcast %c2_i32_164 : i32 to vector<8x64xi32>
    %216 = arith.muli %215, %104 : vector<8x64xi32>
    %c80_i32_165 = arith.constant 80 : i32
    %217 = vector.broadcast %c80_i32_165 : i32 to vector<8x64xi32>
    %218 = arith.addi %217, %216 : vector<8x64xi32>
    %c1_i32_166 = arith.constant 1 : i32
    %219 = vector.broadcast %c1_i32_166 : i32 to vector<8x64xi32>
    %220 = arith.addi %218, %219 : vector<8x64xi32>
    %221 = arith.cmpf ogt, %214, %212 : vector<8x64xf32>
    %222 = arith.select %221, %214, %212 : vector<8x64xi1>, vector<8x64xf32>
    %223 = arith.select %221, %220, %213 : vector<8x64xi1>, vector<8x64xi32>
    %224 = arith.truncf %222 : vector<8x64xf32> to vector<8x64xbf16>
    %c0_167 = arith.constant 0 : index
    %c2_168 = arith.constant 2 : index
    %c0_169 = arith.constant 0 : index
    %c0_170 = arith.constant 0 : index
    %225 = vector.load %arg6[%c0_167, %c2_168, %c0_169, %c0_170] : memref<1x8x8x64xbf16, #tpu.memory_space<vmem>>, vector<1x1x8x64xbf16>
    %226 = vector.shape_cast %225 : vector<1x1x8x64xbf16> to vector<8x64xbf16>
    %227 = vector.shape_cast %224 : vector<8x64xbf16> to vector<1x1x8x64xbf16>
    tpu.vector_store %arg6[%c0_167, %c2_168, %c0_169, %c0_170], %227 {strides = array<i32>} : memref<1x8x8x64xbf16, #tpu.memory_space<vmem>>, vector<1x1x8x64xbf16>,
    %c0_171 = arith.constant 0 : index
    %c2_172 = arith.constant 2 : index
    %c0_173 = arith.constant 0 : index
    %c0_174 = arith.constant 0 : index
    %228 = vector.load %arg7[%c0_171, %c2_172, %c0_173, %c0_174] : memref<1x8x8x64xi32, #tpu.memory_space<vmem>>, vector<1x1x8x64xi32>
    %229 = vector.shape_cast %228 : vector<1x1x8x64xi32> to vector<8x64xi32>
    %230 = vector.shape_cast %223 : vector<8x64xi32> to vector<1x1x8x64xi32>
    tpu.vector_store %arg7[%c0_171, %c2_172, %c0_173, %c0_174], %230 {strides = array<i32>} : memref<1x8x8x64xi32, #tpu.memory_space<vmem>>, vector<1x1x8x64xi32>,
    %c108 = arith.constant 108 : index
    %c0_175 = arith.constant 0 : index
    %231 = tpu.strided_load %arg10[%c108, %c0_175] {strides = array<i32: 2, 1>} : memref<288x64xf32, #tpu.memory_space<vmem>>, vector<8x64xf32>
    %c2_i32_176 = arith.constant 2 : i32
    %232 = vector.broadcast %c2_i32_176 : i32 to vector<8x64xi32>
    %233 = arith.muli %232, %104 : vector<8x64xi32>
    %c96_i32 = arith.constant 96 : i32
    %234 = vector.broadcast %c96_i32 : i32 to vector<8x64xi32>
    %235 = arith.addi %234, %233 : vector<8x64xi32>
    %c109_177 = arith.constant 109 : index
    %c0_178 = arith.constant 0 : index
    %236 = tpu.strided_load %arg10[%c109_177, %c0_178] {strides = array<i32: 2, 1>} : memref<288x64xf32, #tpu.memory_space<vmem>>, vector<8x64xf32>
    %c2_i32_179 = arith.constant 2 : i32
    %237 = vector.broadcast %c2_i32_179 : i32 to vector<8x64xi32>
    %238 = arith.muli %237, %104 : vector<8x64xi32>
    %c96_i32_180 = arith.constant 96 : i32
    %239 = vector.broadcast %c96_i32_180 : i32 to vector<8x64xi32>
    %240 = arith.addi %239, %238 : vector<8x64xi32>
    %c1_i32_181 = arith.constant 1 : i32
    %241 = vector.broadcast %c1_i32_181 : i32 to vector<8x64xi32>
    %242 = arith.addi %240, %241 : vector<8x64xi32>
    %243 = arith.cmpf ogt, %236, %231 : vector<8x64xf32>
    %244 = arith.select %243, %236, %231 : vector<8x64xi1>, vector<8x64xf32>
    %245 = arith.select %243, %242, %235 : vector<8x64xi1>, vector<8x64xi32>
    %c126 = arith.constant 126 : index
    %c0_182 = arith.constant 0 : index
    %246 = tpu.strided_load %arg10[%c126, %c0_182] {strides = array<i32: 2, 1>} : memref<288x64xf32, #tpu.memory_space<vmem>>, vector<8x64xf32>
    %c2_i32_183 = arith.constant 2 : i32
    %247 = vector.broadcast %c2_i32_183 : i32 to vector<8x64xi32>
    %248 = arith.muli %247, %104 : vector<8x64xi32>
    %c112_i32 = arith.constant 112 : i32
    %249 = vector.broadcast %c112_i32 : i32 to vector<8x64xi32>
    %250 = arith.addi %249, %248 : vector<8x64xi32>
    %c0_i32_184 = arith.constant 0 : i32
    %251 = vector.broadcast %c0_i32_184 : i32 to vector<8x64xi32>
    %252 = arith.addi %250, %251 : vector<8x64xi32>
    %253 = arith.cmpf ogt, %246, %244 : vector<8x64xf32>
    %254 = arith.select %253, %246, %244 : vector<8x64xi1>, vector<8x64xf32>
    %255 = arith.select %253, %252, %245 : vector<8x64xi1>, vector<8x64xi32>
    %c127_185 = arith.constant 127 : index
    %c0_186 = arith.constant 0 : index
    %256 = tpu.strided_load %arg10[%c127_185, %c0_186] {strides = array<i32: 2, 1>} : memref<288x64xf32, #tpu.memory_space<vmem>>, vector<8x64xf32>
    %c2_i32_187 = arith.constant 2 : i32
    %257 = vector.broadcast %c2_i32_187 : i32 to vector<8x64xi32>
    %258 = arith.muli %257, %104 : vector<8x64xi32>
    %c112_i32_188 = arith.constant 112 : i32
    %259 = vector.broadcast %c112_i32_188 : i32 to vector<8x64xi32>
    %260 = arith.addi %259, %258 : vector<8x64xi32>
    %c1_i32_189 = arith.constant 1 : i32
    %261 = vector.broadcast %c1_i32_189 : i32 to vector<8x64xi32>
    %262 = arith.addi %260, %261 : vector<8x64xi32>
    %263 = arith.cmpf ogt, %256, %254 : vector<8x64xf32>
    %264 = arith.select %263, %256, %254 : vector<8x64xi1>, vector<8x64xf32>
    %265 = arith.select %263, %262, %255 : vector<8x64xi1>, vector<8x64xi32>
    %266 = arith.truncf %264 : vector<8x64xf32> to vector<8x64xbf16>
    %c0_190 = arith.constant 0 : index
    %c3 = arith.constant 3 : index
    %c0_191 = arith.constant 0 : index
    %c0_192 = arith.constant 0 : index
    %267 = vector.load %arg6[%c0_190, %c3, %c0_191, %c0_192] : memref<1x8x8x64xbf16, #tpu.memory_space<vmem>>, vector<1x1x8x64xbf16>
    %268 = vector.shape_cast %267 : vector<1x1x8x64xbf16> to vector<8x64xbf16>
    %269 = vector.shape_cast %266 : vector<8x64xbf16> to vector<1x1x8x64xbf16>
    tpu.vector_store %arg6[%c0_190, %c3, %c0_191, %c0_192], %269 {strides = array<i32>} : memref<1x8x8x64xbf16, #tpu.memory_space<vmem>>, vector<1x1x8x64xbf16>,
    %c0_193 = arith.constant 0 : index
    %c3_194 = arith.constant 3 : index
    %c0_195 = arith.constant 0 : index
    %c0_196 = arith.constant 0 : index
    %270 = vector.load %arg7[%c0_193, %c3_194, %c0_195, %c0_196] : memref<1x8x8x64xi32, #tpu.memory_space<vmem>>, vector<1x1x8x64xi32>
    %271 = vector.shape_cast %270 : vector<1x1x8x64xi32> to vector<8x64xi32>
    %272 = vector.shape_cast %265 : vector<8x64xi32> to vector<1x1x8x64xi32>
    tpu.vector_store %arg7[%c0_193, %c3_194, %c0_195, %c0_196], %272 {strides = array<i32>} : memref<1x8x8x64xi32, #tpu.memory_space<vmem>>, vector<1x1x8x64xi32>,
    %c144 = arith.constant 144 : index
    %c0_197 = arith.constant 0 : index
    %273 = tpu.strided_load %arg10[%c144, %c0_197] {strides = array<i32: 2, 1>} : memref<288x64xf32, #tpu.memory_space<vmem>>, vector<8x64xf32>
    %c2_i32_198 = arith.constant 2 : i32
    %274 = vector.broadcast %c2_i32_198 : i32 to vector<8x64xi32>
    %275 = arith.muli %274, %104 : vector<8x64xi32>
    %c128_i32 = arith.constant 128 : i32
    %276 = vector.broadcast %c128_i32 : i32 to vector<8x64xi32>
    %277 = arith.addi %276, %275 : vector<8x64xi32>
    %c145_199 = arith.constant 145 : index
    %c0_200 = arith.constant 0 : index
    %278 = tpu.strided_load %arg10[%c145_199, %c0_200] {strides = array<i32: 2, 1>} : memref<288x64xf32, #tpu.memory_space<vmem>>, vector<8x64xf32>
    %c2_i32_201 = arith.constant 2 : i32
    %279 = vector.broadcast %c2_i32_201 : i32 to vector<8x64xi32>
    %280 = arith.muli %279, %104 : vector<8x64xi32>
    %c128_i32_202 = arith.constant 128 : i32
    %281 = vector.broadcast %c128_i32_202 : i32 to vector<8x64xi32>
    %282 = arith.addi %281, %280 : vector<8x64xi32>
    %c1_i32_203 = arith.constant 1 : i32
    %283 = vector.broadcast %c1_i32_203 : i32 to vector<8x64xi32>
    %284 = arith.addi %282, %283 : vector<8x64xi32>
    %285 = arith.cmpf ogt, %278, %273 : vector<8x64xf32>
    %286 = arith.select %285, %278, %273 : vector<8x64xi1>, vector<8x64xf32>
    %287 = arith.select %285, %284, %277 : vector<8x64xi1>, vector<8x64xi32>
    %c162 = arith.constant 162 : index
    %c0_204 = arith.constant 0 : index
    %288 = tpu.strided_load %arg10[%c162, %c0_204] {strides = array<i32: 2, 1>} : memref<288x64xf32, #tpu.memory_space<vmem>>, vector<8x64xf32>
    %c2_i32_205 = arith.constant 2 : i32
    %289 = vector.broadcast %c2_i32_205 : i32 to vector<8x64xi32>
    %290 = arith.muli %289, %104 : vector<8x64xi32>
    %c144_i32 = arith.constant 144 : i32
    %291 = vector.broadcast %c144_i32 : i32 to vector<8x64xi32>
    %292 = arith.addi %291, %290 : vector<8x64xi32>
    %c0_i32_206 = arith.constant 0 : i32
    %293 = vector.broadcast %c0_i32_206 : i32 to vector<8x64xi32>
    %294 = arith.addi %292, %293 : vector<8x64xi32>
    %295 = arith.cmpf ogt, %288, %286 : vector<8x64xf32>
    %296 = arith.select %295, %288, %286 : vector<8x64xi1>, vector<8x64xf32>
    %297 = arith.select %295, %294, %287 : vector<8x64xi1>, vector<8x64xi32>
    %c163_207 = arith.constant 163 : index
    %c0_208 = arith.constant 0 : index
    %298 = tpu.strided_load %arg10[%c163_207, %c0_208] {strides = array<i32: 2, 1>} : memref<288x64xf32, #tpu.memory_space<vmem>>, vector<8x64xf32>
    %c2_i32_209 = arith.constant 2 : i32
    %299 = vector.broadcast %c2_i32_209 : i32 to vector<8x64xi32>
    %300 = arith.muli %299, %104 : vector<8x64xi32>
    %c144_i32_210 = arith.constant 144 : i32
    %301 = vector.broadcast %c144_i32_210 : i32 to vector<8x64xi32>
    %302 = arith.addi %301, %300 : vector<8x64xi32>
    %c1_i32_211 = arith.constant 1 : i32
    %303 = vector.broadcast %c1_i32_211 : i32 to vector<8x64xi32>
    %304 = arith.addi %302, %303 : vector<8x64xi32>
    %305 = arith.cmpf ogt, %298, %296 : vector<8x64xf32>
    %306 = arith.select %305, %298, %296 : vector<8x64xi1>, vector<8x64xf32>
    %307 = arith.select %305, %304, %297 : vector<8x64xi1>, vector<8x64xi32>
    %308 = arith.truncf %306 : vector<8x64xf32> to vector<8x64xbf16>
    %c0_212 = arith.constant 0 : index
    %c4 = arith.constant 4 : index
    %c0_213 = arith.constant 0 : index
    %c0_214 = arith.constant 0 : index
    %309 = vector.load %arg6[%c0_212, %c4, %c0_213, %c0_214] : memref<1x8x8x64xbf16, #tpu.memory_space<vmem>>, vector<1x1x8x64xbf16>
    %310 = vector.shape_cast %309 : vector<1x1x8x64xbf16> to vector<8x64xbf16>
    %311 = vector.shape_cast %308 : vector<8x64xbf16> to vector<1x1x8x64xbf16>
    tpu.vector_store %arg6[%c0_212, %c4, %c0_213, %c0_214], %311 {strides = array<i32>} : memref<1x8x8x64xbf16, #tpu.memory_space<vmem>>, vector<1x1x8x64xbf16>,
    %c0_215 = arith.constant 0 : index
    %c4_216 = arith.constant 4 : index
    %c0_217 = arith.constant 0 : index
    %c0_218 = arith.constant 0 : index
    %312 = vector.load %arg7[%c0_215, %c4_216, %c0_217, %c0_218] : memref<1x8x8x64xi32, #tpu.memory_space<vmem>>, vector<1x1x8x64xi32>
    %313 = vector.shape_cast %312 : vector<1x1x8x64xi32> to vector<8x64xi32>
    %314 = vector.shape_cast %307 : vector<8x64xi32> to vector<1x1x8x64xi32>
    tpu.vector_store %arg7[%c0_215, %c4_216, %c0_217, %c0_218], %314 {strides = array<i32>} : memref<1x8x8x64xi32, #tpu.memory_space<vmem>>, vector<1x1x8x64xi32>,
    %c180 = arith.constant 180 : index
    %c0_219 = arith.constant 0 : index
    %315 = tpu.strided_load %arg10[%c180, %c0_219] {strides = array<i32: 2, 1>} : memref<288x64xf32, #tpu.memory_space<vmem>>, vector<8x64xf32>
    %c2_i32_220 = arith.constant 2 : i32
    %316 = vector.broadcast %c2_i32_220 : i32 to vector<8x64xi32>
    %317 = arith.muli %316, %104 : vector<8x64xi32>
    %c160_i32 = arith.constant 160 : i32
    %318 = vector.broadcast %c160_i32 : i32 to vector<8x64xi32>
    %319 = arith.addi %318, %317 : vector<8x64xi32>
    %c181_221 = arith.constant 181 : index
    %c0_222 = arith.constant 0 : index
    %320 = tpu.strided_load %arg10[%c181_221, %c0_222] {strides = array<i32: 2, 1>} : memref<288x64xf32, #tpu.memory_space<vmem>>, vector<8x64xf32>
    %c2_i32_223 = arith.constant 2 : i32
    %321 = vector.broadcast %c2_i32_223 : i32 to vector<8x64xi32>
    %322 = arith.muli %321, %104 : vector<8x64xi32>
    %c160_i32_224 = arith.constant 160 : i32
    %323 = vector.broadcast %c160_i32_224 : i32 to vector<8x64xi32>
    %324 = arith.addi %323, %322 : vector<8x64xi32>
    %c1_i32_225 = arith.constant 1 : i32
    %325 = vector.broadcast %c1_i32_225 : i32 to vector<8x64xi32>
    %326 = arith.addi %324, %325 : vector<8x64xi32>
    %327 = arith.cmpf ogt, %320, %315 : vector<8x64xf32>
    %328 = arith.select %327, %320, %315 : vector<8x64xi1>, vector<8x64xf32>
    %329 = arith.select %327, %326, %319 : vector<8x64xi1>, vector<8x64xi32>
    %c198 = arith.constant 198 : index
    %c0_226 = arith.constant 0 : index
    %330 = tpu.strided_load %arg10[%c198, %c0_226] {strides = array<i32: 2, 1>} : memref<288x64xf32, #tpu.memory_space<vmem>>, vector<8x64xf32>
    %c2_i32_227 = arith.constant 2 : i32
    %331 = vector.broadcast %c2_i32_227 : i32 to vector<8x64xi32>
    %332 = arith.muli %331, %104 : vector<8x64xi32>
    %c176_i32 = arith.constant 176 : i32
    %333 = vector.broadcast %c176_i32 : i32 to vector<8x64xi32>
    %334 = arith.addi %333, %332 : vector<8x64xi32>
    %c0_i32_228 = arith.constant 0 : i32
    %335 = vector.broadcast %c0_i32_228 : i32 to vector<8x64xi32>
    %336 = arith.addi %334, %335 : vector<8x64xi32>
    %337 = arith.cmpf ogt, %330, %328 : vector<8x64xf32>
    %338 = arith.select %337, %330, %328 : vector<8x64xi1>, vector<8x64xf32>
    %339 = arith.select %337, %336, %329 : vector<8x64xi1>, vector<8x64xi32>
    %c199_229 = arith.constant 199 : index
    %c0_230 = arith.constant 0 : index
    %340 = tpu.strided_load %arg10[%c199_229, %c0_230] {strides = array<i32: 2, 1>} : memref<288x64xf32, #tpu.memory_space<vmem>>, vector<8x64xf32>
    %c2_i32_231 = arith.constant 2 : i32
    %341 = vector.broadcast %c2_i32_231 : i32 to vector<8x64xi32>
    %342 = arith.muli %341, %104 : vector<8x64xi32>
    %c176_i32_232 = arith.constant 176 : i32
    %343 = vector.broadcast %c176_i32_232 : i32 to vector<8x64xi32>
    %344 = arith.addi %343, %342 : vector<8x64xi32>
    %c1_i32_233 = arith.constant 1 : i32
    %345 = vector.broadcast %c1_i32_233 : i32 to vector<8x64xi32>
    %346 = arith.addi %344, %345 : vector<8x64xi32>
    %347 = arith.cmpf ogt, %340, %338 : vector<8x64xf32>
    %348 = arith.select %347, %340, %338 : vector<8x64xi1>, vector<8x64xf32>
    %349 = arith.select %347, %346, %339 : vector<8x64xi1>, vector<8x64xi32>
    %350 = arith.truncf %348 : vector<8x64xf32> to vector<8x64xbf16>
    %c0_234 = arith.constant 0 : index
    %c5 = arith.constant 5 : index
    %c0_235 = arith.constant 0 : index
    %c0_236 = arith.constant 0 : index
    %351 = vector.load %arg6[%c0_234, %c5, %c0_235, %c0_236] : memref<1x8x8x64xbf16, #tpu.memory_space<vmem>>, vector<1x1x8x64xbf16>
    %352 = vector.shape_cast %351 : vector<1x1x8x64xbf16> to vector<8x64xbf16>
    %353 = vector.shape_cast %350 : vector<8x64xbf16> to vector<1x1x8x64xbf16>
    tpu.vector_store %arg6[%c0_234, %c5, %c0_235, %c0_236], %353 {strides = array<i32>} : memref<1x8x8x64xbf16, #tpu.memory_space<vmem>>, vector<1x1x8x64xbf16>,
    %c0_237 = arith.constant 0 : index
    %c5_238 = arith.constant 5 : index
    %c0_239 = arith.constant 0 : index
    %c0_240 = arith.constant 0 : index
    %354 = vector.load %arg7[%c0_237, %c5_238, %c0_239, %c0_240] : memref<1x8x8x64xi32, #tpu.memory_space<vmem>>, vector<1x1x8x64xi32>
    %355 = vector.shape_cast %354 : vector<1x1x8x64xi32> to vector<8x64xi32>
    %356 = vector.shape_cast %349 : vector<8x64xi32> to vector<1x1x8x64xi32>
    tpu.vector_store %arg7[%c0_237, %c5_238, %c0_239, %c0_240], %356 {strides = array<i32>} : memref<1x8x8x64xi32, #tpu.memory_space<vmem>>, vector<1x1x8x64xi32>,
    %c216 = arith.constant 216 : index
    %c0_241 = arith.constant 0 : index
    %357 = tpu.strided_load %arg10[%c216, %c0_241] {strides = array<i32: 2, 1>} : memref<288x64xf32, #tpu.memory_space<vmem>>, vector<8x64xf32>
    %c2_i32_242 = arith.constant 2 : i32
    %358 = vector.broadcast %c2_i32_242 : i32 to vector<8x64xi32>
    %359 = arith.muli %358, %104 : vector<8x64xi32>
    %c192_i32 = arith.constant 192 : i32
    %360 = vector.broadcast %c192_i32 : i32 to vector<8x64xi32>
    %361 = arith.addi %360, %359 : vector<8x64xi32>
    %c217_243 = arith.constant 217 : index
    %c0_244 = arith.constant 0 : index
    %362 = tpu.strided_load %arg10[%c217_243, %c0_244] {strides = array<i32: 2, 1>} : memref<288x64xf32, #tpu.memory_space<vmem>>, vector<8x64xf32>
    %c2_i32_245 = arith.constant 2 : i32
    %363 = vector.broadcast %c2_i32_245 : i32 to vector<8x64xi32>
    %364 = arith.muli %363, %104 : vector<8x64xi32>
    %c192_i32_246 = arith.constant 192 : i32
    %365 = vector.broadcast %c192_i32_246 : i32 to vector<8x64xi32>
    %366 = arith.addi %365, %364 : vector<8x64xi32>
    %c1_i32_247 = arith.constant 1 : i32
    %367 = vector.broadcast %c1_i32_247 : i32 to vector<8x64xi32>
    %368 = arith.addi %366, %367 : vector<8x64xi32>
    %369 = arith.cmpf ogt, %362, %357 : vector<8x64xf32>
    %370 = arith.select %369, %362, %357 : vector<8x64xi1>, vector<8x64xf32>
    %371 = arith.select %369, %368, %361 : vector<8x64xi1>, vector<8x64xi32>
    %c234 = arith.constant 234 : index
    %c0_248 = arith.constant 0 : index
    %372 = tpu.strided_load %arg10[%c234, %c0_248] {strides = array<i32: 2, 1>} : memref<288x64xf32, #tpu.memory_space<vmem>>, vector<8x64xf32>
    %c2_i32_249 = arith.constant 2 : i32
    %373 = vector.broadcast %c2_i32_249 : i32 to vector<8x64xi32>
    %374 = arith.muli %373, %104 : vector<8x64xi32>
    %c208_i32 = arith.constant 208 : i32
    %375 = vector.broadcast %c208_i32 : i32 to vector<8x64xi32>
    %376 = arith.addi %375, %374 : vector<8x64xi32>
    %c0_i32_250 = arith.constant 0 : i32
    %377 = vector.broadcast %c0_i32_250 : i32 to vector<8x64xi32>
    %378 = arith.addi %376, %377 : vector<8x64xi32>
    %379 = arith.cmpf ogt, %372, %370 : vector<8x64xf32>
    %380 = arith.select %379, %372, %370 : vector<8x64xi1>, vector<8x64xf32>
    %381 = arith.select %379, %378, %371 : vector<8x64xi1>, vector<8x64xi32>
    %c235_251 = arith.constant 235 : index
    %c0_252 = arith.constant 0 : index
    %382 = tpu.strided_load %arg10[%c235_251, %c0_252] {strides = array<i32: 2, 1>} : memref<288x64xf32, #tpu.memory_space<vmem>>, vector<8x64xf32>
    %c2_i32_253 = arith.constant 2 : i32
    %383 = vector.broadcast %c2_i32_253 : i32 to vector<8x64xi32>
    %384 = arith.muli %383, %104 : vector<8x64xi32>
    %c208_i32_254 = arith.constant 208 : i32
    %385 = vector.broadcast %c208_i32_254 : i32 to vector<8x64xi32>
    %386 = arith.addi %385, %384 : vector<8x64xi32>
    %c1_i32_255 = arith.constant 1 : i32
    %387 = vector.broadcast %c1_i32_255 : i32 to vector<8x64xi32>
    %388 = arith.addi %386, %387 : vector<8x64xi32>
    %389 = arith.cmpf ogt, %382, %380 : vector<8x64xf32>
    %390 = arith.select %389, %382, %380 : vector<8x64xi1>, vector<8x64xf32>
    %391 = arith.select %389, %388, %381 : vector<8x64xi1>, vector<8x64xi32>
    %392 = arith.truncf %390 : vector<8x64xf32> to vector<8x64xbf16>
    %c0_256 = arith.constant 0 : index
    %c6 = arith.constant 6 : index
    %c0_257 = arith.constant 0 : index
    %c0_258 = arith.constant 0 : index
    %393 = vector.load %arg6[%c0_256, %c6, %c0_257, %c0_258] : memref<1x8x8x64xbf16, #tpu.memory_space<vmem>>, vector<1x1x8x64xbf16>
    %394 = vector.shape_cast %393 : vector<1x1x8x64xbf16> to vector<8x64xbf16>
    %395 = vector.shape_cast %392 : vector<8x64xbf16> to vector<1x1x8x64xbf16>
    tpu.vector_store %arg6[%c0_256, %c6, %c0_257, %c0_258], %395 {strides = array<i32>} : memref<1x8x8x64xbf16, #tpu.memory_space<vmem>>, vector<1x1x8x64xbf16>,
    %c0_259 = arith.constant 0 : index
    %c6_260 = arith.constant 6 : index
    %c0_261 = arith.constant 0 : index
    %c0_262 = arith.constant 0 : index
    %396 = vector.load %arg7[%c0_259, %c6_260, %c0_261, %c0_262] : memref<1x8x8x64xi32, #tpu.memory_space<vmem>>, vector<1x1x8x64xi32>
    %397 = vector.shape_cast %396 : vector<1x1x8x64xi32> to vector<8x64xi32>
    %398 = vector.shape_cast %391 : vector<8x64xi32> to vector<1x1x8x64xi32>
    tpu.vector_store %arg7[%c0_259, %c6_260, %c0_261, %c0_262], %398 {strides = array<i32>} : memref<1x8x8x64xi32, #tpu.memory_space<vmem>>, vector<1x1x8x64xi32>,
    %c252 = arith.constant 252 : index
    %c0_263 = arith.constant 0 : index
    %399 = tpu.strided_load %arg10[%c252, %c0_263] {strides = array<i32: 2, 1>} : memref<288x64xf32, #tpu.memory_space<vmem>>, vector<8x64xf32>
    %c2_i32_264 = arith.constant 2 : i32
    %400 = vector.broadcast %c2_i32_264 : i32 to vector<8x64xi32>
    %401 = arith.muli %400, %104 : vector<8x64xi32>
    %c224_i32 = arith.constant 224 : i32
    %402 = vector.broadcast %c224_i32 : i32 to vector<8x64xi32>
    %403 = arith.addi %402, %401 : vector<8x64xi32>
    %c253_265 = arith.constant 253 : index
    %c0_266 = arith.constant 0 : index
    %404 = tpu.strided_load %arg10[%c253_265, %c0_266] {strides = array<i32: 2, 1>} : memref<288x64xf32, #tpu.memory_space<vmem>>, vector<8x64xf32>
    %c2_i32_267 = arith.constant 2 : i32
    %405 = vector.broadcast %c2_i32_267 : i32 to vector<8x64xi32>
    %406 = arith.muli %405, %104 : vector<8x64xi32>
    %c224_i32_268 = arith.constant 224 : i32
    %407 = vector.broadcast %c224_i32_268 : i32 to vector<8x64xi32>
    %408 = arith.addi %407, %406 : vector<8x64xi32>
    %c1_i32_269 = arith.constant 1 : i32
    %409 = vector.broadcast %c1_i32_269 : i32 to vector<8x64xi32>
    %410 = arith.addi %408, %409 : vector<8x64xi32>
    %411 = arith.cmpf ogt, %404, %399 : vector<8x64xf32>
    %412 = arith.select %411, %404, %399 : vector<8x64xi1>, vector<8x64xf32>
    %413 = arith.select %411, %410, %403 : vector<8x64xi1>, vector<8x64xi32>
    %c270 = arith.constant 270 : index
    %c0_270 = arith.constant 0 : index
    %414 = tpu.strided_load %arg10[%c270, %c0_270] {strides = array<i32: 2, 1>} : memref<288x64xf32, #tpu.memory_space<vmem>>, vector<8x64xf32>
    %c2_i32_271 = arith.constant 2 : i32
    %415 = vector.broadcast %c2_i32_271 : i32 to vector<8x64xi32>
    %416 = arith.muli %415, %104 : vector<8x64xi32>
    %c240_i32 = arith.constant 240 : i32
    %417 = vector.broadcast %c240_i32 : i32 to vector<8x64xi32>
    %418 = arith.addi %417, %416 : vector<8x64xi32>
    %c0_i32_272 = arith.constant 0 : i32
    %419 = vector.broadcast %c0_i32_272 : i32 to vector<8x64xi32>
    %420 = arith.addi %418, %419 : vector<8x64xi32>
    %421 = arith.cmpf ogt, %414, %412 : vector<8x64xf32>
    %422 = arith.select %421, %414, %412 : vector<8x64xi1>, vector<8x64xf32>
    %423 = arith.select %421, %420, %413 : vector<8x64xi1>, vector<8x64xi32>
    %c271_273 = arith.constant 271 : index
    %c0_274 = arith.constant 0 : index
    %424 = tpu.strided_load %arg10[%c271_273, %c0_274] {strides = array<i32: 2, 1>} : memref<288x64xf32, #tpu.memory_space<vmem>>, vector<8x64xf32>
    %c2_i32_275 = arith.constant 2 : i32
    %425 = vector.broadcast %c2_i32_275 : i32 to vector<8x64xi32>
    %426 = arith.muli %425, %104 : vector<8x64xi32>
    %c240_i32_276 = arith.constant 240 : i32
    %427 = vector.broadcast %c240_i32_276 : i32 to vector<8x64xi32>
    %428 = arith.addi %427, %426 : vector<8x64xi32>
    %c1_i32_277 = arith.constant 1 : i32
    %429 = vector.broadcast %c1_i32_277 : i32 to vector<8x64xi32>
    %430 = arith.addi %428, %429 : vector<8x64xi32>
    %431 = arith.cmpf ogt, %424, %422 : vector<8x64xf32>
    %432 = arith.select %431, %424, %422 : vector<8x64xi1>, vector<8x64xf32>
    %433 = arith.select %431, %430, %423 : vector<8x64xi1>, vector<8x64xi32>
    %434 = arith.truncf %432 : vector<8x64xf32> to vector<8x64xbf16>
    %c0_278 = arith.constant 0 : index
    %c7 = arith.constant 7 : index
    %c0_279 = arith.constant 0 : index
    %c0_280 = arith.constant 0 : index
    %435 = vector.load %arg6[%c0_278, %c7, %c0_279, %c0_280] : memref<1x8x8x64xbf16, #tpu.memory_space<vmem>>, vector<1x1x8x64xbf16>
    %436 = vector.shape_cast %435 : vector<1x1x8x64xbf16> to vector<8x64xbf16>
    %437 = vector.shape_cast %434 : vector<8x64xbf16> to vector<1x1x8x64xbf16>
    tpu.vector_store %arg6[%c0_278, %c7, %c0_279, %c0_280], %437 {strides = array<i32>} : memref<1x8x8x64xbf16, #tpu.memory_space<vmem>>, vector<1x1x8x64xbf16>,
    %c0_281 = arith.constant 0 : index
    %c7_282 = arith.constant 7 : index
    %c0_283 = arith.constant 0 : index
    %c0_284 = arith.constant 0 : index
    %438 = vector.load %arg7[%c0_281, %c7_282, %c0_283, %c0_284] : memref<1x8x8x64xi32, #tpu.memory_space<vmem>>, vector<1x1x8x64xi32>
    %439 = vector.shape_cast %438 : vector<1x1x8x64xi32> to vector<8x64xi32>
    %440 = vector.shape_cast %433 : vector<8x64xi32> to vector<1x1x8x64xi32>
    tpu.vector_store %arg7[%c0_281, %c7_282, %c0_283, %c0_284], %440 {strides = array<i32>} : memref<1x8x8x64xi32, #tpu.memory_space<vmem>>, vector<1x1x8x64xi32>,
    return
  }
  func.func @transform_0(%arg0: i32) -> (i32, i32, i32) {
    %c0_i32 = arith.constant 0 : i32
    %c0_i32_0 = arith.constant 0 : i32
    %c0_i32_1 = arith.constant 0 : i32
    return %arg0, %c0_i32, %c0_i32_0 : i32, i32, i32
  }
  func.func @transform_1(%arg0: i32) -> (i32, i32) {
    %c0_i32 = arith.constant 0 : i32
    %c0_i32_0 = arith.constant 0 : i32
    %c0_i32_1 = arith.constant 0 : i32
    return %c0_i32, %c0_i32_0 : i32, i32
  }
  func.func @transform_2(%arg0: i32) -> (i32, i32) {
    %c0_i32 = arith.constant 0 : i32
    %c0_i32_0 = arith.constant 0 : i32
    %c0_i32_1 = arith.constant 0 : i32
    return %c0_i32, %c0_i32_0 : i32, i32
  }
  func.func @transform_3(%arg0: i32) -> (i32, i32) {
    %c0_i32 = arith.constant 0 : i32
    %c0_i32_0 = arith.constant 0 : i32
    %c0_i32_1 = arith.constant 0 : i32
    return %c0_i32, %c0_i32_0 : i32, i32
  }
  func.func @transform_4(%arg0: i32) -> (i32, i32) {
    %c0_i32 = arith.constant 0 : i32
    %c0_i32_0 = arith.constant 0 : i32
    %c0_i32_1 = arith.constant 0 : i32
    return %c0_i32, %c0_i32_0 : i32, i32
  }
  func.func @transform_5(%arg0: i32) -> (i32, i32, i32, i32) {
    %c0_i32 = arith.constant 0 : i32
    %c0_i32_0 = arith.constant 0 : i32
    %c0_i32_1 = arith.constant 0 : i32
    %c0_i32_2 = arith.constant 0 : i32
    return %arg0, %c0_i32, %c0_i32_0, %c0_i32_1 : i32, i32, i32, i32
  }
  func.func @transform_6(%arg0: i32) -> (i32, i32, i32, i32) {
    %c0_i32 = arith.constant 0 : i32
    %c0_i32_0 = arith.constant 0 : i32
    %c0_i32_1 = arith.constant 0 : i32
    %c0_i32_2 = arith.constant 0 : i32
    return %arg0, %c0_i32, %c0_i32_0, %c0_i32_1 : i32, i32, i32, i32
  }
}

</mosaic_0001>

<llo_original>
// kernel: tpu_custom_call.1
$region0: #{tpu_custom_call.1}
  #allocation0 [shape = 'u32[]', space=smem, size = 0x4, offset = 0x4, fixed_abs, tag = 'smem constant byte address 0x4 - core index']
  #allocation1 [shape = 'u32[144,128]{1,0:T(1,128)}', space=vmem, size = 0x12000, scoped, tag = 'internal scratch']
  #allocation2 [shape = 'bf16[360,64]{1,0:T(8,128)(2,1)}', space=vmem, size = 0x16800, scoped, tag = 'scratch operand']
  #allocation3 [shape = 'bf16[288,576]{1,0:T(16,128)(2,1)}', space=vmem, size = 0x5a000, scoped, tag = 'scratch operand']
  #allocation4 [shape = 'f32[288,64]{1,0:T(8,128)}', space=vmem, size = 0x24000, scoped, tag = 'scratch operand']
  %s0 = inlined_call_operand.vmem [shape: bf16[2,360,64], index: 0, kind: input, shape index: {}]
  %s1 = inlined_call_operand.vmem [shape: bf16[576,64], index: 1, kind: input, shape index: {}]
  %s2 = inlined_call_operand.vmem [shape: bf16[576,64], index: 2, kind: input, shape index: {}]
  %s3 = inlined_call_operand.vmem [shape: f32[2,64], index: 3, kind: input, shape index: {}]
  %s4 = inlined_call_operand.vmem [shape: f32[2,64], index: 4, kind: input, shape index: {}]
  %s5 = inlined_call_operand.hbm [shape: bf16[2,8,8,64], index: 5, kind: output, shape index: {0}]
  %s6 = inlined_call_operand.hbm [shape: s32[2,8,8,64], index: 6, kind: output, shape index: {1}]
  %7 = xla_tuple %s5, %s6
  %s8 = sld [smem:[#allocation0]]
  $region65: #{tpu_custom_call.1} parent=0
    _
  %s10 = ssub.s32 1, %s8
  %s11 = scalar_select 0, %s10, %s8
  $region1: #{tpu_custom_call.1} parent=0
    #allocation5 [shape = 'u8[32768]{0}', space=vmem, size = 0x8000, scoped, tag = 'output window, operand 0']
    #allocation6 [shape = 's32[2]{0}', space=sflag, size = 0x8, scoped, tag = 'scoped memory for tpu_custom_call.1']
    #allocation7 [shape = 'u8[65536]{0}', space=vmem, size = 0x10000, scoped, tag = 'output window, operand 1']
    #allocation8 [shape = 's32[2]{0}', space=sflag, size = 0x8, scoped, tag = 'scoped memory for tpu_custom_call.1']
    %12 = vsyncpa [#allocation6], 0
    %s13 = scalar_lea.sflag [#allocation6], 1
    %14 = vsyncpa %s13, 0
    %15 = vsyncpa [#allocation8], 0
    %s16 = scalar_lea.sflag [#allocation8], 1
    %17 = vsyncpa %s16, 0
    loop: start=0, step=1, limit=4
    $region2: #{tpu_custom_call.1} parent=1 // loop_pre_header
      _
    $region3: #{tpu_custom_call.1} parent=1 // loop_header
      %s19 = sphi 0, %s23
      %p20 = scmp.ge.s32.totalorder %s19, 4
      %s29 = sphi 0, %s31
      %s32 = sphi 0, %s29
      %s33 = sphi 0, %s32
      %s49 = sphi 0, %s33
      %s53 = sphi 0, %s53
      %s55 = sphi 0, %s53
      %s56 = sphi 0, %s55
      %s70 = sphi 0, %s56
      %s74 = sphi 0, %s74
      %s76 = sphi 0, %s74
      %s77 = sphi 0, %s76
      %s91 = sphi 0, %s77
      %s95 = sphi 0, %s95
      %s97 = sphi 0, %s95
      %s98 = sphi 0, %s97
      %s112 = sphi 0, %s98
      %s116 = sphi 0, %s116
      %s118 = sphi 0, %s116
      %s119 = sphi 0, %s118
      %s133 = sphi 0, %s119
      %s139 = sphi 0, %s141
      %s142 = sphi 0, %s139
      %s143 = sphi 0, %s142
      %s159 = sphi 0, %s143
      %s165 = sphi 0, %s167
      %s168 = sphi 0, %s165
      %s169 = sphi 0, %s168
      %s185 = sphi 0, %s169
    $region4: #{tpu_custom_call.1} parent=1 // loop_header_branch
      %22 = sbr.rel (%p20) target = $region8
    $region5: #{tpu_custom_call.1} parent=1 // loop_body
      %s24 = ssub.s32 %s19, 1
      %s25 = ssub.s32 %s19, 2
      %s26 = sadd.s32 %s19, 1
      %s27 = ssub.s32 %s19, %s26
      %p28 = scmp.eq.s32.totalorder %s27, 0
      %s30 = sadd.s32 %s29, 1
      %s31 = scalar_select %p28, %s29, %s30
      %p34 = pneg %p28
      %p35 = scmp.eq.s32.totalorder %s19, 1
      %p36 = por %p34, %p35
      %p37 = scmp.ne.s32.totalorder %s29, %s32
      %p38 = scmp.eq.s32.totalorder %s19, 0
      %p39 = por %p37, %p38
      %p40 = scmp.ne.s32.totalorder %s29, %s32
      %p41 = scmp.eq.s32.totalorder %s24, 1
      %p42 = por %p40, %p41
      %p43 = scmp.ne.s32.totalorder %s32, %s33
      %p44 = scmp.eq.s32.totalorder %s24, 0
      %p45 = por %p43, %p44
      %p46 = scmp.ne.s32.totalorder %s32, %s33
      %p47 = scmp.eq.s32.totalorder %s25, 1
      %p48 = por %p46, %p47
      %p50 = scmp.ne.s32.totalorder %s33, %s49
      %p51 = scmp.eq.s32.totalorder %s25, 0
      %p52 = por %p50, %p51
      %s54 = sadd.s32 %s53, 1
      %p57 = scmp.eq.s32.totalorder %s19, 1
      %p58 = scmp.ne.s32.totalorder %s53, %s55
      %p59 = scmp.eq.s32.totalorder %s19, 0
      %p60 = por %p58, %p59
      %p61 = scmp.ne.s32.totalorder %s53, %s55
      %p62 = scmp.eq.s32.totalorder %s24, 1
      %p63 = por %p61, %p62
      %p64 = scmp.ne.s32.totalorder %s55, %s56
      %p65 = scmp.eq.s32.totalorder %s24, 0
      %p66 = por %p64, %p65
      %p67 = scmp.ne.s32.totalorder %s55, %s56
      %p68 = scmp.eq.s32.totalorder %s25, 1
      %p69 = por %p67, %p68
      %p71 = scmp.ne.s32.totalorder %s56, %s70
      %p72 = scmp.eq.s32.totalorder %s25, 0
      %p73 = por %p71, %p72
      %s75 = sadd.s32 %s74, 1
      %p78 = scmp.eq.s32.totalorder %s19, 1
      %p79 = scmp.ne.s32.totalorder %s74, %s76
      %p80 = scmp.eq.s32.totalorder %s19, 0
      %p81 = por %p79, %p80
      %p82 = scmp.ne.s32.totalorder %s74, %s76
      %p83 = scmp.eq.s32.totalorder %s24, 1
      %p84 = por %p82, %p83
      %p85 = scmp.ne.s32.totalorder %s76, %s77
      %p86 = scmp.eq.s32.totalorder %s24, 0
      %p87 = por %p85, %p86
      %p88 = scmp.ne.s32.totalorder %s76, %s77
      %p89 = scmp.eq.s32.totalorder %s25, 1
      %p90 = por %p88, %p89
      %p92 = scmp.ne.s32.totalorder %s77, %s91
      %p93 = scmp.eq.s32.totalorder %s25, 0
      %p94 = por %p92, %p93
      %s96 = sadd.s32 %s95, 1
      %p99 = scmp.eq.s32.totalorder %s19, 1
      %p100 = scmp.ne.s32.totalorder %s95, %s97
      %p101 = scmp.eq.s32.totalorder %s19, 0
      %p102 = por %p100, %p101
      %p103 = scmp.ne.s32.totalorder %s95, %s97
      %p104 = scmp.eq.s32.totalorder %s24, 1
      %p105 = por %p103, %p104
      %p106 = scmp.ne.s32.totalorder %s97, %s98
      %p107 = scmp.eq.s32.totalorder %s24, 0
      %p108 = por %p106, %p107
      %p109 = scmp.ne.s32.totalorder %s97, %s98
      %p110 = scmp.eq.s32.totalorder %s25, 1
      %p111 = por %p109, %p110
      %p113 = scmp.ne.s32.totalorder %s98, %s112
      %p114 = scmp.eq.s32.totalorder %s25, 0
      %p115 = por %p113, %p114
      %s117 = sadd.s32 %s116, 1
      %p120 = scmp.eq.s32.totalorder %s19, 1
      %p121 = scmp.ne.s32.totalorder %s116, %s118
      %p122 = scmp.eq.s32.totalorder %s19, 0
      %p123 = por %p121, %p122
      %p124 = scmp.ne.s32.totalorder %s116, %s118
      %p125 = scmp.eq.s32.totalorder %s24, 1
      %p126 = por %p124, %p125
      %p127 = scmp.ne.s32.totalorder %s118, %s119
      %p128 = scmp.eq.s32.totalorder %s24, 0
      %p129 = por %p127, %p128
      %p130 = scmp.ne.s32.totalorder %s118, %s119
      %p131 = scmp.eq.s32.totalorder %s25, 1
      %p132 = por %p130, %p131
      %p134 = scmp.ne.s32.totalorder %s119, %s133
      %p135 = scmp.eq.s32.totalorder %s25, 0
      %p136 = por %p134, %p135
      %s137 = ssub.s32 %s19, %s26
      %p138 = scmp.eq.s32.totalorder %s137, 0
      %s140 = sadd.s32 %s139, 1
      %s141 = scalar_select %p138, %s139, %s140
      %p144 = pneg %p138
      %p145 = scmp.eq.s32.totalorder %s19, 1
      %p146 = por %p144, %p145
      %p147 = scmp.ne.s32.totalorder %s139, %s142
      %p148 = scmp.eq.s32.totalorder %s19, 0
      %p149 = por %p147, %p148
      %p150 = scmp.ne.s32.totalorder %s139, %s142
      %p151 = scmp.eq.s32.totalorder %s24, 1
      %p152 = por %p150, %p151
      %p153 = scmp.ne.s32.totalorder %s142, %s143
      %p154 = scmp.eq.s32.totalorder %s24, 0
      %p155 = por %p153, %p154
      %p156 = scmp.ne.s32.totalorder %s142, %s143
      %p157 = scmp.eq.s32.totalorder %s25, 1
      %p158 = por %p156, %p157
      %p160 = scmp.ne.s32.totalorder %s143, %s159
      %p161 = scmp.eq.s32.totalorder %s25, 0
      %p162 = por %p160, %p161
      %s163 = ssub.s32 %s19, %s26
      %p164 = scmp.eq.s32.totalorder %s163, 0
      %s166 = sadd.s32 %s165, 1
      %s167 = scalar_select %p164, %s165, %s166
      %p170 = pneg %p164
      %p171 = scmp.eq.s32.totalorder %s19, 1
      %p172 = por %p170, %p171
      %p173 = scmp.ne.s32.totalorder %s165, %s168
      %p174 = scmp.eq.s32.totalorder %s19, 0
      %p175 = por %p173, %p174
      %p176 = scmp.ne.s32.totalorder %s165, %s168
      %p177 = scmp.eq.s32.totalorder %s24, 1
      %p178 = por %p176, %p177
      %p179 = scmp.ne.s32.totalorder %s168, %s169
      %p180 = scmp.eq.s32.totalorder %s24, 0
      %p181 = por %p179, %p180
      %p182 = scmp.ne.s32.totalorder %s168, %s169
      %p183 = scmp.eq.s32.totalorder %s25, 1
      %p184 = por %p182, %p183
      %p186 = scmp.ne.s32.totalorder %s169, %s185
      %p187 = scmp.eq.s32.totalorder %s25, 0
      %p188 = por %p186, %p187
      %p189 = scmp.le.s32.totalorder 1, %s19
      %p190 = scmp.lt.s32.totalorder %s19, 3
      %p191 = pnand %p189, %p190
      %p192 = pneg %p191
      // Predicated region
      $region9: #{tpu_custom_call.1} parent=5 // pred_check
        _
      $region10: #{tpu_custom_call.1} parent=5 // pred_check_branch
        %194 = sbr.rel (%p191) target = $region12
      $region11: #{tpu_custom_call.1} parent=5 // pred_region
        %s195 = ssub.s32 %s19, 1
        // Predicated region
        $region13: #{tpu_custom_call.1} parent=11 // pred_check
          %p196 = pneg %p66
        $region14: #{tpu_custom_call.1} parent=11 // pred_check_branch
          %198 = sbr.rel (%p196) target = $region16
        $region15: #{tpu_custom_call.1} parent=11 // pred_region
          _
        $region16: #{tpu_custom_call.1} parent=11 // pred_fallthru
          _
        // Predicated region
        $region17: #{tpu_custom_call.1} parent=11 // pred_check
          %p199 = pneg %p87
        $region18: #{tpu_custom_call.1} parent=11 // pred_check_branch
          %201 = sbr.rel (%p199) target = $region20
        $region19: #{tpu_custom_call.1} parent=11 // pred_region
          _
        $region20: #{tpu_custom_call.1} parent=11 // pred_fallthru
          _
        // Predicated region
        $region21: #{tpu_custom_call.1} parent=11 // pred_check
          %p202 = pneg %p108
        $region22: #{tpu_custom_call.1} parent=11 // pred_check_branch
          %204 = sbr.rel (%p202) target = $region24
        $region23: #{tpu_custom_call.1} parent=11 // pred_region
          _
        $region24: #{tpu_custom_call.1} parent=11 // pred_fallthru
          _
        // Predicated region
        $region25: #{tpu_custom_call.1} parent=11 // pred_check
          %p205 = pneg %p129
        $region26: #{tpu_custom_call.1} parent=11 // pred_check_branch
          %207 = sbr.rel (%p205) target = $region28
        $region27: #{tpu_custom_call.1} parent=11 // pred_region
          _
        $region28: #{tpu_custom_call.1} parent=11 // pred_fallthru
          _
      $region12: #{tpu_custom_call.1} parent=5 // pred_fallthru
        _
      %p208 = scmp.lt.s32.totalorder %s19, 2
      // Predicated region
      $region29: #{tpu_custom_call.1} parent=5 // pred_check
        %p209 = pneg %p208
      $region30: #{tpu_custom_call.1} parent=5 // pred_check_branch
        %211 = sbr.rel (%p209) target = $region32
      $region31: #{tpu_custom_call.1} parent=5 // pred_region
        // Predicated region
        $region33: #{tpu_custom_call.1} parent=31 // pred_check
          %p212 = pneg %p39
        $region34: #{tpu_custom_call.1} parent=31 // pred_check_branch
          %214 = sbr.rel (%p212) target = $region36
        $region35: #{tpu_custom_call.1} parent=31 // pred_region
          %p215 = scmp.lt.s32.totalorder %s19, 1
          %s216 = scalar_select %p215, %s19, 1
          %s217 = smul.addr %s216, 45
          %s218 = smul.addr %s217, 4
          %s219 = scalar_lea.vmem %s0, %s218
        $region36: #{tpu_custom_call.1} parent=31 // pred_fallthru
          _
      $region32: #{tpu_custom_call.1} parent=5 // pred_fallthru
        _
      %p220 = scmp.le.s32.totalorder 1, %s19
      %p221 = scmp.lt.s32.totalorder %s19, 3
      %p222 = pnand %p220, %p221
      %p223 = pneg %p222
      // Predicated region
      $region37: #{tpu_custom_call.1} parent=5 // pred_check
        _
      $region38: #{tpu_custom_call.1} parent=5 // pred_check_branch
        %225 = sbr.rel (%p222) target = $region40
      $region39: #{tpu_custom_call.1} parent=5 // pred_region
        %s226 = ssub.s32 %s19, 1
        %p227 = scmp.lt.s32.totalorder %s24, 1
        %s228 = scalar_select %p227, %s24, 1
        %s229 = smul.addr %s228, 45
        %s230 = smul.addr %s229, 4
        %s231 = scalar_lea.vmem %s0, %s230
        %p232 = pneg %p45
        %p233 = pneg %p42
        %p234 = pneg %p66
        %p235 = pneg %p63
        %p236 = pneg %p87
        %p237 = pneg %p84
        %p238 = pneg %p108
        %p239 = pneg %p105
        %p240 = pneg %p129
        %p241 = pneg %p126
        %p242 = pneg %p155
        %p243 = pneg %p152
        %s244 = sand.u32 %s142, 1
        %s245 = scalar_lea.sflag [#allocation6], %s244
        %s246 = sand.u32 %s142, 1
        %s247 = smul.addr %s246, 32
        %s248 = scalar_lea.vmem [#allocation5], %s247
        %p249 = pneg %p181
        %p250 = pneg %p178
        %s251 = sand.u32 %s168, 1
        %s252 = scalar_lea.sflag [#allocation8], %s251
        %s253 = sand.u32 %s168, 1
        %s254 = smul.addr %s253, 64
        %s255 = scalar_lea.vmem [#allocation7], %s254
        %p256 = scmp.lt.s32.totalorder %s24, 1
        %s257 = scalar_select %p256, %s24, 1
        %s258 = smul.addr %s257, 45
        %s259 = smul.addr %s258, 4
        %s260 = scalar_lea.vmem %s0, %s259
        %p262 = scmp.eq.s32.totalorder %s24, 0
        // Predicated region
        $region41: #{tpu_custom_call.1} parent=39 // pred_check
          %p263 = pneg %p262
        $region42: #{tpu_custom_call.1} parent=39 // pred_check_branch
          %265 = sbr.rel (%p263) target = $region44
        $region43: #{tpu_custom_call.1} parent=39 // pred_region
          %vm266 = vcmask 519168
          %267 = vst.msk [vmem:[#allocation2] sm:$0xf] %vm266, 0
          %268 = vst.msk [vmem:[#allocation2 + $0x4] sm:$0xf] %vm266, 0
          %269 = vst.msk [vmem:[#allocation2 + $0x8] sm:$0xf] %vm266, 0
          %270 = vst.msk [vmem:[#allocation2 + $0xc] sm:$0xf] %vm266, 0
          %271 = vst.msk [vmem:[#allocation2 + $0x10] sm:$0xf] %vm266, 0
          %272 = vst.msk [vmem:[#allocation2 + $0x14] sm:$0xf] %vm266, 0
          %273 = vst.msk [vmem:[#allocation2 + $0x18] sm:$0xf] %vm266, 0
          %274 = vst.msk [vmem:[#allocation2 + $0x1c] sm:$0xf] %vm266, 0
          %275 = vst.msk [vmem:[#allocation2 + $0x20] sm:$0xf] %vm266, 0
          %276 = vst.msk [vmem:[#allocation2 + $0x24] sm:$0xf] %vm266, 0
          %277 = vst.msk [vmem:[#allocation2 + $0x28] sm:$0xf] %vm266, 0
          %278 = vst.msk [vmem:[#allocation2 + $0x2c] sm:$0xf] %vm266, 0
          %279 = vst.msk [vmem:[#allocation2 + $0x30] sm:$0xf] %vm266, 0
          %280 = vst.msk [vmem:[#allocation2 + $0x34] sm:$0xf] %vm266, 0
          %281 = vst.msk [vmem:[#allocation2 + $0x38] sm:$0xf] %vm266, 0
          %282 = vst.msk [vmem:[#allocation2 + $0x3c] sm:$0xf] %vm266, 0
          %283 = vst.msk [vmem:[#allocation2 + $0x40] sm:$0xf] %vm266, 0
          %284 = vst.msk [vmem:[#allocation2 + $0x44] sm:$0xf] %vm266, 0
          %285 = vst.msk [vmem:[#allocation2 + $0x48] sm:$0xf] %vm266, 0
          %286 = vst.msk [vmem:[#allocation2 + $0x4c] sm:$0xf] %vm266, 0
          %287 = vst.msk [vmem:[#allocation2 + $0x50] sm:$0xf] %vm266, 0
          %288 = vst.msk [vmem:[#allocation2 + $0x54] sm:$0xf] %vm266, 0
          %289 = vst.msk [vmem:[#allocation2 + $0x58] sm:$0xf] %vm266, 0
          %290 = vst.msk [vmem:[#allocation2 + $0x5c] sm:$0xf] %vm266, 0
          %291 = vst.msk [vmem:[#allocation2 + $0x60] sm:$0xf] %vm266, 0
          %292 = vst.msk [vmem:[#allocation2 + $0x64] sm:$0xf] %vm266, 0
          %293 = vst.msk [vmem:[#allocation2 + $0x68] sm:$0xf] %vm266, 0
          %294 = vst.msk [vmem:[#allocation2 + $0x6c] sm:$0xf] %vm266, 0
          %295 = vst.msk [vmem:[#allocation2 + $0x70] sm:$0xf] %vm266, 0
          %296 = vst.msk [vmem:[#allocation2 + $0x74] sm:$0xf] %vm266, 0
          %297 = vst.msk [vmem:[#allocation2 + $0x78] sm:$0xf] %vm266, 0
          %298 = vst.msk [vmem:[#allocation2 + $0x7c] sm:$0xf] %vm266, 0
          %299 = vst.msk [vmem:[#allocation2 + $0x80] sm:$0xf] %vm266, 0
          %300 = vst.msk [vmem:[#allocation2 + $0x84] sm:$0xf] %vm266, 0
          %301 = vst.msk [vmem:[#allocation2 + $0x88] sm:$0xf] %vm266, 0
          %302 = vst.msk [vmem:[#allocation2 + $0x8c] sm:$0xf] %vm266, 0
          %303 = vst.msk [vmem:[#allocation2 + $0x90] sm:$0xf] %vm266, 0
          %304 = vst.msk [vmem:[#allocation2 + $0x94] sm:$0xf] %vm266, 0
          %305 = vst.msk [vmem:[#allocation2 + $0x98] sm:$0xf] %vm266, 0
          %306 = vst.msk [vmem:[#allocation2 + $0x9c] sm:$0xf] %vm266, 0
          %307 = vst.msk [vmem:[#allocation2 + $0xa0] sm:$0xf] %vm266, 0
          %308 = vst.msk [vmem:[#allocation2 + $0xa4] sm:$0xf] %vm266, 0
          %309 = vst.msk [vmem:[#allocation2 + $0xa8] sm:$0xf] %vm266, 0
          %310 = vst.msk [vmem:[#allocation2 + $0xac] sm:$0xf] %vm266, 0
          %311 = vst.msk [vmem:[#allocation2 + $0xb0] sm:$0xf] %vm266, 0
        $region44: #{tpu_custom_call.1} parent=39 // pred_fallthru
          _
        %v312 = vld [vmem:[%s260] sm:$0xf]
        %v313 = vld [vmem:[%s260 + $0x4] sm:$0xf]
        %v314 = vld [vmem:[%s260 + $0x8] sm:$0xf]
        %v315 = vld [vmem:[%s260 + $0xc] sm:$0xf]
        %v316 = vld [vmem:[%s260 + $0x10] sm:$0xf]
        %v317 = vld [vmem:[%s260 + $0x14] sm:$0xf]
        %v318 = vld [vmem:[%s260 + $0x18] sm:$0xf]
        %v319 = vld [vmem:[%s260 + $0x1c] sm:$0xf]
        %v320 = vld [vmem:[%s260 + $0x20] sm:$0xf]
        %v321 = vld [vmem:[%s260 + $0x24] sm:$0xf]
        %v322 = vld [vmem:[%s260 + $0x28] sm:$0xf]
        %v323 = vld [vmem:[%s260 + $0x2c] sm:$0xf]
        %v324 = vld [vmem:[%s260 + $0x30] sm:$0xf]
        %v325 = vld [vmem:[%s260 + $0x34] sm:$0xf]
        %v326 = vld [vmem:[%s260 + $0x38] sm:$0xf]
        %v327 = vld [vmem:[%s260 + $0x3c] sm:$0xf]
        %v328 = vld [vmem:[%s260 + $0x40] sm:$0xf]
        %v329 = vld [vmem:[%s260 + $0x44] sm:$0xf]
        %v330 = vld [vmem:[%s260 + $0x48] sm:$0xf]
        %v331 = vld [vmem:[%s260 + $0x4c] sm:$0xf]
        %v332 = vld [vmem:[%s260 + $0x50] sm:$0xf]
        %v333 = vld [vmem:[%s260 + $0x54] sm:$0xf]
        %v334 = vld [vmem:[%s260 + $0x58] sm:$0xf]
        %v335 = vld [vmem:[%s260 + $0x5c] sm:$0xf]
        %v336 = vld [vmem:[%s260 + $0x60] sm:$0xf]
        %v337 = vld [vmem:[%s260 + $0x64] sm:$0xf]
        %v338 = vld [vmem:[%s260 + $0x68] sm:$0xf]
        %v339 = vld [vmem:[%s260 + $0x6c] sm:$0xf]
        %v340 = vld [vmem:[%s260 + $0x70] sm:$0xf]
        %v341 = vld [vmem:[%s260 + $0x74] sm:$0xf]
        %v342 = vld [vmem:[%s260 + $0x78] sm:$0xf]
        %v343 = vld [vmem:[%s260 + $0x7c] sm:$0xf]
        %v344 = vld [vmem:[%s260 + $0x80] sm:$0xf]
        %v345 = vld [vmem:[%s260 + $0x84] sm:$0xf]
        %v346 = vld [vmem:[%s260 + $0x88] sm:$0xf]
        %v347 = vld [vmem:[%s260 + $0x8c] sm:$0xf]
        %v384 = vunpack.c.l.b16 %v312
        %v385 = vunpack.c.l.b16 %v313
        %v386 = vunpack.c.l.b16 %v314
        %v387 = vunpack.c.l.b16 %v315
        %v388 = vunpack.c.l.b16 %v316
        %v389 = vunpack.c.l.b16 %v317
        %v390 = vunpack.c.l.b16 %v318
        %v391 = vunpack.c.l.b16 %v319
        %v392 = vunpack.c.l.b16 %v320
        %v393 = vunpack.c.l.b16 %v321
        %v394 = vunpack.c.l.b16 %v322
        %v395 = vunpack.c.l.b16 %v323
        %v396 = vunpack.c.l.b16 %v324
        %v397 = vunpack.c.l.b16 %v325
        %v398 = vunpack.c.l.b16 %v326
        %v399 = vunpack.c.l.b16 %v327
        %v400 = vunpack.c.l.b16 %v328
        %v401 = vunpack.c.l.b16 %v329
        %v402 = vunpack.c.l.b16 %v330
        %v403 = vunpack.c.l.b16 %v331
        %v404 = vunpack.c.l.b16 %v332
        %v405 = vunpack.c.l.b16 %v333
        %v406 = vunpack.c.l.b16 %v334
        %v407 = vunpack.c.l.b16 %v335
        %v408 = vunpack.c.l.b16 %v336
        %v409 = vunpack.c.l.b16 %v337
        %v410 = vunpack.c.l.b16 %v338
        %v411 = vunpack.c.l.b16 %v339
        %v412 = vunpack.c.l.b16 %v340
        %v413 = vunpack.c.l.b16 %v341
        %v414 = vunpack.c.l.b16 %v342
        %v415 = vunpack.c.l.b16 %v343
        %v416 = vunpack.c.l.b16 %v344
        %v417 = vunpack.c.l.b16 %v345
        %v418 = vunpack.c.l.b16 %v346
        %v419 = vunpack.c.l.b16 %v347
        %v420 = vpack.c.b16 %v385, %v384
        %v421 = vpack.c.b16 %v387, %v386
        %v422 = vpack.c.b16 %v389, %v388
        %v423 = vpack.c.b16 %v391, %v390
        %v424 = vpack.c.b16 %v393, %v392
        %v425 = vpack.c.b16 %v395, %v394
        %v426 = vpack.c.b16 %v397, %v396
        %v427 = vpack.c.b16 %v399, %v398
        %v428 = vpack.c.b16 %v401, %v400
        %v429 = vpack.c.b16 %v403, %v402
        %v430 = vpack.c.b16 %v405, %v404
        %v431 = vpack.c.b16 %v407, %v406
        %v432 = vpack.c.b16 %v409, %v408
        %v433 = vpack.c.b16 %v411, %v410
        %v434 = vpack.c.b16 %v413, %v412
        %v435 = vpack.c.b16 %v415, %v414
        %v436 = vpack.c.b16 %v417, %v416
        %v437 = vpack.c.b16 %v419, %v418
        %vm456 = vcmask 523264
        %457 = vst.msk [vmem:[#allocation3] sm:$0xff] %vm456, %v420
        %458 = vst.msk [vmem:[#allocation3 + $0x28] sm:$0xff] %vm456, %v421
        %459 = vst.msk [vmem:[#allocation3 + $0x50] sm:$0xff] %vm456, %v422
        %460 = vst.msk [vmem:[#allocation3 + $0x78] sm:$0xff] %vm456, %v423
        %461 = vst.msk [vmem:[#allocation3 + $0xa0] sm:$0xff] %vm456, %v424
        %462 = vst.msk [vmem:[#allocation3 + $0xc8] sm:$0xff] %vm456, %v425
        %463 = vst.msk [vmem:[#allocation3 + $0xf0] sm:$0xff] %vm456, %v426
        %464 = vst.msk [vmem:[#allocation3 + $0x118] sm:$0xff] %vm456, %v427
        %465 = vst.msk [vmem:[#allocation3 + $0x140] sm:$0xff] %vm456, %v428
        %466 = vst.msk [vmem:[#allocation3 + $0x168] sm:$0xff] %vm456, %v429
        %467 = vst.msk [vmem:[#allocation3 + $0x190] sm:$0xff] %vm456, %v430
        %468 = vst.msk [vmem:[#allocation3 + $0x1b8] sm:$0xff] %vm456, %v431
        %469 = vst.msk [vmem:[#allocation3 + $0x1e0] sm:$0xff] %vm456, %v432
        %470 = vst.msk [vmem:[#allocation3 + $0x208] sm:$0xff] %vm456, %v433
        %471 = vst.msk [vmem:[#allocation3 + $0x230] sm:$0xff] %vm456, %v434
        %472 = vst.msk [vmem:[#allocation3 + $0x258] sm:$0xff] %vm456, %v435
        %473 = vst.msk [vmem:[#allocation3 + $0x280] sm:$0xff] %vm456, %v436
        %474 = vst.msk [vmem:[#allocation3 + $0x2a8] sm:$0xff] %vm456, %v437
        %v475 = vld [vmem:[%s260] sm:$0xf]
        %v476 = vld [vmem:[%s260 + $0x4] sm:$0xf]
        %v477 = vld [vmem:[%s260 + $0x8] sm:$0xf]
        %v478 = vld [vmem:[%s260 + $0xc] sm:$0xf]
        %v479 = vld [vmem:[%s260 + $0x10] sm:$0xf]
        %v480 = vld [vmem:[%s260 + $0x14] sm:$0xf]
        %v481 = vld [vmem:[%s260 + $0x18] sm:$0xf]
        %v482 = vld [vmem:[%s260 + $0x1c] sm:$0xf]
        %v483 = vld [vmem:[%s260 + $0x20] sm:$0xf]
        %v484 = vld [vmem:[%s260 + $0x24] sm:$0xf]
        %v485 = vld [vmem:[%s260 + $0x28] sm:$0xf]
        %v486 = vld [vmem:[%s260 + $0x2c] sm:$0xf]
        %v487 = vld [vmem:[%s260 + $0x30] sm:$0xf]
        %v488 = vld [vmem:[%s260 + $0x34] sm:$0xf]
        %v489 = vld [vmem:[%s260 + $0x38] sm:$0xf]
        %v490 = vld [vmem:[%s260 + $0x3c] sm:$0xf]
        %v491 = vld [vmem:[%s260 + $0x40] sm:$0xf]
        %v492 = vld [vmem:[%s260 + $0x44] sm:$0xf]
        %v493 = vld [vmem:[%s260 + $0x48] sm:$0xf]
        %v494 = vld [vmem:[%s260 + $0x4c] sm:$0xf]
        %v495 = vld [vmem:[%s260 + $0x50] sm:$0xf]
        %v496 = vld [vmem:[%s260 + $0x54] sm:$0xf]
        %v497 = vld [vmem:[%s260 + $0x58] sm:$0xf]
        %v498 = vld [vmem:[%s260 + $0x5c] sm:$0xf]
        %v499 = vld [vmem:[%s260 + $0x60] sm:$0xf]
        %v500 = vld [vmem:[%s260 + $0x64] sm:$0xf]
        %v501 = vld [vmem:[%s260 + $0x68] sm:$0xf]
        %v502 = vld [vmem:[%s260 + $0x6c] sm:$0xf]
        %v503 = vld [vmem:[%s260 + $0x70] sm:$0xf]
        %v504 = vld [vmem:[%s260 + $0x74] sm:$0xf]
        %v505 = vld [vmem:[%s260 + $0x78] sm:$0xf]
        %v506 = vld [vmem:[%s260 + $0x7c] sm:$0xf]
        %v507 = vld [vmem:[%s260 + $0x80] sm:$0xf]
        %v508 = vld [vmem:[%s260 + $0x84] sm:$0xf]
        %v509 = vld [vmem:[%s260 + $0x88] sm:$0xf]
        %v510 = vld [vmem:[%s260 + $0x8c] sm:$0xf]
        %v511 = vld [vmem:[%s260 + $0x90] sm:$0x1]
        %v549 = vunpack.c.l.b16 %v475
        %v550 = vunpack.c.l.b16 %v476
        %v551 = vunpack.c.l.b16 %v477
        %v552 = vunpack.c.l.b16 %v478
        %v553 = vunpack.c.l.b16 %v479
        %v554 = vunpack.c.l.b16 %v480
        %v555 = vunpack.c.l.b16 %v481
        %v556 = vunpack.c.l.b16 %v482
        %v557 = vunpack.c.l.b16 %v483
        %v558 = vunpack.c.l.b16 %v484
        %v559 = vunpack.c.l.b16 %v485
        %v560 = vunpack.c.l.b16 %v486
        %v561 = vunpack.c.l.b16 %v487
        %v562 = vunpack.c.l.b16 %v488
        %v563 = vunpack.c.l.b16 %v489
        %v564 = vunpack.c.l.b16 %v490
        %v565 = vunpack.c.l.b16 %v491
        %v566 = vunpack.c.l.b16 %v492
        %v567 = vunpack.c.l.b16 %v493
        %v568 = vunpack.c.l.b16 %v494
        %v569 = vunpack.c.l.b16 %v495
        %v570 = vunpack.c.l.b16 %v496
        %v571 = vunpack.c.l.b16 %v497
        %v572 = vunpack.c.l.b16 %v498
        %v573 = vunpack.c.l.b16 %v499
        %v574 = vunpack.c.l.b16 %v500
        %v575 = vunpack.c.l.b16 %v501
        %v576 = vunpack.c.l.b16 %v502
        %v577 = vunpack.c.l.b16 %v503
        %v578 = vunpack.c.l.b16 %v504
        %v579 = vunpack.c.l.b16 %v505
        %v580 = vunpack.c.l.b16 %v506
        %v581 = vunpack.c.l.b16 %v507
        %v582 = vunpack.c.l.b16 %v508
        %v583 = vunpack.c.l.b16 %v509
        %v584 = vunpack.c.l.b16 %v510
        %v585 = vunpack.c.l.b16 %v511
        %v586 = vpack.c.b16 %v550, %v549
        %v587 = vpack.c.b16 %v552, %v551
        %v588 = vpack.c.b16 %v554, %v553
        %v589 = vpack.c.b16 %v556, %v555
        %v590 = vpack.c.b16 %v558, %v557
        %v591 = vpack.c.b16 %v560, %v559
        %v592 = vpack.c.b16 %v562, %v561
        %v593 = vpack.c.b16 %v564, %v563
        %v594 = vpack.c.b16 %v566, %v565
        %v595 = vpack.c.b16 %v568, %v567
        %v596 = vpack.c.b16 %v570, %v569
        %v597 = vpack.c.b16 %v572, %v571
        %v598 = vpack.c.b16 %v574, %v573
        %v599 = vpack.c.b16 %v576, %v575
        %v600 = vpack.c.b16 %v578, %v577
        %v601 = vpack.c.b16 %v580, %v579
        %v602 = vpack.c.b16 %v582, %v581
        %v603 = vpack.c.b16 %v584, %v583
        %v604 = vpack.c.b16 %v585, %v585
        %vm605 = vsmask.f32 7424
        %v607 = vshrl.u32 %v586, 16
        %v609 = vshll.u32 %v586, 16
        %v611 = vrot.slane %v609, 1
        %v612 = vor.u32 %v607, %v611
        %v614 = vshll.u32 %v587, 16
        %v616 = vrot.slane %v614, 1
        %v617 = vsel %vm605, %v612, %v616
        %v618 = vshrl.u32 %v587, 16
        %v620 = vor.u32 %v618, %v616
        %v622 = vshll.u32 %v588, 16
        %v624 = vrot.slane %v622, 1
        %v625 = vsel %vm605, %v620, %v624
        %v626 = vshrl.u32 %v588, 16
        %v628 = vor.u32 %v626, %v624
        %v630 = vshll.u32 %v589, 16
        %v632 = vrot.slane %v630, 1
        %v633 = vsel %vm605, %v628, %v632
        %v634 = vshrl.u32 %v589, 16
        %v636 = vor.u32 %v634, %v632
        %v638 = vshll.u32 %v590, 16
        %v640 = vrot.slane %v638, 1
        %v641 = vsel %vm605, %v636, %v640
        %v642 = vshrl.u32 %v590, 16
        %v644 = vor.u32 %v642, %v640
        %v646 = vshll.u32 %v591, 16
        %v648 = vrot.slane %v646, 1
        %v649 = vsel %vm605, %v644, %v648
        %v650 = vshrl.u32 %v591, 16
        %v652 = vor.u32 %v650, %v648
        %v654 = vshll.u32 %v592, 16
        %v656 = vrot.slane %v654, 1
        %v657 = vsel %vm605, %v652, %v656
        %v658 = vshrl.u32 %v592, 16
        %v660 = vor.u32 %v658, %v656
        %v662 = vshll.u32 %v593, 16
        %v664 = vrot.slane %v662, 1
        %v665 = vsel %vm605, %v660, %v664
        %v666 = vshrl.u32 %v593, 16
        %v668 = vor.u32 %v666, %v664
        %v670 = vshll.u32 %v594, 16
        %v672 = vrot.slane %v670, 1
        %v673 = vsel %vm605, %v668, %v672
        %v674 = vshrl.u32 %v594, 16
        %v676 = vor.u32 %v674, %v672
        %v678 = vshll.u32 %v595, 16
        %v680 = vrot.slane %v678, 1
        %v681 = vsel %vm605, %v676, %v680
        %v682 = vshrl.u32 %v595, 16
        %v684 = vor.u32 %v682, %v680
        %v686 = vshll.u32 %v596, 16
        %v688 = vrot.slane %v686, 1
        %v689 = vsel %vm605, %v684, %v688
        %v690 = vshrl.u32 %v596, 16
        %v692 = vor.u32 %v690, %v688
        %v694 = vshll.u32 %v597, 16
        %v696 = vrot.slane %v694, 1
        %v697 = vsel %vm605, %v692, %v696
        %v698 = vshrl.u32 %v597, 16
        %v700 = vor.u32 %v698, %v696
        %v702 = vshll.u32 %v598, 16
        %v704 = vrot.slane %v702, 1
        %v705 = vsel %vm605, %v700, %v704
        %v706 = vshrl.u32 %v598, 16
        %v708 = vor.u32 %v706, %v704
        %v710 = vshll.u32 %v599, 16
        %v712 = vrot.slane %v710, 1
        %v713 = vsel %vm605, %v708, %v712
        %v714 = vshrl.u32 %v599, 16
        %v716 = vor.u32 %v714, %v712
        %v718 = vshll.u32 %v600, 16
        %v720 = vrot.slane %v718, 1
        %v721 = vsel %vm605, %v716, %v720
        %v722 = vshrl.u32 %v600, 16
        %v724 = vor.u32 %v722, %v720
        %v726 = vshll.u32 %v601, 16
        %v728 = vrot.slane %v726, 1
        %v729 = vsel %vm605, %v724, %v728
        %v730 = vshrl.u32 %v601, 16
        %v732 = vor.u32 %v730, %v728
        %v734 = vshll.u32 %v602, 16
        %v736 = vrot.slane %v734, 1
        %v737 = vsel %vm605, %v732, %v736
        %v738 = vshrl.u32 %v602, 16
        %v740 = vor.u32 %v738, %v736
        %v742 = vshll.u32 %v603, 16
        %v744 = vrot.slane %v742, 1
        %v745 = vsel %vm605, %v740, %v744
        %v746 = vshrl.u32 %v603, 16
        %v748 = vor.u32 %v746, %v744
        %v750 = vshll.u32 %v604, 16
        %v752 = vrot.slane %v750, 1
        %v753 = vsel %vm605, %v748, %v752
        %754 = vrot.lane.b32.xlu0 %v617, 64
        %v755 = vpop.permute.xlu0 %754
        %756 = vrot.lane.b32.xlu0 %v625, 64
        %v757 = vpop.permute.xlu0 %756
        %758 = vrot.lane.b32.xlu0 %v633, 64
        %v759 = vpop.permute.xlu0 %758
        %760 = vrot.lane.b32.xlu0 %v641, 64
        %v761 = vpop.permute.xlu0 %760
        %762 = vrot.lane.b32.xlu0 %v649, 64
        %v763 = vpop.permute.xlu0 %762
        %764 = vrot.lane.b32.xlu0 %v657, 64
        %v765 = vpop.permute.xlu0 %764
        %766 = vrot.lane.b32.xlu0 %v665, 64
        %v767 = vpop.permute.xlu0 %766
        %768 = vrot.lane.b32.xlu0 %v673, 64
        %v769 = vpop.permute.xlu0 %768
        %770 = vrot.lane.b32.xlu0 %v681, 64
        %v771 = vpop.permute.xlu0 %770
        %772 = vrot.lane.b32.xlu0 %v689, 64
        %v773 = vpop.permute.xlu0 %772
        %774 = vrot.lane.b32.xlu0 %v697, 64
        %v775 = vpop.permute.xlu0 %774
        %776 = vrot.lane.b32.xlu0 %v705, 64
        %v777 = vpop.permute.xlu0 %776
        %778 = vrot.lane.b32.xlu0 %v713, 64
        %v779 = vpop.permute.xlu0 %778
        %780 = vrot.lane.b32.xlu0 %v721, 64
        %v781 = vpop.permute.xlu0 %780
        %782 = vrot.lane.b32.xlu0 %v729, 64
        %v783 = vpop.permute.xlu0 %782
        %784 = vrot.lane.b32.xlu0 %v737, 64
        %v785 = vpop.permute.xlu0 %784
        %786 = vrot.lane.b32.xlu0 %v745, 64
        %v787 = vpop.permute.xlu0 %786
        %788 = vrot.lane.b32.xlu0 %v753, 64
        %v789 = vpop.permute.xlu0 %788
        %vm808 = vcmask 1048064
        %809 = vst.msk [vmem:[#allocation3] sm:$0xff] %vm808, %v755
        %810 = vst.msk [vmem:[#allocation3 + $0x28] sm:$0xff] %vm808, %v757
        %811 = vst.msk [vmem:[#allocation3 + $0x50] sm:$0xff] %vm808, %v759
        %812 = vst.msk [vmem:[#allocation3 + $0x78] sm:$0xff] %vm808, %v761
        %813 = vst.msk [vmem:[#allocation3 + $0xa0] sm:$0xff] %vm808, %v763
        %814 = vst.msk [vmem:[#allocation3 + $0xc8] sm:$0xff] %vm808, %v765
        %815 = vst.msk [vmem:[#allocation3 + $0xf0] sm:$0xff] %vm808, %v767
        %816 = vst.msk [vmem:[#allocation3 + $0x118] sm:$0xff] %vm808, %v769
        %817 = vst.msk [vmem:[#allocation3 + $0x140] sm:$0xff] %vm808, %v771
        %818 = vst.msk [vmem:[#allocation3 + $0x168] sm:$0xff] %vm808, %v773
        %819 = vst.msk [vmem:[#allocation3 + $0x190] sm:$0xff] %vm808, %v775
        %820 = vst.msk [vmem:[#allocation3 + $0x1b8] sm:$0xff] %vm808, %v777
        %821 = vst.msk [vmem:[#allocation3 + $0x1e0] sm:$0xff] %vm808, %v779
        %822 = vst.msk [vmem:[#allocation3 + $0x208] sm:$0xff] %vm808, %v781
        %823 = vst.msk [vmem:[#allocation3 + $0x230] sm:$0xff] %vm808, %v783
        %824 = vst.msk [vmem:[#allocation3 + $0x258] sm:$0xff] %vm808, %v785
        %825 = vst.msk [vmem:[#allocation3 + $0x280] sm:$0xff] %vm808, %v787
        %826 = vst.msk [vmem:[#allocation3 + $0x2a8] sm:$0xff] %vm808, %v789
        %v827 = vld [vmem:[%s260] sm:$0xe]
        %v828 = vld [vmem:[%s260 + $0x4] sm:$0xf]
        %v829 = vld [vmem:[%s260 + $0x8] sm:$0xf]
        %v830 = vld [vmem:[%s260 + $0xc] sm:$0xf]
        %v831 = vld [vmem:[%s260 + $0x10] sm:$0xf]
        %v832 = vld [vmem:[%s260 + $0x14] sm:$0xf]
        %v833 = vld [vmem:[%s260 + $0x18] sm:$0xf]
        %v834 = vld [vmem:[%s260 + $0x1c] sm:$0xf]
        %v835 = vld [vmem:[%s260 + $0x20] sm:$0xf]
        %v836 = vld [vmem:[%s260 + $0x24] sm:$0xf]
        %v837 = vld [vmem:[%s260 + $0x28] sm:$0xf]
        %v838 = vld [vmem:[%s260 + $0x2c] sm:$0xf]
        %v839 = vld [vmem:[%s260 + $0x30] sm:$0xf]
        %v840 = vld [vmem:[%s260 + $0x34] sm:$0xf]
        %v841 = vld [vmem:[%s260 + $0x38] sm:$0xf]
        %v842 = vld [vmem:[%s260 + $0x3c] sm:$0xf]
        %v843 = vld [vmem:[%s260 + $0x40] sm:$0xf]
        %v844 = vld [vmem:[%s260 + $0x44] sm:$0xf]
        %v845 = vld [vmem:[%s260 + $0x48] sm:$0xf]
        %v846 = vld [vmem:[%s260 + $0x4c] sm:$0xf]
        %v847 = vld [vmem:[%s260 + $0x50] sm:$0xf]
        %v848 = vld [vmem:[%s260 + $0x54] sm:$0xf]
        %v849 = vld [vmem:[%s260 + $0x58] sm:$0xf]
        %v850 = vld [vmem:[%s260 + $0x5c] sm:$0xf]
        %v851 = vld [vmem:[%s260 + $0x60] sm:$0xf]
        %v852 = vld [vmem:[%s260 + $0x64] sm:$0xf]
        %v853 = vld [vmem:[%s260 + $0x68] sm:$0xf]
        %v854 = vld [vmem:[%s260 + $0x6c] sm:$0xf]
        %v855 = vld [vmem:[%s260 + $0x70] sm:$0xf]
        %v856 = vld [vmem:[%s260 + $0x74] sm:$0xf]
        %v857 = vld [vmem:[%s260 + $0x78] sm:$0xf]
        %v858 = vld [vmem:[%s260 + $0x7c] sm:$0xf]
        %v859 = vld [vmem:[%s260 + $0x80] sm:$0xf]
        %v860 = vld [vmem:[%s260 + $0x84] sm:$0xf]
        %v861 = vld [vmem:[%s260 + $0x88] sm:$0xf]
        %v862 = vld [vmem:[%s260 + $0x8c] sm:$0xf]
        %v863 = vld [vmem:[%s260 + $0x90] sm:$0x1]
        %v901 = vunpack.c.l.b16 %v827
        %v902 = vunpack.c.l.b16 %v828
        %v903 = vunpack.c.l.b16 %v829
        %v904 = vunpack.c.l.b16 %v830
        %v905 = vunpack.c.l.b16 %v831
        %v906 = vunpack.c.l.b16 %v832
        %v907 = vunpack.c.l.b16 %v833
        %v908 = vunpack.c.l.b16 %v834
        %v909 = vunpack.c.l.b16 %v835
        %v910 = vunpack.c.l.b16 %v836
        %v911 = vunpack.c.l.b16 %v837
        %v912 = vunpack.c.l.b16 %v838
        %v913 = vunpack.c.l.b16 %v839
        %v914 = vunpack.c.l.b16 %v840
        %v915 = vunpack.c.l.b16 %v841
        %v916 = vunpack.c.l.b16 %v842
        %v917 = vunpack.c.l.b16 %v843
        %v918 = vunpack.c.l.b16 %v844
        %v919 = vunpack.c.l.b16 %v845
        %v920 = vunpack.c.l.b16 %v846
        %v921 = vunpack.c.l.b16 %v847
        %v922 = vunpack.c.l.b16 %v848
        %v923 = vunpack.c.l.b16 %v849
        %v924 = vunpack.c.l.b16 %v850
        %v925 = vunpack.c.l.b16 %v851
        %v926 = vunpack.c.l.b16 %v852
        %v927 = vunpack.c.l.b16 %v853
        %v928 = vunpack.c.l.b16 %v854
        %v929 = vunpack.c.l.b16 %v855
        %v930 = vunpack.c.l.b16 %v856
        %v931 = vunpack.c.l.b16 %v857
        %v932 = vunpack.c.l.b16 %v858
        %v933 = vunpack.c.l.b16 %v859
        %v934 = vunpack.c.l.b16 %v860
        %v935 = vunpack.c.l.b16 %v861
        %v936 = vunpack.c.l.b16 %v862
        %v937 = vunpack.c.l.b16 %v863
        %v938 = vpack.c.b16 %v902, %v901
        %v939 = vpack.c.b16 %v904, %v903
        %v940 = vpack.c.b16 %v906, %v905
        %v941 = vpack.c.b16 %v908, %v907
        %v942 = vpack.c.b16 %v910, %v909
        %v943 = vpack.c.b16 %v912, %v911
        %v944 = vpack.c.b16 %v914, %v913
        %v945 = vpack.c.b16 %v916, %v915
        %v946 = vpack.c.b16 %v918, %v917
        %v947 = vpack.c.b16 %v920, %v919
        %v948 = vpack.c.b16 %v922, %v921
        %v949 = vpack.c.b16 %v924, %v923
        %v950 = vpack.c.b16 %v926, %v925
        %v951 = vpack.c.b16 %v928, %v927
        %v952 = vpack.c.b16 %v930, %v929
        %v953 = vpack.c.b16 %v932, %v931
        %v954 = vpack.c.b16 %v934, %v933
        %v955 = vpack.c.b16 %v936, %v935
        %v956 = vpack.c.b16 %v937, %v937
        %vm957 = vcmask 1046528
        %v958 = vrot.slane %v938, 1
        %v959 = vrot.slane %v939, 1
        %v960 = vsel %vm957, %v958, %v959
        %v961 = vrot.slane %v940, 1
        %v962 = vsel %vm957, %v959, %v961
        %v963 = vrot.slane %v941, 1
        %v964 = vsel %vm957, %v961, %v963
        %v965 = vrot.slane %v942, 1
        %v966 = vsel %vm957, %v963, %v965
        %v967 = vrot.slane %v943, 1
        %v968 = vsel %vm957, %v965, %v967
        %v969 = vrot.slane %v944, 1
        %v970 = vsel %vm957, %v967, %v969
        %v971 = vrot.slane %v945, 1
        %v972 = vsel %vm957, %v969, %v971
        %v973 = vrot.slane %v946, 1
        %v974 = vsel %vm957, %v971, %v973
        %v975 = vrot.slane %v947, 1
        %v976 = vsel %vm957, %v973, %v975
        %v977 = vrot.slane %v948, 1
        %v978 = vsel %vm957, %v975, %v977
        %v979 = vrot.slane %v949, 1
        %v980 = vsel %vm957, %v977, %v979
        %v981 = vrot.slane %v950, 1
        %v982 = vsel %vm957, %v979, %v981
        %v983 = vrot.slane %v951, 1
        %v984 = vsel %vm957, %v981, %v983
        %v985 = vrot.slane %v952, 1
        %v986 = vsel %vm957, %v983, %v985
        %v987 = vrot.slane %v953, 1
        %v988 = vsel %vm957, %v985, %v987
        %v989 = vrot.slane %v954, 1
        %v990 = vsel %vm957, %v987, %v989
        %v991 = vrot.slane %v955, 1
        %v992 = vsel %vm957, %v989, %v991
        %v993 = vrot.slane %v956, 1
        %v994 = vsel %vm957, %v991, %v993
        %1013 = vst.msk [vmem:[#allocation3 + $0x8] sm:$0xff] %vm456, %v960
        %1014 = vst.msk [vmem:[#allocation3 + $0x30] sm:$0xff] %vm456, %v962
        %1015 = vst.msk [vmem:[#allocation3 + $0x58] sm:$0xff] %vm456, %v964
        %1016 = vst.msk [vmem:[#allocation3 + $0x80] sm:$0xff] %vm456, %v966
        %1017 = vst.msk [vmem:[#allocation3 + $0xa8] sm:$0xff] %vm456, %v968
        %1018 = vst.msk [vmem:[#allocation3 + $0xd0] sm:$0xff] %vm456, %v970
        %1019 = vst.msk [vmem:[#allocation3 + $0xf8] sm:$0xff] %vm456, %v972
        %1020 = vst.msk [vmem:[#allocation3 + $0x120] sm:$0xff] %vm456, %v974
        %1021 = vst.msk [vmem:[#allocation3 + $0x148] sm:$0xff] %vm456, %v976
        %1022 = vst.msk [vmem:[#allocation3 + $0x170] sm:$0xff] %vm456, %v978
        %1023 = vst.msk [vmem:[#allocation3 + $0x198] sm:$0xff] %vm456, %v980
        %1024 = vst.msk [vmem:[#allocation3 + $0x1c0] sm:$0xff] %vm456, %v982
        %1025 = vst.msk [vmem:[#allocation3 + $0x1e8] sm:$0xff] %vm456, %v984
        %1026 = vst.msk [vmem:[#allocation3 + $0x210] sm:$0xff] %vm456, %v986
        %1027 = vst.msk [vmem:[#allocation3 + $0x238] sm:$0xff] %vm456, %v988
        %1028 = vst.msk [vmem:[#allocation3 + $0x260] sm:$0xff] %vm456, %v990
        %1029 = vst.msk [vmem:[#allocation3 + $0x288] sm:$0xff] %vm456, %v992
        %1030 = vst.msk [vmem:[#allocation3 + $0x2b0] sm:$0xff] %vm456, %v994
        %v1031 = vld [vmem:[%s260 + $0x8] sm:$0xe]
        %v1032 = vld [vmem:[%s260 + $0xc] sm:$0xf]
        %v1033 = vld [vmem:[%s260 + $0x10] sm:$0xf]
        %v1034 = vld [vmem:[%s260 + $0x14] sm:$0xf]
        %v1035 = vld [vmem:[%s260 + $0x18] sm:$0xf]
        %v1036 = vld [vmem:[%s260 + $0x1c] sm:$0xf]
        %v1037 = vld [vmem:[%s260 + $0x20] sm:$0xf]
        %v1038 = vld [vmem:[%s260 + $0x24] sm:$0xf]
        %v1039 = vld [vmem:[%s260 + $0x28] sm:$0xf]
        %v1040 = vld [vmem:[%s260 + $0x2c] sm:$0xf]
        %v1041 = vld [vmem:[%s260 + $0x30] sm:$0xf]
        %v1042 = vld [vmem:[%s260 + $0x34] sm:$0xf]
        %v1043 = vld [vmem:[%s260 + $0x38] sm:$0xf]
        %v1044 = vld [vmem:[%s260 + $0x3c] sm:$0xf]
        %v1045 = vld [vmem:[%s260 + $0x40] sm:$0xf]
        %v1046 = vld [vmem:[%s260 + $0x44] sm:$0xf]
        %v1047 = vld [vmem:[%s260 + $0x48] sm:$0xf]
        %v1048 = vld [vmem:[%s260 + $0x4c] sm:$0xf]
        %v1049 = vld [vmem:[%s260 + $0x50] sm:$0xf]
        %v1050 = vld [vmem:[%s260 + $0x54] sm:$0xf]
        %v1051 = vld [vmem:[%s260 + $0x58] sm:$0xf]
        %v1052 = vld [vmem:[%s260 + $0x5c] sm:$0xf]
        %v1053 = vld [vmem:[%s260 + $0x60] sm:$0xf]
        %v1054 = vld [vmem:[%s260 + $0x64] sm:$0xf]
        %v1055 = vld [vmem:[%s260 + $0x68] sm:$0xf]
        %v1056 = vld [vmem:[%s260 + $0x6c] sm:$0xf]
        %v1057 = vld [vmem:[%s260 + $0x70] sm:$0xf]
        %v1058 = vld [vmem:[%s260 + $0x74] sm:$0xf]
        %v1059 = vld [vmem:[%s260 + $0x78] sm:$0xf]
        %v1060 = vld [vmem:[%s260 + $0x7c] sm:$0xf]
        %v1061 = vld [vmem:[%s260 + $0x80] sm:$0xf]
        %v1062 = vld [vmem:[%s260 + $0x84] sm:$0xf]
        %v1063 = vld [vmem:[%s260 + $0x88] sm:$0xf]
        %v1064 = vld [vmem:[%s260 + $0x8c] sm:$0xf]
        %v1065 = vld [vmem:[%s260 + $0x90] sm:$0xf]
        %v1066 = vld [vmem:[%s260 + $0x94] sm:$0xf]
        %v1067 = vld [vmem:[%s260 + $0x98] sm:$0x1]
        %v1105 = vunpack.c.l.b16 %v1031
        %v1106 = vunpack.c.l.b16 %v1032
        %v1107 = vunpack.c.l.b16 %v1033
        %v1108 = vunpack.c.l.b16 %v1034
        %v1109 = vunpack.c.l.b16 %v1035
        %v1110 = vunpack.c.l.b16 %v1036
        %v1111 = vunpack.c.l.b16 %v1037
        %v1112 = vunpack.c.l.b16 %v1038
        %v1113 = vunpack.c.l.b16 %v1039
        %v1114 = vunpack.c.l.b16 %v1040
        %v1115 = vunpack.c.l.b16 %v1041
        %v1116 = vunpack.c.l.b16 %v1042
        %v1117 = vunpack.c.l.b16 %v1043
        %v1118 = vunpack.c.l.b16 %v1044
        %v1119 = vunpack.c.l.b16 %v1045
        %v1120 = vunpack.c.l.b16 %v1046
        %v1121 = vunpack.c.l.b16 %v1047
        %v1122 = vunpack.c.l.b16 %v1048
        %v1123 = vunpack.c.l.b16 %v1049
        %v1124 = vunpack.c.l.b16 %v1050
        %v1125 = vunpack.c.l.b16 %v1051
        %v1126 = vunpack.c.l.b16 %v1052
        %v1127 = vunpack.c.l.b16 %v1053
        %v1128 = vunpack.c.l.b16 %v1054
        %v1129 = vunpack.c.l.b16 %v1055
        %v1130 = vunpack.c.l.b16 %v1056
        %v1131 = vunpack.c.l.b16 %v1057
        %v1132 = vunpack.c.l.b16 %v1058
        %v1133 = vunpack.c.l.b16 %v1059
        %v1134 = vunpack.c.l.b16 %v1060
        %v1135 = vunpack.c.l.b16 %v1061
        %v1136 = vunpack.c.l.b16 %v1062
        %v1137 = vunpack.c.l.b16 %v1063
        %v1138 = vunpack.c.l.b16 %v1064
        %v1139 = vunpack.c.l.b16 %v1065
        %v1140 = vunpack.c.l.b16 %v1066
        %v1141 = vunpack.c.l.b16 %v1067
        %v1142 = vpack.c.b16 %v1106, %v1105
        %v1143 = vpack.c.b16 %v1108, %v1107
        %v1144 = vpack.c.b16 %v1110, %v1109
        %v1145 = vpack.c.b16 %v1112, %v1111
        %v1146 = vpack.c.b16 %v1114, %v1113
        %v1147 = vpack.c.b16 %v1116, %v1115
        %v1148 = vpack.c.b16 %v1118, %v1117
        %v1149 = vpack.c.b16 %v1120, %v1119
        %v1150 = vpack.c.b16 %v1122, %v1121
        %v1151 = vpack.c.b16 %v1124, %v1123
        %v1152 = vpack.c.b16 %v1126, %v1125
        %v1153 = vpack.c.b16 %v1128, %v1127
        %v1154 = vpack.c.b16 %v1130, %v1129
        %v1155 = vpack.c.b16 %v1132, %v1131
        %v1156 = vpack.c.b16 %v1134, %v1133
        %v1157 = vpack.c.b16 %v1136, %v1135
        %v1158 = vpack.c.b16 %v1138, %v1137
        %v1159 = vpack.c.b16 %v1140, %v1139
        %v1160 = vpack.c.b16 %v1141, %v1141
        %v1161 = vrot.slane %v1142, 1
        %v1162 = vrot.slane %v1143, 1
        %v1163 = vsel %vm957, %v1161, %v1162
        %v1164 = vrot.slane %v1144, 1
        %v1165 = vsel %vm957, %v1162, %v1164
        %v1166 = vrot.slane %v1145, 1
        %v1167 = vsel %vm957, %v1164, %v1166
        %v1168 = vrot.slane %v1146, 1
        %v1169 = vsel %vm957, %v1166, %v1168
        %v1170 = vrot.slane %v1147, 1
        %v1171 = vsel %vm957, %v1168, %v1170
        %v1172 = vrot.slane %v1148, 1
        %v1173 = vsel %vm957, %v1170, %v1172
        %v1174 = vrot.slane %v1149, 1
        %v1175 = vsel %vm957, %v1172, %v1174
        %v1176 = vrot.slane %v1150, 1
        %v1177 = vsel %vm957, %v1174, %v1176
        %v1178 = vrot.slane %v1151, 1
        %v1179 = vsel %vm957, %v1176, %v1178
        %v1180 = vrot.slane %v1152, 1
        %v1181 = vsel %vm957, %v1178, %v1180
        %v1182 = vrot.slane %v1153, 1
        %v1183 = vsel %vm957, %v1180, %v1182
        %v1184 = vrot.slane %v1154, 1
        %v1185 = vsel %vm957, %v1182, %v1184
        %v1186 = vrot.slane %v1155, 1
        %v1187 = vsel %vm957, %v1184, %v1186
        %v1188 = vrot.slane %v1156, 1
        %v1189 = vsel %vm957, %v1186, %v1188
        %v1190 = vrot.slane %v1157, 1
        %v1191 = vsel %vm957, %v1188, %v1190
        %v1192 = vrot.slane %v1158, 1
        %v1193 = vsel %vm957, %v1190, %v1192
        %v1194 = vrot.slane %v1159, 1
        %v1195 = vsel %vm957, %v1192, %v1194
        %v1196 = vrot.slane %v1160, 1
        %v1197 = vsel %vm957, %v1194, %v1196
        %1198 = vrot.lane.b32.xlu0 %v1163, 64
        %v1199 = vpop.permute.xlu0 %1198
        %1200 = vrot.lane.b32.xlu0 %v1165, 64
        %v1201 = vpop.permute.xlu0 %1200
        %1202 = vrot.lane.b32.xlu0 %v1167, 64
        %v1203 = vpop.permute.xlu0 %1202
        %1204 = vrot.lane.b32.xlu0 %v1169, 64
        %v1205 = vpop.permute.xlu0 %1204
        %1206 = vrot.lane.b32.xlu0 %v1171, 64
        %v1207 = vpop.permute.xlu0 %1206
        %1208 = vrot.lane.b32.xlu0 %v1173, 64
        %v1209 = vpop.permute.xlu0 %1208
        %1210 = vrot.lane.b32.xlu0 %v1175, 64
        %v1211 = vpop.permute.xlu0 %1210
        %1212 = vrot.lane.b32.xlu0 %v1177, 64
        %v1213 = vpop.permute.xlu0 %1212
        %1214 = vrot.lane.b32.xlu0 %v1179, 64
        %v1215 = vpop.permute.xlu0 %1214
        %1216 = vrot.lane.b32.xlu0 %v1181, 64
        %v1217 = vpop.permute.xlu0 %1216
        %1218 = vrot.lane.b32.xlu0 %v1183, 64
        %v1219 = vpop.permute.xlu0 %1218
        %1220 = vrot.lane.b32.xlu0 %v1185, 64
        %v1221 = vpop.permute.xlu0 %1220
        %1222 = vrot.lane.b32.xlu0 %v1187, 64
        %v1223 = vpop.permute.xlu0 %1222
        %1224 = vrot.lane.b32.xlu0 %v1189, 64
        %v1225 = vpop.permute.xlu0 %1224
        %1226 = vrot.lane.b32.xlu0 %v1191, 64
        %v1227 = vpop.permute.xlu0 %1226
        %1228 = vrot.lane.b32.xlu0 %v1193, 64
        %v1229 = vpop.permute.xlu0 %1228
        %1230 = vrot.lane.b32.xlu0 %v1195, 64
        %v1231 = vpop.permute.xlu0 %1230
        %1232 = vrot.lane.b32.xlu0 %v1197, 64
        %v1233 = vpop.permute.xlu0 %1232
        %1252 = vst.msk [vmem:[#allocation3 + $0x8] sm:$0xff] %vm808, %v1199
        %1253 = vst.msk [vmem:[#allocation3 + $0x30] sm:$0xff] %vm808, %v1201
        %1254 = vst.msk [vmem:[#allocation3 + $0x58] sm:$0xff] %vm808, %v1203
        %1255 = vst.msk [vmem:[#allocation3 + $0x80] sm:$0xff] %vm808, %v1205
        %1256 = vst.msk [vmem:[#allocation3 + $0xa8] sm:$0xff] %vm808, %v1207
        %1257 = vst.msk [vmem:[#allocation3 + $0xd0] sm:$0xff] %vm808, %v1209
        %1258 = vst.msk [vmem:[#allocation3 + $0xf8] sm:$0xff] %vm808, %v1211
        %1259 = vst.msk [vmem:[#allocation3 + $0x120] sm:$0xff] %vm808, %v1213
        %1260 = vst.msk [vmem:[#allocation3 + $0x148] sm:$0xff] %vm808, %v1215
        %1261 = vst.msk [vmem:[#allocation3 + $0x170] sm:$0xff] %vm808, %v1217
        %1262 = vst.msk [vmem:[#allocation3 + $0x198] sm:$0xff] %vm808, %v1219
        %1263 = vst.msk [vmem:[#allocation3 + $0x1c0] sm:$0xff] %vm808, %v1221
        %1264 = vst.msk [vmem:[#allocation3 + $0x1e8] sm:$0xff] %vm808, %v1223
        %1265 = vst.msk [vmem:[#allocation3 + $0x210] sm:$0xff] %vm808, %v1225
        %1266 = vst.msk [vmem:[#allocation3 + $0x238] sm:$0xff] %vm808, %v1227
        %1267 = vst.msk [vmem:[#allocation3 + $0x260] sm:$0xff] %vm808, %v1229
        %1268 = vst.msk [vmem:[#allocation3 + $0x288] sm:$0xff] %vm808, %v1231
        %1269 = vst.msk [vmem:[#allocation3 + $0x2b0] sm:$0xff] %vm808, %v1233
        %v1270 = vld [vmem:[%s260 + $0x8] sm:$0xe]
        %v1271 = vld [vmem:[%s260 + $0xc] sm:$0xf]
        %v1272 = vld [vmem:[%s260 + $0x10] sm:$0xf]
        %v1273 = vld [vmem:[%s260 + $0x14] sm:$0xf]
        %v1274 = vld [vmem:[%s260 + $0x18] sm:$0xf]
        %v1275 = vld [vmem:[%s260 + $0x1c] sm:$0xf]
        %v1276 = vld [vmem:[%s260 + $0x20] sm:$0xf]
        %v1277 = vld [vmem:[%s260 + $0x24] sm:$0xf]
        %v1278 = vld [vmem:[%s260 + $0x28] sm:$0xf]
        %v1279 = vld [vmem:[%s260 + $0x2c] sm:$0xf]
        %v1280 = vld [vmem:[%s260 + $0x30] sm:$0xf]
        %v1281 = vld [vmem:[%s260 + $0x34] sm:$0xf]
        %v1282 = vld [vmem:[%s260 + $0x38] sm:$0xf]
        %v1283 = vld [vmem:[%s260 + $0x3c] sm:$0xf]
        %v1284 = vld [vmem:[%s260 + $0x40] sm:$0xf]
        %v1285 = vld [vmem:[%s260 + $0x44] sm:$0xf]
        %v1286 = vld [vmem:[%s260 + $0x48] sm:$0xf]
        %v1287 = vld [vmem:[%s260 + $0x4c] sm:$0xf]
        %v1288 = vld [vmem:[%s260 + $0x50] sm:$0xf]
        %v1289 = vld [vmem:[%s260 + $0x54] sm:$0xf]
        %v1290 = vld [vmem:[%s260 + $0x58] sm:$0xf]
        %v1291 = vld [vmem:[%s260 + $0x5c] sm:$0xf]
        %v1292 = vld [vmem:[%s260 + $0x60] sm:$0xf]
        %v1293 = vld [vmem:[%s260 + $0x64] sm:$0xf]
        %v1294 = vld [vmem:[%s260 + $0x68] sm:$0xf]
        %v1295 = vld [vmem:[%s260 + $0x6c] sm:$0xf]
        %v1296 = vld [vmem:[%s260 + $0x70] sm:$0xf]
        %v1297 = vld [vmem:[%s260 + $0x74] sm:$0xf]
        %v1298 = vld [vmem:[%s260 + $0x78] sm:$0xf]
        %v1299 = vld [vmem:[%s260 + $0x7c] sm:$0xf]
        %v1300 = vld [vmem:[%s260 + $0x80] sm:$0xf]
        %v1301 = vld [vmem:[%s260 + $0x84] sm:$0xf]
        %v1302 = vld [vmem:[%s260 + $0x88] sm:$0xf]
        %v1303 = vld [vmem:[%s260 + $0x8c] sm:$0xf]
        %v1304 = vld [vmem:[%s260 + $0x90] sm:$0xf]
        %v1305 = vld [vmem:[%s260 + $0x94] sm:$0xf]
        %v1306 = vld [vmem:[%s260 + $0x98] sm:$0x3]
        %v1344 = vunpack.c.l.b16 %v1270
        %v1345 = vunpack.c.l.b16 %v1271
        %v1346 = vunpack.c.l.b16 %v1272
        %v1347 = vunpack.c.l.b16 %v1273
        %v1348 = vunpack.c.l.b16 %v1274
        %v1349 = vunpack.c.l.b16 %v1275
        %v1350 = vunpack.c.l.b16 %v1276
        %v1351 = vunpack.c.l.b16 %v1277
        %v1352 = vunpack.c.l.b16 %v1278
        %v1353 = vunpack.c.l.b16 %v1279
        %v1354 = vunpack.c.l.b16 %v1280
        %v1355 = vunpack.c.l.b16 %v1281
        %v1356 = vunpack.c.l.b16 %v1282
        %v1357 = vunpack.c.l.b16 %v1283
        %v1358 = vunpack.c.l.b16 %v1284
        %v1359 = vunpack.c.l.b16 %v1285
        %v1360 = vunpack.c.l.b16 %v1286
        %v1361 = vunpack.c.l.b16 %v1287
        %v1362 = vunpack.c.l.b16 %v1288
        %v1363 = vunpack.c.l.b16 %v1289
        %v1364 = vunpack.c.l.b16 %v1290
        %v1365 = vunpack.c.l.b16 %v1291
        %v1366 = vunpack.c.l.b16 %v1292
        %v1367 = vunpack.c.l.b16 %v1293
        %v1368 = vunpack.c.l.b16 %v1294
        %v1369 = vunpack.c.l.b16 %v1295
        %v1370 = vunpack.c.l.b16 %v1296
        %v1371 = vunpack.c.l.b16 %v1297
        %v1372 = vunpack.c.l.b16 %v1298
        %v1373 = vunpack.c.l.b16 %v1299
        %v1374 = vunpack.c.l.b16 %v1300
        %v1375 = vunpack.c.l.b16 %v1301
        %v1376 = vunpack.c.l.b16 %v1302
        %v1377 = vunpack.c.l.b16 %v1303
        %v1378 = vunpack.c.l.b16 %v1304
        %v1379 = vunpack.c.l.b16 %v1305
        %v1380 = vunpack.c.l.b16 %v1306
        %v1381 = vpack.c.b16 %v1345, %v1344
        %v1382 = vpack.c.b16 %v1347, %v1346
        %v1383 = vpack.c.b16 %v1349, %v1348
        %v1384 = vpack.c.b16 %v1351, %v1350
        %v1385 = vpack.c.b16 %v1353, %v1352
        %v1386 = vpack.c.b16 %v1355, %v1354
        %v1387 = vpack.c.b16 %v1357, %v1356
        %v1388 = vpack.c.b16 %v1359, %v1358
        %v1389 = vpack.c.b16 %v1361, %v1360
        %v1390 = vpack.c.b16 %v1363, %v1362
        %v1391 = vpack.c.b16 %v1365, %v1364
        %v1392 = vpack.c.b16 %v1367, %v1366
        %v1393 = vpack.c.b16 %v1369, %v1368
        %v1394 = vpack.c.b16 %v1371, %v1370
        %v1395 = vpack.c.b16 %v1373, %v1372
        %v1396 = vpack.c.b16 %v1375, %v1374
        %v1397 = vpack.c.b16 %v1377, %v1376
        %v1398 = vpack.c.b16 %v1379, %v1378
        %v1399 = vpack.c.b16 %v1380, %v1380
        %vm1400 = vsmask.f32 6400
        %v1402 = vshrl.u32 %v1381, 16
        %v1404 = vrot.slane %v1402, 1
        %v1405 = vshll.u32 %v1381, 16
        %v1407 = vrot.slane %v1405, 2
        %v1408 = vor.u32 %v1404, %v1407
        %v1410 = vshrl.u32 %v1382, 16
        %v1412 = vrot.slane %v1410, 1
        %v1413 = vshll.u32 %v1382, 16
        %v1415 = vrot.slane %v1413, 2
        %v1416 = vor.u32 %v1412, %v1415
        %v1417 = vsel %vm1400, %v1408, %v1416
        %v1419 = vshrl.u32 %v1383, 16
        %v1421 = vrot.slane %v1419, 1
        %v1422 = vshll.u32 %v1383, 16
        %v1424 = vrot.slane %v1422, 2
        %v1425 = vor.u32 %v1421, %v1424
        %v1426 = vsel %vm1400, %v1416, %v1425
        %v1428 = vshrl.u32 %v1384, 16
        %v1430 = vrot.slane %v1428, 1
        %v1431 = vshll.u32 %v1384, 16
        %v1433 = vrot.slane %v1431, 2
        %v1434 = vor.u32 %v1430, %v1433
        %v1435 = vsel %vm1400, %v1425, %v1434
        %v1437 = vshrl.u32 %v1385, 16
        %v1439 = vrot.slane %v1437, 1
        %v1440 = vshll.u32 %v1385, 16
        %v1442 = vrot.slane %v1440, 2
        %v1443 = vor.u32 %v1439, %v1442
        %v1444 = vsel %vm1400, %v1434, %v1443
        %v1446 = vshrl.u32 %v1386, 16
        %v1448 = vrot.slane %v1446, 1
        %v1449 = vshll.u32 %v1386, 16
        %v1451 = vrot.slane %v1449, 2
        %v1452 = vor.u32 %v1448, %v1451
        %v1453 = vsel %vm1400, %v1443, %v1452
        %v1455 = vshrl.u32 %v1387, 16
        %v1457 = vrot.slane %v1455, 1
        %v1458 = vshll.u32 %v1387, 16
        %v1460 = vrot.slane %v1458, 2
        %v1461 = vor.u32 %v1457, %v1460
        %v1462 = vsel %vm1400, %v1452, %v1461
        %v1464 = vshrl.u32 %v1388, 16
        %v1466 = vrot.slane %v1464, 1
        %v1467 = vshll.u32 %v1388, 16
        %v1469 = vrot.slane %v1467, 2
        %v1470 = vor.u32 %v1466, %v1469
        %v1471 = vsel %vm1400, %v1461, %v1470
        %v1473 = vshrl.u32 %v1389, 16
        %v1475 = vrot.slane %v1473, 1
        %v1476 = vshll.u32 %v1389, 16
        %v1478 = vrot.slane %v1476, 2
        %v1479 = vor.u32 %v1475, %v1478
        %v1480 = vsel %vm1400, %v1470, %v1479
        %v1482 = vshrl.u32 %v1390, 16
        %v1484 = vrot.slane %v1482, 1
        %v1485 = vshll.u32 %v1390, 16
        %v1487 = vrot.slane %v1485, 2
        %v1488 = vor.u32 %v1484, %v1487
        %v1489 = vsel %vm1400, %v1479, %v1488
        %v1491 = vshrl.u32 %v1391, 16
        %v1493 = vrot.slane %v1491, 1
        %v1494 = vshll.u32 %v1391, 16
        %v1496 = vrot.slane %v1494, 2
        %v1497 = vor.u32 %v1493, %v1496
        %v1498 = vsel %vm1400, %v1488, %v1497
        %v1500 = vshrl.u32 %v1392, 16
        %v1502 = vrot.slane %v1500, 1
        %v1503 = vshll.u32 %v1392, 16
        %v1505 = vrot.slane %v1503, 2
        %v1506 = vor.u32 %v1502, %v1505
        %v1507 = vsel %vm1400, %v1497, %v1506
        %v1509 = vshrl.u32 %v1393, 16
        %v1511 = vrot.slane %v1509, 1
        %v1512 = vshll.u32 %v1393, 16
        %v1514 = vrot.slane %v1512, 2
        %v1515 = vor.u32 %v1511, %v1514
        %v1516 = vsel %vm1400, %v1506, %v1515
        %v1518 = vshrl.u32 %v1394, 16
        %v1520 = vrot.slane %v1518, 1
        %v1521 = vshll.u32 %v1394, 16
        %v1523 = vrot.slane %v1521, 2
        %v1524 = vor.u32 %v1520, %v1523
        %v1525 = vsel %vm1400, %v1515, %v1524
        %v1527 = vshrl.u32 %v1395, 16
        %v1529 = vrot.slane %v1527, 1
        %v1530 = vshll.u32 %v1395, 16
        %v1532 = vrot.slane %v1530, 2
        %v1533 = vor.u32 %v1529, %v1532
        %v1534 = vsel %vm1400, %v1524, %v1533
        %v1536 = vshrl.u32 %v1396, 16
        %v1538 = vrot.slane %v1536, 1
        %v1539 = vshll.u32 %v1396, 16
        %v1541 = vrot.slane %v1539, 2
        %v1542 = vor.u32 %v1538, %v1541
        %v1543 = vsel %vm1400, %v1533, %v1542
        %v1545 = vshrl.u32 %v1397, 16
        %v1547 = vrot.slane %v1545, 1
        %v1548 = vshll.u32 %v1397, 16
        %v1550 = vrot.slane %v1548, 2
        %v1551 = vor.u32 %v1547, %v1550
        %v1552 = vsel %vm1400, %v1542, %v1551
        %v1554 = vshrl.u32 %v1398, 16
        %v1556 = vrot.slane %v1554, 1
        %v1557 = vshll.u32 %v1398, 16
        %v1559 = vrot.slane %v1557, 2
        %v1560 = vor.u32 %v1556, %v1559
        %v1561 = vsel %vm1400, %v1551, %v1560
        %v1563 = vshrl.u32 %v1399, 16
        %v1565 = vrot.slane %v1563, 1
        %v1566 = vshll.u32 %v1399, 16
        %v1568 = vrot.slane %v1566, 2
        %v1569 = vor.u32 %v1565, %v1568
        %v1570 = vsel %vm1400, %v1560, %v1569
        %1589 = vst.msk [vmem:[#allocation3 + $0x10] sm:$0xff] %vm456, %v1417
        %1590 = vst.msk [vmem:[#allocation3 + $0x38] sm:$0xff] %vm456, %v1426
        %1591 = vst.msk [vmem:[#allocation3 + $0x60] sm:$0xff] %vm456, %v1435
        %1592 = vst.msk [vmem:[#allocation3 + $0x88] sm:$0xff] %vm456, %v1444
        %1593 = vst.msk [vmem:[#allocation3 + $0xb0] sm:$0xff] %vm456, %v1453
        %1594 = vst.msk [vmem:[#allocation3 + $0xd8] sm:$0xff] %vm456, %v1462
        %1595 = vst.msk [vmem:[#allocation3 + $0x100] sm:$0xff] %vm456, %v1471
        %1596 = vst.msk [vmem:[#allocation3 + $0x128] sm:$0xff] %vm456, %v1480
        %1597 = vst.msk [vmem:[#allocation3 + $0x150] sm:$0xff] %vm456, %v1489
        %1598 = vst.msk [vmem:[#allocation3 + $0x178] sm:$0xff] %vm456, %v1498
        %1599 = vst.msk [vmem:[#allocation3 + $0x1a0] sm:$0xff] %vm456, %v1507
        %1600 = vst.msk [vmem:[#allocation3 + $0x1c8] sm:$0xff] %vm456, %v1516
        %1601 = vst.msk [vmem:[#allocation3 + $0x1f0] sm:$0xff] %vm456, %v1525
        %1602 = vst.msk [vmem:[#allocation3 + $0x218] sm:$0xff] %vm456, %v1534
        %1603 = vst.msk [vmem:[#allocation3 + $0x240] sm:$0xff] %vm456, %v1543
        %1604 = vst.msk [vmem:[#allocation3 + $0x268] sm:$0xff] %vm456, %v1552
        %1605 = vst.msk [vmem:[#allocation3 + $0x290] sm:$0xff] %vm456, %v1561
        %1606 = vst.msk [vmem:[#allocation3 + $0x2b8] sm:$0xff] %vm456, %v1570
        %v1607 = vld [vmem:[%s260 + $0x8] sm:$0xc]
        %v1608 = vld [vmem:[%s260 + $0xc] sm:$0xf]
        %v1609 = vld [vmem:[%s260 + $0x10] sm:$0xf]
        %v1610 = vld [vmem:[%s260 + $0x14] sm:$0xf]
        %v1611 = vld [vmem:[%s260 + $0x18] sm:$0xf]
        %v1612 = vld [vmem:[%s260 + $0x1c] sm:$0xf]
        %v1613 = vld [vmem:[%s260 + $0x20] sm:$0xf]
        %v1614 = vld [vmem:[%s260 + $0x24] sm:$0xf]
        %v1615 = vld [vmem:[%s260 + $0x28] sm:$0xf]
        %v1616 = vld [vmem:[%s260 + $0x2c] sm:$0xf]
        %v1617 = vld [vmem:[%s260 + $0x30] sm:$0xf]
        %v1618 = vld [vmem:[%s260 + $0x34] sm:$0xf]
        %v1619 = vld [vmem:[%s260 + $0x38] sm:$0xf]
        %v1620 = vld [vmem:[%s260 + $0x3c] sm:$0xf]
        %v1621 = vld [vmem:[%s260 + $0x40] sm:$0xf]
        %v1622 = vld [vmem:[%s260 + $0x44] sm:$0xf]
        %v1623 = vld [vmem:[%s260 + $0x48] sm:$0xf]
        %v1624 = vld [vmem:[%s260 + $0x4c] sm:$0xf]
        %v1625 = vld [vmem:[%s260 + $0x50] sm:$0xf]
        %v1626 = vld [vmem:[%s260 + $0x54] sm:$0xf]
        %v1627 = vld [vmem:[%s260 + $0x58] sm:$0xf]
        %v1628 = vld [vmem:[%s260 + $0x5c] sm:$0xf]
        %v1629 = vld [vmem:[%s260 + $0x60] sm:$0xf]
        %v1630 = vld [vmem:[%s260 + $0x64] sm:$0xf]
        %v1631 = vld [vmem:[%s260 + $0x68] sm:$0xf]
        %v1632 = vld [vmem:[%s260 + $0x6c] sm:$0xf]
        %v1633 = vld [vmem:[%s260 + $0x70] sm:$0xf]
        %v1634 = vld [vmem:[%s260 + $0x74] sm:$0xf]
        %v1635 = vld [vmem:[%s260 + $0x78] sm:$0xf]
        %v1636 = vld [vmem:[%s260 + $0x7c] sm:$0xf]
        %v1637 = vld [vmem:[%s260 + $0x80] sm:$0xf]
        %v1638 = vld [vmem:[%s260 + $0x84] sm:$0xf]
        %v1639 = vld [vmem:[%s260 + $0x88] sm:$0xf]
        %v1640 = vld [vmem:[%s260 + $0x8c] sm:$0xf]
        %v1641 = vld [vmem:[%s260 + $0x90] sm:$0xf]
        %v1642 = vld [vmem:[%s260 + $0x94] sm:$0xf]
        %v1643 = vld [vmem:[%s260 + $0x98] sm:$0x3]
        %v1681 = vunpack.c.l.b16 %v1607
        %v1682 = vunpack.c.l.b16 %v1608
        %v1683 = vunpack.c.l.b16 %v1609
        %v1684 = vunpack.c.l.b16 %v1610
        %v1685 = vunpack.c.l.b16 %v1611
        %v1686 = vunpack.c.l.b16 %v1612
        %v1687 = vunpack.c.l.b16 %v1613
        %v1688 = vunpack.c.l.b16 %v1614
        %v1689 = vunpack.c.l.b16 %v1615
        %v1690 = vunpack.c.l.b16 %v1616
        %v1691 = vunpack.c.l.b16 %v1617
        %v1692 = vunpack.c.l.b16 %v1618
        %v1693 = vunpack.c.l.b16 %v1619
        %v1694 = vunpack.c.l.b16 %v1620
        %v1695 = vunpack.c.l.b16 %v1621
        %v1696 = vunpack.c.l.b16 %v1622
        %v1697 = vunpack.c.l.b16 %v1623
        %v1698 = vunpack.c.l.b16 %v1624
        %v1699 = vunpack.c.l.b16 %v1625
        %v1700 = vunpack.c.l.b16 %v1626
        %v1701 = vunpack.c.l.b16 %v1627
        %v1702 = vunpack.c.l.b16 %v1628
        %v1703 = vunpack.c.l.b16 %v1629
        %v1704 = vunpack.c.l.b16 %v1630
        %v1705 = vunpack.c.l.b16 %v1631
        %v1706 = vunpack.c.l.b16 %v1632
        %v1707 = vunpack.c.l.b16 %v1633
        %v1708 = vunpack.c.l.b16 %v1634
        %v1709 = vunpack.c.l.b16 %v1635
        %v1710 = vunpack.c.l.b16 %v1636
        %v1711 = vunpack.c.l.b16 %v1637
        %v1712 = vunpack.c.l.b16 %v1638
        %v1713 = vunpack.c.l.b16 %v1639
        %v1714 = vunpack.c.l.b16 %v1640
        %v1715 = vunpack.c.l.b16 %v1641
        %v1716 = vunpack.c.l.b16 %v1642
        %v1717 = vunpack.c.l.b16 %v1643
        %v1718 = vpack.c.b16 %v1682, %v1681
        %v1719 = vpack.c.b16 %v1684, %v1683
        %v1720 = vpack.c.b16 %v1686, %v1685
        %v1721 = vpack.c.b16 %v1688, %v1687
        %v1722 = vpack.c.b16 %v1690, %v1689
        %v1723 = vpack.c.b16 %v1692, %v1691
        %v1724 = vpack.c.b16 %v1694, %v1693
        %v1725 = vpack.c.b16 %v1696, %v1695
        %v1726 = vpack.c.b16 %v1698, %v1697
        %v1727 = vpack.c.b16 %v1700, %v1699
        %v1728 = vpack.c.b16 %v1702, %v1701
        %v1729 = vpack.c.b16 %v1704, %v1703
        %v1730 = vpack.c.b16 %v1706, %v1705
        %v1731 = vpack.c.b16 %v1708, %v1707
        %v1732 = vpack.c.b16 %v1710, %v1709
        %v1733 = vpack.c.b16 %v1712, %v1711
        %v1734 = vpack.c.b16 %v1714, %v1713
        %v1735 = vpack.c.b16 %v1716, %v1715
        %v1736 = vpack.c.b16 %v1717, %v1717
        %vm1737 = vcmask 1045504
        %v1738 = vrot.slane %v1718, 2
        %v1739 = vrot.slane %v1719, 2
        %v1740 = vsel %vm1737, %v1738, %v1739
        %v1741 = vrot.slane %v1720, 2
        %v1742 = vsel %vm1737, %v1739, %v1741
        %v1743 = vrot.slane %v1721, 2
        %v1744 = vsel %vm1737, %v1741, %v1743
        %v1745 = vrot.slane %v1722, 2
        %v1746 = vsel %vm1737, %v1743, %v1745
        %v1747 = vrot.slane %v1723, 2
        %v1748 = vsel %vm1737, %v1745, %v1747
        %v1749 = vrot.slane %v1724, 2
        %v1750 = vsel %vm1737, %v1747, %v1749
        %v1751 = vrot.slane %v1725, 2
        %v1752 = vsel %vm1737, %v1749, %v1751
        %v1753 = vrot.slane %v1726, 2
        %v1754 = vsel %vm1737, %v1751, %v1753
        %v1755 = vrot.slane %v1727, 2
        %v1756 = vsel %vm1737, %v1753, %v1755
        %v1757 = vrot.slane %v1728, 2
        %v1758 = vsel %vm1737, %v1755, %v1757
        %v1759 = vrot.slane %v1729, 2
        %v1760 = vsel %vm1737, %v1757, %v1759
        %v1761 = vrot.slane %v1730, 2
        %v1762 = vsel %vm1737, %v1759, %v1761
        %v1763 = vrot.slane %v1731, 2
        %v1764 = vsel %vm1737, %v1761, %v1763
        %v1765 = vrot.slane %v1732, 2
        %v1766 = vsel %vm1737, %v1763, %v1765
        %v1767 = vrot.slane %v1733, 2
        %v1768 = vsel %vm1737, %v1765, %v1767
        %v1769 = vrot.slane %v1734, 2
        %v1770 = vsel %vm1737, %v1767, %v1769
        %v1771 = vrot.slane %v1735, 2
        %v1772 = vsel %vm1737, %v1769, %v1771
        %v1773 = vrot.slane %v1736, 2
        %v1774 = vsel %vm1737, %v1771, %v1773
        %1775 = vrot.lane.b32.xlu0 %v1740, 64
        %v1776 = vpop.permute.xlu0 %1775
        %1777 = vrot.lane.b32.xlu0 %v1742, 64
        %v1778 = vpop.permute.xlu0 %1777
        %1779 = vrot.lane.b32.xlu0 %v1744, 64
        %v1780 = vpop.permute.xlu0 %1779
        %1781 = vrot.lane.b32.xlu0 %v1746, 64
        %v1782 = vpop.permute.xlu0 %1781
        %1783 = vrot.lane.b32.xlu0 %v1748, 64
        %v1784 = vpop.permute.xlu0 %1783
        %1785 = vrot.lane.b32.xlu0 %v1750, 64
        %v1786 = vpop.permute.xlu0 %1785
        %1787 = vrot.lane.b32.xlu0 %v1752, 64
        %v1788 = vpop.permute.xlu0 %1787
        %1789 = vrot.lane.b32.xlu0 %v1754, 64
        %v1790 = vpop.permute.xlu0 %1789
        %1791 = vrot.lane.b32.xlu0 %v1756, 64
        %v1792 = vpop.permute.xlu0 %1791
        %1793 = vrot.lane.b32.xlu0 %v1758, 64
        %v1794 = vpop.permute.xlu0 %1793
        %1795 = vrot.lane.b32.xlu0 %v1760, 64
        %v1796 = vpop.permute.xlu0 %1795
        %1797 = vrot.lane.b32.xlu0 %v1762, 64
        %v1798 = vpop.permute.xlu0 %1797
        %1799 = vrot.lane.b32.xlu0 %v1764, 64
        %v1800 = vpop.permute.xlu0 %1799
        %1801 = vrot.lane.b32.xlu0 %v1766, 64
        %v1802 = vpop.permute.xlu0 %1801
        %1803 = vrot.lane.b32.xlu0 %v1768, 64
        %v1804 = vpop.permute.xlu0 %1803
        %1805 = vrot.lane.b32.xlu0 %v1770, 64
        %v1806 = vpop.permute.xlu0 %1805
        %1807 = vrot.lane.b32.xlu0 %v1772, 64
        %v1808 = vpop.permute.xlu0 %1807
        %1809 = vrot.lane.b32.xlu0 %v1774, 64
        %v1810 = vpop.permute.xlu0 %1809
        %1829 = vst.msk [vmem:[#allocation3 + $0x10] sm:$0xff] %vm808, %v1776
        %1830 = vst.msk [vmem:[#allocation3 + $0x38] sm:$0xff] %vm808, %v1778
        %1831 = vst.msk [vmem:[#allocation3 + $0x60] sm:$0xff] %vm808, %v1780
        %1832 = vst.msk [vmem:[#allocation3 + $0x88] sm:$0xff] %vm808, %v1782
        %1833 = vst.msk [vmem:[#allocation3 + $0xb0] sm:$0xff] %vm808, %v1784
        %1834 = vst.msk [vmem:[#allocation3 + $0xd8] sm:$0xff] %vm808, %v1786
        %1835 = vst.msk [vmem:[#allocation3 + $0x100] sm:$0xff] %vm808, %v1788
        %1836 = vst.msk [vmem:[#allocation3 + $0x128] sm:$0xff] %vm808, %v1790
        %1837 = vst.msk [vmem:[#allocation3 + $0x150] sm:$0xff] %vm808, %v1792
        %1838 = vst.msk [vmem:[#allocation3 + $0x178] sm:$0xff] %vm808, %v1794
        %1839 = vst.msk [vmem:[#allocation3 + $0x1a0] sm:$0xff] %vm808, %v1796
        %1840 = vst.msk [vmem:[#allocation3 + $0x1c8] sm:$0xff] %vm808, %v1798
        %1841 = vst.msk [vmem:[#allocation3 + $0x1f0] sm:$0xff] %vm808, %v1800
        %1842 = vst.msk [vmem:[#allocation3 + $0x218] sm:$0xff] %vm808, %v1802
        %1843 = vst.msk [vmem:[#allocation3 + $0x240] sm:$0xff] %vm808, %v1804
        %1844 = vst.msk [vmem:[#allocation3 + $0x268] sm:$0xff] %vm808, %v1806
        %1845 = vst.msk [vmem:[#allocation3 + $0x290] sm:$0xff] %vm808, %v1808
        %1846 = vst.msk [vmem:[#allocation3 + $0x2b8] sm:$0xff] %vm808, %v1810
        %v1847 = vld [vmem:[%s260 + $0x10] sm:$0xc]
        %v1848 = vld [vmem:[%s260 + $0x14] sm:$0xf]
        %v1849 = vld [vmem:[%s260 + $0x18] sm:$0xf]
        %v1850 = vld [vmem:[%s260 + $0x1c] sm:$0xf]
        %v1851 = vld [vmem:[%s260 + $0x20] sm:$0xf]
        %v1852 = vld [vmem:[%s260 + $0x24] sm:$0xf]
        %v1853 = vld [vmem:[%s260 + $0x28] sm:$0xf]
        %v1854 = vld [vmem:[%s260 + $0x2c] sm:$0xf]
        %v1855 = vld [vmem:[%s260 + $0x30] sm:$0xf]
        %v1856 = vld [vmem:[%s260 + $0x34] sm:$0xf]
        %v1857 = vld [vmem:[%s260 + $0x38] sm:$0xf]
        %v1858 = vld [vmem:[%s260 + $0x3c] sm:$0xf]
        %v1859 = vld [vmem:[%s260 + $0x40] sm:$0xf]
        %v1860 = vld [vmem:[%s260 + $0x44] sm:$0xf]
        %v1861 = vld [vmem:[%s260 + $0x48] sm:$0xf]
        %v1862 = vld [vmem:[%s260 + $0x4c] sm:$0xf]
        %v1863 = vld [vmem:[%s260 + $0x50] sm:$0xf]
        %v1864 = vld [vmem:[%s260 + $0x54] sm:$0xf]
        %v1865 = vld [vmem:[%s260 + $0x58] sm:$0xf]
        %v1866 = vld [vmem:[%s260 + $0x5c] sm:$0xf]
        %v1867 = vld [vmem:[%s260 + $0x60] sm:$0xf]
        %v1868 = vld [vmem:[%s260 + $0x64] sm:$0xf]
        %v1869 = vld [vmem:[%s260 + $0x68] sm:$0xf]
        %v1870 = vld [vmem:[%s260 + $0x6c] sm:$0xf]
        %v1871 = vld [vmem:[%s260 + $0x70] sm:$0xf]
        %v1872 = vld [vmem:[%s260 + $0x74] sm:$0xf]
        %v1873 = vld [vmem:[%s260 + $0x78] sm:$0xf]
        %v1874 = vld [vmem:[%s260 + $0x7c] sm:$0xf]
        %v1875 = vld [vmem:[%s260 + $0x80] sm:$0xf]
        %v1876 = vld [vmem:[%s260 + $0x84] sm:$0xf]
        %v1877 = vld [vmem:[%s260 + $0x88] sm:$0xf]
        %v1878 = vld [vmem:[%s260 + $0x8c] sm:$0xf]
        %v1879 = vld [vmem:[%s260 + $0x90] sm:$0xf]
        %v1880 = vld [vmem:[%s260 + $0x94] sm:$0xf]
        %v1881 = vld [vmem:[%s260 + $0x98] sm:$0xf]
        %v1882 = vld [vmem:[%s260 + $0x9c] sm:$0xf]
        %v1883 = vld [vmem:[%s260 + $0xa0] sm:$0x3]
        %v1921 = vunpack.c.l.b16 %v1847
        %v1922 = vunpack.c.l.b16 %v1848
        %v1923 = vunpack.c.l.b16 %v1849
        %v1924 = vunpack.c.l.b16 %v1850
        %v1925 = vunpack.c.l.b16 %v1851
        %v1926 = vunpack.c.l.b16 %v1852
        %v1927 = vunpack.c.l.b16 %v1853
        %v1928 = vunpack.c.l.b16 %v1854
        %v1929 = vunpack.c.l.b16 %v1855
        %v1930 = vunpack.c.l.b16 %v1856
        %v1931 = vunpack.c.l.b16 %v1857
        %v1932 = vunpack.c.l.b16 %v1858
        %v1933 = vunpack.c.l.b16 %v1859
        %v1934 = vunpack.c.l.b16 %v1860
        %v1935 = vunpack.c.l.b16 %v1861
        %v1936 = vunpack.c.l.b16 %v1862
        %v1937 = vunpack.c.l.b16 %v1863
        %v1938 = vunpack.c.l.b16 %v1864
        %v1939 = vunpack.c.l.b16 %v1865
        %v1940 = vunpack.c.l.b16 %v1866
        %v1941 = vunpack.c.l.b16 %v1867
        %v1942 = vunpack.c.l.b16 %v1868
        %v1943 = vunpack.c.l.b16 %v1869
        %v1944 = vunpack.c.l.b16 %v1870
        %v1945 = vunpack.c.l.b16 %v1871
        %v1946 = vunpack.c.l.b16 %v1872
        %v1947 = vunpack.c.l.b16 %v1873
        %v1948 = vunpack.c.l.b16 %v1874
        %v1949 = vunpack.c.l.b16 %v1875
        %v1950 = vunpack.c.l.b16 %v1876
        %v1951 = vunpack.c.l.b16 %v1877
        %v1952 = vunpack.c.l.b16 %v1878
        %v1953 = vunpack.c.l.b16 %v1879
        %v1954 = vunpack.c.l.b16 %v1880
        %v1955 = vunpack.c.l.b16 %v1881
        %v1956 = vunpack.c.l.b16 %v1882
        %v1957 = vunpack.c.l.b16 %v1883
        %v1958 = vpack.c.b16 %v1922, %v1921
        %v1959 = vpack.c.b16 %v1924, %v1923
        %v1960 = vpack.c.b16 %v1926, %v1925
        %v1961 = vpack.c.b16 %v1928, %v1927
        %v1962 = vpack.c.b16 %v1930, %v1929
        %v1963 = vpack.c.b16 %v1932, %v1931
        %v1964 = vpack.c.b16 %v1934, %v1933
        %v1965 = vpack.c.b16 %v1936, %v1935
        %v1966 = vpack.c.b16 %v1938, %v1937
        %v1967 = vpack.c.b16 %v1940, %v1939
        %v1968 = vpack.c.b16 %v1942, %v1941
        %v1969 = vpack.c.b16 %v1944, %v1943
        %v1970 = vpack.c.b16 %v1946, %v1945
        %v1971 = vpack.c.b16 %v1948, %v1947
        %v1972 = vpack.c.b16 %v1950, %v1949
        %v1973 = vpack.c.b16 %v1952, %v1951
        %v1974 = vpack.c.b16 %v1954, %v1953
        %v1975 = vpack.c.b16 %v1956, %v1955
        %v1976 = vpack.c.b16 %v1957, %v1957
        %v1977 = vrot.slane %v1958, 2
        %v1978 = vrot.slane %v1959, 2
        %v1979 = vsel %vm1737, %v1977, %v1978
        %v1980 = vrot.slane %v1960, 2
        %v1981 = vsel %vm1737, %v1978, %v1980
        %v1982 = vrot.slane %v1961, 2
        %v1983 = vsel %vm1737, %v1980, %v1982
        %v1984 = vrot.slane %v1962, 2
        %v1985 = vsel %vm1737, %v1982, %v1984
        %v1986 = vrot.slane %v1963, 2
        %v1987 = vsel %vm1737, %v1984, %v1986
        %v1988 = vrot.slane %v1964, 2
        %v1989 = vsel %vm1737, %v1986, %v1988
        %v1990 = vrot.slane %v1965, 2
        %v1991 = vsel %vm1737, %v1988, %v1990
        %v1992 = vrot.slane %v1966, 2
        %v1993 = vsel %vm1737, %v1990, %v1992
        %v1994 = vrot.slane %v1967, 2
        %v1995 = vsel %vm1737, %v1992, %v1994
        %v1996 = vrot.slane %v1968, 2
        %v1997 = vsel %vm1737, %v1994, %v1996
        %v1998 = vrot.slane %v1969, 2
        %v1999 = vsel %vm1737, %v1996, %v1998
        %v2000 = vrot.slane %v1970, 2
        %v2001 = vsel %vm1737, %v1998, %v2000
        %v2002 = vrot.slane %v1971, 2
        %v2003 = vsel %vm1737, %v2000, %v2002
        %v2004 = vrot.slane %v1972, 2
        %v2005 = vsel %vm1737, %v2002, %v2004
        %v2006 = vrot.slane %v1973, 2
        %v2007 = vsel %vm1737, %v2004, %v2006
        %v2008 = vrot.slane %v1974, 2
        %v2009 = vsel %vm1737, %v2006, %v2008
        %v2010 = vrot.slane %v1975, 2
        %v2011 = vsel %vm1737, %v2008, %v2010
        %v2012 = vrot.slane %v1976, 2
        %v2013 = vsel %vm1737, %v2010, %v2012
        %2032 = vst.msk [vmem:[#allocation3 + $0x18] sm:$0xff] %vm456, %v1979
        %2033 = vst.msk [vmem:[#allocation3 + $0x40] sm:$0xff] %vm456, %v1981
        %2034 = vst.msk [vmem:[#allocation3 + $0x68] sm:$0xff] %vm456, %v1983
        %2035 = vst.msk [vmem:[#allocation3 + $0x90] sm:$0xff] %vm456, %v1985
        %2036 = vst.msk [vmem:[#allocation3 + $0xb8] sm:$0xff] %vm456, %v1987
        %2037 = vst.msk [vmem:[#allocation3 + $0xe0] sm:$0xff] %vm456, %v1989
        %2038 = vst.msk [vmem:[#allocation3 + $0x108] sm:$0xff] %vm456, %v1991
        %2039 = vst.msk [vmem:[#allocation3 + $0x130] sm:$0xff] %vm456, %v1993
        %2040 = vst.msk [vmem:[#allocation3 + $0x158] sm:$0xff] %vm456, %v1995
        %2041 = vst.msk [vmem:[#allocation3 + $0x180] sm:$0xff] %vm456, %v1997
        %2042 = vst.msk [vmem:[#allocation3 + $0x1a8] sm:$0xff] %vm456, %v1999
        %2043 = vst.msk [vmem:[#allocation3 + $0x1d0] sm:$0xff] %vm456, %v2001
        %2044 = vst.msk [vmem:[#allocation3 + $0x1f8] sm:$0xff] %vm456, %v2003
        %2045 = vst.msk [vmem:[#allocation3 + $0x220] sm:$0xff] %vm456, %v2005
        %2046 = vst.msk [vmem:[#allocation3 + $0x248] sm:$0xff] %vm456, %v2007
        %2047 = vst.msk [vmem:[#allocation3 + $0x270] sm:$0xff] %vm456, %v2009
        %2048 = vst.msk [vmem:[#allocation3 + $0x298] sm:$0xff] %vm456, %v2011
        %2049 = vst.msk [vmem:[#allocation3 + $0x2c0] sm:$0xff] %vm456, %v2013
        %v2050 = vld [vmem:[%s260 + $0x10] sm:$0xc]
        %v2051 = vld [vmem:[%s260 + $0x14] sm:$0xf]
        %v2052 = vld [vmem:[%s260 + $0x18] sm:$0xf]
        %v2053 = vld [vmem:[%s260 + $0x1c] sm:$0xf]
        %v2054 = vld [vmem:[%s260 + $0x20] sm:$0xf]
        %v2055 = vld [vmem:[%s260 + $0x24] sm:$0xf]
        %v2056 = vld [vmem:[%s260 + $0x28] sm:$0xf]
        %v2057 = vld [vmem:[%s260 + $0x2c] sm:$0xf]
        %v2058 = vld [vmem:[%s260 + $0x30] sm:$0xf]
        %v2059 = vld [vmem:[%s260 + $0x34] sm:$0xf]
        %v2060 = vld [vmem:[%s260 + $0x38] sm:$0xf]
        %v2061 = vld [vmem:[%s260 + $0x3c] sm:$0xf]
        %v2062 = vld [vmem:[%s260 + $0x40] sm:$0xf]
        %v2063 = vld [vmem:[%s260 + $0x44] sm:$0xf]
        %v2064 = vld [vmem:[%s260 + $0x48] sm:$0xf]
        %v2065 = vld [vmem:[%s260 + $0x4c] sm:$0xf]
        %v2066 = vld [vmem:[%s260 + $0x50] sm:$0xf]
        %v2067 = vld [vmem:[%s260 + $0x54] sm:$0xf]
        %v2068 = vld [vmem:[%s260 + $0x58] sm:$0xf]
        %v2069 = vld [vmem:[%s260 + $0x5c] sm:$0xf]
        %v2070 = vld [vmem:[%s260 + $0x60] sm:$0xf]
        %v2071 = vld [vmem:[%s260 + $0x64] sm:$0xf]
        %v2072 = vld [vmem:[%s260 + $0x68] sm:$0xf]
        %v2073 = vld [vmem:[%s260 + $0x6c] sm:$0xf]
        %v2074 = vld [vmem:[%s260 + $0x70] sm:$0xf]
        %v2075 = vld [vmem:[%s260 + $0x74] sm:$0xf]
        %v2076 = vld [vmem:[%s260 + $0x78] sm:$0xf]
        %v2077 = vld [vmem:[%s260 + $0x7c] sm:$0xf]
        %v2078 = vld [vmem:[%s260 + $0x80] sm:$0xf]
        %v2079 = vld [vmem:[%s260 + $0x84] sm:$0xf]
        %v2080 = vld [vmem:[%s260 + $0x88] sm:$0xf]
        %v2081 = vld [vmem:[%s260 + $0x8c] sm:$0xf]
        %v2082 = vld [vmem:[%s260 + $0x90] sm:$0xf]
        %v2083 = vld [vmem:[%s260 + $0x94] sm:$0xf]
        %v2084 = vld [vmem:[%s260 + $0x98] sm:$0xf]
        %v2085 = vld [vmem:[%s260 + $0x9c] sm:$0xf]
        %v2086 = vld [vmem:[%s260 + $0xa0] sm:$0x7]
        %v2124 = vunpack.c.l.b16 %v2050
        %v2125 = vunpack.c.l.b16 %v2051
        %v2126 = vunpack.c.l.b16 %v2052
        %v2127 = vunpack.c.l.b16 %v2053
        %v2128 = vunpack.c.l.b16 %v2054
        %v2129 = vunpack.c.l.b16 %v2055
        %v2130 = vunpack.c.l.b16 %v2056
        %v2131 = vunpack.c.l.b16 %v2057
        %v2132 = vunpack.c.l.b16 %v2058
        %v2133 = vunpack.c.l.b16 %v2059
        %v2134 = vunpack.c.l.b16 %v2060
        %v2135 = vunpack.c.l.b16 %v2061
        %v2136 = vunpack.c.l.b16 %v2062
        %v2137 = vunpack.c.l.b16 %v2063
        %v2138 = vunpack.c.l.b16 %v2064
        %v2139 = vunpack.c.l.b16 %v2065
        %v2140 = vunpack.c.l.b16 %v2066
        %v2141 = vunpack.c.l.b16 %v2067
        %v2142 = vunpack.c.l.b16 %v2068
        %v2143 = vunpack.c.l.b16 %v2069
        %v2144 = vunpack.c.l.b16 %v2070
        %v2145 = vunpack.c.l.b16 %v2071
        %v2146 = vunpack.c.l.b16 %v2072
        %v2147 = vunpack.c.l.b16 %v2073
        %v2148 = vunpack.c.l.b16 %v2074
        %v2149 = vunpack.c.l.b16 %v2075
        %v2150 = vunpack.c.l.b16 %v2076
        %v2151 = vunpack.c.l.b16 %v2077
        %v2152 = vunpack.c.l.b16 %v2078
        %v2153 = vunpack.c.l.b16 %v2079
        %v2154 = vunpack.c.l.b16 %v2080
        %v2155 = vunpack.c.l.b16 %v2081
        %v2156 = vunpack.c.l.b16 %v2082
        %v2157 = vunpack.c.l.b16 %v2083
        %v2158 = vunpack.c.l.b16 %v2084
        %v2159 = vunpack.c.l.b16 %v2085
        %v2160 = vunpack.c.l.b16 %v2086
        %v2161 = vpack.c.b16 %v2125, %v2124
        %v2162 = vpack.c.b16 %v2127, %v2126
        %v2163 = vpack.c.b16 %v2129, %v2128
        %v2164 = vpack.c.b16 %v2131, %v2130
        %v2165 = vpack.c.b16 %v2133, %v2132
        %v2166 = vpack.c.b16 %v2135, %v2134
        %v2167 = vpack.c.b16 %v2137, %v2136
        %v2168 = vpack.c.b16 %v2139, %v2138
        %v2169 = vpack.c.b16 %v2141, %v2140
        %v2170 = vpack.c.b16 %v2143, %v2142
        %v2171 = vpack.c.b16 %v2145, %v2144
        %v2172 = vpack.c.b16 %v2147, %v2146
        %v2173 = vpack.c.b16 %v2149, %v2148
        %v2174 = vpack.c.b16 %v2151, %v2150
        %v2175 = vpack.c.b16 %v2153, %v2152
        %v2176 = vpack.c.b16 %v2155, %v2154
        %v2177 = vpack.c.b16 %v2157, %v2156
        %v2178 = vpack.c.b16 %v2159, %v2158
        %v2179 = vpack.c.b16 %v2160, %v2160
        %vm2180 = vsmask.f32 5376
        %v2182 = vshrl.u32 %v2161, 16
        %v2184 = vrot.slane %v2182, 2
        %v2185 = vshll.u32 %v2161, 16
        %v2187 = vrot.slane %v2185, 3
        %v2188 = vor.u32 %v2184, %v2187
        %v2190 = vshrl.u32 %v2162, 16
        %v2192 = vrot.slane %v2190, 2
        %v2193 = vshll.u32 %v2162, 16
        %v2195 = vrot.slane %v2193, 3
        %v2196 = vor.u32 %v2192, %v2195
        %v2197 = vsel %vm2180, %v2188, %v2196
        %v2199 = vshrl.u32 %v2163, 16
        %v2201 = vrot.slane %v2199, 2
        %v2202 = vshll.u32 %v2163, 16
        %v2204 = vrot.slane %v2202, 3
        %v2205 = vor.u32 %v2201, %v2204
        %v2206 = vsel %vm2180, %v2196, %v2205
        %v2208 = vshrl.u32 %v2164, 16
        %v2210 = vrot.slane %v2208, 2
        %v2211 = vshll.u32 %v2164, 16
        %v2213 = vrot.slane %v2211, 3
        %v2214 = vor.u32 %v2210, %v2213
        %v2215 = vsel %vm2180, %v2205, %v2214
        %v2217 = vshrl.u32 %v2165, 16
        %v2219 = vrot.slane %v2217, 2
        %v2220 = vshll.u32 %v2165, 16
        %v2222 = vrot.slane %v2220, 3
        %v2223 = vor.u32 %v2219, %v2222
        %v2224 = vsel %vm2180, %v2214, %v2223
        %v2226 = vshrl.u32 %v2166, 16
        %v2228 = vrot.slane %v2226, 2
        %v2229 = vshll.u32 %v2166, 16
        %v2231 = vrot.slane %v2229, 3
        %v2232 = vor.u32 %v2228, %v2231
        %v2233 = vsel %vm2180, %v2223, %v2232
        %v2235 = vshrl.u32 %v2167, 16
        %v2237 = vrot.slane %v2235, 2
        %v2238 = vshll.u32 %v2167, 16
        %v2240 = vrot.slane %v2238, 3
        %v2241 = vor.u32 %v2237, %v2240
        %v2242 = vsel %vm2180, %v2232, %v2241
        %v2244 = vshrl.u32 %v2168, 16
        %v2246 = vrot.slane %v2244, 2
        %v2247 = vshll.u32 %v2168, 16
        %v2249 = vrot.slane %v2247, 3
        %v2250 = vor.u32 %v2246, %v2249
        %v2251 = vsel %vm2180, %v2241, %v2250
        %v2253 = vshrl.u32 %v2169, 16
        %v2255 = vrot.slane %v2253, 2
        %v2256 = vshll.u32 %v2169, 16
        %v2258 = vrot.slane %v2256, 3
        %v2259 = vor.u32 %v2255, %v2258
        %v2260 = vsel %vm2180, %v2250, %v2259
        %v2262 = vshrl.u32 %v2170, 16
        %v2264 = vrot.slane %v2262, 2
        %v2265 = vshll.u32 %v2170, 16
        %v2267 = vrot.slane %v2265, 3
        %v2268 = vor.u32 %v2264, %v2267
        %v2269 = vsel %vm2180, %v2259, %v2268
        %v2271 = vshrl.u32 %v2171, 16
        %v2273 = vrot.slane %v2271, 2
        %v2274 = vshll.u32 %v2171, 16
        %v2276 = vrot.slane %v2274, 3
        %v2277 = vor.u32 %v2273, %v2276
        %v2278 = vsel %vm2180, %v2268, %v2277
        %v2280 = vshrl.u32 %v2172, 16
        %v2282 = vrot.slane %v2280, 2
        %v2283 = vshll.u32 %v2172, 16
        %v2285 = vrot.slane %v2283, 3
        %v2286 = vor.u32 %v2282, %v2285
        %v2287 = vsel %vm2180, %v2277, %v2286
        %v2289 = vshrl.u32 %v2173, 16
        %v2291 = vrot.slane %v2289, 2
        %v2292 = vshll.u32 %v2173, 16
        %v2294 = vrot.slane %v2292, 3
        %v2295 = vor.u32 %v2291, %v2294
        %v2296 = vsel %vm2180, %v2286, %v2295
        %v2298 = vshrl.u32 %v2174, 16
        %v2300 = vrot.slane %v2298, 2
        %v2301 = vshll.u32 %v2174, 16
        %v2303 = vrot.slane %v2301, 3
        %v2304 = vor.u32 %v2300, %v2303
        %v2305 = vsel %vm2180, %v2295, %v2304
        %v2307 = vshrl.u32 %v2175, 16
        %v2309 = vrot.slane %v2307, 2
        %v2310 = vshll.u32 %v2175, 16
        %v2312 = vrot.slane %v2310, 3
        %v2313 = vor.u32 %v2309, %v2312
        %v2314 = vsel %vm2180, %v2304, %v2313
        %v2316 = vshrl.u32 %v2176, 16
        %v2318 = vrot.slane %v2316, 2
        %v2319 = vshll.u32 %v2176, 16
        %v2321 = vrot.slane %v2319, 3
        %v2322 = vor.u32 %v2318, %v2321
        %v2323 = vsel %vm2180, %v2313, %v2322
        %v2325 = vshrl.u32 %v2177, 16
        %v2327 = vrot.slane %v2325, 2
        %v2328 = vshll.u32 %v2177, 16
        %v2330 = vrot.slane %v2328, 3
        %v2331 = vor.u32 %v2327, %v2330
        %v2332 = vsel %vm2180, %v2322, %v2331
        %v2334 = vshrl.u32 %v2178, 16
        %v2336 = vrot.slane %v2334, 2
        %v2337 = vshll.u32 %v2178, 16
        %v2339 = vrot.slane %v2337, 3
        %v2340 = vor.u32 %v2336, %v2339
        %v2341 = vsel %vm2180, %v2331, %v2340
        %v2343 = vshrl.u32 %v2179, 16
        %v2345 = vrot.slane %v2343, 2
        %v2346 = vshll.u32 %v2179, 16
        %v2348 = vrot.slane %v2346, 3
        %v2349 = vor.u32 %v2345, %v2348
        %v2350 = vsel %vm2180, %v2340, %v2349
        %2351 = vrot.lane.b32.xlu0 %v2197, 64
        %v2352 = vpop.permute.xlu0 %2351
        %2353 = vrot.lane.b32.xlu0 %v2206, 64
        %v2354 = vpop.permute.xlu0 %2353
        %2355 = vrot.lane.b32.xlu0 %v2215, 64
        %v2356 = vpop.permute.xlu0 %2355
        %2357 = vrot.lane.b32.xlu0 %v2224, 64
        %v2358 = vpop.permute.xlu0 %2357
        %2359 = vrot.lane.b32.xlu0 %v2233, 64
        %v2360 = vpop.permute.xlu0 %2359
        %2361 = vrot.lane.b32.xlu0 %v2242, 64
        %v2362 = vpop.permute.xlu0 %2361
        %2363 = vrot.lane.b32.xlu0 %v2251, 64
        %v2364 = vpop.permute.xlu0 %2363
        %2365 = vrot.lane.b32.xlu0 %v2260, 64
        %v2366 = vpop.permute.xlu0 %2365
        %2367 = vrot.lane.b32.xlu0 %v2269, 64
        %v2368 = vpop.permute.xlu0 %2367
        %2369 = vrot.lane.b32.xlu0 %v2278, 64
        %v2370 = vpop.permute.xlu0 %2369
        %2371 = vrot.lane.b32.xlu0 %v2287, 64
        %v2372 = vpop.permute.xlu0 %2371
        %2373 = vrot.lane.b32.xlu0 %v2296, 64
        %v2374 = vpop.permute.xlu0 %2373
        %2375 = vrot.lane.b32.xlu0 %v2305, 64
        %v2376 = vpop.permute.xlu0 %2375
        %2377 = vrot.lane.b32.xlu0 %v2314, 64
        %v2378 = vpop.permute.xlu0 %2377
        %2379 = vrot.lane.b32.xlu0 %v2323, 64
        %v2380 = vpop.permute.xlu0 %2379
        %2381 = vrot.lane.b32.xlu0 %v2332, 64
        %v2382 = vpop.permute.xlu0 %2381
        %2383 = vrot.lane.b32.xlu0 %v2341, 64
        %v2384 = vpop.permute.xlu0 %2383
        %2385 = vrot.lane.b32.xlu0 %v2350, 64
        %v2386 = vpop.permute.xlu0 %2385
        %2405 = vst.msk [vmem:[#allocation3 + $0x18] sm:$0xff] %vm808, %v2352
        %2406 = vst.msk [vmem:[#allocation3 + $0x40] sm:$0xff] %vm808, %v2354
        %2407 = vst.msk [vmem:[#allocation3 + $0x68] sm:$0xff] %vm808, %v2356
        %2408 = vst.msk [vmem:[#allocation3 + $0x90] sm:$0xff] %vm808, %v2358
        %2409 = vst.msk [vmem:[#allocation3 + $0xb8] sm:$0xff] %vm808, %v2360
        %2410 = vst.msk [vmem:[#allocation3 + $0xe0] sm:$0xff] %vm808, %v2362
        %2411 = vst.msk [vmem:[#allocation3 + $0x108] sm:$0xff] %vm808, %v2364
        %2412 = vst.msk [vmem:[#allocation3 + $0x130] sm:$0xff] %vm808, %v2366
        %2413 = vst.msk [vmem:[#allocation3 + $0x158] sm:$0xff] %vm808, %v2368
        %2414 = vst.msk [vmem:[#allocation3 + $0x180] sm:$0xff] %vm808, %v2370
        %2415 = vst.msk [vmem:[#allocation3 + $0x1a8] sm:$0xff] %vm808, %v2372
        %2416 = vst.msk [vmem:[#allocation3 + $0x1d0] sm:$0xff] %vm808, %v2374
        %2417 = vst.msk [vmem:[#allocation3 + $0x1f8] sm:$0xff] %vm808, %v2376
        %2418 = vst.msk [vmem:[#allocation3 + $0x220] sm:$0xff] %vm808, %v2378
        %2419 = vst.msk [vmem:[#allocation3 + $0x248] sm:$0xff] %vm808, %v2380
        %2420 = vst.msk [vmem:[#allocation3 + $0x270] sm:$0xff] %vm808, %v2382
        %2421 = vst.msk [vmem:[#allocation3 + $0x298] sm:$0xff] %vm808, %v2384
        %2422 = vst.msk [vmem:[#allocation3 + $0x2c0] sm:$0xff] %vm808, %v2386
        %v2423 = vld [vmem:[%s260 + $0x10] sm:$0x8]
        %v2424 = vld [vmem:[%s260 + $0x14] sm:$0xf]
        %v2425 = vld [vmem:[%s260 + $0x18] sm:$0xf]
        %v2426 = vld [vmem:[%s260 + $0x1c] sm:$0xf]
        %v2427 = vld [vmem:[%s260 + $0x20] sm:$0xf]
        %v2428 = vld [vmem:[%s260 + $0x24] sm:$0xf]
        %v2429 = vld [vmem:[%s260 + $0x28] sm:$0xf]
        %v2430 = vld [vmem:[%s260 + $0x2c] sm:$0xf]
        %v2431 = vld [vmem:[%s260 + $0x30] sm:$0xf]
        %v2432 = vld [vmem:[%s260 + $0x34] sm:$0xf]
        %v2433 = vld [vmem:[%s260 + $0x38] sm:$0xf]
        %v2434 = vld [vmem:[%s260 + $0x3c] sm:$0xf]
        %v2435 = vld [vmem:[%s260 + $0x40] sm:$0xf]
        %v2436 = vld [vmem:[%s260 + $0x44] sm:$0xf]
        %v2437 = vld [vmem:[%s260 + $0x48] sm:$0xf]
        %v2438 = vld [vmem:[%s260 + $0x4c] sm:$0xf]
        %v2439 = vld [vmem:[%s260 + $0x50] sm:$0xf]
        %v2440 = vld [vmem:[%s260 + $0x54] sm:$0xf]
        %v2441 = vld [vmem:[%s260 + $0x58] sm:$0xf]
        %v2442 = vld [vmem:[%s260 + $0x5c] sm:$0xf]
        %v2443 = vld [vmem:[%s260 + $0x60] sm:$0xf]
        %v2444 = vld [vmem:[%s260 + $0x64] sm:$0xf]
        %v2445 = vld [vmem:[%s260 + $0x68] sm:$0xf]
        %v2446 = vld [vmem:[%s260 + $0x6c] sm:$0xf]
        %v2447 = vld [vmem:[%s260 + $0x70] sm:$0xf]
        %v2448 = vld [vmem:[%s260 + $0x74] sm:$0xf]
        %v2449 = vld [vmem:[%s260 + $0x78] sm:$0xf]
        %v2450 = vld [vmem:[%s260 + $0x7c] sm:$0xf]
        %v2451 = vld [vmem:[%s260 + $0x80] sm:$0xf]
        %v2452 = vld [vmem:[%s260 + $0x84] sm:$0xf]
        %v2453 = vld [vmem:[%s260 + $0x88] sm:$0xf]
        %v2454 = vld [vmem:[%s260 + $0x8c] sm:$0xf]
        %v2455 = vld [vmem:[%s260 + $0x90] sm:$0xf]
        %v2456 = vld [vmem:[%s260 + $0x94] sm:$0xf]
        %v2457 = vld [vmem:[%s260 + $0x98] sm:$0xf]
        %v2458 = vld [vmem:[%s260 + $0x9c] sm:$0xf]
        %v2459 = vld [vmem:[%s260 + $0xa0] sm:$0x7]
        %v2497 = vunpack.c.l.b16 %v2423
        %v2498 = vunpack.c.l.b16 %v2424
        %v2499 = vunpack.c.l.b16 %v2425
        %v2500 = vunpack.c.l.b16 %v2426
        %v2501 = vunpack.c.l.b16 %v2427
        %v2502 = vunpack.c.l.b16 %v2428
        %v2503 = vunpack.c.l.b16 %v2429
        %v2504 = vunpack.c.l.b16 %v2430
        %v2505 = vunpack.c.l.b16 %v2431
        %v2506 = vunpack.c.l.b16 %v2432
        %v2507 = vunpack.c.l.b16 %v2433
        %v2508 = vunpack.c.l.b16 %v2434
        %v2509 = vunpack.c.l.b16 %v2435
        %v2510 = vunpack.c.l.b16 %v2436
        %v2511 = vunpack.c.l.b16 %v2437
        %v2512 = vunpack.c.l.b16 %v2438
        %v2513 = vunpack.c.l.b16 %v2439
        %v2514 = vunpack.c.l.b16 %v2440
        %v2515 = vunpack.c.l.b16 %v2441
        %v2516 = vunpack.c.l.b16 %v2442
        %v2517 = vunpack.c.l.b16 %v2443
        %v2518 = vunpack.c.l.b16 %v2444
        %v2519 = vunpack.c.l.b16 %v2445
        %v2520 = vunpack.c.l.b16 %v2446
        %v2521 = vunpack.c.l.b16 %v2447
        %v2522 = vunpack.c.l.b16 %v2448
        %v2523 = vunpack.c.l.b16 %v2449
        %v2524 = vunpack.c.l.b16 %v2450
        %v2525 = vunpack.c.l.b16 %v2451
        %v2526 = vunpack.c.l.b16 %v2452
        %v2527 = vunpack.c.l.b16 %v2453
        %v2528 = vunpack.c.l.b16 %v2454
        %v2529 = vunpack.c.l.b16 %v2455
        %v2530 = vunpack.c.l.b16 %v2456
        %v2531 = vunpack.c.l.b16 %v2457
        %v2532 = vunpack.c.l.b16 %v2458
        %v2533 = vunpack.c.l.b16 %v2459
        %v2534 = vpack.c.b16 %v2498, %v2497
        %v2535 = vpack.c.b16 %v2500, %v2499
        %v2536 = vpack.c.b16 %v2502, %v2501
        %v2537 = vpack.c.b16 %v2504, %v2503
        %v2538 = vpack.c.b16 %v2506, %v2505
        %v2539 = vpack.c.b16 %v2508, %v2507
        %v2540 = vpack.c.b16 %v2510, %v2509
        %v2541 = vpack.c.b16 %v2512, %v2511
        %v2542 = vpack.c.b16 %v2514, %v2513
        %v2543 = vpack.c.b16 %v2516, %v2515
        %v2544 = vpack.c.b16 %v2518, %v2517
        %v2545 = vpack.c.b16 %v2520, %v2519
        %v2546 = vpack.c.b16 %v2522, %v2521
        %v2547 = vpack.c.b16 %v2524, %v2523
        %v2548 = vpack.c.b16 %v2526, %v2525
        %v2549 = vpack.c.b16 %v2528, %v2527
        %v2550 = vpack.c.b16 %v2530, %v2529
        %v2551 = vpack.c.b16 %v2532, %v2531
        %v2552 = vpack.c.b16 %v2533, %v2533
        %vm2553 = vcmask 1044480
        %v2554 = vrot.slane %v2534, 3
        %v2555 = vrot.slane %v2535, 3
        %v2556 = vsel %vm2553, %v2554, %v2555
        %v2557 = vrot.slane %v2536, 3
        %v2558 = vsel %vm2553, %v2555, %v2557
        %v2559 = vrot.slane %v2537, 3
        %v2560 = vsel %vm2553, %v2557, %v2559
        %v2561 = vrot.slane %v2538, 3
        %v2562 = vsel %vm2553, %v2559, %v2561
        %v2563 = vrot.slane %v2539, 3
        %v2564 = vsel %vm2553, %v2561, %v2563
        %v2565 = vrot.slane %v2540, 3
        %v2566 = vsel %vm2553, %v2563, %v2565
        %v2567 = vrot.slane %v2541, 3
        %v2568 = vsel %vm2553, %v2565, %v2567
        %v2569 = vrot.slane %v2542, 3
        %v2570 = vsel %vm2553, %v2567, %v2569
        %v2571 = vrot.slane %v2543, 3
        %v2572 = vsel %vm2553, %v2569, %v2571
        %v2573 = vrot.slane %v2544, 3
        %v2574 = vsel %vm2553, %v2571, %v2573
        %v2575 = vrot.slane %v2545, 3
        %v2576 = vsel %vm2553, %v2573, %v2575
        %v2577 = vrot.slane %v2546, 3
        %v2578 = vsel %vm2553, %v2575, %v2577
        %v2579 = vrot.slane %v2547, 3
        %v2580 = vsel %vm2553, %v2577, %v2579
        %v2581 = vrot.slane %v2548, 3
        %v2582 = vsel %vm2553, %v2579, %v2581
        %v2583 = vrot.slane %v2549, 3
        %v2584 = vsel %vm2553, %v2581, %v2583
        %v2585 = vrot.slane %v2550, 3
        %v2586 = vsel %vm2553, %v2583, %v2585
        %v2587 = vrot.slane %v2551, 3
        %v2588 = vsel %vm2553, %v2585, %v2587
        %v2589 = vrot.slane %v2552, 3
        %v2590 = vsel %vm2553, %v2587, %v2589
        %2609 = vst.msk [vmem:[#allocation3 + $0x20] sm:$0xff] %vm456, %v2556
        %2610 = vst.msk [vmem:[#allocation3 + $0x48] sm:$0xff] %vm456, %v2558
        %2611 = vst.msk [vmem:[#allocation3 + $0x70] sm:$0xff] %vm456, %v2560
        %2612 = vst.msk [vmem:[#allocation3 + $0x98] sm:$0xff] %vm456, %v2562
        %2613 = vst.msk [vmem:[#allocation3 + $0xc0] sm:$0xff] %vm456, %v2564
        %2614 = vst.msk [vmem:[#allocation3 + $0xe8] sm:$0xff] %vm456, %v2566
        %2615 = vst.msk [vmem:[#allocation3 + $0x110] sm:$0xff] %vm456, %v2568
        %2616 = vst.msk [vmem:[#allocation3 + $0x138] sm:$0xff] %vm456, %v2570
        %2617 = vst.msk [vmem:[#allocation3 + $0x160] sm:$0xff] %vm456, %v2572
        %2618 = vst.msk [vmem:[#allocation3 + $0x188] sm:$0xff] %vm456, %v2574
        %2619 = vst.msk [vmem:[#allocation3 + $0x1b0] sm:$0xff] %vm456, %v2576
        %2620 = vst.msk [vmem:[#allocation3 + $0x1d8] sm:$0xff] %vm456, %v2578
        %2621 = vst.msk [vmem:[#allocation3 + $0x200] sm:$0xff] %vm456, %v2580
        %2622 = vst.msk [vmem:[#allocation3 + $0x228] sm:$0xff] %vm456, %v2582
        %2623 = vst.msk [vmem:[#allocation3 + $0x250] sm:$0xff] %vm456, %v2584
        %2624 = vst.msk [vmem:[#allocation3 + $0x278] sm:$0xff] %vm456, %v2586
        %2625 = vst.msk [vmem:[#allocation3 + $0x2a0] sm:$0xff] %vm456, %v2588
        %2626 = vst.msk [vmem:[#allocation3 + $0x2c8] sm:$0xff] %vm456, %v2590
        %v2627 = vld [vmem:[#allocation3] sm:$0xff]
        %v2628 = vld [vmem:[#allocation3 + $0x8] sm:$0xff]
        %v2629 = vld [vmem:[#allocation3 + $0x10] sm:$0xff]
        %v2630 = vld [vmem:[#allocation3 + $0x18] sm:$0xff]
        %v2631 = vld [vmem:[#allocation3 + $0x20] sm:$0xff]
        %v2632 = vld [vmem:[#allocation3 + $0x28] sm:$0xff]
        %v2633 = vld [vmem:[#allocation3 + $0x30] sm:$0xff]
        %v2634 = vld [vmem:[#allocation3 + $0x38] sm:$0xff]
        %v2635 = vld [vmem:[#allocation3 + $0x40] sm:$0xff]
        %v2636 = vld [vmem:[#allocation3 + $0x48] sm:$0xff]
        %v2637 = vld [vmem:[#allocation3 + $0x50] sm:$0xff]
        %v2638 = vld [vmem:[#allocation3 + $0x58] sm:$0xff]
        %v2639 = vld [vmem:[#allocation3 + $0x60] sm:$0xff]
        %v2640 = vld [vmem:[#allocation3 + $0x68] sm:$0xff]
        %v2641 = vld [vmem:[#allocation3 + $0x70] sm:$0xff]
        %v2642 = vld [vmem:[#allocation3 + $0x78] sm:$0xff]
        %v2643 = vld [vmem:[#allocation3 + $0x80] sm:$0xff]
        %v2644 = vld [vmem:[#allocation3 + $0x88] sm:$0xff]
        %v2645 = vld [vmem:[#allocation3 + $0x90] sm:$0xff]
        %v2646 = vld [vmem:[#allocation3 + $0x98] sm:$0xff]
        %v2647 = vld [vmem:[#allocation3 + $0xa0] sm:$0xff]
        %v2648 = vld [vmem:[#allocation3 + $0xa8] sm:$0xff]
        %v2649 = vld [vmem:[#allocation3 + $0xb0] sm:$0xff]
        %v2650 = vld [vmem:[#allocation3 + $0xb8] sm:$0xff]
        %v2651 = vld [vmem:[#allocation3 + $0xc0] sm:$0xff]
        %v2652 = vld [vmem:[#allocation3 + $0xc8] sm:$0xff]
        %v2653 = vld [vmem:[#allocation3 + $0xd0] sm:$0xff]
        %v2654 = vld [vmem:[#allocation3 + $0xd8] sm:$0xff]
        %v2655 = vld [vmem:[#allocation3 + $0xe0] sm:$0xff]
        %v2656 = vld [vmem:[#allocation3 + $0xe8] sm:$0xff]
        %v2657 = vld [vmem:[#allocation3 + $0xf0] sm:$0xff]
        %v2658 = vld [vmem:[#allocation3 + $0xf8] sm:$0xff]
        %v2659 = vld [vmem:[#allocation3 + $0x100] sm:$0xff]
        %v2660 = vld [vmem:[#allocation3 + $0x108] sm:$0xff]
        %v2661 = vld [vmem:[#allocation3 + $0x110] sm:$0xff]
        %v2662 = vld [vmem:[#allocation3 + $0x118] sm:$0xff]
        %v2663 = vld [vmem:[#allocation3 + $0x120] sm:$0xff]
        %v2664 = vld [vmem:[#allocation3 + $0x128] sm:$0xff]
        %v2665 = vld [vmem:[#allocation3 + $0x130] sm:$0xff]
        %v2666 = vld [vmem:[#allocation3 + $0x138] sm:$0xff]
        %v2667 = vld [vmem:[#allocation3 + $0x140] sm:$0xff]
        %v2668 = vld [vmem:[#allocation3 + $0x148] sm:$0xff]
        %v2669 = vld [vmem:[#allocation3 + $0x150] sm:$0xff]
        %v2670 = vld [vmem:[#allocation3 + $0x158] sm:$0xff]
        %v2671 = vld [vmem:[#allocation3 + $0x160] sm:$0xff]
        %v2672 = vld [vmem:[#allocation3 + $0x168] sm:$0xff]
        %v2673 = vld [vmem:[#allocation3 + $0x170] sm:$0xff]
        %v2674 = vld [vmem:[#allocation3 + $0x178] sm:$0xff]
        %v2675 = vld [vmem:[#allocation3 + $0x180] sm:$0xff]
        %v2676 = vld [vmem:[#allocation3 + $0x188] sm:$0xff]
        %v2677 = vld [vmem:[#allocation3 + $0x190] sm:$0xff]
        %v2678 = vld [vmem:[#allocation3 + $0x198] sm:$0xff]
        %v2679 = vld [vmem:[#allocation3 + $0x1a0] sm:$0xff]
        %v2680 = vld [vmem:[#allocation3 + $0x1a8] sm:$0xff]
        %v2681 = vld [vmem:[#allocation3 + $0x1b0] sm:$0xff]
        %v2682 = vld [vmem:[#allocation3 + $0x1b8] sm:$0xff]
        %v2683 = vld [vmem:[#allocation3 + $0x1c0] sm:$0xff]
        %v2684 = vld [vmem:[#allocation3 + $0x1c8] sm:$0xff]
        %v2685 = vld [vmem:[#allocation3 + $0x1d0] sm:$0xff]
        %v2686 = vld [vmem:[#allocation3 + $0x1d8] sm:$0xff]
        %v2687 = vld [vmem:[#allocation3 + $0x1e0] sm:$0xff]
        %v2688 = vld [vmem:[#allocation3 + $0x1e8] sm:$0xff]
        %v2689 = vld [vmem:[#allocation3 + $0x1f0] sm:$0xff]
        %v2690 = vld [vmem:[#allocation3 + $0x1f8] sm:$0xff]
        %v2691 = vld [vmem:[#allocation3 + $0x200] sm:$0xff]
        %v2692 = vld [vmem:[#allocation3 + $0x208] sm:$0xff]
        %v2693 = vld [vmem:[#allocation3 + $0x210] sm:$0xff]
        %v2694 = vld [vmem:[#allocation3 + $0x218] sm:$0xff]
        %v2695 = vld [vmem:[#allocation3 + $0x220] sm:$0xff]
        %v2696 = vld [vmem:[#allocation3 + $0x228] sm:$0xff]
        %v2697 = vld [vmem:[#allocation3 + $0x230] sm:$0xff]
        %v2698 = vld [vmem:[#allocation3 + $0x238] sm:$0xff]
        %v2699 = vld [vmem:[#allocation3 + $0x240] sm:$0xff]
        %v2700 = vld [vmem:[#allocation3 + $0x248] sm:$0xff]
        %v2701 = vld [vmem:[#allocation3 + $0x250] sm:$0xff]
        %v2702 = vld [vmem:[#allocation3 + $0x258] sm:$0xff]
        %v2703 = vld [vmem:[#allocation3 + $0x260] sm:$0xff]
        %v2704 = vld [vmem:[#allocation3 + $0x268] sm:$0xff]
        %v2705 = vld [vmem:[#allocation3 + $0x270] sm:$0xff]
        %v2706 = vld [vmem:[#allocation3 + $0x278] sm:$0xff]
        %v2707 = vld [vmem:[#allocation3 + $0x280] sm:$0xff]
        %v2708 = vld [vmem:[#allocation3 + $0x288] sm:$0xff]
        %v2709 = vld [vmem:[#allocation3 + $0x290] sm:$0xff]
        %v2710 = vld [vmem:[#allocation3 + $0x298] sm:$0xff]
        %v2711 = vld [vmem:[#allocation3 + $0x2a0] sm:$0xff]
        %v2712 = vld [vmem:[#allocation3 + $0x2a8] sm:$0xff]
        %v2713 = vld [vmem:[#allocation3 + $0x2b0] sm:$0xff]
        %v2714 = vld [vmem:[#allocation3 + $0x2b8] sm:$0xff]
        %v2715 = vld [vmem:[#allocation3 + $0x2c0] sm:$0xff]
        %v2716 = vld [vmem:[#allocation3 + $0x2c8] sm:$0xff]
        %v2717 = vld [vmem:[%s1] sm:$0xf]
        %v2718 = vld [vmem:[%s1 + $0x4] sm:$0xf]
        %v2719 = vld [vmem:[%s1 + $0x8] sm:$0xf]
        %v2720 = vld [vmem:[%s1 + $0xc] sm:$0xf]
        %v2721 = vld [vmem:[%s1 + $0x10] sm:$0xf]
        %v2722 = vld [vmem:[%s1 + $0x14] sm:$0xf]
        %v2723 = vld [vmem:[%s1 + $0x18] sm:$0xf]
        %v2724 = vld [vmem:[%s1 + $0x1c] sm:$0xf]
        %v2725 = vld [vmem:[%s1 + $0x20] sm:$0xf]
        %v2726 = vld [vmem:[%s1 + $0x24] sm:$0xf]
        %v2727 = vld [vmem:[%s1 + $0x28] sm:$0xf]
        %v2728 = vld [vmem:[%s1 + $0x2c] sm:$0xf]
        %v2729 = vld [vmem:[%s1 + $0x30] sm:$0xf]
        %v2730 = vld [vmem:[%s1 + $0x34] sm:$0xf]
        %v2731 = vld [vmem:[%s1 + $0x38] sm:$0xf]
        %v2732 = vld [vmem:[%s1 + $0x3c] sm:$0xf]
        %v2733 = vld [vmem:[%s1 + $0x40] sm:$0xf]
        %v2734 = vld [vmem:[%s1 + $0x44] sm:$0xf]
        %v2735 = vld [vmem:[%s1 + $0x48] sm:$0xf]
        %v2736 = vld [vmem:[%s1 + $0x4c] sm:$0xf]
        %v2737 = vld [vmem:[%s1 + $0x50] sm:$0xf]
        %v2738 = vld [vmem:[%s1 + $0x54] sm:$0xf]
        %v2739 = vld [vmem:[%s1 + $0x58] sm:$0xf]
        %v2740 = vld [vmem:[%s1 + $0x5c] sm:$0xf]
        %v2741 = vld [vmem:[%s1 + $0x60] sm:$0xf]
        %v2742 = vld [vmem:[%s1 + $0x64] sm:$0xf]
        %v2743 = vld [vmem:[%s1 + $0x68] sm:$0xf]
        %v2744 = vld [vmem:[%s1 + $0x6c] sm:$0xf]
        %v2745 = vld [vmem:[%s1 + $0x70] sm:$0xf]
        %v2746 = vld [vmem:[%s1 + $0x74] sm:$0xf]
        %v2747 = vld [vmem:[%s1 + $0x78] sm:$0xf]
        %v2748 = vld [vmem:[%s1 + $0x7c] sm:$0xf]
        %v2749 = vld [vmem:[%s1 + $0x80] sm:$0xf]
        %v2750 = vld [vmem:[%s1 + $0x84] sm:$0xf]
        %v2751 = vld [vmem:[%s1 + $0x88] sm:$0xf]
        %v2752 = vld [vmem:[%s1 + $0x8c] sm:$0xf]
        %v2753 = vld [vmem:[%s1 + $0x90] sm:$0xf]
        %v2754 = vld [vmem:[%s1 + $0x94] sm:$0xf]
        %v2755 = vld [vmem:[%s1 + $0x98] sm:$0xf]
        %v2756 = vld [vmem:[%s1 + $0x9c] sm:$0xf]
        %v2757 = vld [vmem:[%s1 + $0xa0] sm:$0xf]
        %v2758 = vld [vmem:[%s1 + $0xa4] sm:$0xf]
        %v2759 = vld [vmem:[%s1 + $0xa8] sm:$0xf]
        %v2760 = vld [vmem:[%s1 + $0xac] sm:$0xf]
        %v2761 = vld [vmem:[%s1 + $0xb0] sm:$0xf]
        %v2762 = vld [vmem:[%s1 + $0xb4] sm:$0xf]
        %v2763 = vld [vmem:[%s1 + $0xb8] sm:$0xf]
        %v2764 = vld [vmem:[%s1 + $0xbc] sm:$0xf]
        %v2765 = vld [vmem:[%s1 + $0xc0] sm:$0xf]
        %v2766 = vld [vmem:[%s1 + $0xc4] sm:$0xf]
        %v2767 = vld [vmem:[%s1 + $0xc8] sm:$0xf]
        %v2768 = vld [vmem:[%s1 + $0xcc] sm:$0xf]
        %v2769 = vld [vmem:[%s1 + $0xd0] sm:$0xf]
        %v2770 = vld [vmem:[%s1 + $0xd4] sm:$0xf]
        %v2771 = vld [vmem:[%s1 + $0xd8] sm:$0xf]
        %v2772 = vld [vmem:[%s1 + $0xdc] sm:$0xf]
        %v2773 = vld [vmem:[%s1 + $0xe0] sm:$0xf]
        %v2774 = vld [vmem:[%s1 + $0xe4] sm:$0xf]
        %v2775 = vld [vmem:[%s1 + $0xe8] sm:$0xf]
        %v2776 = vld [vmem:[%s1 + $0xec] sm:$0xf]
        %v2777 = vld [vmem:[%s1 + $0xf0] sm:$0xf]
        %v2778 = vld [vmem:[%s1 + $0xf4] sm:$0xf]
        %v2779 = vld [vmem:[%s1 + $0xf8] sm:$0xf]
        %v2780 = vld [vmem:[%s1 + $0xfc] sm:$0xf]
        %v2781 = vld [vmem:[%s1 + $0x100] sm:$0xf]
        %v2782 = vld [vmem:[%s1 + $0x104] sm:$0xf]
        %v2783 = vld [vmem:[%s1 + $0x108] sm:$0xf]
        %v2784 = vld [vmem:[%s1 + $0x10c] sm:$0xf]
        %v2785 = vld [vmem:[%s1 + $0x110] sm:$0xf]
        %v2786 = vld [vmem:[%s1 + $0x114] sm:$0xf]
        %v2787 = vld [vmem:[%s1 + $0x118] sm:$0xf]
        %v2788 = vld [vmem:[%s1 + $0x11c] sm:$0xf]
        %v2861 = vunpack.c.l.b16 %v2717
        %v2862 = vunpack.c.l.b16 %v2718
        %v2863 = vunpack.c.l.b16 %v2719
        %v2864 = vunpack.c.l.b16 %v2720
        %v2865 = vunpack.c.l.b16 %v2721
        %v2866 = vunpack.c.l.b16 %v2722
        %v2867 = vunpack.c.l.b16 %v2723
        %v2868 = vunpack.c.l.b16 %v2724
        %v2869 = vunpack.c.l.b16 %v2725
        %v2870 = vunpack.c.l.b16 %v2726
        %v2871 = vunpack.c.l.b16 %v2727
        %v2872 = vunpack.c.l.b16 %v2728
        %v2873 = vunpack.c.l.b16 %v2729
        %v2874 = vunpack.c.l.b16 %v2730
        %v2875 = vunpack.c.l.b16 %v2731
        %v2876 = vunpack.c.l.b16 %v2732
        %v2877 = vunpack.c.l.b16 %v2733
        %v2878 = vunpack.c.l.b16 %v2734
        %v2879 = vunpack.c.l.b16 %v2735
        %v2880 = vunpack.c.l.b16 %v2736
        %v2881 = vunpack.c.l.b16 %v2737
        %v2882 = vunpack.c.l.b16 %v2738
        %v2883 = vunpack.c.l.b16 %v2739
        %v2884 = vunpack.c.l.b16 %v2740
        %v2885 = vunpack.c.l.b16 %v2741
        %v2886 = vunpack.c.l.b16 %v2742
        %v2887 = vunpack.c.l.b16 %v2743
        %v2888 = vunpack.c.l.b16 %v2744
        %v2889 = vunpack.c.l.b16 %v2745
        %v2890 = vunpack.c.l.b16 %v2746
        %v2891 = vunpack.c.l.b16 %v2747
        %v2892 = vunpack.c.l.b16 %v2748
        %v2893 = vunpack.c.l.b16 %v2749
        %v2894 = vunpack.c.l.b16 %v2750
        %v2895 = vunpack.c.l.b16 %v2751
        %v2896 = vunpack.c.l.b16 %v2752
        %v2897 = vunpack.c.l.b16 %v2753
        %v2898 = vunpack.c.l.b16 %v2754
        %v2899 = vunpack.c.l.b16 %v2755
        %v2900 = vunpack.c.l.b16 %v2756
        %v2901 = vunpack.c.l.b16 %v2757
        %v2902 = vunpack.c.l.b16 %v2758
        %v2903 = vunpack.c.l.b16 %v2759
        %v2904 = vunpack.c.l.b16 %v2760
        %v2905 = vunpack.c.l.b16 %v2761
        %v2906 = vunpack.c.l.b16 %v2762
        %v2907 = vunpack.c.l.b16 %v2763
        %v2908 = vunpack.c.l.b16 %v2764
        %v2909 = vunpack.c.l.b16 %v2765
        %v2910 = vunpack.c.l.b16 %v2766
        %v2911 = vunpack.c.l.b16 %v2767
        %v2912 = vunpack.c.l.b16 %v2768
        %v2913 = vunpack.c.l.b16 %v2769
        %v2914 = vunpack.c.l.b16 %v2770
        %v2915 = vunpack.c.l.b16 %v2771
        %v2916 = vunpack.c.l.b16 %v2772
        %v2917 = vunpack.c.l.b16 %v2773
        %v2918 = vunpack.c.l.b16 %v2774
        %v2919 = vunpack.c.l.b16 %v2775
        %v2920 = vunpack.c.l.b16 %v2776
        %v2921 = vunpack.c.l.b16 %v2777
        %v2922 = vunpack.c.l.b16 %v2778
        %v2923 = vunpack.c.l.b16 %v2779
        %v2924 = vunpack.c.l.b16 %v2780
        %v2925 = vunpack.c.l.b16 %v2781
        %v2926 = vunpack.c.l.b16 %v2782
        %v2927 = vunpack.c.l.b16 %v2783
        %v2928 = vunpack.c.l.b16 %v2784
        %v2929 = vunpack.c.l.b16 %v2785
        %v2930 = vunpack.c.l.b16 %v2786
        %v2931 = vunpack.c.l.b16 %v2787
        %v2932 = vunpack.c.l.b16 %v2788
        %v2933 = vpack.c.b16 %v2862, %v2861
        %v2934 = vpack.c.b16 %v2864, %v2863
        %v2935 = vpack.c.b16 %v2866, %v2865
        %v2936 = vpack.c.b16 %v2868, %v2867
        %v2937 = vpack.c.b16 %v2870, %v2869
        %v2938 = vpack.c.b16 %v2872, %v2871
        %v2939 = vpack.c.b16 %v2874, %v2873
        %v2940 = vpack.c.b16 %v2876, %v2875
        %v2941 = vpack.c.b16 %v2878, %v2877
        %v2942 = vpack.c.b16 %v2880, %v2879
        %v2943 = vpack.c.b16 %v2882, %v2881
        %v2944 = vpack.c.b16 %v2884, %v2883
        %v2945 = vpack.c.b16 %v2886, %v2885
        %v2946 = vpack.c.b16 %v2888, %v2887
        %v2947 = vpack.c.b16 %v2890, %v2889
        %v2948 = vpack.c.b16 %v2892, %v2891
        %v2949 = vpack.c.b16 %v2894, %v2893
        %v2950 = vpack.c.b16 %v2896, %v2895
        %v2951 = vpack.c.b16 %v2898, %v2897
        %v2952 = vpack.c.b16 %v2900, %v2899
        %v2953 = vpack.c.b16 %v2902, %v2901
        %v2954 = vpack.c.b16 %v2904, %v2903
        %v2955 = vpack.c.b16 %v2906, %v2905
        %v2956 = vpack.c.b16 %v2908, %v2907
        %v2957 = vpack.c.b16 %v2910, %v2909
        %v2958 = vpack.c.b16 %v2912, %v2911
        %v2959 = vpack.c.b16 %v2914, %v2913
        %v2960 = vpack.c.b16 %v2916, %v2915
        %v2961 = vpack.c.b16 %v2918, %v2917
        %v2962 = vpack.c.b16 %v2920, %v2919
        %v2963 = vpack.c.b16 %v2922, %v2921
        %v2964 = vpack.c.b16 %v2924, %v2923
        %v2965 = vpack.c.b16 %v2926, %v2925
        %v2966 = vpack.c.b16 %v2928, %v2927
        %v2967 = vpack.c.b16 %v2930, %v2929
        %v2968 = vpack.c.b16 %v2932, %v2931
        %v3006 = vsel %vm456, %v2631, 0
        %v3009 = vsel %vm456, %v2636, 0
        %v3012 = vsel %vm456, %v2641, 0
        %v3015 = vsel %vm456, %v2646, 0
        %v3018 = vsel %vm456, %v2651, 0
        %v3021 = vsel %vm456, %v2656, 0
        %v3024 = vsel %vm456, %v2661, 0
        %v3027 = vsel %vm456, %v2666, 0
        %v3030 = vsel %vm456, %v2671, 0
        %v3033 = vsel %vm456, %v2676, 0
        %v3036 = vsel %vm456, %v2681, 0
        %v3039 = vsel %vm456, %v2686, 0
        %v3042 = vsel %vm456, %v2691, 0
        %v3045 = vsel %vm456, %v2696, 0
        %v3048 = vsel %vm456, %v2701, 0
        %v3051 = vsel %vm456, %v2706, 0
        %v3054 = vsel %vm456, %v2711, 0
        %v3057 = vsel %vm456, %v2716, 0
        %3059 = vmatprep.subr.bf16.mxu0 0
        %3060 = vmatpush1.bf16.msra.mxu0 %v2933
        %3061 = vmatprep.subr.bf16.mxu0 0
        %3062 = vmatpush1.bf16.msra.mxu0 %v2934
        %3063 = vmatprep.subr.bf16.mxu0 0
        %3064 = vmatpush1.bf16.msra.mxu0 %v2935
        %3065 = vmatprep.subr.bf16.mxu0 0
        %3066 = vmatpush1.bf16.msra.mxu0 %v2936
        %3067 = vmatprep.subr.bf16.mxu0 0
        %3068 = vmatpush1.bf16.msra.mxu0 %v2937
        %3069 = vmatprep.subr.bf16.mxu0 0
        %3070 = vmatpush1.bf16.msra.mxu0 %v2938
        %3071 = vmatprep.subr.bf16.mxu0 0
        %3072 = vmatpush1.bf16.msra.mxu0 %v2939
        %3073 = vmatprep.subr.bf16.mxu0 0
        %3074 = vmatpush1.bf16.msra.mxu0 %v2940
        %3075 = vmatprep.subr.bf16.mxu0 0
        %3076 = vmatpush1.bf16.msra.mxu0 %v2941
        %3077 = vmatprep.subr.bf16.mxu0 0
        %3078 = vmatpush1.bf16.msra.mxu0 %v2942
        %3079 = vmatprep.subr.bf16.mxu0 0
        %3080 = vmatpush1.bf16.msra.mxu0 %v2943
        %3081 = vmatprep.subr.bf16.mxu0 0
        %3082 = vmatpush1.bf16.msra.mxu0 %v2944
        %3083 = vmatprep.subr.bf16.mxu0 0
        %3084 = vmatpush1.bf16.msra.mxu0 %v2945
        %3085 = vmatprep.subr.bf16.mxu0 0
        %3086 = vmatpush1.bf16.msra.mxu0 %v2946
        %3087 = vmatprep.subr.bf16.mxu0 0
        %3088 = vmatpush1.bf16.msra.mxu0 %v2947
        %3089 = vmatprep.subr.bf16.mxu0 0
        %3090 = vmatpush1.bf16.msra.mxu0 %v2948
        %3091 = vmatprep.mubr.bf16.mxu0 %v2628
        %3092 = vmatmul.mubr.bf16.gmra.mrb[0].mxu0 %v2627
        %v3093 = vpop.f32.mrb[0].mxu0
        %v3094 = vadd.f32 0.0, %v3093
        %v3095 = vpop.f32.mrb[0].mxu0
        %v3096 = vpop.f32.mrb[0].mxu0
        %v3097 = vadd.f32 0.0, %v3096
        %v3098 = vpop.f32.mrb[0].mxu0
        %3099 = vmatprep.mubr.bf16.mxu0 %v2633
        %3100 = vmatmul.mubr.bf16.gmra.mrb[0].mxu0 %v2632
        %v3101 = vpop.f32.mrb[0].mxu0
        %v3102 = vadd.f32 0.0, %v3101
        %v3103 = vpop.f32.mrb[0].mxu0
        %v3104 = vpop.f32.mrb[0].mxu0
        %v3105 = vadd.f32 0.0, %v3104
        %v3106 = vpop.f32.mrb[0].mxu0
        %3107 = vmatprep.mubr.bf16.mxu0 %v2638
        %3108 = vmatmul.mubr.bf16.gmra.mrb[0].mxu0 %v2637
        %v3109 = vpop.f32.mrb[0].mxu0
        %v3110 = vadd.f32 0.0, %v3109
        %v3111 = vpop.f32.mrb[0].mxu0
        %v3112 = vpop.f32.mrb[0].mxu0
        %v3113 = vadd.f32 0.0, %v3112
        %v3114 = vpop.f32.mrb[0].mxu0
        %3115 = vmatprep.mubr.bf16.mxu0 %v2643
        %3116 = vmatmul.mubr.bf16.gmra.mrb[0].mxu0 %v2642
        %v3117 = vpop.f32.mrb[0].mxu0
        %v3118 = vadd.f32 0.0, %v3117
        %v3119 = vpop.f32.mrb[0].mxu0
        %v3120 = vpop.f32.mrb[0].mxu0
        %v3121 = vadd.f32 0.0, %v3120
        %v3122 = vpop.f32.mrb[0].mxu0
        %3123 = vmatprep.mubr.bf16.mxu0 %v2648
        %3124 = vmatmul.mubr.bf16.gmra.mrb[0].mxu0 %v2647
        %v3125 = vpop.f32.mrb[0].mxu0
        %v3126 = vadd.f32 0.0, %v3125
        %v3127 = vpop.f32.mrb[0].mxu0
        %v3128 = vpop.f32.mrb[0].mxu0
        %v3129 = vadd.f32 0.0, %v3128
        %v3130 = vpop.f32.mrb[0].mxu0
        %3131 = vmatprep.mubr.bf16.mxu0 %v2653
        %3132 = vmatmul.mubr.bf16.gmra.mrb[0].mxu0 %v2652
        %v3133 = vpop.f32.mrb[0].mxu0
        %v3134 = vadd.f32 0.0, %v3133
        %v3135 = vpop.f32.mrb[0].mxu0
        %v3136 = vpop.f32.mrb[0].mxu0
        %v3137 = vadd.f32 0.0, %v3136
        %v3138 = vpop.f32.mrb[0].mxu0
        %3139 = vmatprep.mubr.bf16.mxu0 %v2658
        %3140 = vmatmul.mubr.bf16.gmra.mrb[0].mxu0 %v2657
        %v3141 = vpop.f32.mrb[0].mxu0
        %v3142 = vadd.f32 0.0, %v3141
        %v3143 = vpop.f32.mrb[0].mxu0
        %v3144 = vpop.f32.mrb[0].mxu0
        %v3145 = vadd.f32 0.0, %v3144
        %v3146 = vpop.f32.mrb[0].mxu0
        %3147 = vmatprep.mubr.bf16.mxu0 %v2663
        %3148 = vmatmul.mubr.bf16.gmra.mrb[0].mxu0 %v2662
        %v3149 = vpop.f32.mrb[0].mxu0
        %v3150 = vadd.f32 0.0, %v3149
        %v3151 = vpop.f32.mrb[0].mxu0
        %v3152 = vpop.f32.mrb[0].mxu0
        %v3153 = vadd.f32 0.0, %v3152
        %v3154 = vpop.f32.mrb[0].mxu0
        %3155 = vmatprep.mubr.bf16.mxu0 %v2668
        %3156 = vmatmul.mubr.bf16.gmra.mrb[0].mxu0 %v2667
        %v3157 = vpop.f32.mrb[0].mxu0
        %v3158 = vadd.f32 0.0, %v3157
        %v3159 = vpop.f32.mrb[0].mxu0
        %v3160 = vpop.f32.mrb[0].mxu0
        %v3161 = vadd.f32 0.0, %v3160
        %v3162 = vpop.f32.mrb[0].mxu0
        %3163 = vmatprep.mubr.bf16.mxu0 %v2673
        %3164 = vmatmul.mubr.bf16.gmra.mrb[0].mxu0 %v2672
        %v3165 = vpop.f32.mrb[0].mxu0
        %v3166 = vadd.f32 0.0, %v3165
        %v3167 = vpop.f32.mrb[0].mxu0
        %v3168 = vpop.f32.mrb[0].mxu0
        %v3169 = vadd.f32 0.0, %v3168
        %v3170 = vpop.f32.mrb[0].mxu0
        %3171 = vmatprep.mubr.bf16.mxu0 %v2678
        %3172 = vmatmul.mubr.bf16.gmra.mrb[0].mxu0 %v2677
        %v3173 = vpop.f32.mrb[0].mxu0
        %v3174 = vadd.f32 0.0, %v3173
        %v3175 = vpop.f32.mrb[0].mxu0
        %v3176 = vpop.f32.mrb[0].mxu0
        %v3177 = vadd.f32 0.0, %v3176
        %v3178 = vpop.f32.mrb[0].mxu0
        %3179 = vmatprep.mubr.bf16.mxu0 %v2683
        %3180 = vmatmul.mubr.bf16.gmra.mrb[0].mxu0 %v2682
        %v3181 = vpop.f32.mrb[0].mxu0
        %v3182 = vadd.f32 0.0, %v3181
        %v3183 = vpop.f32.mrb[0].mxu0
        %v3184 = vpop.f32.mrb[0].mxu0
        %v3185 = vadd.f32 0.0, %v3184
        %v3186 = vpop.f32.mrb[0].mxu0
        %3187 = vmatprep.mubr.bf16.mxu0 %v2688
        %3188 = vmatmul.mubr.bf16.gmra.mrb[0].mxu0 %v2687
        %v3189 = vpop.f32.mrb[0].mxu0
        %v3190 = vadd.f32 0.0, %v3189
        %v3191 = vpop.f32.mrb[0].mxu0
        %v3192 = vpop.f32.mrb[0].mxu0
        %v3193 = vadd.f32 0.0, %v3192
        %v3194 = vpop.f32.mrb[0].mxu0
        %3195 = vmatprep.mubr.bf16.mxu0 %v2693
        %3196 = vmatmul.mubr.bf16.gmra.mrb[0].mxu0 %v2692
        %v3197 = vpop.f32.mrb[0].mxu0
        %v3198 = vadd.f32 0.0, %v3197
        %v3199 = vpop.f32.mrb[0].mxu0
        %v3200 = vpop.f32.mrb[0].mxu0
        %v3201 = vadd.f32 0.0, %v3200
        %v3202 = vpop.f32.mrb[0].mxu0
        %3203 = vmatprep.mubr.bf16.mxu0 %v2698
        %3204 = vmatmul.mubr.bf16.gmra.mrb[0].mxu0 %v2697
        %v3205 = vpop.f32.mrb[0].mxu0
        %v3206 = vadd.f32 0.0, %v3205
        %v3207 = vpop.f32.mrb[0].mxu0
        %v3208 = vpop.f32.mrb[0].mxu0
        %v3209 = vadd.f32 0.0, %v3208
        %v3210 = vpop.f32.mrb[0].mxu0
        %3211 = vmatprep.mubr.bf16.mxu0 %v2703
        %3212 = vmatmul.mubr.bf16.gmra.mrb[0].mxu0 %v2702
        %v3213 = vpop.f32.mrb[0].mxu0
        %v3214 = vadd.f32 0.0, %v3213
        %v3215 = vpop.f32.mrb[0].mxu0
        %v3216 = vpop.f32.mrb[0].mxu0
        %v3217 = vadd.f32 0.0, %v3216
        %v3218 = vpop.f32.mrb[0].mxu0
        %3219 = vmatprep.mubr.bf16.mxu0 %v2708
        %3220 = vmatmul.mubr.bf16.gmra.mrb[0].mxu0 %v2707
        %v3221 = vpop.f32.mrb[0].mxu0
        %v3222 = vadd.f32 0.0, %v3221
        %v3223 = vpop.f32.mrb[0].mxu0
        %v3224 = vpop.f32.mrb[0].mxu0
        %v3225 = vadd.f32 0.0, %v3224
        %v3226 = vpop.f32.mrb[0].mxu0
        %3227 = vmatprep.mubr.bf16.mxu0 %v2713
        %3228 = vmatmul.mubr.bf16.gmra.mrb[0].mxu0 %v2712
        %v3229 = vpop.f32.mrb[0].mxu0
        %v3230 = vadd.f32 0.0, %v3229
        %v3231 = vpop.f32.mrb[0].mxu0
        %v3232 = vpop.f32.mrb[0].mxu0
        %v3233 = vadd.f32 0.0, %v3232
        %v3234 = vpop.f32.mrb[0].mxu0
        %3235 = vdwg.mxu0
        %3236 = vmatprep.subr.bf16.mxu0 0
        %3237 = vmatpush1.bf16.msra.mxu0 %v2949
        %3238 = vmatprep.subr.bf16.mxu0 0
        %3239 = vmatpush1.bf16.msra.mxu0 %v2950
        %3240 = vmatprep.subr.bf16.mxu0 0
        %3241 = vmatpush1.bf16.msra.mxu0 %v2951
        %3242 = vmatprep.subr.bf16.mxu0 0
        %3243 = vmatpush1.bf16.msra.mxu0 %v2952
        %3244 = vmatprep.subr.bf16.mxu0 0
        %3245 = vmatpush1.bf16.msra.mxu0 %v2953
        %3246 = vmatprep.subr.bf16.mxu0 0
        %3247 = vmatpush1.bf16.msra.mxu0 %v2954
        %3248 = vmatprep.subr.bf16.mxu0 0
        %3249 = vmatpush1.bf16.msra.mxu0 %v2955
        %3250 = vmatprep.subr.bf16.mxu0 0
        %3251 = vmatpush1.bf16.msra.mxu0 %v2956
        %3252 = vmatprep.subr.bf16.mxu0 0
        %3253 = vmatpush1.bf16.msra.mxu0 %v2957
        %3254 = vmatprep.subr.bf16.mxu0 0
        %3255 = vmatpush1.bf16.msra.mxu0 %v2958
        %3256 = vmatprep.subr.bf16.mxu0 0
        %3257 = vmatpush1.bf16.msra.mxu0 %v2959
        %3258 = vmatprep.subr.bf16.mxu0 0
        %3259 = vmatpush1.bf16.msra.mxu0 %v2960
        %3260 = vmatprep.subr.bf16.mxu0 0
        %3261 = vmatpush1.bf16.msra.mxu0 %v2961
        %3262 = vmatprep.subr.bf16.mxu0 0
        %3263 = vmatpush1.bf16.msra.mxu0 %v2962
        %3264 = vmatprep.subr.bf16.mxu0 0
        %3265 = vmatpush1.bf16.msra.mxu0 %v2963
        %3266 = vmatprep.subr.bf16.mxu0 0
        %3267 = vmatpush1.bf16.msra.mxu0 %v2964
        %3268 = vmatprep.mubr.bf16.mxu0 %v2630
        %3269 = vmatmul.mubr.bf16.gmra.mrb[0].mxu0 %v2629
        %v3270 = vpop.f32.mrb[0].mxu0
        %v3271 = vadd.f32 %v3094, %v3270
        %v3272 = vpop.f32.mrb[0].mxu0
        %v3273 = vpop.f32.mrb[0].mxu0
        %v3274 = vadd.f32 %v3097, %v3273
        %v3275 = vpop.f32.mrb[0].mxu0
        %3276 = vmatprep.mubr.bf16.mxu0 %v2635
        %3277 = vmatmul.mubr.bf16.gmra.mrb[0].mxu0 %v2634
        %v3278 = vpop.f32.mrb[0].mxu0
        %v3279 = vadd.f32 %v3102, %v3278
        %v3280 = vpop.f32.mrb[0].mxu0
        %v3281 = vpop.f32.mrb[0].mxu0
        %v3282 = vadd.f32 %v3105, %v3281
        %v3283 = vpop.f32.mrb[0].mxu0
        %3284 = vmatprep.mubr.bf16.mxu0 %v2640
        %3285 = vmatmul.mubr.bf16.gmra.mrb[0].mxu0 %v2639
        %v3286 = vpop.f32.mrb[0].mxu0
        %v3287 = vadd.f32 %v3110, %v3286
        %v3288 = vpop.f32.mrb[0].mxu0
        %v3289 = vpop.f32.mrb[0].mxu0
        %v3290 = vadd.f32 %v3113, %v3289
        %v3291 = vpop.f32.mrb[0].mxu0
        %3292 = vmatprep.mubr.bf16.mxu0 %v2645
        %3293 = vmatmul.mubr.bf16.gmra.mrb[0].mxu0 %v2644
        %v3294 = vpop.f32.mrb[0].mxu0
        %v3295 = vadd.f32 %v3118, %v3294
        %v3296 = vpop.f32.mrb[0].mxu0
        %v3297 = vpop.f32.mrb[0].mxu0
        %v3298 = vadd.f32 %v3121, %v3297
        %v3299 = vpop.f32.mrb[0].mxu0
        %3300 = vmatprep.mubr.bf16.mxu0 %v2650
        %3301 = vmatmul.mubr.bf16.gmra.mrb[0].mxu0 %v2649
        %v3302 = vpop.f32.mrb[0].mxu0
        %v3303 = vadd.f32 %v3126, %v3302
        %v3304 = vpop.f32.mrb[0].mxu0
        %v3305 = vpop.f32.mrb[0].mxu0
        %v3306 = vadd.f32 %v3129, %v3305
        %v3307 = vpop.f32.mrb[0].mxu0
        %3308 = vmatprep.mubr.bf16.mxu0 %v2655
        %3309 = vmatmul.mubr.bf16.gmra.mrb[0].mxu0 %v2654
        %v3310 = vpop.f32.mrb[0].mxu0
        %v3311 = vadd.f32 %v3134, %v3310
        %v3312 = vpop.f32.mrb[0].mxu0
        %v3313 = vpop.f32.mrb[0].mxu0
        %v3314 = vadd.f32 %v3137, %v3313
        %v3315 = vpop.f32.mrb[0].mxu0
        %3316 = vmatprep.mubr.bf16.mxu0 %v2660
        %3317 = vmatmul.mubr.bf16.gmra.mrb[0].mxu0 %v2659
        %v3318 = vpop.f32.mrb[0].mxu0
        %v3319 = vadd.f32 %v3142, %v3318
        %v3320 = vpop.f32.mrb[0].mxu0
        %v3321 = vpop.f32.mrb[0].mxu0
        %v3322 = vadd.f32 %v3145, %v3321
        %v3323 = vpop.f32.mrb[0].mxu0
        %3324 = vmatprep.mubr.bf16.mxu0 %v2665
        %3325 = vmatmul.mubr.bf16.gmra.mrb[0].mxu0 %v2664
        %v3326 = vpop.f32.mrb[0].mxu0
        %v3327 = vadd.f32 %v3150, %v3326
        %v3328 = vpop.f32.mrb[0].mxu0
        %v3329 = vpop.f32.mrb[0].mxu0
        %v3330 = vadd.f32 %v3153, %v3329
        %v3331 = vpop.f32.mrb[0].mxu0
        %3332 = vmatprep.mubr.bf16.mxu0 %v2670
        %3333 = vmatmul.mubr.bf16.gmra.mrb[0].mxu0 %v2669
        %v3334 = vpop.f32.mrb[0].mxu0
        %v3335 = vadd.f32 %v3158, %v3334
        %v3336 = vpop.f32.mrb[0].mxu0
        %v3337 = vpop.f32.mrb[0].mxu0
        %v3338 = vadd.f32 %v3161, %v3337
        %v3339 = vpop.f32.mrb[0].mxu0
        %3340 = vmatprep.mubr.bf16.mxu0 %v2675
        %3341 = vmatmul.mubr.bf16.gmra.mrb[0].mxu0 %v2674
        %v3342 = vpop.f32.mrb[0].mxu0
        %v3343 = vadd.f32 %v3166, %v3342
        %v3344 = vpop.f32.mrb[0].mxu0
        %v3345 = vpop.f32.mrb[0].mxu0
        %v3346 = vadd.f32 %v3169, %v3345
        %v3347 = vpop.f32.mrb[0].mxu0
        %3348 = vmatprep.mubr.bf16.mxu0 %v2680
        %3349 = vmatmul.mubr.bf16.gmra.mrb[0].mxu0 %v2679
        %v3350 = vpop.f32.mrb[0].mxu0
        %v3351 = vadd.f32 %v3174, %v3350
        %v3352 = vpop.f32.mrb[0].mxu0
        %v3353 = vpop.f32.mrb[0].mxu0
        %v3354 = vadd.f32 %v3177, %v3353
        %v3355 = vpop.f32.mrb[0].mxu0
        %3356 = vmatprep.mubr.bf16.mxu0 %v2685
        %3357 = vmatmul.mubr.bf16.gmra.mrb[0].mxu0 %v2684
        %v3358 = vpop.f32.mrb[0].mxu0
        %v3359 = vadd.f32 %v3182, %v3358
        %v3360 = vpop.f32.mrb[0].mxu0
        %v3361 = vpop.f32.mrb[0].mxu0
        %v3362 = vadd.f32 %v3185, %v3361
        %v3363 = vpop.f32.mrb[0].mxu0
        %3364 = vmatprep.mubr.bf16.mxu0 %v2690
        %3365 = vmatmul.mubr.bf16.gmra.mrb[0].mxu0 %v2689
        %v3366 = vpop.f32.mrb[0].mxu0
        %v3367 = vadd.f32 %v3190, %v3366
        %v3368 = vpop.f32.mrb[0].mxu0
        %v3369 = vpop.f32.mrb[0].mxu0
        %v3370 = vadd.f32 %v3193, %v3369
        %v3371 = vpop.f32.mrb[0].mxu0
        %3372 = vmatprep.mubr.bf16.mxu0 %v2695
        %3373 = vmatmul.mubr.bf16.gmra.mrb[0].mxu0 %v2694
        %v3374 = vpop.f32.mrb[0].mxu0
        %v3375 = vadd.f32 %v3198, %v3374
        %v3376 = vpop.f32.mrb[0].mxu0
        %v3377 = vpop.f32.mrb[0].mxu0
        %v3378 = vadd.f32 %v3201, %v3377
        %v3379 = vpop.f32.mrb[0].mxu0
        %3380 = vmatprep.mubr.bf16.mxu0 %v2700
        %3381 = vmatmul.mubr.bf16.gmra.mrb[0].mxu0 %v2699
        %v3382 = vpop.f32.mrb[0].mxu0
        %v3383 = vadd.f32 %v3206, %v3382
        %v3384 = vpop.f32.mrb[0].mxu0
        %v3385 = vpop.f32.mrb[0].mxu0
        %v3386 = vadd.f32 %v3209, %v3385
        %v3387 = vpop.f32.mrb[0].mxu0
        %3388 = vmatprep.mubr.bf16.mxu0 %v2705
        %3389 = vmatmul.mubr.bf16.gmra.mrb[0].mxu0 %v2704
        %v3390 = vpop.f32.mrb[0].mxu0
        %v3391 = vadd.f32 %v3214, %v3390
        %v3392 = vpop.f32.mrb[0].mxu0
        %v3393 = vpop.f32.mrb[0].mxu0
        %v3394 = vadd.f32 %v3217, %v3393
        %v3395 = vpop.f32.mrb[0].mxu0
        %3396 = vmatprep.mubr.bf16.mxu0 %v2710
        %3397 = vmatmul.mubr.bf16.gmra.mrb[0].mxu0 %v2709
        %v3398 = vpop.f32.mrb[0].mxu0
        %v3399 = vadd.f32 %v3222, %v3398
        %v3400 = vpop.f32.mrb[0].mxu0
        %v3401 = vpop.f32.mrb[0].mxu0
        %v3402 = vadd.f32 %v3225, %v3401
        %v3403 = vpop.f32.mrb[0].mxu0
        %3404 = vmatprep.mubr.bf16.mxu0 %v2715
        %3405 = vmatmul.mubr.bf16.gmra.mrb[0].mxu0 %v2714
        %v3406 = vpop.f32.mrb[0].mxu0
        %v3407 = vadd.f32 %v3230, %v3406
        %v3408 = vpop.f32.mrb[0].mxu0
        %v3409 = vpop.f32.mrb[0].mxu0
        %v3410 = vadd.f32 %v3233, %v3409
        %v3411 = vpop.f32.mrb[0].mxu0
        %3412 = vdwg.mxu0
        %3413 = vmatprep.subr.bf16.mxu0 0
        %3414 = vmatpush1.bf16.msra.mxu0 %v2965
        %3415 = vmatprep.subr.bf16.mxu0 0
        %3416 = vmatpush1.bf16.msra.mxu0 %v2966
        %3417 = vmatprep.subr.bf16.mxu0 0
        %3418 = vmatpush1.bf16.msra.mxu0 %v2967
        %3419 = vmatprep.subr.bf16.mxu0 0
        %3420 = vmatpush1.bf16.msra.mxu0 %v2968
        %3421 = vmatprep.subr.bf16.mxu0 0
        %3422 = vmatpush1.bf16.msra.mxu0 0
        %3423 = vmatprep.subr.bf16.mxu0 0
        %3424 = vmatpush1.bf16.msra.mxu0 0
        %3425 = vmatprep.subr.bf16.mxu0 0
        %3426 = vmatpush1.bf16.msra.mxu0 0
        %3427 = vmatprep.subr.bf16.mxu0 0
        %3428 = vmatpush1.bf16.msra.mxu0 0
        %3429 = vmatprep.subr.bf16.mxu0 0
        %3430 = vmatpush1.bf16.msra.mxu0 0
        %3431 = vmatprep.subr.bf16.mxu0 0
        %3432 = vmatpush1.bf16.msra.mxu0 0
        %3433 = vmatprep.subr.bf16.mxu0 0
        %3434 = vmatpush1.bf16.msra.mxu0 0
        %3435 = vmatprep.subr.bf16.mxu0 0
        %3436 = vmatpush1.bf16.msra.mxu0 0
        %3437 = vmatprep.subr.bf16.mxu0 0
        %3438 = vmatpush1.bf16.msra.mxu0 0
        %3439 = vmatprep.subr.bf16.mxu0 0
        %3440 = vmatpush1.bf16.msra.mxu0 0
        %3441 = vmatprep.subr.bf16.mxu0 0
        %3442 = vmatpush1.bf16.msra.mxu0 0
        %3443 = vmatprep.subr.bf16.mxu0 0
        %3444 = vmatpush1.bf16.msra.mxu0 0
        %3445 = vmatprep.mubr.bf16.mxu0 0
        %3446 = vmatmul.mubr.bf16.gmra.mrb[0].mxu0 %v3006
        %v3447 = vpop.f32.mrb[0].mxu0
        %v3448 = vadd.f32 %v3271, %v3447
        %v3449 = vpop.f32.mrb[0].mxu0
        %v3450 = vpop.f32.mrb[0].mxu0
        %v3451 = vadd.f32 %v3274, %v3450
        %v3452 = vpop.f32.mrb[0].mxu0
        %3453 = vmatprep.mubr.bf16.mxu0 0
        %3454 = vmatmul.mubr.bf16.gmra.mrb[0].mxu0 %v3009
        %v3455 = vpop.f32.mrb[0].mxu0
        %v3456 = vadd.f32 %v3279, %v3455
        %v3457 = vpop.f32.mrb[0].mxu0
        %v3458 = vpop.f32.mrb[0].mxu0
        %v3459 = vadd.f32 %v3282, %v3458
        %v3460 = vpop.f32.mrb[0].mxu0
        %3461 = vmatprep.mubr.bf16.mxu0 0
        %3462 = vmatmul.mubr.bf16.gmra.mrb[0].mxu0 %v3012
        %v3463 = vpop.f32.mrb[0].mxu0
        %v3464 = vadd.f32 %v3287, %v3463
        %v3465 = vpop.f32.mrb[0].mxu0
        %v3466 = vpop.f32.mrb[0].mxu0
        %v3467 = vadd.f32 %v3290, %v3466
        %v3468 = vpop.f32.mrb[0].mxu0
        %3469 = vmatprep.mubr.bf16.mxu0 0
        %3470 = vmatmul.mubr.bf16.gmra.mrb[0].mxu0 %v3015
        %v3471 = vpop.f32.mrb[0].mxu0
        %v3472 = vadd.f32 %v3295, %v3471
        %v3473 = vpop.f32.mrb[0].mxu0
        %v3474 = vpop.f32.mrb[0].mxu0
        %v3475 = vadd.f32 %v3298, %v3474
        %v3476 = vpop.f32.mrb[0].mxu0
        %3477 = vmatprep.mubr.bf16.mxu0 0
        %3478 = vmatmul.mubr.bf16.gmra.mrb[0].mxu0 %v3018
        %v3479 = vpop.f32.mrb[0].mxu0
        %v3480 = vadd.f32 %v3303, %v3479
        %v3481 = vpop.f32.mrb[0].mxu0
        %v3482 = vpop.f32.mrb[0].mxu0
        %v3483 = vadd.f32 %v3306, %v3482
        %v3484 = vpop.f32.mrb[0].mxu0
        %3485 = vmatprep.mubr.bf16.mxu0 0
        %3486 = vmatmul.mubr.bf16.gmra.mrb[0].mxu0 %v3021
        %v3487 = vpop.f32.mrb[0].mxu0
        %v3488 = vadd.f32 %v3311, %v3487
        %v3489 = vpop.f32.mrb[0].mxu0
        %v3490 = vpop.f32.mrb[0].mxu0
        %v3491 = vadd.f32 %v3314, %v3490
        %v3492 = vpop.f32.mrb[0].mxu0
        %3493 = vmatprep.mubr.bf16.mxu0 0
        %3494 = vmatmul.mubr.bf16.gmra.mrb[0].mxu0 %v3024
        %v3495 = vpop.f32.mrb[0].mxu0
        %v3496 = vadd.f32 %v3319, %v3495
        %v3497 = vpop.f32.mrb[0].mxu0
        %v3498 = vpop.f32.mrb[0].mxu0
        %v3499 = vadd.f32 %v3322, %v3498
        %v3500 = vpop.f32.mrb[0].mxu0
        %3501 = vmatprep.mubr.bf16.mxu0 0
        %3502 = vmatmul.mubr.bf16.gmra.mrb[0].mxu0 %v3027
        %v3503 = vpop.f32.mrb[0].mxu0
        %v3504 = vadd.f32 %v3327, %v3503
        %v3505 = vpop.f32.mrb[0].mxu0
        %v3506 = vpop.f32.mrb[0].mxu0
        %v3507 = vadd.f32 %v3330, %v3506
        %v3508 = vpop.f32.mrb[0].mxu0
        %3509 = vmatprep.mubr.bf16.mxu0 0
        %3510 = vmatmul.mubr.bf16.gmra.mrb[0].mxu0 %v3030
        %v3511 = vpop.f32.mrb[0].mxu0
        %v3512 = vadd.f32 %v3335, %v3511
        %v3513 = vpop.f32.mrb[0].mxu0
        %v3514 = vpop.f32.mrb[0].mxu0
        %v3515 = vadd.f32 %v3338, %v3514
        %v3516 = vpop.f32.mrb[0].mxu0
        %3517 = vmatprep.mubr.bf16.mxu0 0
        %3518 = vmatmul.mubr.bf16.gmra.mrb[0].mxu0 %v3033
        %v3519 = vpop.f32.mrb[0].mxu0
        %v3520 = vadd.f32 %v3343, %v3519
        %v3521 = vpop.f32.mrb[0].mxu0
        %v3522 = vpop.f32.mrb[0].mxu0
        %v3523 = vadd.f32 %v3346, %v3522
        %v3524 = vpop.f32.mrb[0].mxu0
        %3525 = vmatprep.mubr.bf16.mxu0 0
        %3526 = vmatmul.mubr.bf16.gmra.mrb[0].mxu0 %v3036
        %v3527 = vpop.f32.mrb[0].mxu0
        %v3528 = vadd.f32 %v3351, %v3527
        %v3529 = vpop.f32.mrb[0].mxu0
        %v3530 = vpop.f32.mrb[0].mxu0
        %v3531 = vadd.f32 %v3354, %v3530
        %v3532 = vpop.f32.mrb[0].mxu0
        %3533 = vmatprep.mubr.bf16.mxu0 0
        %3534 = vmatmul.mubr.bf16.gmra.mrb[0].mxu0 %v3039
        %v3535 = vpop.f32.mrb[0].mxu0
        %v3536 = vadd.f32 %v3359, %v3535
        %v3537 = vpop.f32.mrb[0].mxu0
        %v3538 = vpop.f32.mrb[0].mxu0
        %v3539 = vadd.f32 %v3362, %v3538
        %v3540 = vpop.f32.mrb[0].mxu0
        %3541 = vmatprep.mubr.bf16.mxu0 0
        %3542 = vmatmul.mubr.bf16.gmra.mrb[0].mxu0 %v3042
        %v3543 = vpop.f32.mrb[0].mxu0
        %v3544 = vadd.f32 %v3367, %v3543
        %v3545 = vpop.f32.mrb[0].mxu0
        %v3546 = vpop.f32.mrb[0].mxu0
        %v3547 = vadd.f32 %v3370, %v3546
        %v3548 = vpop.f32.mrb[0].mxu0
        %3549 = vmatprep.mubr.bf16.mxu0 0
        %3550 = vmatmul.mubr.bf16.gmra.mrb[0].mxu0 %v3045
        %v3551 = vpop.f32.mrb[0].mxu0
        %v3552 = vadd.f32 %v3375, %v3551
        %v3553 = vpop.f32.mrb[0].mxu0
        %v3554 = vpop.f32.mrb[0].mxu0
        %v3555 = vadd.f32 %v3378, %v3554
        %v3556 = vpop.f32.mrb[0].mxu0
        %3557 = vmatprep.mubr.bf16.mxu0 0
        %3558 = vmatmul.mubr.bf16.gmra.mrb[0].mxu0 %v3048
        %v3559 = vpop.f32.mrb[0].mxu0
        %v3560 = vadd.f32 %v3383, %v3559
        %v3561 = vpop.f32.mrb[0].mxu0
        %v3562 = vpop.f32.mrb[0].mxu0
        %v3563 = vadd.f32 %v3386, %v3562
        %v3564 = vpop.f32.mrb[0].mxu0
        %3565 = vmatprep.mubr.bf16.mxu0 0
        %3566 = vmatmul.mubr.bf16.gmra.mrb[0].mxu0 %v3051
        %v3567 = vpop.f32.mrb[0].mxu0
        %v3568 = vadd.f32 %v3391, %v3567
        %v3569 = vpop.f32.mrb[0].mxu0
        %v3570 = vpop.f32.mrb[0].mxu0
        %v3571 = vadd.f32 %v3394, %v3570
        %v3572 = vpop.f32.mrb[0].mxu0
        %3573 = vmatprep.mubr.bf16.mxu0 0
        %3574 = vmatmul.mubr.bf16.gmra.mrb[0].mxu0 %v3054
        %v3575 = vpop.f32.mrb[0].mxu0
        %v3576 = vadd.f32 %v3399, %v3575
        %v3577 = vpop.f32.mrb[0].mxu0
        %v3578 = vpop.f32.mrb[0].mxu0
        %v3579 = vadd.f32 %v3402, %v3578
        %v3580 = vpop.f32.mrb[0].mxu0
        %3581 = vmatprep.mubr.bf16.mxu0 0
        %3582 = vmatmul.mubr.bf16.gmra.mrb[0].mxu0 %v3057
        %v3583 = vpop.f32.mrb[0].mxu0
        %v3584 = vadd.f32 %v3407, %v3583
        %v3585 = vpop.f32.mrb[0].mxu0
        %v3586 = vpop.f32.mrb[0].mxu0
        %v3587 = vadd.f32 %v3410, %v3586
        %v3588 = vpop.f32.mrb[0].mxu0
        %3589 = vdwg.mxu0
        %v3590 = vld [vmem:[%s3] sm:$0x1]
        %v3591 = vlaneseq
        %v3592 = vshrl.u32 %v3591, 7
        %v3593 = vsub.s32 0, %v3592
        %v3594 = vrot.slane %v3590, %v3593
        %v3595 = vmul.f32 %v3448, %v3594
        %v3596 = vmul.f32 %v3451, %v3594
        %v3597 = vmul.f32 %v3456, %v3594
        %v3598 = vmul.f32 %v3459, %v3594
        %v3599 = vmul.f32 %v3464, %v3594
        %v3600 = vmul.f32 %v3467, %v3594
        %v3601 = vmul.f32 %v3472, %v3594
        %v3602 = vmul.f32 %v3475, %v3594
        %v3603 = vmul.f32 %v3480, %v3594
        %v3604 = vmul.f32 %v3483, %v3594
        %v3605 = vmul.f32 %v3488, %v3594
        %v3606 = vmul.f32 %v3491, %v3594
        %v3607 = vmul.f32 %v3496, %v3594
        %v3608 = vmul.f32 %v3499, %v3594
        %v3609 = vmul.f32 %v3504, %v3594
        %v3610 = vmul.f32 %v3507, %v3594
        %v3611 = vmul.f32 %v3512, %v3594
        %v3612 = vmul.f32 %v3515, %v3594
        %v3613 = vmul.f32 %v3520, %v3594
        %v3614 = vmul.f32 %v3523, %v3594
        %v3615 = vmul.f32 %v3528, %v3594
        %v3616 = vmul.f32 %v3531, %v3594
        %v3617 = vmul.f32 %v3536, %v3594
        %v3618 = vmul.f32 %v3539, %v3594
        %v3619 = vmul.f32 %v3544, %v3594
        %v3620 = vmul.f32 %v3547, %v3594
        %v3621 = vmul.f32 %v3552, %v3594
        %v3622 = vmul.f32 %v3555, %v3594
        %v3623 = vmul.f32 %v3560, %v3594
        %v3624 = vmul.f32 %v3563, %v3594
        %v3625 = vmul.f32 %v3568, %v3594
        %v3626 = vmul.f32 %v3571, %v3594
        %v3627 = vmul.f32 %v3576, %v3594
        %v3628 = vmul.f32 %v3579, %v3594
        %v3629 = vmul.f32 %v3584, %v3594
        %v3630 = vmul.f32 %v3587, %v3594
        %v3631 = vld [vmem:[%s4] sm:$0x1]
        %v3632 = vlaneseq
        %v3633 = vshrl.u32 %v3632, 7
        %v3634 = vsub.s32 0, %v3633
        %v3635 = vrot.slane %v3631, %v3634
        %v3636 = vadd.f32 %v3595, %v3635
        %v3637 = vadd.f32 %v3596, %v3635
        %v3638 = vadd.f32 %v3597, %v3635
        %v3639 = vadd.f32 %v3598, %v3635
        %v3640 = vadd.f32 %v3599, %v3635
        %v3641 = vadd.f32 %v3600, %v3635
        %v3642 = vadd.f32 %v3601, %v3635
        %v3643 = vadd.f32 %v3602, %v3635
        %v3644 = vadd.f32 %v3603, %v3635
        %v3645 = vadd.f32 %v3604, %v3635
        %v3646 = vadd.f32 %v3605, %v3635
        %v3647 = vadd.f32 %v3606, %v3635
        %v3648 = vadd.f32 %v3607, %v3635
        %v3649 = vadd.f32 %v3608, %v3635
        %v3650 = vadd.f32 %v3609, %v3635
        %v3651 = vadd.f32 %v3610, %v3635
        %v3652 = vadd.f32 %v3611, %v3635
        %v3653 = vadd.f32 %v3612, %v3635
        %v3654 = vadd.f32 %v3613, %v3635
        %v3655 = vadd.f32 %v3614, %v3635
        %v3656 = vadd.f32 %v3615, %v3635
        %v3657 = vadd.f32 %v3616, %v3635
        %v3658 = vadd.f32 %v3617, %v3635
        %v3659 = vadd.f32 %v3618, %v3635
        %v3660 = vadd.f32 %v3619, %v3635
        %v3661 = vadd.f32 %v3620, %v3635
        %v3662 = vadd.f32 %v3621, %v3635
        %v3663 = vadd.f32 %v3622, %v3635
        %v3664 = vadd.f32 %v3623, %v3635
        %v3665 = vadd.f32 %v3624, %v3635
        %v3666 = vadd.f32 %v3625, %v3635
        %v3667 = vadd.f32 %v3626, %v3635
        %v3668 = vadd.f32 %v3627, %v3635
        %v3669 = vadd.f32 %v3628, %v3635
        %v3670 = vadd.f32 %v3629, %v3635
        %v3671 = vadd.f32 %v3630, %v3635
        %v3672 = vmax.f32 %v3636, 0.0
        %v3673 = vmax.f32 %v3637, 0.0
        %v3674 = vmax.f32 %v3638, 0.0
        %v3675 = vmax.f32 %v3639, 0.0
        %v3676 = vmax.f32 %v3640, 0.0
        %v3677 = vmax.f32 %v3641, 0.0
        %v3678 = vmax.f32 %v3642, 0.0
        %v3679 = vmax.f32 %v3643, 0.0
        %v3680 = vmax.f32 %v3644, 0.0
        %v3681 = vmax.f32 %v3645, 0.0
        %v3682 = vmax.f32 %v3646, 0.0
        %v3683 = vmax.f32 %v3647, 0.0
        %v3684 = vmax.f32 %v3648, 0.0
        %v3685 = vmax.f32 %v3649, 0.0
        %v3686 = vmax.f32 %v3650, 0.0
        %v3687 = vmax.f32 %v3651, 0.0
        %v3688 = vmax.f32 %v3652, 0.0
        %v3689 = vmax.f32 %v3653, 0.0
        %v3690 = vmax.f32 %v3654, 0.0
        %v3691 = vmax.f32 %v3655, 0.0
        %v3692 = vmax.f32 %v3656, 0.0
        %v3693 = vmax.f32 %v3657, 0.0
        %v3694 = vmax.f32 %v3658, 0.0
        %v3695 = vmax.f32 %v3659, 0.0
        %v3696 = vmax.f32 %v3660, 0.0
        %v3697 = vmax.f32 %v3661, 0.0
        %v3698 = vmax.f32 %v3662, 0.0
        %v3699 = vmax.f32 %v3663, 0.0
        %v3700 = vmax.f32 %v3664, 0.0
        %v3701 = vmax.f32 %v3665, 0.0
        %v3702 = vmax.f32 %v3666, 0.0
        %v3703 = vmax.f32 %v3667, 0.0
        %v3704 = vmax.f32 %v3668, 0.0
        %v3705 = vmax.f32 %v3669, 0.0
        %v3706 = vmax.f32 %v3670, 0.0
        %v3707 = vmax.f32 %v3671, 0.0
        %v3708 = vpack.c.bf16 %v3673, %v3672
        %v3709 = vpack.c.bf16 %v3675, %v3674
        %v3710 = vpack.c.bf16 %v3677, %v3676
        %v3711 = vpack.c.bf16 %v3679, %v3678
        %v3712 = vpack.c.bf16 %v3681, %v3680
        %v3713 = vpack.c.bf16 %v3683, %v3682
        %v3714 = vpack.c.bf16 %v3685, %v3684
        %v3715 = vpack.c.bf16 %v3687, %v3686
        %v3716 = vpack.c.bf16 %v3689, %v3688
        %v3717 = vpack.c.bf16 %v3691, %v3690
        %v3718 = vpack.c.bf16 %v3693, %v3692
        %v3719 = vpack.c.bf16 %v3695, %v3694
        %v3720 = vpack.c.bf16 %v3697, %v3696
        %v3721 = vpack.c.bf16 %v3699, %v3698
        %v3722 = vpack.c.bf16 %v3701, %v3700
        %v3723 = vpack.c.bf16 %v3703, %v3702
        %v3724 = vpack.c.bf16 %v3705, %v3704
        %v3725 = vpack.c.bf16 %v3707, %v3706
        %v3727 = vunpack.c.l.b16 %v3708
        %v3728 = vunpack.c.h.b16 %v3708
        %v3729 = vpack.c.b16 %v3727, %v3727
        %v3730 = vpack.c.b16 %v3728, %v3728
        %vm3731 = vsmask.f32 1280
        %vm3732 = vsmask.f32 5392
        %vm3733 = vmor %vm3731, %vm3732
        %v3735 = vshrl.u32 %v3729, 16
        %v3737 = vrot.slane %v3735, 6
        %v3738 = vshll.u32 %v3729, 16
        %v3740 = vrot.slane %v3738, 7
        %v3741 = vor.u32 %v3737, %v3740
        %v3742 = vrot.slane %v3741, 4
        %v3744 = vshrl.u32 %v3730, 16
        %v3746 = vrot.slane %v3744, 6
        %v3747 = vshll.u32 %v3730, 16
        %v3749 = vrot.slane %v3747, 7
        %v3750 = vor.u32 %v3746, %v3749
        %v3751 = vsel %vm3733, %v3742, %v3750
        %v3752 = vrot.slane %v3750, 4
        %vm3756 = vcmask 519169
        %vm3757 = vsmask.f32 7942
        %vm3758 = vmand %vm3756, %vm3757
        %v3759 = vld [vmem:[#allocation2 + $0x8] sm:$0xe]
        %v3760 = vsel %vm3758, %v3741, %v3759
        %3761 = vst [vmem:[#allocation2 + $0x8] sm:$0xe] %v3760
        %vm3762 = vcmask 519168
        %3763 = vst.msk [vmem:[#allocation2 + $0xc] sm:$0xf] %vm3762, %v3751
        %vm3764 = vcmask 517120
        %vm3765 = vmand %vm3764, %vm3731
        %v3766 = vld [vmem:[#allocation2 + $0x10] sm:$0x3]
        %v3767 = vsel %vm3765, %v3752, %v3766
        %3768 = vst [vmem:[#allocation2 + $0x10] sm:$0x3] %v3767
        %v3771 = vunpack.c.l.b16 %v3709
        %v3772 = vunpack.c.h.b16 %v3709
        %v3773 = vunpack.c.l.b16 %v3710
        %v3774 = vpack.c.b16 %v3771, %v3771
        %v3775 = vpack.c.b16 %v3772, %v3772
        %v3776 = vpack.c.b16 %v3773, %v3773
        %v3778 = vshrl.u32 %v3774, 16
        %v3780 = vrot.slane %v3778, 6
        %v3781 = vshll.u32 %v3774, 16
        %v3783 = vrot.slane %v3781, 7
        %v3784 = vor.u32 %v3780, %v3783
        %v3785 = vrot.slane %v3784, 4
        %v3787 = vshrl.u32 %v3775, 16
        %v3789 = vrot.slane %v3787, 6
        %v3790 = vshll.u32 %v3775, 16
        %v3792 = vrot.slane %v3790, 7
        %v3793 = vor.u32 %v3789, %v3792
        %v3794 = vsel %vm3733, %v3785, %v3793
        %v3795 = vrot.slane %v3793, 4
        %v3797 = vshrl.u32 %v3776, 16
        %v3799 = vrot.slane %v3797, 6
        %v3800 = vshll.u32 %v3776, 16
        %v3802 = vrot.slane %v3800, 7
        %v3803 = vor.u32 %v3799, %v3802
        %v3804 = vsel %vm3733, %v3795, %v3803
        %vm3808 = vcmask 519170
        %vm3809 = vsmask.f32 7946
        %vm3810 = vmand %vm3808, %vm3809
        %v3811 = vld [vmem:[#allocation2 + $0x10] sm:$0xc]
        %v3812 = vsel %vm3810, %v3784, %v3811
        %3813 = vst [vmem:[#allocation2 + $0x10] sm:$0xc] %v3812
        %3814 = vst.msk [vmem:[#allocation2 + $0x14] sm:$0xf] %vm3762, %v3794
        %vm3815 = vcmask 518144
        %vm3816 = vsmask.f32 2304
        %vm3817 = vmand %vm3815, %vm3816
        %v3818 = vld [vmem:[#allocation2 + $0x18] sm:$0x7]
        %v3819 = vsel %vm3817, %v3804, %v3818
        %3820 = vst [vmem:[#allocation2 + $0x18] sm:$0x7] %v3819
        %v3822 = vunpack.c.h.b16 %v3710
        %v3823 = vunpack.c.l.b16 %v3711
        %v3824 = vpack.c.b16 %v3822, %v3822
        %v3825 = vpack.c.b16 %v3823, %v3823
        %v3826 = vrot.slane %v3803, 4
        %v3828 = vshrl.u32 %v3824, 16
        %v3830 = vrot.slane %v3828, 6
        %v3831 = vshll.u32 %v3824, 16
        %v3833 = vrot.slane %v3831, 7
        %v3834 = vor.u32 %v3830, %v3833
        %v3835 = vsel %vm3733, %v3826, %v3834
        %v3836 = vrot.slane %v3834, 4
        %v3838 = vshrl.u32 %v3825, 16
        %v3840 = vrot.slane %v3838, 6
        %v3841 = vshll.u32 %v3825, 16
        %v3843 = vrot.slane %v3841, 7
        %v3844 = vor.u32 %v3840, %v3843
        %v3845 = vsel %vm3733, %v3836, %v3844
        %vm3849 = vcmask 519171
        %vm3850 = vsmask.f32 7950
        %vm3851 = vmand %vm3849, %vm3850
        %v3852 = vld [vmem:[#allocation2 + $0x18] sm:$0x8]
        %v3853 = vsel %vm3851, %v3802, %v3852
        %3854 = vst [vmem:[#allocation2 + $0x18] sm:$0x8] %v3853
        %3855 = vst.msk [vmem:[#allocation2 + $0x1c] sm:$0xf] %vm3762, %v3835
        %vm3856 = vcmask 519168
        %vm3857 = vsmask.f32 3328
        %vm3858 = vmand %vm3856, %vm3857
        %v3859 = vld [vmem:[#allocation2 + $0x20] sm:$0xf]
        %v3860 = vsel %vm3858, %v3845, %v3859
        %3861 = vst [vmem:[#allocation2 + $0x20] sm:$0xf] %v3860
        %v3863 = vunpack.c.h.b16 %v3711
        %v3864 = vunpack.c.l.b16 %v3712
        %v3865 = vpack.c.b16 %v3863, %v3863
        %v3866 = vpack.c.b16 %v3864, %v3864
        %v3867 = vrot.slane %v3844, 4
        %v3869 = vshrl.u32 %v3865, 16
        %v3871 = vrot.slane %v3869, 6
        %v3872 = vshll.u32 %v3865, 16
        %v3874 = vrot.slane %v3872, 7
        %v3875 = vor.u32 %v3871, %v3874
        %v3876 = vsel %vm3733, %v3867, %v3875
        %v3877 = vrot.slane %v3875, 4
        %v3879 = vshrl.u32 %v3866, 16
        %v3881 = vrot.slane %v3879, 6
        %v3882 = vshll.u32 %v3866, 16
        %v3884 = vrot.slane %v3882, 7
        %v3885 = vor.u32 %v3881, %v3884
        %v3886 = vsel %vm3733, %v3877, %v3885
        %v3887 = vrot.slane %v3881, 4
        %vm3891 = vsmask.f32 7938
        %vm3892 = vmand %vm3856, %vm3891
        %v3893 = vld [vmem:[#allocation2 + $0x24] sm:$0xf]
        %v3894 = vsel %vm3892, %v3876, %v3893
        %3895 = vst [vmem:[#allocation2 + $0x24] sm:$0xf] %v3894
        %3896 = vst.msk [vmem:[#allocation2 + $0x28] sm:$0xf] %vm3762, %v3886
        %vm3897 = vcmask 516096
        %vm3898 = vsmask.f32 256
        %vm3899 = vmand %vm3897, %vm3898
        %v3900 = vld [vmem:[#allocation2 + $0x2c] sm:$0x1]
        %v3901 = vsel %vm3899, %v3887, %v3900
        %3902 = vst [vmem:[#allocation2 + $0x2c] sm:$0x1] %v3901
        %v3904 = vunpack.c.h.b16 %v3712
        %v3905 = vunpack.c.l.b16 %v3713
        %v3906 = vpack.c.b16 %v3904, %v3904
        %v3907 = vpack.c.b16 %v3905, %v3905
        %v3909 = vshrl.u32 %v3906, 16
        %v3911 = vrot.slane %v3909, 6
        %v3912 = vshll.u32 %v3906, 16
        %v3914 = vrot.slane %v3912, 7
        %v3915 = vor.u32 %v3911, %v3914
        %v3916 = vrot.slane %v3915, 4
        %v3918 = vshrl.u32 %v3907, 16
        %v3920 = vrot.slane %v3918, 6
        %v3921 = vshll.u32 %v3907, 16
        %v3923 = vrot.slane %v3921, 7
        %v3924 = vor.u32 %v3920, %v3923
        %v3925 = vsel %vm3733, %v3916, %v3924
        %v3926 = vrot.slane %v3924, 4
        %v3930 = vld [vmem:[#allocation2 + $0x2c] sm:$0xe]
        %v3931 = vsel %vm3758, %v3915, %v3930
        %3932 = vst [vmem:[#allocation2 + $0x2c] sm:$0xe] %v3931
        %3933 = vst.msk [vmem:[#allocation2 + $0x30] sm:$0xf] %vm3762, %v3925
        %v3934 = vld [vmem:[#allocation2 + $0x34] sm:$0x3]
        %v3935 = vsel %vm3765, %v3926, %v3934
        %3936 = vst [vmem:[#allocation2 + $0x34] sm:$0x3] %v3935
        %v3938 = vunpack.c.h.b16 %v3713
        %v3939 = vunpack.c.l.b16 %v3714
        %v3940 = vunpack.c.h.b16 %v3714
        %v3941 = vpack.c.b16 %v3938, %v3938
        %v3942 = vpack.c.b16 %v3939, %v3939
        %v3943 = vpack.c.b16 %v3940, %v3940
        %v3945 = vshrl.u32 %v3941, 16
        %v3947 = vrot.slane %v3945, 6
        %v3948 = vshll.u32 %v3941, 16
        %v3950 = vrot.slane %v3948, 7
        %v3951 = vor.u32 %v3947, %v3950
        %v3952 = vrot.slane %v3951, 4
        %v3954 = vshrl.u32 %v3942, 16
        %v3956 = vrot.slane %v3954, 6
        %v3957 = vshll.u32 %v3942, 16
        %v3959 = vrot.slane %v3957, 7
        %v3960 = vor.u32 %v3956, %v3959
        %v3961 = vsel %vm3733, %v3952, %v3960
        %v3962 = vrot.slane %v3960, 4
        %v3964 = vshrl.u32 %v3943, 16
        %v3966 = vrot.slane %v3964, 6
        %v3967 = vshll.u32 %v3943, 16
        %v3969 = vrot.slane %v3967, 7
        %v3970 = vor.u32 %v3966, %v3969
        %v3971 = vsel %vm3733, %v3962, %v3970
        %v3975 = vld [vmem:[#allocation2 + $0x34] sm:$0xc]
        %v3976 = vsel %vm3810, %v3951, %v3975
        %3977 = vst [vmem:[#allocation2 + $0x34] sm:$0xc] %v3976
        %3978 = vst.msk [vmem:[#allocation2 + $0x38] sm:$0xf] %vm3762, %v3961
        %v3979 = vld [vmem:[#allocation2 + $0x3c] sm:$0x7]
        %v3980 = vsel %vm3817, %v3971, %v3979
        %3981 = vst [vmem:[#allocation2 + $0x3c] sm:$0x7] %v3980
        %v3983 = vunpack.c.l.b16 %v3715
        %v3984 = vunpack.c.h.b16 %v3715
        %v3985 = vpack.c.b16 %v3983, %v3983
        %v3986 = vpack.c.b16 %v3984, %v3984
        %v3987 = vrot.slane %v3970, 4
        %v3989 = vshrl.u32 %v3985, 16
        %v3991 = vrot.slane %v3989, 6
        %v3992 = vshll.u32 %v3985, 16
        %v3994 = vrot.slane %v3992, 7
        %v3995 = vor.u32 %v3991, %v3994
        %v3996 = vsel %vm3733, %v3987, %v3995
        %v3997 = vrot.slane %v3995, 4
        %v3999 = vshrl.u32 %v3986, 16
        %v4001 = vrot.slane %v3999, 6
        %v4002 = vshll.u32 %v3986, 16
        %v4004 = vrot.slane %v4002, 7
        %v4005 = vor.u32 %v4001, %v4004
        %v4006 = vsel %vm3733, %v3997, %v4005
        %v4010 = vld [vmem:[#allocation2 + $0x3c] sm:$0x8]
        %v4011 = vsel %vm3851, %v3969, %v4010
        %4012 = vst [vmem:[#allocation2 + $0x3c] sm:$0x8] %v4011
        %4013 = vst.msk [vmem:[#allocation2 + $0x40] sm:$0xf] %vm3762, %v3996
        %v4014 = vld [vmem:[#allocation2 + $0x44] sm:$0xf]
        %v4015 = vsel %vm3858, %v4006, %v4014
        %4016 = vst [vmem:[#allocation2 + $0x44] sm:$0xf] %v4015
        %v4018 = vunpack.c.l.b16 %v3716
        %v4019 = vunpack.c.h.b16 %v3716
        %v4020 = vpack.c.b16 %v4018, %v4018
        %v4021 = vpack.c.b16 %v4019, %v4019
        %v4022 = vrot.slane %v4005, 4
        %v4024 = vshrl.u32 %v4020, 16
        %v4026 = vrot.slane %v4024, 6
        %v4027 = vshll.u32 %v4020, 16
        %v4029 = vrot.slane %v4027, 7
        %v4030 = vor.u32 %v4026, %v4029
        %v4031 = vsel %vm3733, %v4022, %v4030
        %v4032 = vrot.slane %v4030, 4
        %v4034 = vshrl.u32 %v4021, 16
        %v4036 = vrot.slane %v4034, 6
        %v4037 = vshll.u32 %v4021, 16
        %v4039 = vrot.slane %v4037, 7
        %v4040 = vor.u32 %v4036, %v4039
        %v4041 = vsel %vm3733, %v4032, %v4040
        %v4042 = vrot.slane %v4036, 4
        %v4046 = vld [vmem:[#allocation2 + $0x48] sm:$0xf]
        %v4047 = vsel %vm3892, %v4031, %v4046
        %4048 = vst [vmem:[#allocation2 + $0x48] sm:$0xf] %v4047
        %4049 = vst.msk [vmem:[#allocation2 + $0x4c] sm:$0xf] %vm3762, %v4041
        %v4050 = vld [vmem:[#allocation2 + $0x50] sm:$0x1]
        %v4051 = vsel %vm3899, %v4042, %v4050
        %4052 = vst [vmem:[#allocation2 + $0x50] sm:$0x1] %v4051
        %v4054 = vunpack.c.l.b16 %v3717
        %v4055 = vunpack.c.h.b16 %v3717
        %v4056 = vpack.c.b16 %v4054, %v4054
        %v4057 = vpack.c.b16 %v4055, %v4055
        %v4059 = vshrl.u32 %v4056, 16
        %v4061 = vrot.slane %v4059, 6
        %v4062 = vshll.u32 %v4056, 16
        %v4064 = vrot.slane %v4062, 7
        %v4065 = vor.u32 %v4061, %v4064
        %v4066 = vrot.slane %v4065, 4
        %v4068 = vshrl.u32 %v4057, 16
        %v4070 = vrot.slane %v4068, 6
        %v4071 = vshll.u32 %v4057, 16
        %v4073 = vrot.slane %v4071, 7
        %v4074 = vor.u32 %v4070, %v4073
        %v4075 = vsel %vm3733, %v4066, %v4074
        %v4076 = vrot.slane %v4074, 4
        %v4080 = vld [vmem:[#allocation2 + $0x50] sm:$0xe]
        %v4081 = vsel %vm3758, %v4065, %v4080
        %4082 = vst [vmem:[#allocation2 + $0x50] sm:$0xe] %v4081
        %4083 = vst.msk [vmem:[#allocation2 + $0x54] sm:$0xf] %vm3762, %v4075
        %v4084 = vld [vmem:[#allocation2 + $0x58] sm:$0x3]
        %v4085 = vsel %vm3765, %v4076, %v4084
        %4086 = vst [vmem:[#allocation2 + $0x58] sm:$0x3] %v4085
        %v4089 = vunpack.c.l.b16 %v3718
        %v4090 = vunpack.c.h.b16 %v3718
        %v4091 = vunpack.c.l.b16 %v3719
        %v4092 = vpack.c.b16 %v4089, %v4089
        %v4093 = vpack.c.b16 %v4090, %v4090
        %v4094 = vpack.c.b16 %v4091, %v4091
        %v4096 = vshrl.u32 %v4092, 16
        %v4098 = vrot.slane %v4096, 6
        %v4099 = vshll.u32 %v4092, 16
        %v4101 = vrot.slane %v4099, 7
        %v4102 = vor.u32 %v4098, %v4101
        %v4103 = vrot.slane %v4102, 4
        %v4105 = vshrl.u32 %v4093, 16
        %v4107 = vrot.slane %v4105, 6
        %v4108 = vshll.u32 %v4093, 16
        %v4110 = vrot.slane %v4108, 7
        %v4111 = vor.u32 %v4107, %v4110
        %v4112 = vsel %vm3733, %v4103, %v4111
        %v4113 = vrot.slane %v4111, 4
        %v4115 = vshrl.u32 %v4094, 16
        %v4117 = vrot.slane %v4115, 6
        %v4118 = vshll.u32 %v4094, 16
        %v4120 = vrot.slane %v4118, 7
        %v4121 = vor.u32 %v4117, %v4120
        %v4122 = vsel %vm3733, %v4113, %v4121
        %v4126 = vld [vmem:[#allocation2 + $0x58] sm:$0xc]
        %v4127 = vsel %vm3810, %v4102, %v4126
        %4128 = vst [vmem:[#allocation2 + $0x58] sm:$0xc] %v4127
        %4129 = vst.msk [vmem:[#allocation2 + $0x5c] sm:$0xf] %vm3762, %v4112
        %v4130 = vld [vmem:[#allocation2 + $0x60] sm:$0x7]
        %v4131 = vsel %vm3817, %v4122, %v4130
        %4132 = vst [vmem:[#allocation2 + $0x60] sm:$0x7] %v4131
        %v4134 = vunpack.c.h.b16 %v3719
        %v4135 = vunpack.c.l.b16 %v3720
        %v4136 = vpack.c.b16 %v4134, %v4134
        %v4137 = vpack.c.b16 %v4135, %v4135
        %v4138 = vrot.slane %v4121, 4
        %v4140 = vshrl.u32 %v4136, 16
        %v4142 = vrot.slane %v4140, 6
        %v4143 = vshll.u32 %v4136, 16
        %v4145 = vrot.slane %v4143, 7
        %v4146 = vor.u32 %v4142, %v4145
        %v4147 = vsel %vm3733, %v4138, %v4146
        %v4148 = vrot.slane %v4146, 4
        %v4150 = vshrl.u32 %v4137, 16
        %v4152 = vrot.slane %v4150, 6
        %v4153 = vshll.u32 %v4137, 16
        %v4155 = vrot.slane %v4153, 7
        %v4156 = vor.u32 %v4152, %v4155
        %v4157 = vsel %vm3733, %v4148, %v4156
        %v4161 = vld [vmem:[#allocation2 + $0x60] sm:$0x8]
        %v4162 = vsel %vm3851, %v4120, %v4161
        %4163 = vst [vmem:[#allocation2 + $0x60] sm:$0x8] %v4162
        %4164 = vst.msk [vmem:[#allocation2 + $0x64] sm:$0xf] %vm3762, %v4147
        %v4165 = vld [vmem:[#allocation2 + $0x68] sm:$0xf]
        %v4166 = vsel %vm3858, %v4157, %v4165
        %4167 = vst [vmem:[#allocation2 + $0x68] sm:$0xf] %v4166
        %v4169 = vunpack.c.h.b16 %v3720
        %v4170 = vunpack.c.l.b16 %v3721
        %v4171 = vpack.c.b16 %v4169, %v4169
        %v4172 = vpack.c.b16 %v4170, %v4170
        %v4173 = vrot.slane %v4156, 4
        %v4175 = vshrl.u32 %v4171, 16
        %v4177 = vrot.slane %v4175, 6
        %v4178 = vshll.u32 %v4171, 16
        %v4180 = vrot.slane %v4178, 7
        %v4181 = vor.u32 %v4177, %v4180
        %v4182 = vsel %vm3733, %v4173, %v4181
        %v4183 = vrot.slane %v4181, 4
        %v4185 = vshrl.u32 %v4172, 16
        %v4187 = vrot.slane %v4185, 6
        %v4188 = vshll.u32 %v4172, 16
        %v4190 = vrot.slane %v4188, 7
        %v4191 = vor.u32 %v4187, %v4190
        %v4192 = vsel %vm3733, %v4183, %v4191
        %v4193 = vrot.slane %v4187, 4
        %v4197 = vld [vmem:[#allocation2 + $0x6c] sm:$0xf]
        %v4198 = vsel %vm3892, %v4182, %v4197
        %4199 = vst [vmem:[#allocation2 + $0x6c] sm:$0xf] %v4198
        %4200 = vst.msk [vmem:[#allocation2 + $0x70] sm:$0xf] %vm3762, %v4192
        %v4201 = vld [vmem:[#allocation2 + $0x74] sm:$0x1]
        %v4202 = vsel %vm3899, %v4193, %v4201
        %4203 = vst [vmem:[#allocation2 + $0x74] sm:$0x1] %v4202
        %v4205 = vunpack.c.h.b16 %v3721
        %v4206 = vunpack.c.l.b16 %v3722
        %v4207 = vpack.c.b16 %v4205, %v4205
        %v4208 = vpack.c.b16 %v4206, %v4206
        %v4210 = vshrl.u32 %v4207, 16
        %v4212 = vrot.slane %v4210, 6
        %v4213 = vshll.u32 %v4207, 16
        %v4215 = vrot.slane %v4213, 7
        %v4216 = vor.u32 %v4212, %v4215
        %v4217 = vrot.slane %v4216, 4
        %v4219 = vshrl.u32 %v4208, 16
        %v4221 = vrot.slane %v4219, 6
        %v4222 = vshll.u32 %v4208, 16
        %v4224 = vrot.slane %v4222, 7
        %v4225 = vor.u32 %v4221, %v4224
        %v4226 = vsel %vm3733, %v4217, %v4225
        %v4227 = vrot.slane %v4225, 4
        %v4231 = vld [vmem:[#allocation2 + $0x74] sm:$0xe]
        %v4232 = vsel %vm3758, %v4216, %v4231
        %4233 = vst [vmem:[#allocation2 + $0x74] sm:$0xe] %v4232
        %4234 = vst.msk [vmem:[#allocation2 + $0x78] sm:$0xf] %vm3762, %v4226
        %v4235 = vld [vmem:[#allocation2 + $0x7c] sm:$0x3]
        %v4236 = vsel %vm3765, %v4227, %v4235
        %4237 = vst [vmem:[#allocation2 + $0x7c] sm:$0x3] %v4236
        %v4239 = vunpack.c.h.b16 %v3722
        %v4240 = vunpack.c.l.b16 %v3723
        %v4241 = vunpack.c.h.b16 %v3723
        %v4242 = vpack.c.b16 %v4239, %v4239
        %v4243 = vpack.c.b16 %v4240, %v4240
        %v4244 = vpack.c.b16 %v4241, %v4241
        %v4246 = vshrl.u32 %v4242, 16
        %v4248 = vrot.slane %v4246, 6
        %v4249 = vshll.u32 %v4242, 16
        %v4251 = vrot.slane %v4249, 7
        %v4252 = vor.u32 %v4248, %v4251
        %v4253 = vrot.slane %v4252, 4
        %v4255 = vshrl.u32 %v4243, 16
        %v4257 = vrot.slane %v4255, 6
        %v4258 = vshll.u32 %v4243, 16
        %v4260 = vrot.slane %v4258, 7
        %v4261 = vor.u32 %v4257, %v4260
        %v4262 = vsel %vm3733, %v4253, %v4261
        %v4263 = vrot.slane %v4261, 4
        %v4265 = vshrl.u32 %v4244, 16
        %v4267 = vrot.slane %v4265, 6
        %v4268 = vshll.u32 %v4244, 16
        %v4270 = vrot.slane %v4268, 7
        %v4271 = vor.u32 %v4267, %v4270
        %v4272 = vsel %vm3733, %v4263, %v4271
        %v4276 = vld [vmem:[#allocation2 + $0x7c] sm:$0xc]
        %v4277 = vsel %vm3810, %v4252, %v4276
        %4278 = vst [vmem:[#allocation2 + $0x7c] sm:$0xc] %v4277
        %4279 = vst.msk [vmem:[#allocation2 + $0x80] sm:$0xf] %vm3762, %v4262
        %v4280 = vld [vmem:[#allocation2 + $0x84] sm:$0x7]
        %v4281 = vsel %vm3817, %v4272, %v4280
        %4282 = vst [vmem:[#allocation2 + $0x84] sm:$0x7] %v4281
        %v4284 = vunpack.c.l.b16 %v3724
        %v4285 = vunpack.c.h.b16 %v3724
        %v4286 = vpack.c.b16 %v4284, %v4284
        %v4287 = vpack.c.b16 %v4285, %v4285
        %v4288 = vrot.slane %v4271, 4
        %v4290 = vshrl.u32 %v4286, 16
        %v4292 = vrot.slane %v4290, 6
        %v4293 = vshll.u32 %v4286, 16
        %v4295 = vrot.slane %v4293, 7
        %v4296 = vor.u32 %v4292, %v4295
        %v4297 = vsel %vm3733, %v4288, %v4296
        %v4298 = vrot.slane %v4296, 4
        %v4300 = vshrl.u32 %v4287, 16
        %v4302 = vrot.slane %v4300, 6
        %v4303 = vshll.u32 %v4287, 16
        %v4305 = vrot.slane %v4303, 7
        %v4306 = vor.u32 %v4302, %v4305
        %v4307 = vsel %vm3733, %v4298, %v4306
        %v4311 = vld [vmem:[#allocation2 + $0x84] sm:$0x8]
        %v4312 = vsel %vm3851, %v4270, %v4311
        %4313 = vst [vmem:[#allocation2 + $0x84] sm:$0x8] %v4312
        %4314 = vst.msk [vmem:[#allocation2 + $0x88] sm:$0xf] %vm3762, %v4297
        %v4315 = vld [vmem:[#allocation2 + $0x8c] sm:$0xf]
        %v4316 = vsel %vm3858, %v4307, %v4315
        %4317 = vst [vmem:[#allocation2 + $0x8c] sm:$0xf] %v4316
        %v4319 = vunpack.c.l.b16 %v3725
        %v4320 = vunpack.c.h.b16 %v3725
        %v4321 = vpack.c.b16 %v4319, %v4319
        %v4322 = vpack.c.b16 %v4320, %v4320
        %v4323 = vrot.slane %v4306, 4
        %v4325 = vshrl.u32 %v4321, 16
        %v4327 = vrot.slane %v4325, 6
        %v4328 = vshll.u32 %v4321, 16
        %v4330 = vrot.slane %v4328, 7
        %v4331 = vor.u32 %v4327, %v4330
        %v4332 = vsel %vm3733, %v4323, %v4331
        %v4333 = vrot.slane %v4331, 4
        %v4335 = vshrl.u32 %v4322, 16
        %v4337 = vrot.slane %v4335, 6
        %v4338 = vshll.u32 %v4322, 16
        %v4340 = vrot.slane %v4338, 7
        %v4341 = vor.u32 %v4337, %v4340
        %v4342 = vsel %vm3733, %v4333, %v4341
        %v4343 = vrot.slane %v4337, 4
        %v4347 = vld [vmem:[#allocation2 + $0x90] sm:$0xf]
        %v4348 = vsel %vm3892, %v4332, %v4347
        %4349 = vst [vmem:[#allocation2 + $0x90] sm:$0xf] %v4348
        %4350 = vst.msk [vmem:[#allocation2 + $0x94] sm:$0xf] %vm3762, %v4342
        %v4351 = vld [vmem:[#allocation2 + $0x98] sm:$0x1]
        %v4352 = vsel %vm3899, %v4343, %v4351
        %4353 = vst [vmem:[#allocation2 + $0x98] sm:$0x1] %v4352
        %v4354 = vld [vmem:[#allocation2] sm:$0xf]
        %v4355 = vld [vmem:[#allocation2 + $0x4] sm:$0xf]
        %v4356 = vld [vmem:[#allocation2 + $0x8] sm:$0xf]
        %v4357 = vld [vmem:[#allocation2 + $0xc] sm:$0xf]
        %v4358 = vld [vmem:[#allocation2 + $0x10] sm:$0xf]
        %v4359 = vld [vmem:[#allocation2 + $0x14] sm:$0xf]
        %v4360 = vld [vmem:[#allocation2 + $0x18] sm:$0xf]
        %v4361 = vld [vmem:[#allocation2 + $0x1c] sm:$0xf]
        %v4362 = vld [vmem:[#allocation2 + $0x20] sm:$0xf]
        %v4363 = vld [vmem:[#allocation2 + $0x24] sm:$0xf]
        %v4364 = vld [vmem:[#allocation2 + $0x28] sm:$0xf]
        %v4365 = vld [vmem:[#allocation2 + $0x2c] sm:$0xf]
        %v4366 = vld [vmem:[#allocation2 + $0x30] sm:$0xf]
        %v4367 = vld [vmem:[#allocation2 + $0x34] sm:$0xf]
        %v4368 = vld [vmem:[#allocation2 + $0x38] sm:$0xf]
        %v4369 = vld [vmem:[#allocation2 + $0x3c] sm:$0xf]
        %v4370 = vld [vmem:[#allocation2 + $0x40] sm:$0xf]
        %v4371 = vld [vmem:[#allocation2 + $0x44] sm:$0xf]
        %v4372 = vld [vmem:[#allocation2 + $0x48] sm:$0xf]
        %v4373 = vld [vmem:[#allocation2 + $0x4c] sm:$0xf]
        %v4374 = vld [vmem:[#allocation2 + $0x50] sm:$0xf]
        %v4375 = vld [vmem:[#allocation2 + $0x54] sm:$0xf]
        %v4376 = vld [vmem:[#allocation2 + $0x58] sm:$0xf]
        %v4377 = vld [vmem:[#allocation2 + $0x5c] sm:$0xf]
        %v4378 = vld [vmem:[#allocation2 + $0x60] sm:$0xf]
        %v4379 = vld [vmem:[#allocation2 + $0x64] sm:$0xf]
        %v4380 = vld [vmem:[#allocation2 + $0x68] sm:$0xf]
        %v4381 = vld [vmem:[#allocation2 + $0x6c] sm:$0xf]
        %v4382 = vld [vmem:[#allocation2 + $0x70] sm:$0xf]
        %v4383 = vld [vmem:[#allocation2 + $0x74] sm:$0xf]
        %v4384 = vld [vmem:[#allocation2 + $0x78] sm:$0xf]
        %v4385 = vld [vmem:[#allocation2 + $0x7c] sm:$0xf]
        %v4386 = vld [vmem:[#allocation2 + $0x80] sm:$0xf]
        %v4387 = vld [vmem:[#allocation2 + $0x84] sm:$0xf]
        %v4388 = vld [vmem:[#allocation2 + $0x88] sm:$0xf]
        %v4389 = vld [vmem:[#allocation2 + $0x8c] sm:$0xf]
        %v4426 = vunpack.c.l.b16 %v4354
        %v4427 = vunpack.c.l.b16 %v4355
        %v4428 = vunpack.c.l.b16 %v4356
        %v4429 = vunpack.c.l.b16 %v4357
        %v4430 = vunpack.c.l.b16 %v4358
        %v4431 = vunpack.c.l.b16 %v4359
        %v4432 = vunpack.c.l.b16 %v4360
        %v4433 = vunpack.c.l.b16 %v4361
        %v4434 = vunpack.c.l.b16 %v4362
        %v4435 = vunpack.c.l.b16 %v4363
        %v4436 = vunpack.c.l.b16 %v4364
        %v4437 = vunpack.c.l.b16 %v4365
        %v4438 = vunpack.c.l.b16 %v4366
        %v4439 = vunpack.c.l.b16 %v4367
        %v4440 = vunpack.c.l.b16 %v4368
        %v4441 = vunpack.c.l.b16 %v4369
        %v4442 = vunpack.c.l.b16 %v4370
        %v4443 = vunpack.c.l.b16 %v4371
        %v4444 = vunpack.c.l.b16 %v4372
        %v4445 = vunpack.c.l.b16 %v4373
        %v4446 = vunpack.c.l.b16 %v4374
        %v4447 = vunpack.c.l.b16 %v4375
        %v4448 = vunpack.c.l.b16 %v4376
        %v4449 = vunpack.c.l.b16 %v4377
        %v4450 = vunpack.c.l.b16 %v4378
        %v4451 = vunpack.c.l.b16 %v4379
        %v4452 = vunpack.c.l.b16 %v4380
        %v4453 = vunpack.c.l.b16 %v4381
        %v4454 = vunpack.c.l.b16 %v4382
        %v4455 = vunpack.c.l.b16 %v4383
        %v4456 = vunpack.c.l.b16 %v4384
        %v4457 = vunpack.c.l.b16 %v4385
        %v4458 = vunpack.c.l.b16 %v4386
        %v4459 = vunpack.c.l.b16 %v4387
        %v4460 = vunpack.c.l.b16 %v4388
        %v4461 = vunpack.c.l.b16 %v4389
        %v4462 = vpack.c.b16 %v4427, %v4426
        %v4463 = vpack.c.b16 %v4429, %v4428
        %v4464 = vpack.c.b16 %v4431, %v4430
        %v4465 = vpack.c.b16 %v4433, %v4432
        %v4466 = vpack.c.b16 %v4435, %v4434
        %v4467 = vpack.c.b16 %v4437, %v4436
        %v4468 = vpack.c.b16 %v4439, %v4438
        %v4469 = vpack.c.b16 %v4441, %v4440
        %v4470 = vpack.c.b16 %v4443, %v4442
        %v4471 = vpack.c.b16 %v4445, %v4444
        %v4472 = vpack.c.b16 %v4447, %v4446
        %v4473 = vpack.c.b16 %v4449, %v4448
        %v4474 = vpack.c.b16 %v4451, %v4450
        %v4475 = vpack.c.b16 %v4453, %v4452
        %v4476 = vpack.c.b16 %v4455, %v4454
        %v4477 = vpack.c.b16 %v4457, %v4456
        %v4478 = vpack.c.b16 %v4459, %v4458
        %v4479 = vpack.c.b16 %v4461, %v4460
        %4498 = vst.msk [vmem:[#allocation3] sm:$0xff] %vm456, %v4462
        %4499 = vst.msk [vmem:[#allocation3 + $0x28] sm:$0xff] %vm456, %v4463
        %4500 = vst.msk [vmem:[#allocation3 + $0x50] sm:$0xff] %vm456, %v4464
        %4501 = vst.msk [vmem:[#allocation3 + $0x78] sm:$0xff] %vm456, %v4465
        %4502 = vst.msk [vmem:[#allocation3 + $0xa0] sm:$0xff] %vm456, %v4466
        %4503 = vst.msk [vmem:[#allocation3 + $0xc8] sm:$0xff] %vm456, %v4467
        %4504 = vst.msk [vmem:[#allocation3 + $0xf0] sm:$0xff] %vm456, %v4468
        %4505 = vst.msk [vmem:[#allocation3 + $0x118] sm:$0xff] %vm456, %v4469
        %4506 = vst.msk [vmem:[#allocation3 + $0x140] sm:$0xff] %vm456, %v4470
        %4507 = vst.msk [vmem:[#allocation3 + $0x168] sm:$0xff] %vm456, %v4471
        %4508 = vst.msk [vmem:[#allocation3 + $0x190] sm:$0xff] %vm456, %v4472
        %4509 = vst.msk [vmem:[#allocation3 + $0x1b8] sm:$0xff] %vm456, %v4473
        %4510 = vst.msk [vmem:[#allocation3 + $0x1e0] sm:$0xff] %vm456, %v4474
        %4511 = vst.msk [vmem:[#allocation3 + $0x208] sm:$0xff] %vm456, %v4475
        %4512 = vst.msk [vmem:[#allocation3 + $0x230] sm:$0xff] %vm456, %v4476
        %4513 = vst.msk [vmem:[#allocation3 + $0x258] sm:$0xff] %vm456, %v4477
        %4514 = vst.msk [vmem:[#allocation3 + $0x280] sm:$0xff] %vm456, %v4478
        %4515 = vst.msk [vmem:[#allocation3 + $0x2a8] sm:$0xff] %vm456, %v4479
        %v4516 = vld [vmem:[#allocation2] sm:$0xf]
        %v4517 = vld [vmem:[#allocation2 + $0x4] sm:$0xf]
        %v4518 = vld [vmem:[#allocation2 + $0x8] sm:$0xf]
        %v4519 = vld [vmem:[#allocation2 + $0xc] sm:$0xf]
        %v4520 = vld [vmem:[#allocation2 + $0x10] sm:$0xf]
        %v4521 = vld [vmem:[#allocation2 + $0x14] sm:$0xf]
        %v4522 = vld [vmem:[#allocation2 + $0x18] sm:$0xf]
        %v4523 = vld [vmem:[#allocation2 + $0x1c] sm:$0xf]
        %v4524 = vld [vmem:[#allocation2 + $0x20] sm:$0xf]
        %v4525 = vld [vmem:[#allocation2 + $0x24] sm:$0xf]
        %v4526 = vld [vmem:[#allocation2 + $0x28] sm:$0xf]
        %v4527 = vld [vmem:[#allocation2 + $0x2c] sm:$0xf]
        %v4528 = vld [vmem:[#allocation2 + $0x30] sm:$0xf]
        %v4529 = vld [vmem:[#allocation2 + $0x34] sm:$0xf]
        %v4530 = vld [vmem:[#allocation2 + $0x38] sm:$0xf]
        %v4531 = vld [vmem:[#allocation2 + $0x3c] sm:$0xf]
        %v4532 = vld [vmem:[#allocation2 + $0x40] sm:$0xf]
        %v4533 = vld [vmem:[#allocation2 + $0x44] sm:$0xf]
        %v4534 = vld [vmem:[#allocation2 + $0x48] sm:$0xf]
        %v4535 = vld [vmem:[#allocation2 + $0x4c] sm:$0xf]
        %v4536 = vld [vmem:[#allocation2 + $0x50] sm:$0xf]
        %v4537 = vld [vmem:[#allocation2 + $0x54] sm:$0xf]
        %v4538 = vld [vmem:[#allocation2 + $0x58] sm:$0xf]
        %v4539 = vld [vmem:[#allocation2 + $0x5c] sm:$0xf]
        %v4540 = vld [vmem:[#allocation2 + $0x60] sm:$0xf]
        %v4541 = vld [vmem:[#allocation2 + $0x64] sm:$0xf]
        %v4542 = vld [vmem:[#allocation2 + $0x68] sm:$0xf]
        %v4543 = vld [vmem:[#allocation2 + $0x6c] sm:$0xf]
        %v4544 = vld [vmem:[#allocation2 + $0x70] sm:$0xf]
        %v4545 = vld [vmem:[#allocation2 + $0x74] sm:$0xf]
        %v4546 = vld [vmem:[#allocation2 + $0x78] sm:$0xf]
        %v4547 = vld [vmem:[#allocation2 + $0x7c] sm:$0xf]
        %v4548 = vld [vmem:[#allocation2 + $0x80] sm:$0xf]
        %v4549 = vld [vmem:[#allocation2 + $0x84] sm:$0xf]
        %v4550 = vld [vmem:[#allocation2 + $0x88] sm:$0xf]
        %v4551 = vld [vmem:[#allocation2 + $0x8c] sm:$0xf]
        %v4552 = vld [vmem:[#allocation2 + $0x90] sm:$0x1]
        %v4590 = vunpack.c.l.b16 %v4516
        %v4591 = vunpack.c.l.b16 %v4517
        %v4592 = vunpack.c.l.b16 %v4518
        %v4593 = vunpack.c.l.b16 %v4519
        %v4594 = vunpack.c.l.b16 %v4520
        %v4595 = vunpack.c.l.b16 %v4521
        %v4596 = vunpack.c.l.b16 %v4522
        %v4597 = vunpack.c.l.b16 %v4523
        %v4598 = vunpack.c.l.b16 %v4524
        %v4599 = vunpack.c.l.b16 %v4525
        %v4600 = vunpack.c.l.b16 %v4526
        %v4601 = vunpack.c.l.b16 %v4527
        %v4602 = vunpack.c.l.b16 %v4528
        %v4603 = vunpack.c.l.b16 %v4529
        %v4604 = vunpack.c.l.b16 %v4530
        %v4605 = vunpack.c.l.b16 %v4531
        %v4606 = vunpack.c.l.b16 %v4532
        %v4607 = vunpack.c.l.b16 %v4533
        %v4608 = vunpack.c.l.b16 %v4534
        %v4609 = vunpack.c.l.b16 %v4535
        %v4610 = vunpack.c.l.b16 %v4536
        %v4611 = vunpack.c.l.b16 %v4537
        %v4612 = vunpack.c.l.b16 %v4538
        %v4613 = vunpack.c.l.b16 %v4539
        %v4614 = vunpack.c.l.b16 %v4540
        %v4615 = vunpack.c.l.b16 %v4541
        %v4616 = vunpack.c.l.b16 %v4542
        %v4617 = vunpack.c.l.b16 %v4543
        %v4618 = vunpack.c.l.b16 %v4544
        %v4619 = vunpack.c.l.b16 %v4545
        %v4620 = vunpack.c.l.b16 %v4546
        %v4621 = vunpack.c.l.b16 %v4547
        %v4622 = vunpack.c.l.b16 %v4548
        %v4623 = vunpack.c.l.b16 %v4549
        %v4624 = vunpack.c.l.b16 %v4550
        %v4625 = vunpack.c.l.b16 %v4551
        %v4626 = vunpack.c.l.b16 %v4552
        %v4627 = vpack.c.b16 %v4591, %v4590
        %v4628 = vpack.c.b16 %v4593, %v4592
        %v4629 = vpack.c.b16 %v4595, %v4594
        %v4630 = vpack.c.b16 %v4597, %v4596
        %v4631 = vpack.c.b16 %v4599, %v4598
        %v4632 = vpack.c.b16 %v4601, %v4600
        %v4633 = vpack.c.b16 %v4603, %v4602
        %v4634 = vpack.c.b16 %v4605, %v4604
        %v4635 = vpack.c.b16 %v4607, %v4606
        %v4636 = vpack.c.b16 %v4609, %v4608
        %v4637 = vpack.c.b16 %v4611, %v4610
        %v4638 = vpack.c.b16 %v4613, %v4612
        %v4639 = vpack.c.b16 %v4615, %v4614
        %v4640 = vpack.c.b16 %v4617, %v4616
        %v4641 = vpack.c.b16 %v4619, %v4618
        %v4642 = vpack.c.b16 %v4621, %v4620
        %v4643 = vpack.c.b16 %v4623, %v4622
        %v4644 = vpack.c.b16 %v4625, %v4624
        %v4645 = vpack.c.b16 %v4626, %v4626
        %v4647 = vshrl.u32 %v4627, 16
        %v4649 = vshll.u32 %v4627, 16
        %v4651 = vrot.slane %v4649, 1
        %v4652 = vor.u32 %v4647, %v4651
        %v4654 = vshll.u32 %v4628, 16
        %v4656 = vrot.slane %v4654, 1
        %v4657 = vsel %vm605, %v4652, %v4656
        %v4658 = vshrl.u32 %v4628, 16
        %v4660 = vor.u32 %v4658, %v4656
        %v4662 = vshll.u32 %v4629, 16
        %v4664 = vrot.slane %v4662, 1
        %v4665 = vsel %vm605, %v4660, %v4664
        %v4666 = vshrl.u32 %v4629, 16
        %v4668 = vor.u32 %v4666, %v4664
        %v4670 = vshll.u32 %v4630, 16
        %v4672 = vrot.slane %v4670, 1
        %v4673 = vsel %vm605, %v4668, %v4672
        %v4674 = vshrl.u32 %v4630, 16
        %v4676 = vor.u32 %v4674, %v4672
        %v4678 = vshll.u32 %v4631, 16
        %v4680 = vrot.slane %v4678, 1
        %v4681 = vsel %vm605, %v4676, %v4680
        %v4682 = vshrl.u32 %v4631, 16
        %v4684 = vor.u32 %v4682, %v4680
        %v4686 = vshll.u32 %v4632, 16
        %v4688 = vrot.slane %v4686, 1
        %v4689 = vsel %vm605, %v4684, %v4688
        %v4690 = vshrl.u32 %v4632, 16
        %v4692 = vor.u32 %v4690, %v4688
        %v4694 = vshll.u32 %v4633, 16
        %v4696 = vrot.slane %v4694, 1
        %v4697 = vsel %vm605, %v4692, %v4696
        %v4698 = vshrl.u32 %v4633, 16
        %v4700 = vor.u32 %v4698, %v4696
        %v4702 = vshll.u32 %v4634, 16
        %v4704 = vrot.slane %v4702, 1
        %v4705 = vsel %vm605, %v4700, %v4704
        %v4706 = vshrl.u32 %v4634, 16
        %v4708 = vor.u32 %v4706, %v4704
        %v4710 = vshll.u32 %v4635, 16
        %v4712 = vrot.slane %v4710, 1
        %v4713 = vsel %vm605, %v4708, %v4712
        %v4714 = vshrl.u32 %v4635, 16
        %v4716 = vor.u32 %v4714, %v4712
        %v4718 = vshll.u32 %v4636, 16
        %v4720 = vrot.slane %v4718, 1
        %v4721 = vsel %vm605, %v4716, %v4720
        %v4722 = vshrl.u32 %v4636, 16
        %v4724 = vor.u32 %v4722, %v4720
        %v4726 = vshll.u32 %v4637, 16
        %v4728 = vrot.slane %v4726, 1
        %v4729 = vsel %vm605, %v4724, %v4728
        %v4730 = vshrl.u32 %v4637, 16
        %v4732 = vor.u32 %v4730, %v4728
        %v4734 = vshll.u32 %v4638, 16
        %v4736 = vrot.slane %v4734, 1
        %v4737 = vsel %vm605, %v4732, %v4736
        %v4738 = vshrl.u32 %v4638, 16
        %v4740 = vor.u32 %v4738, %v4736
        %v4742 = vshll.u32 %v4639, 16
        %v4744 = vrot.slane %v4742, 1
        %v4745 = vsel %vm605, %v4740, %v4744
        %v4746 = vshrl.u32 %v4639, 16
        %v4748 = vor.u32 %v4746, %v4744
        %v4750 = vshll.u32 %v4640, 16
        %v4752 = vrot.slane %v4750, 1
        %v4753 = vsel %vm605, %v4748, %v4752
        %v4754 = vshrl.u32 %v4640, 16
        %v4756 = vor.u32 %v4754, %v4752
        %v4758 = vshll.u32 %v4641, 16
        %v4760 = vrot.slane %v4758, 1
        %v4761 = vsel %vm605, %v4756, %v4760
        %v4762 = vshrl.u32 %v4641, 16
        %v4764 = vor.u32 %v4762, %v4760
        %v4766 = vshll.u32 %v4642, 16
        %v4768 = vrot.slane %v4766, 1
        %v4769 = vsel %vm605, %v4764, %v4768
        %v4770 = vshrl.u32 %v4642, 16
        %v4772 = vor.u32 %v4770, %v4768
        %v4774 = vshll.u32 %v4643, 16
        %v4776 = vrot.slane %v4774, 1
        %v4777 = vsel %vm605, %v4772, %v4776
        %v4778 = vshrl.u32 %v4643, 16
        %v4780 = vor.u32 %v4778, %v4776
        %v4782 = vshll.u32 %v4644, 16
        %v4784 = vrot.slane %v4782, 1
        %v4785 = vsel %vm605, %v4780, %v4784
        %v4786 = vshrl.u32 %v4644, 16
        %v4788 = vor.u32 %v4786, %v4784
        %v4790 = vshll.u32 %v4645, 16
        %v4792 = vrot.slane %v4790, 1
        %v4793 = vsel %vm605, %v4788, %v4792
        %4794 = vrot.lane.b32.xlu0 %v4657, 64
        %v4795 = vpop.permute.xlu0 %4794
        %4796 = vrot.lane.b32.xlu0 %v4665, 64
        %v4797 = vpop.permute.xlu0 %4796
        %4798 = vrot.lane.b32.xlu0 %v4673, 64
        %v4799 = vpop.permute.xlu0 %4798
        %4800 = vrot.lane.b32.xlu0 %v4681, 64
        %v4801 = vpop.permute.xlu0 %4800
        %4802 = vrot.lane.b32.xlu0 %v4689, 64
        %v4803 = vpop.permute.xlu0 %4802
        %4804 = vrot.lane.b32.xlu0 %v4697, 64
        %v4805 = vpop.permute.xlu0 %4804
        %4806 = vrot.lane.b32.xlu0 %v4705, 64
        %v4807 = vpop.permute.xlu0 %4806
        %4808 = vrot.lane.b32.xlu0 %v4713, 64
        %v4809 = vpop.permute.xlu0 %4808
        %4810 = vrot.lane.b32.xlu0 %v4721, 64
        %v4811 = vpop.permute.xlu0 %4810
        %4812 = vrot.lane.b32.xlu0 %v4729, 64
        %v4813 = vpop.permute.xlu0 %4812
        %4814 = vrot.lane.b32.xlu0 %v4737, 64
        %v4815 = vpop.permute.xlu0 %4814
        %4816 = vrot.lane.b32.xlu0 %v4745, 64
        %v4817 = vpop.permute.xlu0 %4816
        %4818 = vrot.lane.b32.xlu0 %v4753, 64
        %v4819 = vpop.permute.xlu0 %4818
        %4820 = vrot.lane.b32.xlu0 %v4761, 64
        %v4821 = vpop.permute.xlu0 %4820
        %4822 = vrot.lane.b32.xlu0 %v4769, 64
        %v4823 = vpop.permute.xlu0 %4822
        %4824 = vrot.lane.b32.xlu0 %v4777, 64
        %v4825 = vpop.permute.xlu0 %4824
        %4826 = vrot.lane.b32.xlu0 %v4785, 64
        %v4827 = vpop.permute.xlu0 %4826
        %4828 = vrot.lane.b32.xlu0 %v4793, 64
        %v4829 = vpop.permute.xlu0 %4828
        %4848 = vst.msk [vmem:[#allocation3] sm:$0xff] %vm808, %v4795
        %4849 = vst.msk [vmem:[#allocation3 + $0x28] sm:$0xff] %vm808, %v4797
        %4850 = vst.msk [vmem:[#allocation3 + $0x50] sm:$0xff] %vm808, %v4799
        %4851 = vst.msk [vmem:[#allocation3 + $0x78] sm:$0xff] %vm808, %v4801
        %4852 = vst.msk [vmem:[#allocation3 + $0xa0] sm:$0xff] %vm808, %v4803
        %4853 = vst.msk [vmem:[#allocation3 + $0xc8] sm:$0xff] %vm808, %v4805
        %4854 = vst.msk [vmem:[#allocation3 + $0xf0] sm:$0xff] %vm808, %v4807
        %4855 = vst.msk [vmem:[#allocation3 + $0x118] sm:$0xff] %vm808, %v4809
        %4856 = vst.msk [vmem:[#allocation3 + $0x140] sm:$0xff] %vm808, %v4811
        %4857 = vst.msk [vmem:[#allocation3 + $0x168] sm:$0xff] %vm808, %v4813
        %4858 = vst.msk [vmem:[#allocation3 + $0x190] sm:$0xff] %vm808, %v4815
        %4859 = vst.msk [vmem:[#allocation3 + $0x1b8] sm:$0xff] %vm808, %v4817
        %4860 = vst.msk [vmem:[#allocation3 + $0x1e0] sm:$0xff] %vm808, %v4819
        %4861 = vst.msk [vmem:[#allocation3 + $0x208] sm:$0xff] %vm808, %v4821
        %4862 = vst.msk [vmem:[#allocation3 + $0x230] sm:$0xff] %vm808, %v4823
        %4863 = vst.msk [vmem:[#allocation3 + $0x258] sm:$0xff] %vm808, %v4825
        %4864 = vst.msk [vmem:[#allocation3 + $0x280] sm:$0xff] %vm808, %v4827
        %4865 = vst.msk [vmem:[#allocation3 + $0x2a8] sm:$0xff] %vm808, %v4829
        %v4866 = vld [vmem:[#allocation2] sm:$0xe]
        %v4867 = vld [vmem:[#allocation2 + $0x4] sm:$0xf]
        %v4868 = vld [vmem:[#allocation2 + $0x8] sm:$0xf]
        %v4869 = vld [vmem:[#allocation2 + $0xc] sm:$0xf]
        %v4870 = vld [vmem:[#allocation2 + $0x10] sm:$0xf]
        %v4871 = vld [vmem:[#allocation2 + $0x14] sm:$0xf]
        %v4872 = vld [vmem:[#allocation2 + $0x18] sm:$0xf]
        %v4873 = vld [vmem:[#allocation2 + $0x1c] sm:$0xf]
        %v4874 = vld [vmem:[#allocation2 + $0x20] sm:$0xf]
        %v4875 = vld [vmem:[#allocation2 + $0x24] sm:$0xf]
        %v4876 = vld [vmem:[#allocation2 + $0x28] sm:$0xf]
        %v4877 = vld [vmem:[#allocation2 + $0x2c] sm:$0xf]
        %v4878 = vld [vmem:[#allocation2 + $0x30] sm:$0xf]
        %v4879 = vld [vmem:[#allocation2 + $0x34] sm:$0xf]
        %v4880 = vld [vmem:[#allocation2 + $0x38] sm:$0xf]
        %v4881 = vld [vmem:[#allocation2 + $0x3c] sm:$0xf]
        %v4882 = vld [vmem:[#allocation2 + $0x40] sm:$0xf]
        %v4883 = vld [vmem:[#allocation2 + $0x44] sm:$0xf]
        %v4884 = vld [vmem:[#allocation2 + $0x48] sm:$0xf]
        %v4885 = vld [vmem:[#allocation2 + $0x4c] sm:$0xf]
        %v4886 = vld [vmem:[#allocation2 + $0x50] sm:$0xf]
        %v4887 = vld [vmem:[#allocation2 + $0x54] sm:$0xf]
        %v4888 = vld [vmem:[#allocation2 + $0x58] sm:$0xf]
        %v4889 = vld [vmem:[#allocation2 + $0x5c] sm:$0xf]
        %v4890 = vld [vmem:[#allocation2 + $0x60] sm:$0xf]
        %v4891 = vld [vmem:[#allocation2 + $0x64] sm:$0xf]
        %v4892 = vld [vmem:[#allocation2 + $0x68] sm:$0xf]
        %v4893 = vld [vmem:[#allocation2 + $0x6c] sm:$0xf]
        %v4894 = vld [vmem:[#allocation2 + $0x70] sm:$0xf]
        %v4895 = vld [vmem:[#allocation2 + $0x74] sm:$0xf]
        %v4896 = vld [vmem:[#allocation2 + $0x78] sm:$0xf]
        %v4897 = vld [vmem:[#allocation2 + $0x7c] sm:$0xf]
        %v4898 = vld [vmem:[#allocation2 + $0x80] sm:$0xf]
        %v4899 = vld [vmem:[#allocation2 + $0x84] sm:$0xf]
        %v4900 = vld [vmem:[#allocation2 + $0x88] sm:$0xf]
        %v4901 = vld [vmem:[#allocation2 + $0x8c] sm:$0xf]
        %v4902 = vld [vmem:[#allocation2 + $0x90] sm:$0x1]
        %v4940 = vunpack.c.l.b16 %v4866
        %v4941 = vunpack.c.l.b16 %v4867
        %v4942 = vunpack.c.l.b16 %v4868
        %v4943 = vunpack.c.l.b16 %v4869
        %v4944 = vunpack.c.l.b16 %v4870
        %v4945 = vunpack.c.l.b16 %v4871
        %v4946 = vunpack.c.l.b16 %v4872
        %v4947 = vunpack.c.l.b16 %v4873
        %v4948 = vunpack.c.l.b16 %v4874
        %v4949 = vunpack.c.l.b16 %v4875
        %v4950 = vunpack.c.l.b16 %v4876
        %v4951 = vunpack.c.l.b16 %v4877
        %v4952 = vunpack.c.l.b16 %v4878
        %v4953 = vunpack.c.l.b16 %v4879
        %v4954 = vunpack.c.l.b16 %v4880
        %v4955 = vunpack.c.l.b16 %v4881
        %v4956 = vunpack.c.l.b16 %v4882
        %v4957 = vunpack.c.l.b16 %v4883
        %v4958 = vunpack.c.l.b16 %v4884
        %v4959 = vunpack.c.l.b16 %v4885
        %v4960 = vunpack.c.l.b16 %v4886
        %v4961 = vunpack.c.l.b16 %v4887
        %v4962 = vunpack.c.l.b16 %v4888
        %v4963 = vunpack.c.l.b16 %v4889
        %v4964 = vunpack.c.l.b16 %v4890
        %v4965 = vunpack.c.l.b16 %v4891
        %v4966 = vunpack.c.l.b16 %v4892
        %v4967 = vunpack.c.l.b16 %v4893
        %v4968 = vunpack.c.l.b16 %v4894
        %v4969 = vunpack.c.l.b16 %v4895
        %v4970 = vunpack.c.l.b16 %v4896
        %v4971 = vunpack.c.l.b16 %v4897
        %v4972 = vunpack.c.l.b16 %v4898
        %v4973 = vunpack.c.l.b16 %v4899
        %v4974 = vunpack.c.l.b16 %v4900
        %v4975 = vunpack.c.l.b16 %v4901
        %v4976 = vunpack.c.l.b16 %v4902
        %v4977 = vpack.c.b16 %v4941, %v4940
        %v4978 = vpack.c.b16 %v4943, %v4942
        %v4979 = vpack.c.b16 %v4945, %v4944
        %v4980 = vpack.c.b16 %v4947, %v4946
        %v4981 = vpack.c.b16 %v4949, %v4948
        %v4982 = vpack.c.b16 %v4951, %v4950
        %v4983 = vpack.c.b16 %v4953, %v4952
        %v4984 = vpack.c.b16 %v4955, %v4954
        %v4985 = vpack.c.b16 %v4957, %v4956
        %v4986 = vpack.c.b16 %v4959, %v4958
        %v4987 = vpack.c.b16 %v4961, %v4960
        %v4988 = vpack.c.b16 %v4963, %v4962
        %v4989 = vpack.c.b16 %v4965, %v4964
        %v4990 = vpack.c.b16 %v4967, %v4966
        %v4991 = vpack.c.b16 %v4969, %v4968
        %v4992 = vpack.c.b16 %v4971, %v4970
        %v4993 = vpack.c.b16 %v4973, %v4972
        %v4994 = vpack.c.b16 %v4975, %v4974
        %v4995 = vpack.c.b16 %v4976, %v4976
        %v4996 = vrot.slane %v4977, 1
        %v4997 = vrot.slane %v4978, 1
        %v4998 = vsel %vm957, %v4996, %v4997
        %v4999 = vrot.slane %v4979, 1
        %v5000 = vsel %vm957, %v4997, %v4999
        %v5001 = vrot.slane %v4980, 1
        %v5002 = vsel %vm957, %v4999, %v5001
        %v5003 = vrot.slane %v4981, 1
        %v5004 = vsel %vm957, %v5001, %v5003
        %v5005 = vrot.slane %v4982, 1
        %v5006 = vsel %vm957, %v5003, %v5005
        %v5007 = vrot.slane %v4983, 1
        %v5008 = vsel %vm957, %v5005, %v5007
        %v5009 = vrot.slane %v4984, 1
        %v5010 = vsel %vm957, %v5007, %v5009
        %v5011 = vrot.slane %v4985, 1
        %v5012 = vsel %vm957, %v5009, %v5011
        %v5013 = vrot.slane %v4986, 1
        %v5014 = vsel %vm957, %v5011, %v5013
        %v5015 = vrot.slane %v4987, 1
        %v5016 = vsel %vm957, %v5013, %v5015
        %v5017 = vrot.slane %v4988, 1
        %v5018 = vsel %vm957, %v5015, %v5017
        %v5019 = vrot.slane %v4989, 1
        %v5020 = vsel %vm957, %v5017, %v5019
        %v5021 = vrot.slane %v4990, 1
        %v5022 = vsel %vm957, %v5019, %v5021
        %v5023 = vrot.slane %v4991, 1
        %v5024 = vsel %vm957, %v5021, %v5023
        %v5025 = vrot.slane %v4992, 1
        %v5026 = vsel %vm957, %v5023, %v5025
        %v5027 = vrot.slane %v4993, 1
        %v5028 = vsel %vm957, %v5025, %v5027
        %v5029 = vrot.slane %v4994, 1
        %v5030 = vsel %vm957, %v5027, %v5029
        %v5031 = vrot.slane %v4995, 1
        %v5032 = vsel %vm957, %v5029, %v5031
        %5051 = vst.msk [vmem:[#allocation3 + $0x8] sm:$0xff] %vm456, %v4998
        %5052 = vst.msk [vmem:[#allocation3 + $0x30] sm:$0xff] %vm456, %v5000
        %5053 = vst.msk [vmem:[#allocation3 + $0x58] sm:$0xff] %vm456, %v5002
        %5054 = vst.msk [vmem:[#allocation3 + $0x80] sm:$0xff] %vm456, %v5004
        %5055 = vst.msk [vmem:[#allocation3 + $0xa8] sm:$0xff] %vm456, %v5006
        %5056 = vst.msk [vmem:[#allocation3 + $0xd0] sm:$0xff] %vm456, %v5008
        %5057 = vst.msk [vmem:[#allocation3 + $0xf8] sm:$0xff] %vm456, %v5010
        %5058 = vst.msk [vmem:[#allocation3 + $0x120] sm:$0xff] %vm456, %v5012
        %5059 = vst.msk [vmem:[#allocation3 + $0x148] sm:$0xff] %vm456, %v5014
        %5060 = vst.msk [vmem:[#allocation3 + $0x170] sm:$0xff] %vm456, %v5016
        %5061 = vst.msk [vmem:[#allocation3 + $0x198] sm:$0xff] %vm456, %v5018
        %5062 = vst.msk [vmem:[#allocation3 + $0x1c0] sm:$0xff] %vm456, %v5020
        %5063 = vst.msk [vmem:[#allocation3 + $0x1e8] sm:$0xff] %vm456, %v5022
        %5064 = vst.msk [vmem:[#allocation3 + $0x210] sm:$0xff] %vm456, %v5024
        %5065 = vst.msk [vmem:[#allocation3 + $0x238] sm:$0xff] %vm456, %v5026
        %5066 = vst.msk [vmem:[#allocation3 + $0x260] sm:$0xff] %vm456, %v5028
        %5067 = vst.msk [vmem:[#allocation3 + $0x288] sm:$0xff] %vm456, %v5030
        %5068 = vst.msk [vmem:[#allocation3 + $0x2b0] sm:$0xff] %vm456, %v5032
        %v5069 = vld [vmem:[#allocation2 + $0x8] sm:$0xe]
        %v5070 = vld [vmem:[#allocation2 + $0xc] sm:$0xf]
        %v5071 = vld [vmem:[#allocation2 + $0x10] sm:$0xf]
        %v5072 = vld [vmem:[#allocation2 + $0x14] sm:$0xf]
        %v5073 = vld [vmem:[#allocation2 + $0x18] sm:$0xf]
        %v5074 = vld [vmem:[#allocation2 + $0x1c] sm:$0xf]
        %v5075 = vld [vmem:[#allocation2 + $0x20] sm:$0xf]
        %v5076 = vld [vmem:[#allocation2 + $0x24] sm:$0xf]
        %v5077 = vld [vmem:[#allocation2 + $0x28] sm:$0xf]
        %v5078 = vld [vmem:[#allocation2 + $0x2c] sm:$0xf]
        %v5079 = vld [vmem:[#allocation2 + $0x30] sm:$0xf]
        %v5080 = vld [vmem:[#allocation2 + $0x34] sm:$0xf]
        %v5081 = vld [vmem:[#allocation2 + $0x38] sm:$0xf]
        %v5082 = vld [vmem:[#allocation2 + $0x3c] sm:$0xf]
        %v5083 = vld [vmem:[#allocation2 + $0x40] sm:$0xf]
        %v5084 = vld [vmem:[#allocation2 + $0x44] sm:$0xf]
        %v5085 = vld [vmem:[#allocation2 + $0x48] sm:$0xf]
        %v5086 = vld [vmem:[#allocation2 + $0x4c] sm:$0xf]
        %v5087 = vld [vmem:[#allocation2 + $0x50] sm:$0xf]
        %v5088 = vld [vmem:[#allocation2 + $0x54] sm:$0xf]
        %v5089 = vld [vmem:[#allocation2 + $0x58] sm:$0xf]
        %v5090 = vld [vmem:[#allocation2 + $0x5c] sm:$0xf]
        %v5091 = vld [vmem:[#allocation2 + $0x60] sm:$0xf]
        %v5092 = vld [vmem:[#allocation2 + $0x64] sm:$0xf]
        %v5093 = vld [vmem:[#allocation2 + $0x68] sm:$0xf]
        %v5094 = vld [vmem:[#allocation2 + $0x6c] sm:$0xf]
        %v5095 = vld [vmem:[#allocation2 + $0x70] sm:$0xf]
        %v5096 = vld [vmem:[#allocation2 + $0x74] sm:$0xf]
        %v5097 = vld [vmem:[#allocation2 + $0x78] sm:$0xf]
        %v5098 = vld [vmem:[#allocation2 + $0x7c] sm:$0xf]
        %v5099 = vld [vmem:[#allocation2 + $0x80] sm:$0xf]
        %v5100 = vld [vmem:[#allocation2 + $0x84] sm:$0xf]
        %v5101 = vld [vmem:[#allocation2 + $0x88] sm:$0xf]
        %v5102 = vld [vmem:[#allocation2 + $0x8c] sm:$0xf]
        %v5103 = vld [vmem:[#allocation2 + $0x90] sm:$0xf]
        %v5104 = vld [vmem:[#allocation2 + $0x94] sm:$0xf]
        %v5105 = vld [vmem:[#allocation2 + $0x98] sm:$0x1]
        %v5143 = vunpack.c.l.b16 %v5069
        %v5144 = vunpack.c.l.b16 %v5070
        %v5145 = vunpack.c.l.b16 %v5071
        %v5146 = vunpack.c.l.b16 %v5072
        %v5147 = vunpack.c.l.b16 %v5073
        %v5148 = vunpack.c.l.b16 %v5074
        %v5149 = vunpack.c.l.b16 %v5075
        %v5150 = vunpack.c.l.b16 %v5076
        %v5151 = vunpack.c.l.b16 %v5077
        %v5152 = vunpack.c.l.b16 %v5078
        %v5153 = vunpack.c.l.b16 %v5079
        %v5154 = vunpack.c.l.b16 %v5080
        %v5155 = vunpack.c.l.b16 %v5081
        %v5156 = vunpack.c.l.b16 %v5082
        %v5157 = vunpack.c.l.b16 %v5083
        %v5158 = vunpack.c.l.b16 %v5084
        %v5159 = vunpack.c.l.b16 %v5085
        %v5160 = vunpack.c.l.b16 %v5086
        %v5161 = vunpack.c.l.b16 %v5087
        %v5162 = vunpack.c.l.b16 %v5088
        %v5163 = vunpack.c.l.b16 %v5089
        %v5164 = vunpack.c.l.b16 %v5090
        %v5165 = vunpack.c.l.b16 %v5091
        %v5166 = vunpack.c.l.b16 %v5092
        %v5167 = vunpack.c.l.b16 %v5093
        %v5168 = vunpack.c.l.b16 %v5094
        %v5169 = vunpack.c.l.b16 %v5095
        %v5170 = vunpack.c.l.b16 %v5096
        %v5171 = vunpack.c.l.b16 %v5097
        %v5172 = vunpack.c.l.b16 %v5098
        %v5173 = vunpack.c.l.b16 %v5099
        %v5174 = vunpack.c.l.b16 %v5100
        %v5175 = vunpack.c.l.b16 %v5101
        %v5176 = vunpack.c.l.b16 %v5102
        %v5177 = vunpack.c.l.b16 %v5103
        %v5178 = vunpack.c.l.b16 %v5104
        %v5179 = vunpack.c.l.b16 %v5105
        %v5180 = vpack.c.b16 %v5144, %v5143
        %v5181 = vpack.c.b16 %v5146, %v5145
        %v5182 = vpack.c.b16 %v5148, %v5147
        %v5183 = vpack.c.b16 %v5150, %v5149
        %v5184 = vpack.c.b16 %v5152, %v5151
        %v5185 = vpack.c.b16 %v5154, %v5153
        %v5186 = vpack.c.b16 %v5156, %v5155
        %v5187 = vpack.c.b16 %v5158, %v5157
        %v5188 = vpack.c.b16 %v5160, %v5159
        %v5189 = vpack.c.b16 %v5162, %v5161
        %v5190 = vpack.c.b16 %v5164, %v5163
        %v5191 = vpack.c.b16 %v5166, %v5165
        %v5192 = vpack.c.b16 %v5168, %v5167
        %v5193 = vpack.c.b16 %v5170, %v5169
        %v5194 = vpack.c.b16 %v5172, %v5171
        %v5195 = vpack.c.b16 %v5174, %v5173
        %v5196 = vpack.c.b16 %v5176, %v5175
        %v5197 = vpack.c.b16 %v5178, %v5177
        %v5198 = vpack.c.b16 %v5179, %v5179
        %v5199 = vrot.slane %v5180, 1
        %v5200 = vrot.slane %v5181, 1
        %v5201 = vsel %vm957, %v5199, %v5200
        %v5202 = vrot.slane %v5182, 1
        %v5203 = vsel %vm957, %v5200, %v5202
        %v5204 = vrot.slane %v5183, 1
        %v5205 = vsel %vm957, %v5202, %v5204
        %v5206 = vrot.slane %v5184, 1
        %v5207 = vsel %vm957, %v5204, %v5206
        %v5208 = vrot.slane %v5185, 1
        %v5209 = vsel %vm957, %v5206, %v5208
        %v5210 = vrot.slane %v5186, 1
        %v5211 = vsel %vm957, %v5208, %v5210
        %v5212 = vrot.slane %v5187, 1
        %v5213 = vsel %vm957, %v5210, %v5212
        %v5214 = vrot.slane %v5188, 1
        %v5215 = vsel %vm957, %v5212, %v5214
        %v5216 = vrot.slane %v5189, 1
        %v5217 = vsel %vm957, %v5214, %v5216
        %v5218 = vrot.slane %v5190, 1
        %v5219 = vsel %vm957, %v5216, %v5218
        %v5220 = vrot.slane %v5191, 1
        %v5221 = vsel %vm957, %v5218, %v5220
        %v5222 = vrot.slane %v5192, 1
        %v5223 = vsel %vm957, %v5220, %v5222
        %v5224 = vrot.slane %v5193, 1
        %v5225 = vsel %vm957, %v5222, %v5224
        %v5226 = vrot.slane %v5194, 1
        %v5227 = vsel %vm957, %v5224, %v5226
        %v5228 = vrot.slane %v5195, 1
        %v5229 = vsel %vm957, %v5226, %v5228
        %v5230 = vrot.slane %v5196, 1
        %v5231 = vsel %vm957, %v5228, %v5230
        %v5232 = vrot.slane %v5197, 1
        %v5233 = vsel %vm957, %v5230, %v5232
        %v5234 = vrot.slane %v5198, 1
        %v5235 = vsel %vm957, %v5232, %v5234
        %5236 = vrot.lane.b32.xlu0 %v5201, 64
        %v5237 = vpop.permute.xlu0 %5236
        %5238 = vrot.lane.b32.xlu0 %v5203, 64
        %v5239 = vpop.permute.xlu0 %5238
        %5240 = vrot.lane.b32.xlu0 %v5205, 64
        %v5241 = vpop.permute.xlu0 %5240
        %5242 = vrot.lane.b32.xlu0 %v5207, 64
        %v5243 = vpop.permute.xlu0 %5242
        %5244 = vrot.lane.b32.xlu0 %v5209, 64
        %v5245 = vpop.permute.xlu0 %5244
        %5246 = vrot.lane.b32.xlu0 %v5211, 64
        %v5247 = vpop.permute.xlu0 %5246
        %5248 = vrot.lane.b32.xlu0 %v5213, 64
        %v5249 = vpop.permute.xlu0 %5248
        %5250 = vrot.lane.b32.xlu0 %v5215, 64
        %v5251 = vpop.permute.xlu0 %5250
        %5252 = vrot.lane.b32.xlu0 %v5217, 64
        %v5253 = vpop.permute.xlu0 %5252
        %5254 = vrot.lane.b32.xlu0 %v5219, 64
        %v5255 = vpop.permute.xlu0 %5254
        %5256 = vrot.lane.b32.xlu0 %v5221, 64
        %v5257 = vpop.permute.xlu0 %5256
        %5258 = vrot.lane.b32.xlu0 %v5223, 64
        %v5259 = vpop.permute.xlu0 %5258
        %5260 = vrot.lane.b32.xlu0 %v5225, 64
        %v5261 = vpop.permute.xlu0 %5260
        %5262 = vrot.lane.b32.xlu0 %v5227, 64
        %v5263 = vpop.permute.xlu0 %5262
        %5264 = vrot.lane.b32.xlu0 %v5229, 64
        %v5265 = vpop.permute.xlu0 %5264
        %5266 = vrot.lane.b32.xlu0 %v5231, 64
        %v5267 = vpop.permute.xlu0 %5266
        %5268 = vrot.lane.b32.xlu0 %v5233, 64
        %v5269 = vpop.permute.xlu0 %5268
        %5270 = vrot.lane.b32.xlu0 %v5235, 64
        %v5271 = vpop.permute.xlu0 %5270
        %5290 = vst.msk [vmem:[#allocation3 + $0x8] sm:$0xff] %vm808, %v5237
        %5291 = vst.msk [vmem:[#allocation3 + $0x30] sm:$0xff] %vm808, %v5239
        %5292 = vst.msk [vmem:[#allocation3 + $0x58] sm:$0xff] %vm808, %v5241
        %5293 = vst.msk [vmem:[#allocation3 + $0x80] sm:$0xff] %vm808, %v5243
        %5294 = vst.msk [vmem:[#allocation3 + $0xa8] sm:$0xff] %vm808, %v5245
        %5295 = vst.msk [vmem:[#allocation3 + $0xd0] sm:$0xff] %vm808, %v5247
        %5296 = vst.msk [vmem:[#allocation3 + $0xf8] sm:$0xff] %vm808, %v5249
        %5297 = vst.msk [vmem:[#allocation3 + $0x120] sm:$0xff] %vm808, %v5251
        %5298 = vst.msk [vmem:[#allocation3 + $0x148] sm:$0xff] %vm808, %v5253
        %5299 = vst.msk [vmem:[#allocation3 + $0x170] sm:$0xff] %vm808, %v5255
        %5300 = vst.msk [vmem:[#allocation3 + $0x198] sm:$0xff] %vm808, %v5257
        %5301 = vst.msk [vmem:[#allocation3 + $0x1c0] sm:$0xff] %vm808, %v5259
        %5302 = vst.msk [vmem:[#allocation3 + $0x1e8] sm:$0xff] %vm808, %v5261
        %5303 = vst.msk [vmem:[#allocation3 + $0x210] sm:$0xff] %vm808, %v5263
        %5304 = vst.msk [vmem:[#allocation3 + $0x238] sm:$0xff] %vm808, %v5265
        %5305 = vst.msk [vmem:[#allocation3 + $0x260] sm:$0xff] %vm808, %v5267
        %5306 = vst.msk [vmem:[#allocation3 + $0x288] sm:$0xff] %vm808, %v5269
        %5307 = vst.msk [vmem:[#allocation3 + $0x2b0] sm:$0xff] %vm808, %v5271
        %v5308 = vld [vmem:[#allocation2 + $0x8] sm:$0xe]
        %v5309 = vld [vmem:[#allocation2 + $0xc] sm:$0xf]
        %v5310 = vld [vmem:[#allocation2 + $0x10] sm:$0xf]
        %v5311 = vld [vmem:[#allocation2 + $0x14] sm:$0xf]
        %v5312 = vld [vmem:[#allocation2 + $0x18] sm:$0xf]
        %v5313 = vld [vmem:[#allocation2 + $0x1c] sm:$0xf]
        %v5314 = vld [vmem:[#allocation2 + $0x20] sm:$0xf]
        %v5315 = vld [vmem:[#allocation2 + $0x24] sm:$0xf]
        %v5316 = vld [vmem:[#allocation2 + $0x28] sm:$0xf]
        %v5317 = vld [vmem:[#allocation2 + $0x2c] sm:$0xf]
        %v5318 = vld [vmem:[#allocation2 + $0x30] sm:$0xf]
        %v5319 = vld [vmem:[#allocation2 + $0x34] sm:$0xf]
        %v5320 = vld [vmem:[#allocation2 + $0x38] sm:$0xf]
        %v5321 = vld [vmem:[#allocation2 + $0x3c] sm:$0xf]
        %v5322 = vld [vmem:[#allocation2 + $0x40] sm:$0xf]
        %v5323 = vld [vmem:[#allocation2 + $0x44] sm:$0xf]
        %v5324 = vld [vmem:[#allocation2 + $0x48] sm:$0xf]
        %v5325 = vld [vmem:[#allocation2 + $0x4c] sm:$0xf]
        %v5326 = vld [vmem:[#allocation2 + $0x50] sm:$0xf]
        %v5327 = vld [vmem:[#allocation2 + $0x54] sm:$0xf]
        %v5328 = vld [vmem:[#allocation2 + $0x58] sm:$0xf]
        %v5329 = vld [vmem:[#allocation2 + $0x5c] sm:$0xf]
        %v5330 = vld [vmem:[#allocation2 + $0x60] sm:$0xf]
        %v5331 = vld [vmem:[#allocation2 + $0x64] sm:$0xf]
        %v5332 = vld [vmem:[#allocation2 + $0x68] sm:$0xf]
        %v5333 = vld [vmem:[#allocation2 + $0x6c] sm:$0xf]
        %v5334 = vld [vmem:[#allocation2 + $0x70] sm:$0xf]
        %v5335 = vld [vmem:[#allocation2 + $0x74] sm:$0xf]
        %v5336 = vld [vmem:[#allocation2 + $0x78] sm:$0xf]
        %v5337 = vld [vmem:[#allocation2 + $0x7c] sm:$0xf]
        %v5338 = vld [vmem:[#allocation2 + $0x80] sm:$0xf]
        %v5339 = vld [vmem:[#allocation2 + $0x84] sm:$0xf]
        %v5340 = vld [vmem:[#allocation2 + $0x88] sm:$0xf]
        %v5341 = vld [vmem:[#allocation2 + $0x8c] sm:$0xf]
        %v5342 = vld [vmem:[#allocation2 + $0x90] sm:$0xf]
        %v5343 = vld [vmem:[#allocation2 + $0x94] sm:$0xf]
        %v5344 = vld [vmem:[#allocation2 + $0x98] sm:$0x3]
        %v5382 = vunpack.c.l.b16 %v5308
        %v5383 = vunpack.c.l.b16 %v5309
        %v5384 = vunpack.c.l.b16 %v5310
        %v5385 = vunpack.c.l.b16 %v5311
        %v5386 = vunpack.c.l.b16 %v5312
        %v5387 = vunpack.c.l.b16 %v5313
        %v5388 = vunpack.c.l.b16 %v5314
        %v5389 = vunpack.c.l.b16 %v5315
        %v5390 = vunpack.c.l.b16 %v5316
        %v5391 = vunpack.c.l.b16 %v5317
        %v5392 = vunpack.c.l.b16 %v5318
        %v5393 = vunpack.c.l.b16 %v5319
        %v5394 = vunpack.c.l.b16 %v5320
        %v5395 = vunpack.c.l.b16 %v5321
        %v5396 = vunpack.c.l.b16 %v5322
        %v5397 = vunpack.c.l.b16 %v5323
        %v5398 = vunpack.c.l.b16 %v5324
        %v5399 = vunpack.c.l.b16 %v5325
        %v5400 = vunpack.c.l.b16 %v5326
        %v5401 = vunpack.c.l.b16 %v5327
        %v5402 = vunpack.c.l.b16 %v5328
        %v5403 = vunpack.c.l.b16 %v5329
        %v5404 = vunpack.c.l.b16 %v5330
        %v5405 = vunpack.c.l.b16 %v5331
        %v5406 = vunpack.c.l.b16 %v5332
        %v5407 = vunpack.c.l.b16 %v5333
        %v5408 = vunpack.c.l.b16 %v5334
        %v5409 = vunpack.c.l.b16 %v5335
        %v5410 = vunpack.c.l.b16 %v5336
        %v5411 = vunpack.c.l.b16 %v5337
        %v5412 = vunpack.c.l.b16 %v5338
        %v5413 = vunpack.c.l.b16 %v5339
        %v5414 = vunpack.c.l.b16 %v5340
        %v5415 = vunpack.c.l.b16 %v5341
        %v5416 = vunpack.c.l.b16 %v5342
        %v5417 = vunpack.c.l.b16 %v5343
        %v5418 = vunpack.c.l.b16 %v5344
        %v5419 = vpack.c.b16 %v5383, %v5382
        %v5420 = vpack.c.b16 %v5385, %v5384
        %v5421 = vpack.c.b16 %v5387, %v5386
        %v5422 = vpack.c.b16 %v5389, %v5388
        %v5423 = vpack.c.b16 %v5391, %v5390
        %v5424 = vpack.c.b16 %v5393, %v5392
        %v5425 = vpack.c.b16 %v5395, %v5394
        %v5426 = vpack.c.b16 %v5397, %v5396
        %v5427 = vpack.c.b16 %v5399, %v5398
        %v5428 = vpack.c.b16 %v5401, %v5400
        %v5429 = vpack.c.b16 %v5403, %v5402
        %v5430 = vpack.c.b16 %v5405, %v5404
        %v5431 = vpack.c.b16 %v5407, %v5406
        %v5432 = vpack.c.b16 %v5409, %v5408
        %v5433 = vpack.c.b16 %v5411, %v5410
        %v5434 = vpack.c.b16 %v5413, %v5412
        %v5435 = vpack.c.b16 %v5415, %v5414
        %v5436 = vpack.c.b16 %v5417, %v5416
        %v5437 = vpack.c.b16 %v5418, %v5418
        %v5439 = vshrl.u32 %v5419, 16
        %v5441 = vrot.slane %v5439, 1
        %v5442 = vshll.u32 %v5419, 16
        %v5444 = vrot.slane %v5442, 2
        %v5445 = vor.u32 %v5441, %v5444
        %v5447 = vshrl.u32 %v5420, 16
        %v5449 = vrot.slane %v5447, 1
        %v5450 = vshll.u32 %v5420, 16
        %v5452 = vrot.slane %v5450, 2
        %v5453 = vor.u32 %v5449, %v5452
        %v5454 = vsel %vm1400, %v5445, %v5453
        %v5456 = vshrl.u32 %v5421, 16
        %v5458 = vrot.slane %v5456, 1
        %v5459 = vshll.u32 %v5421, 16
        %v5461 = vrot.slane %v5459, 2
        %v5462 = vor.u32 %v5458, %v5461
        %v5463 = vsel %vm1400, %v5453, %v5462
        %v5465 = vshrl.u32 %v5422, 16
        %v5467 = vrot.slane %v5465, 1
        %v5468 = vshll.u32 %v5422, 16
        %v5470 = vrot.slane %v5468, 2
        %v5471 = vor.u32 %v5467, %v5470
        %v5472 = vsel %vm1400, %v5462, %v5471
        %v5474 = vshrl.u32 %v5423, 16
        %v5476 = vrot.slane %v5474, 1
        %v5477 = vshll.u32 %v5423, 16
        %v5479 = vrot.slane %v5477, 2
        %v5480 = vor.u32 %v5476, %v5479
        %v5481 = vsel %vm1400, %v5471, %v5480
        %v5483 = vshrl.u32 %v5424, 16
        %v5485 = vrot.slane %v5483, 1
        %v5486 = vshll.u32 %v5424, 16
        %v5488 = vrot.slane %v5486, 2
        %v5489 = vor.u32 %v5485, %v5488
        %v5490 = vsel %vm1400, %v5480, %v5489
        %v5492 = vshrl.u32 %v5425, 16
        %v5494 = vrot.slane %v5492, 1
        %v5495 = vshll.u32 %v5425, 16
        %v5497 = vrot.slane %v5495, 2
        %v5498 = vor.u32 %v5494, %v5497
        %v5499 = vsel %vm1400, %v5489, %v5498
        %v5501 = vshrl.u32 %v5426, 16
        %v5503 = vrot.slane %v5501, 1
        %v5504 = vshll.u32 %v5426, 16
        %v5506 = vrot.slane %v5504, 2
        %v5507 = vor.u32 %v5503, %v5506
        %v5508 = vsel %vm1400, %v5498, %v5507
        %v5510 = vshrl.u32 %v5427, 16
        %v5512 = vrot.slane %v5510, 1
        %v5513 = vshll.u32 %v5427, 16
        %v5515 = vrot.slane %v5513, 2
        %v5516 = vor.u32 %v5512, %v5515
        %v5517 = vsel %vm1400, %v5507, %v5516
        %v5519 = vshrl.u32 %v5428, 16
        %v5521 = vrot.slane %v5519, 1
        %v5522 = vshll.u32 %v5428, 16
        %v5524 = vrot.slane %v5522, 2
        %v5525 = vor.u32 %v5521, %v5524
        %v5526 = vsel %vm1400, %v5516, %v5525
        %v5528 = vshrl.u32 %v5429, 16
        %v5530 = vrot.slane %v5528, 1
        %v5531 = vshll.u32 %v5429, 16
        %v5533 = vrot.slane %v5531, 2
        %v5534 = vor.u32 %v5530, %v5533
        %v5535 = vsel %vm1400, %v5525, %v5534
        %v5537 = vshrl.u32 %v5430, 16
        %v5539 = vrot.slane %v5537, 1
        %v5540 = vshll.u32 %v5430, 16
        %v5542 = vrot.slane %v5540, 2
        %v5543 = vor.u32 %v5539, %v5542
        %v5544 = vsel %vm1400, %v5534, %v5543
        %v5546 = vshrl.u32 %v5431, 16
        %v5548 = vrot.slane %v5546, 1
        %v5549 = vshll.u32 %v5431, 16
        %v5551 = vrot.slane %v5549, 2
        %v5552 = vor.u32 %v5548, %v5551
        %v5553 = vsel %vm1400, %v5543, %v5552
        %v5555 = vshrl.u32 %v5432, 16
        %v5557 = vrot.slane %v5555, 1
        %v5558 = vshll.u32 %v5432, 16
        %v5560 = vrot.slane %v5558, 2
        %v5561 = vor.u32 %v5557, %v5560
        %v5562 = vsel %vm1400, %v5552, %v5561
        %v5564 = vshrl.u32 %v5433, 16
        %v5566 = vrot.slane %v5564, 1
        %v5567 = vshll.u32 %v5433, 16
        %v5569 = vrot.slane %v5567, 2
        %v5570 = vor.u32 %v5566, %v5569
        %v5571 = vsel %vm1400, %v5561, %v5570
        %v5573 = vshrl.u32 %v5434, 16
        %v5575 = vrot.slane %v5573, 1
        %v5576 = vshll.u32 %v5434, 16
        %v5578 = vrot.slane %v5576, 2
        %v5579 = vor.u32 %v5575, %v5578
        %v5580 = vsel %vm1400, %v5570, %v5579
        %v5582 = vshrl.u32 %v5435, 16
        %v5584 = vrot.slane %v5582, 1
        %v5585 = vshll.u32 %v5435, 16
        %v5587 = vrot.slane %v5585, 2
        %v5588 = vor.u32 %v5584, %v5587
        %v5589 = vsel %vm1400, %v5579, %v5588
        %v5591 = vshrl.u32 %v5436, 16
        %v5593 = vrot.slane %v5591, 1
        %v5594 = vshll.u32 %v5436, 16
        %v5596 = vrot.slane %v5594, 2
        %v5597 = vor.u32 %v5593, %v5596
        %v5598 = vsel %vm1400, %v5588, %v5597
        %v5600 = vshrl.u32 %v5437, 16
        %v5602 = vrot.slane %v5600, 1
        %v5603 = vshll.u32 %v5437, 16
        %v5605 = vrot.slane %v5603, 2
        %v5606 = vor.u32 %v5602, %v5605
        %v5607 = vsel %vm1400, %v5597, %v5606
        %5626 = vst.msk [vmem:[#allocation3 + $0x10] sm:$0xff] %vm456, %v5454
        %5627 = vst.msk [vmem:[#allocation3 + $0x38] sm:$0xff] %vm456, %v5463
        %5628 = vst.msk [vmem:[#allocation3 + $0x60] sm:$0xff] %vm456, %v5472
        %5629 = vst.msk [vmem:[#allocation3 + $0x88] sm:$0xff] %vm456, %v5481
        %5630 = vst.msk [vmem:[#allocation3 + $0xb0] sm:$0xff] %vm456, %v5490
        %5631 = vst.msk [vmem:[#allocation3 + $0xd8] sm:$0xff] %vm456, %v5499
        %5632 = vst.msk [vmem:[#allocation3 + $0x100] sm:$0xff] %vm456, %v5508
        %5633 = vst.msk [vmem:[#allocation3 + $0x128] sm:$0xff] %vm456, %v5517
        %5634 = vst.msk [vmem:[#allocation3 + $0x150] sm:$0xff] %vm456, %v5526
        %5635 = vst.msk [vmem:[#allocation3 + $0x178] sm:$0xff] %vm456, %v5535
        %5636 = vst.msk [vmem:[#allocation3 + $0x1a0] sm:$0xff] %vm456, %v5544
        %5637 = vst.msk [vmem:[#allocation3 + $0x1c8] sm:$0xff] %vm456, %v5553
        %5638 = vst.msk [vmem:[#allocation3 + $0x1f0] sm:$0xff] %vm456, %v5562
        %5639 = vst.msk [vmem:[#allocation3 + $0x218] sm:$0xff] %vm456, %v5571
        %5640 = vst.msk [vmem:[#allocation3 + $0x240] sm:$0xff] %vm456, %v5580
        %5641 = vst.msk [vmem:[#allocation3 + $0x268] sm:$0xff] %vm456, %v5589
        %5642 = vst.msk [vmem:[#allocation3 + $0x290] sm:$0xff] %vm456, %v5598
        %5643 = vst.msk [vmem:[#allocation3 + $0x2b8] sm:$0xff] %vm456, %v5607
        %v5644 = vld [vmem:[#allocation2 + $0x8] sm:$0xc]
        %v5645 = vld [vmem:[#allocation2 + $0xc] sm:$0xf]
        %v5646 = vld [vmem:[#allocation2 + $0x10] sm:$0xf]
        %v5647 = vld [vmem:[#allocation2 + $0x14] sm:$0xf]
        %v5648 = vld [vmem:[#allocation2 + $0x18] sm:$0xf]
        %v5649 = vld [vmem:[#allocation2 + $0x1c] sm:$0xf]
        %v5650 = vld [vmem:[#allocation2 + $0x20] sm:$0xf]
        %v5651 = vld [vmem:[#allocation2 + $0x24] sm:$0xf]
        %v5652 = vld [vmem:[#allocation2 + $0x28] sm:$0xf]
        %v5653 = vld [vmem:[#allocation2 + $0x2c] sm:$0xf]
        %v5654 = vld [vmem:[#allocation2 + $0x30] sm:$0xf]
        %v5655 = vld [vmem:[#allocation2 + $0x34] sm:$0xf]
        %v5656 = vld [vmem:[#allocation2 + $0x38] sm:$0xf]
        %v5657 = vld [vmem:[#allocation2 + $0x3c] sm:$0xf]
        %v5658 = vld [vmem:[#allocation2 + $0x40] sm:$0xf]
        %v5659 = vld [vmem:[#allocation2 + $0x44] sm:$0xf]
        %v5660 = vld [vmem:[#allocation2 + $0x48] sm:$0xf]
        %v5661 = vld [vmem:[#allocation2 + $0x4c] sm:$0xf]
        %v5662 = vld [vmem:[#allocation2 + $0x50] sm:$0xf]
        %v5663 = vld [vmem:[#allocation2 + $0x54] sm:$0xf]
        %v5664 = vld [vmem:[#allocation2 + $0x58] sm:$0xf]
        %v5665 = vld [vmem:[#allocation2 + $0x5c] sm:$0xf]
        %v5666 = vld [vmem:[#allocation2 + $0x60] sm:$0xf]
        %v5667 = vld [vmem:[#allocation2 + $0x64] sm:$0xf]
        %v5668 = vld [vmem:[#allocation2 + $0x68] sm:$0xf]
        %v5669 = vld [vmem:[#allocation2 + $0x6c] sm:$0xf]
        %v5670 = vld [vmem:[#allocation2 + $0x70] sm:$0xf]
        %v5671 = vld [vmem:[#allocation2 + $0x74] sm:$0xf]
        %v5672 = vld [vmem:[#allocation2 + $0x78] sm:$0xf]
        %v5673 = vld [vmem:[#allocation2 + $0x7c] sm:$0xf]
        %v5674 = vld [vmem:[#allocation2 + $0x80] sm:$0xf]
        %v5675 = vld [vmem:[#allocation2 + $0x84] sm:$0xf]
        %v5676 = vld [vmem:[#allocation2 + $0x88] sm:$0xf]
        %v5677 = vld [vmem:[#allocation2 + $0x8c] sm:$0xf]
        %v5678 = vld [vmem:[#allocation2 + $0x90] sm:$0xf]
        %v5679 = vld [vmem:[#allocation2 + $0x94] sm:$0xf]
        %v5680 = vld [vmem:[#allocation2 + $0x98] sm:$0x3]
        %v5718 = vunpack.c.l.b16 %v5644
        %v5719 = vunpack.c.l.b16 %v5645
        %v5720 = vunpack.c.l.b16 %v5646
        %v5721 = vunpack.c.l.b16 %v5647
        %v5722 = vunpack.c.l.b16 %v5648
        %v5723 = vunpack.c.l.b16 %v5649
        %v5724 = vunpack.c.l.b16 %v5650
        %v5725 = vunpack.c.l.b16 %v5651
        %v5726 = vunpack.c.l.b16 %v5652
        %v5727 = vunpack.c.l.b16 %v5653
        %v5728 = vunpack.c.l.b16 %v5654
        %v5729 = vunpack.c.l.b16 %v5655
        %v5730 = vunpack.c.l.b16 %v5656
        %v5731 = vunpack.c.l.b16 %v5657
        %v5732 = vunpack.c.l.b16 %v5658
        %v5733 = vunpack.c.l.b16 %v5659
        %v5734 = vunpack.c.l.b16 %v5660
        %v5735 = vunpack.c.l.b16 %v5661
        %v5736 = vunpack.c.l.b16 %v5662
        %v5737 = vunpack.c.l.b16 %v5663
        %v5738 = vunpack.c.l.b16 %v5664
        %v5739 = vunpack.c.l.b16 %v5665
        %v5740 = vunpack.c.l.b16 %v5666
        %v5741 = vunpack.c.l.b16 %v5667
        %v5742 = vunpack.c.l.b16 %v5668
        %v5743 = vunpack.c.l.b16 %v5669
        %v5744 = vunpack.c.l.b16 %v5670
        %v5745 = vunpack.c.l.b16 %v5671
        %v5746 = vunpack.c.l.b16 %v5672
        %v5747 = vunpack.c.l.b16 %v5673
        %v5748 = vunpack.c.l.b16 %v5674
        %v5749 = vunpack.c.l.b16 %v5675
        %v5750 = vunpack.c.l.b16 %v5676
        %v5751 = vunpack.c.l.b16 %v5677
        %v5752 = vunpack.c.l.b16 %v5678
        %v5753 = vunpack.c.l.b16 %v5679
        %v5754 = vunpack.c.l.b16 %v5680
        %v5755 = vpack.c.b16 %v5719, %v5718
        %v5756 = vpack.c.b16 %v5721, %v5720
        %v5757 = vpack.c.b16 %v5723, %v5722
        %v5758 = vpack.c.b16 %v5725, %v5724
        %v5759 = vpack.c.b16 %v5727, %v5726
        %v5760 = vpack.c.b16 %v5729, %v5728
        %v5761 = vpack.c.b16 %v5731, %v5730
        %v5762 = vpack.c.b16 %v5733, %v5732
        %v5763 = vpack.c.b16 %v5735, %v5734
        %v5764 = vpack.c.b16 %v5737, %v5736
        %v5765 = vpack.c.b16 %v5739, %v5738
        %v5766 = vpack.c.b16 %v5741, %v5740
        %v5767 = vpack.c.b16 %v5743, %v5742
        %v5768 = vpack.c.b16 %v5745, %v5744
        %v5769 = vpack.c.b16 %v5747, %v5746
        %v5770 = vpack.c.b16 %v5749, %v5748
        %v5771 = vpack.c.b16 %v5751, %v5750
        %v5772 = vpack.c.b16 %v5753, %v5752
        %v5773 = vpack.c.b16 %v5754, %v5754
        %v5774 = vrot.slane %v5755, 2
        %v5775 = vrot.slane %v5756, 2
        %v5776 = vsel %vm1737, %v5774, %v5775
        %v5777 = vrot.slane %v5757, 2
        %v5778 = vsel %vm1737, %v5775, %v5777
        %v5779 = vrot.slane %v5758, 2
        %v5780 = vsel %vm1737, %v5777, %v5779
        %v5781 = vrot.slane %v5759, 2
        %v5782 = vsel %vm1737, %v5779, %v5781
        %v5783 = vrot.slane %v5760, 2
        %v5784 = vsel %vm1737, %v5781, %v5783
        %v5785 = vrot.slane %v5761, 2
        %v5786 = vsel %vm1737, %v5783, %v5785
        %v5787 = vrot.slane %v5762, 2
        %v5788 = vsel %vm1737, %v5785, %v5787
        %v5789 = vrot.slane %v5763, 2
        %v5790 = vsel %vm1737, %v5787, %v5789
        %v5791 = vrot.slane %v5764, 2
        %v5792 = vsel %vm1737, %v5789, %v5791
        %v5793 = vrot.slane %v5765, 2
        %v5794 = vsel %vm1737, %v5791, %v5793
        %v5795 = vrot.slane %v5766, 2
        %v5796 = vsel %vm1737, %v5793, %v5795
        %v5797 = vrot.slane %v5767, 2
        %v5798 = vsel %vm1737, %v5795, %v5797
        %v5799 = vrot.slane %v5768, 2
        %v5800 = vsel %vm1737, %v5797, %v5799
        %v5801 = vrot.slane %v5769, 2
        %v5802 = vsel %vm1737, %v5799, %v5801
        %v5803 = vrot.slane %v5770, 2
        %v5804 = vsel %vm1737, %v5801, %v5803
        %v5805 = vrot.slane %v5771, 2
        %v5806 = vsel %vm1737, %v5803, %v5805
        %v5807 = vrot.slane %v5772, 2
        %v5808 = vsel %vm1737, %v5805, %v5807
        %v5809 = vrot.slane %v5773, 2
        %v5810 = vsel %vm1737, %v5807, %v5809
        %5811 = vrot.lane.b32.xlu0 %v5776, 64
        %v5812 = vpop.permute.xlu0 %5811
        %5813 = vrot.lane.b32.xlu0 %v5778, 64
        %v5814 = vpop.permute.xlu0 %5813
        %5815 = vrot.lane.b32.xlu0 %v5780, 64
        %v5816 = vpop.permute.xlu0 %5815
        %5817 = vrot.lane.b32.xlu0 %v5782, 64
        %v5818 = vpop.permute.xlu0 %5817
        %5819 = vrot.lane.b32.xlu0 %v5784, 64
        %v5820 = vpop.permute.xlu0 %5819
        %5821 = vrot.lane.b32.xlu0 %v5786, 64
        %v5822 = vpop.permute.xlu0 %5821
        %5823 = vrot.lane.b32.xlu0 %v5788, 64
        %v5824 = vpop.permute.xlu0 %5823
        %5825 = vrot.lane.b32.xlu0 %v5790, 64
        %v5826 = vpop.permute.xlu0 %5825
        %5827 = vrot.lane.b32.xlu0 %v5792, 64
        %v5828 = vpop.permute.xlu0 %5827
        %5829 = vrot.lane.b32.xlu0 %v5794, 64
        %v5830 = vpop.permute.xlu0 %5829
        %5831 = vrot.lane.b32.xlu0 %v5796, 64
        %v5832 = vpop.permute.xlu0 %5831
        %5833 = vrot.lane.b32.xlu0 %v5798, 64
        %v5834 = vpop.permute.xlu0 %5833
        %5835 = vrot.lane.b32.xlu0 %v5800, 64
        %v5836 = vpop.permute.xlu0 %5835
        %5837 = vrot.lane.b32.xlu0 %v5802, 64
        %v5838 = vpop.permute.xlu0 %5837
        %5839 = vrot.lane.b32.xlu0 %v5804, 64
        %v5840 = vpop.permute.xlu0 %5839
        %5841 = vrot.lane.b32.xlu0 %v5806, 64
        %v5842 = vpop.permute.xlu0 %5841
        %5843 = vrot.lane.b32.xlu0 %v5808, 64
        %v5844 = vpop.permute.xlu0 %5843
        %5845 = vrot.lane.b32.xlu0 %v5810, 64
        %v5846 = vpop.permute.xlu0 %5845
        %5865 = vst.msk [vmem:[#allocation3 + $0x10] sm:$0xff] %vm808, %v5812
        %5866 = vst.msk [vmem:[#allocation3 + $0x38] sm:$0xff] %vm808, %v5814
        %5867 = vst.msk [vmem:[#allocation3 + $0x60] sm:$0xff] %vm808, %v5816
        %5868 = vst.msk [vmem:[#allocation3 + $0x88] sm:$0xff] %vm808, %v5818
        %5869 = vst.msk [vmem:[#allocation3 + $0xb0] sm:$0xff] %vm808, %v5820
        %5870 = vst.msk [vmem:[#allocation3 + $0xd8] sm:$0xff] %vm808, %v5822
        %5871 = vst.msk [vmem:[#allocation3 + $0x100] sm:$0xff] %vm808, %v5824
        %5872 = vst.msk [vmem:[#allocation3 + $0x128] sm:$0xff] %vm808, %v5826
        %5873 = vst.msk [vmem:[#allocation3 + $0x150] sm:$0xff] %vm808, %v5828
        %5874 = vst.msk [vmem:[#allocation3 + $0x178] sm:$0xff] %vm808, %v5830
        %5875 = vst.msk [vmem:[#allocation3 + $0x1a0] sm:$0xff] %vm808, %v5832
        %5876 = vst.msk [vmem:[#allocation3 + $0x1c8] sm:$0xff] %vm808, %v5834
        %5877 = vst.msk [vmem:[#allocation3 + $0x1f0] sm:$0xff] %vm808, %v5836
        %5878 = vst.msk [vmem:[#allocation3 + $0x218] sm:$0xff] %vm808, %v5838
        %5879 = vst.msk [vmem:[#allocation3 + $0x240] sm:$0xff] %vm808, %v5840
        %5880 = vst.msk [vmem:[#allocation3 + $0x268] sm:$0xff] %vm808, %v5842
        %5881 = vst.msk [vmem:[#allocation3 + $0x290] sm:$0xff] %vm808, %v5844
        %5882 = vst.msk [vmem:[#allocation3 + $0x2b8] sm:$0xff] %vm808, %v5846
        %v5883 = vld [vmem:[#allocation2 + $0x10] sm:$0xc]
        %v5884 = vld [vmem:[#allocation2 + $0x14] sm:$0xf]
        %v5885 = vld [vmem:[#allocation2 + $0x18] sm:$0xf]
        %v5886 = vld [vmem:[#allocation2 + $0x1c] sm:$0xf]
        %v5887 = vld [vmem:[#allocation2 + $0x20] sm:$0xf]
        %v5888 = vld [vmem:[#allocation2 + $0x24] sm:$0xf]
        %v5889 = vld [vmem:[#allocation2 + $0x28] sm:$0xf]
        %v5890 = vld [vmem:[#allocation2 + $0x2c] sm:$0xf]
        %v5891 = vld [vmem:[#allocation2 + $0x30] sm:$0xf]
        %v5892 = vld [vmem:[#allocation2 + $0x34] sm:$0xf]
        %v5893 = vld [vmem:[#allocation2 + $0x38] sm:$0xf]
        %v5894 = vld [vmem:[#allocation2 + $0x3c] sm:$0xf]
        %v5895 = vld [vmem:[#allocation2 + $0x40] sm:$0xf]
        %v5896 = vld [vmem:[#allocation2 + $0x44] sm:$0xf]
        %v5897 = vld [vmem:[#allocation2 + $0x48] sm:$0xf]
        %v5898 = vld [vmem:[#allocation2 + $0x4c] sm:$0xf]
        %v5899 = vld [vmem:[#allocation2 + $0x50] sm:$0xf]
        %v5900 = vld [vmem:[#allocation2 + $0x54] sm:$0xf]
        %v5901 = vld [vmem:[#allocation2 + $0x58] sm:$0xf]
        %v5902 = vld [vmem:[#allocation2 + $0x5c] sm:$0xf]
        %v5903 = vld [vmem:[#allocation2 + $0x60] sm:$0xf]
        %v5904 = vld [vmem:[#allocation2 + $0x64] sm:$0xf]
        %v5905 = vld [vmem:[#allocation2 + $0x68] sm:$0xf]
        %v5906 = vld [vmem:[#allocation2 + $0x6c] sm:$0xf]
        %v5907 = vld [vmem:[#allocation2 + $0x70] sm:$0xf]
        %v5908 = vld [vmem:[#allocation2 + $0x74] sm:$0xf]
        %v5909 = vld [vmem:[#allocation2 + $0x78] sm:$0xf]
        %v5910 = vld [vmem:[#allocation2 + $0x7c] sm:$0xf]
        %v5911 = vld [vmem:[#allocation2 + $0x80] sm:$0xf]
        %v5912 = vld [vmem:[#allocation2 + $0x84] sm:$0xf]
        %v5913 = vld [vmem:[#allocation2 + $0x88] sm:$0xf]
        %v5914 = vld [vmem:[#allocation2 + $0x8c] sm:$0xf]
        %v5915 = vld [vmem:[#allocation2 + $0x90] sm:$0xf]
        %v5916 = vld [vmem:[#allocation2 + $0x94] sm:$0xf]
        %v5917 = vld [vmem:[#allocation2 + $0x98] sm:$0xf]
        %v5918 = vld [vmem:[#allocation2 + $0x9c] sm:$0xf]
        %v5919 = vld [vmem:[#allocation2 + $0xa0] sm:$0x3]
        %v5957 = vunpack.c.l.b16 %v5883
        %v5958 = vunpack.c.l.b16 %v5884
        %v5959 = vunpack.c.l.b16 %v5885
        %v5960 = vunpack.c.l.b16 %v5886
        %v5961 = vunpack.c.l.b16 %v5887
        %v5962 = vunpack.c.l.b16 %v5888
        %v5963 = vunpack.c.l.b16 %v5889
        %v5964 = vunpack.c.l.b16 %v5890
        %v5965 = vunpack.c.l.b16 %v5891
        %v5966 = vunpack.c.l.b16 %v5892
        %v5967 = vunpack.c.l.b16 %v5893
        %v5968 = vunpack.c.l.b16 %v5894
        %v5969 = vunpack.c.l.b16 %v5895
        %v5970 = vunpack.c.l.b16 %v5896
        %v5971 = vunpack.c.l.b16 %v5897
        %v5972 = vunpack.c.l.b16 %v5898
        %v5973 = vunpack.c.l.b16 %v5899
        %v5974 = vunpack.c.l.b16 %v5900
        %v5975 = vunpack.c.l.b16 %v5901
        %v5976 = vunpack.c.l.b16 %v5902
        %v5977 = vunpack.c.l.b16 %v5903
        %v5978 = vunpack.c.l.b16 %v5904
        %v5979 = vunpack.c.l.b16 %v5905
        %v5980 = vunpack.c.l.b16 %v5906
        %v5981 = vunpack.c.l.b16 %v5907
        %v5982 = vunpack.c.l.b16 %v5908
        %v5983 = vunpack.c.l.b16 %v5909
        %v5984 = vunpack.c.l.b16 %v5910
        %v5985 = vunpack.c.l.b16 %v5911
        %v5986 = vunpack.c.l.b16 %v5912
        %v5987 = vunpack.c.l.b16 %v5913
        %v5988 = vunpack.c.l.b16 %v5914
        %v5989 = vunpack.c.l.b16 %v5915
        %v5990 = vunpack.c.l.b16 %v5916
        %v5991 = vunpack.c.l.b16 %v5917
        %v5992 = vunpack.c.l.b16 %v5918
        %v5993 = vunpack.c.l.b16 %v5919
        %v5994 = vpack.c.b16 %v5958, %v5957
        %v5995 = vpack.c.b16 %v5960, %v5959
        %v5996 = vpack.c.b16 %v5962, %v5961
        %v5997 = vpack.c.b16 %v5964, %v5963
        %v5998 = vpack.c.b16 %v5966, %v5965
        %v5999 = vpack.c.b16 %v5968, %v5967
        %v6000 = vpack.c.b16 %v5970, %v5969
        %v6001 = vpack.c.b16 %v5972, %v5971
        %v6002 = vpack.c.b16 %v5974, %v5973
        %v6003 = vpack.c.b16 %v5976, %v5975
        %v6004 = vpack.c.b16 %v5978, %v5977
        %v6005 = vpack.c.b16 %v5980, %v5979
        %v6006 = vpack.c.b16 %v5982, %v5981
        %v6007 = vpack.c.b16 %v5984, %v5983
        %v6008 = vpack.c.b16 %v5986, %v5985
        %v6009 = vpack.c.b16 %v5988, %v5987
        %v6010 = vpack.c.b16 %v5990, %v5989
        %v6011 = vpack.c.b16 %v5992, %v5991
        %v6012 = vpack.c.b16 %v5993, %v5993
        %v6013 = vrot.slane %v5994, 2
        %v6014 = vrot.slane %v5995, 2
        %v6015 = vsel %vm1737, %v6013, %v6014
        %v6016 = vrot.slane %v5996, 2
        %v6017 = vsel %vm1737, %v6014, %v6016
        %v6018 = vrot.slane %v5997, 2
        %v6019 = vsel %vm1737, %v6016, %v6018
        %v6020 = vrot.slane %v5998, 2
        %v6021 = vsel %vm1737, %v6018, %v6020
        %v6022 = vrot.slane %v5999, 2
        %v6023 = vsel %vm1737, %v6020, %v6022
        %v6024 = vrot.slane %v6000, 2
        %v6025 = vsel %vm1737, %v6022, %v6024
        %v6026 = vrot.slane %v6001, 2
        %v6027 = vsel %vm1737, %v6024, %v6026
        %v6028 = vrot.slane %v6002, 2
        %v6029 = vsel %vm1737, %v6026, %v6028
        %v6030 = vrot.slane %v6003, 2
        %v6031 = vsel %vm1737, %v6028, %v6030
        %v6032 = vrot.slane %v6004, 2
        %v6033 = vsel %vm1737, %v6030, %v6032
        %v6034 = vrot.slane %v6005, 2
        %v6035 = vsel %vm1737, %v6032, %v6034
        %v6036 = vrot.slane %v6006, 2
        %v6037 = vsel %vm1737, %v6034, %v6036
        %v6038 = vrot.slane %v6007, 2
        %v6039 = vsel %vm1737, %v6036, %v6038
        %v6040 = vrot.slane %v6008, 2
        %v6041 = vsel %vm1737, %v6038, %v6040
        %v6042 = vrot.slane %v6009, 2
        %v6043 = vsel %vm1737, %v6040, %v6042
        %v6044 = vrot.slane %v6010, 2
        %v6045 = vsel %vm1737, %v6042, %v6044
        %v6046 = vrot.slane %v6011, 2
        %v6047 = vsel %vm1737, %v6044, %v6046
        %v6048 = vrot.slane %v6012, 2
        %v6049 = vsel %vm1737, %v6046, %v6048
        %6068 = vst.msk [vmem:[#allocation3 + $0x18] sm:$0xff] %vm456, %v6015
        %6069 = vst.msk [vmem:[#allocation3 + $0x40] sm:$0xff] %vm456, %v6017
        %6070 = vst.msk [vmem:[#allocation3 + $0x68] sm:$0xff] %vm456, %v6019
        %6071 = vst.msk [vmem:[#allocation3 + $0x90] sm:$0xff] %vm456, %v6021
        %6072 = vst.msk [vmem:[#allocation3 + $0xb8] sm:$0xff] %vm456, %v6023
        %6073 = vst.msk [vmem:[#allocation3 + $0xe0] sm:$0xff] %vm456, %v6025
        %6074 = vst.msk [vmem:[#allocation3 + $0x108] sm:$0xff] %vm456, %v6027
        %6075 = vst.msk [vmem:[#allocation3 + $0x130] sm:$0xff] %vm456, %v6029
        %6076 = vst.msk [vmem:[#allocation3 + $0x158] sm:$0xff] %vm456, %v6031
        %6077 = vst.msk [vmem:[#allocation3 + $0x180] sm:$0xff] %vm456, %v6033
        %6078 = vst.msk [vmem:[#allocation3 + $0x1a8] sm:$0xff] %vm456, %v6035
        %6079 = vst.msk [vmem:[#allocation3 + $0x1d0] sm:$0xff] %vm456, %v6037
        %6080 = vst.msk [vmem:[#allocation3 + $0x1f8] sm:$0xff] %vm456, %v6039
        %6081 = vst.msk [vmem:[#allocation3 + $0x220] sm:$0xff] %vm456, %v6041
        %6082 = vst.msk [vmem:[#allocation3 + $0x248] sm:$0xff] %vm456, %v6043
        %6083 = vst.msk [vmem:[#allocation3 + $0x270] sm:$0xff] %vm456, %v6045
        %6084 = vst.msk [vmem:[#allocation3 + $0x298] sm:$0xff] %vm456, %v6047
        %6085 = vst.msk [vmem:[#allocation3 + $0x2c0] sm:$0xff] %vm456, %v6049
        %v6086 = vld [vmem:[#allocation2 + $0x10] sm:$0xc]
        %v6087 = vld [vmem:[#allocation2 + $0x14] sm:$0xf]
        %v6088 = vld [vmem:[#allocation2 + $0x18] sm:$0xf]
        %v6089 = vld [vmem:[#allocation2 + $0x1c] sm:$0xf]
        %v6090 = vld [vmem:[#allocation2 + $0x20] sm:$0xf]
        %v6091 = vld [vmem:[#allocation2 + $0x24] sm:$0xf]
        %v6092 = vld [vmem:[#allocation2 + $0x28] sm:$0xf]
        %v6093 = vld [vmem:[#allocation2 + $0x2c] sm:$0xf]
        %v6094 = vld [vmem:[#allocation2 + $0x30] sm:$0xf]
        %v6095 = vld [vmem:[#allocation2 + $0x34] sm:$0xf]
        %v6096 = vld [vmem:[#allocation2 + $0x38] sm:$0xf]
        %v6097 = vld [vmem:[#allocation2 + $0x3c] sm:$0xf]
        %v6098 = vld [vmem:[#allocation2 + $0x40] sm:$0xf]
        %v6099 = vld [vmem:[#allocation2 + $0x44] sm:$0xf]
        %v6100 = vld [vmem:[#allocation2 + $0x48] sm:$0xf]
        %v6101 = vld [vmem:[#allocation2 + $0x4c] sm:$0xf]
        %v6102 = vld [vmem:[#allocation2 + $0x50] sm:$0xf]
        %v6103 = vld [vmem:[#allocation2 + $0x54] sm:$0xf]
        %v6104 = vld [vmem:[#allocation2 + $0x58] sm:$0xf]
        %v6105 = vld [vmem:[#allocation2 + $0x5c] sm:$0xf]
        %v6106 = vld [vmem:[#allocation2 + $0x60] sm:$0xf]
        %v6107 = vld [vmem:[#allocation2 + $0x64] sm:$0xf]
        %v6108 = vld [vmem:[#allocation2 + $0x68] sm:$0xf]
        %v6109 = vld [vmem:[#allocation2 + $0x6c] sm:$0xf]
        %v6110 = vld [vmem:[#allocation2 + $0x70] sm:$0xf]
        %v6111 = vld [vmem:[#allocation2 + $0x74] sm:$0xf]
        %v6112 = vld [vmem:[#allocation2 + $0x78] sm:$0xf]
        %v6113 = vld [vmem:[#allocation2 + $0x7c] sm:$0xf]
        %v6114 = vld [vmem:[#allocation2 + $0x80] sm:$0xf]
        %v6115 = vld [vmem:[#allocation2 + $0x84] sm:$0xf]
        %v6116 = vld [vmem:[#allocation2 + $0x88] sm:$0xf]
        %v6117 = vld [vmem:[#allocation2 + $0x8c] sm:$0xf]
        %v6118 = vld [vmem:[#allocation2 + $0x90] sm:$0xf]
        %v6119 = vld [vmem:[#allocation2 + $0x94] sm:$0xf]
        %v6120 = vld [vmem:[#allocation2 + $0x98] sm:$0xf]
        %v6121 = vld [vmem:[#allocation2 + $0x9c] sm:$0xf]
        %v6122 = vld [vmem:[#allocation2 + $0xa0] sm:$0x7]
        %v6160 = vunpack.c.l.b16 %v6086
        %v6161 = vunpack.c.l.b16 %v6087
        %v6162 = vunpack.c.l.b16 %v6088
        %v6163 = vunpack.c.l.b16 %v6089
        %v6164 = vunpack.c.l.b16 %v6090
        %v6165 = vunpack.c.l.b16 %v6091
        %v6166 = vunpack.c.l.b16 %v6092
        %v6167 = vunpack.c.l.b16 %v6093
        %v6168 = vunpack.c.l.b16 %v6094
        %v6169 = vunpack.c.l.b16 %v6095
        %v6170 = vunpack.c.l.b16 %v6096
        %v6171 = vunpack.c.l.b16 %v6097
        %v6172 = vunpack.c.l.b16 %v6098
        %v6173 = vunpack.c.l.b16 %v6099
        %v6174 = vunpack.c.l.b16 %v6100
        %v6175 = vunpack.c.l.b16 %v6101
        %v6176 = vunpack.c.l.b16 %v6102
        %v6177 = vunpack.c.l.b16 %v6103
        %v6178 = vunpack.c.l.b16 %v6104
        %v6179 = vunpack.c.l.b16 %v6105
        %v6180 = vunpack.c.l.b16 %v6106
        %v6181 = vunpack.c.l.b16 %v6107
        %v6182 = vunpack.c.l.b16 %v6108
        %v6183 = vunpack.c.l.b16 %v6109
        %v6184 = vunpack.c.l.b16 %v6110
        %v6185 = vunpack.c.l.b16 %v6111
        %v6186 = vunpack.c.l.b16 %v6112
        %v6187 = vunpack.c.l.b16 %v6113
        %v6188 = vunpack.c.l.b16 %v6114
        %v6189 = vunpack.c.l.b16 %v6115
        %v6190 = vunpack.c.l.b16 %v6116
        %v6191 = vunpack.c.l.b16 %v6117
        %v6192 = vunpack.c.l.b16 %v6118
        %v6193 = vunpack.c.l.b16 %v6119
        %v6194 = vunpack.c.l.b16 %v6120
        %v6195 = vunpack.c.l.b16 %v6121
        %v6196 = vunpack.c.l.b16 %v6122
        %v6197 = vpack.c.b16 %v6161, %v6160
        %v6198 = vpack.c.b16 %v6163, %v6162
        %v6199 = vpack.c.b16 %v6165, %v6164
        %v6200 = vpack.c.b16 %v6167, %v6166
        %v6201 = vpack.c.b16 %v6169, %v6168
        %v6202 = vpack.c.b16 %v6171, %v6170
        %v6203 = vpack.c.b16 %v6173, %v6172
        %v6204 = vpack.c.b16 %v6175, %v6174
        %v6205 = vpack.c.b16 %v6177, %v6176
        %v6206 = vpack.c.b16 %v6179, %v6178
        %v6207 = vpack.c.b16 %v6181, %v6180
        %v6208 = vpack.c.b16 %v6183, %v6182
        %v6209 = vpack.c.b16 %v6185, %v6184
        %v6210 = vpack.c.b16 %v6187, %v6186
        %v6211 = vpack.c.b16 %v6189, %v6188
        %v6212 = vpack.c.b16 %v6191, %v6190
        %v6213 = vpack.c.b16 %v6193, %v6192
        %v6214 = vpack.c.b16 %v6195, %v6194
        %v6215 = vpack.c.b16 %v6196, %v6196
        %v6217 = vshrl.u32 %v6197, 16
        %v6219 = vrot.slane %v6217, 2
        %v6220 = vshll.u32 %v6197, 16
        %v6222 = vrot.slane %v6220, 3
        %v6223 = vor.u32 %v6219, %v6222
        %v6225 = vshrl.u32 %v6198, 16
        %v6227 = vrot.slane %v6225, 2
        %v6228 = vshll.u32 %v6198, 16
        %v6230 = vrot.slane %v6228, 3
        %v6231 = vor.u32 %v6227, %v6230
        %v6232 = vsel %vm2180, %v6223, %v6231
        %v6234 = vshrl.u32 %v6199, 16
        %v6236 = vrot.slane %v6234, 2
        %v6237 = vshll.u32 %v6199, 16
        %v6239 = vrot.slane %v6237, 3
        %v6240 = vor.u32 %v6236, %v6239
        %v6241 = vsel %vm2180, %v6231, %v6240
        %v6243 = vshrl.u32 %v6200, 16
        %v6245 = vrot.slane %v6243, 2
        %v6246 = vshll.u32 %v6200, 16
        %v6248 = vrot.slane %v6246, 3
        %v6249 = vor.u32 %v6245, %v6248
        %v6250 = vsel %vm2180, %v6240, %v6249
        %v6252 = vshrl.u32 %v6201, 16
        %v6254 = vrot.slane %v6252, 2
        %v6255 = vshll.u32 %v6201, 16
        %v6257 = vrot.slane %v6255, 3
        %v6258 = vor.u32 %v6254, %v6257
        %v6259 = vsel %vm2180, %v6249, %v6258
        %v6261 = vshrl.u32 %v6202, 16
        %v6263 = vrot.slane %v6261, 2
        %v6264 = vshll.u32 %v6202, 16
        %v6266 = vrot.slane %v6264, 3
        %v6267 = vor.u32 %v6263, %v6266
        %v6268 = vsel %vm2180, %v6258, %v6267
        %v6270 = vshrl.u32 %v6203, 16
        %v6272 = vrot.slane %v6270, 2
        %v6273 = vshll.u32 %v6203, 16
        %v6275 = vrot.slane %v6273, 3
        %v6276 = vor.u32 %v6272, %v6275
        %v6277 = vsel %vm2180, %v6267, %v6276
        %v6279 = vshrl.u32 %v6204, 16
        %v6281 = vrot.slane %v6279, 2
        %v6282 = vshll.u32 %v6204, 16
        %v6284 = vrot.slane %v6282, 3
        %v6285 = vor.u32 %v6281, %v6284
        %v6286 = vsel %vm2180, %v6276, %v6285
        %v6288 = vshrl.u32 %v6205, 16
        %v6290 = vrot.slane %v6288, 2
        %v6291 = vshll.u32 %v6205, 16
        %v6293 = vrot.slane %v6291, 3
        %v6294 = vor.u32 %v6290, %v6293
        %v6295 = vsel %vm2180, %v6285, %v6294
        %v6297 = vshrl.u32 %v6206, 16
        %v6299 = vrot.slane %v6297, 2
        %v6300 = vshll.u32 %v6206, 16
        %v6302 = vrot.slane %v6300, 3
        %v6303 = vor.u32 %v6299, %v6302
        %v6304 = vsel %vm2180, %v6294, %v6303
        %v6306 = vshrl.u32 %v6207, 16
        %v6308 = vrot.slane %v6306, 2
        %v6309 = vshll.u32 %v6207, 16
        %v6311 = vrot.slane %v6309, 3
        %v6312 = vor.u32 %v6308, %v6311
        %v6313 = vsel %vm2180, %v6303, %v6312
        %v6315 = vshrl.u32 %v6208, 16
        %v6317 = vrot.slane %v6315, 2
        %v6318 = vshll.u32 %v6208, 16
        %v6320 = vrot.slane %v6318, 3
        %v6321 = vor.u32 %v6317, %v6320
        %v6322 = vsel %vm2180, %v6312, %v6321
        %v6324 = vshrl.u32 %v6209, 16
        %v6326 = vrot.slane %v6324, 2
        %v6327 = vshll.u32 %v6209, 16
        %v6329 = vrot.slane %v6327, 3
        %v6330 = vor.u32 %v6326, %v6329
        %v6331 = vsel %vm2180, %v6321, %v6330
        %v6333 = vshrl.u32 %v6210, 16
        %v6335 = vrot.slane %v6333, 2
        %v6336 = vshll.u32 %v6210, 16
        %v6338 = vrot.slane %v6336, 3
        %v6339 = vor.u32 %v6335, %v6338
        %v6340 = vsel %vm2180, %v6330, %v6339
        %v6342 = vshrl.u32 %v6211, 16
        %v6344 = vrot.slane %v6342, 2
        %v6345 = vshll.u32 %v6211, 16
        %v6347 = vrot.slane %v6345, 3
        %v6348 = vor.u32 %v6344, %v6347
        %v6349 = vsel %vm2180, %v6339, %v6348
        %v6351 = vshrl.u32 %v6212, 16
        %v6353 = vrot.slane %v6351, 2
        %v6354 = vshll.u32 %v6212, 16
        %v6356 = vrot.slane %v6354, 3
        %v6357 = vor.u32 %v6353, %v6356
        %v6358 = vsel %vm2180, %v6348, %v6357
        %v6360 = vshrl.u32 %v6213, 16
        %v6362 = vrot.slane %v6360, 2
        %v6363 = vshll.u32 %v6213, 16
        %v6365 = vrot.slane %v6363, 3
        %v6366 = vor.u32 %v6362, %v6365
        %v6367 = vsel %vm2180, %v6357, %v6366
        %v6369 = vshrl.u32 %v6214, 16
        %v6371 = vrot.slane %v6369, 2
        %v6372 = vshll.u32 %v6214, 16
        %v6374 = vrot.slane %v6372, 3
        %v6375 = vor.u32 %v6371, %v6374
        %v6376 = vsel %vm2180, %v6366, %v6375
        %v6378 = vshrl.u32 %v6215, 16
        %v6380 = vrot.slane %v6378, 2
        %v6381 = vshll.u32 %v6215, 16
        %v6383 = vrot.slane %v6381, 3
        %v6384 = vor.u32 %v6380, %v6383
        %v6385 = vsel %vm2180, %v6375, %v6384
        %6386 = vrot.lane.b32.xlu0 %v6232, 64
        %v6387 = vpop.permute.xlu0 %6386
        %6388 = vrot.lane.b32.xlu0 %v6241, 64
        %v6389 = vpop.permute.xlu0 %6388
        %6390 = vrot.lane.b32.xlu0 %v6250, 64
        %v6391 = vpop.permute.xlu0 %6390
        %6392 = vrot.lane.b32.xlu0 %v6259, 64
        %v6393 = vpop.permute.xlu0 %6392
        %6394 = vrot.lane.b32.xlu0 %v6268, 64
        %v6395 = vpop.permute.xlu0 %6394
        %6396 = vrot.lane.b32.xlu0 %v6277, 64
        %v6397 = vpop.permute.xlu0 %6396
        %6398 = vrot.lane.b32.xlu0 %v6286, 64
        %v6399 = vpop.permute.xlu0 %6398
        %6400 = vrot.lane.b32.xlu0 %v6295, 64
        %v6401 = vpop.permute.xlu0 %6400
        %6402 = vrot.lane.b32.xlu0 %v6304, 64
        %v6403 = vpop.permute.xlu0 %6402
        %6404 = vrot.lane.b32.xlu0 %v6313, 64
        %v6405 = vpop.permute.xlu0 %6404
        %6406 = vrot.lane.b32.xlu0 %v6322, 64
        %v6407 = vpop.permute.xlu0 %6406
        %6408 = vrot.lane.b32.xlu0 %v6331, 64
        %v6409 = vpop.permute.xlu0 %6408
        %6410 = vrot.lane.b32.xlu0 %v6340, 64
        %v6411 = vpop.permute.xlu0 %6410
        %6412 = vrot.lane.b32.xlu0 %v6349, 64
        %v6413 = vpop.permute.xlu0 %6412
        %6414 = vrot.lane.b32.xlu0 %v6358, 64
        %v6415 = vpop.permute.xlu0 %6414
        %6416 = vrot.lane.b32.xlu0 %v6367, 64
        %v6417 = vpop.permute.xlu0 %6416
        %6418 = vrot.lane.b32.xlu0 %v6376, 64
        %v6419 = vpop.permute.xlu0 %6418
        %6420 = vrot.lane.b32.xlu0 %v6385, 64
        %v6421 = vpop.permute.xlu0 %6420
        %6440 = vst.msk [vmem:[#allocation3 + $0x18] sm:$0xff] %vm808, %v6387
        %6441 = vst.msk [vmem:[#allocation3 + $0x40] sm:$0xff] %vm808, %v6389
        %6442 = vst.msk [vmem:[#allocation3 + $0x68] sm:$0xff] %vm808, %v6391
        %6443 = vst.msk [vmem:[#allocation3 + $0x90] sm:$0xff] %vm808, %v6393
        %6444 = vst.msk [vmem:[#allocation3 + $0xb8] sm:$0xff] %vm808, %v6395
        %6445 = vst.msk [vmem:[#allocation3 + $0xe0] sm:$0xff] %vm808, %v6397
        %6446 = vst.msk [vmem:[#allocation3 + $0x108] sm:$0xff] %vm808, %v6399
        %6447 = vst.msk [vmem:[#allocation3 + $0x130] sm:$0xff] %vm808, %v6401
        %6448 = vst.msk [vmem:[#allocation3 + $0x158] sm:$0xff] %vm808, %v6403
        %6449 = vst.msk [vmem:[#allocation3 + $0x180] sm:$0xff] %vm808, %v6405
        %6450 = vst.msk [vmem:[#allocation3 + $0x1a8] sm:$0xff] %vm808, %v6407
        %6451 = vst.msk [vmem:[#allocation3 + $0x1d0] sm:$0xff] %vm808, %v6409
        %6452 = vst.msk [vmem:[#allocation3 + $0x1f8] sm:$0xff] %vm808, %v6411
        %6453 = vst.msk [vmem:[#allocation3 + $0x220] sm:$0xff] %vm808, %v6413
        %6454 = vst.msk [vmem:[#allocation3 + $0x248] sm:$0xff] %vm808, %v6415
        %6455 = vst.msk [vmem:[#allocation3 + $0x270] sm:$0xff] %vm808, %v6417
        %6456 = vst.msk [vmem:[#allocation3 + $0x298] sm:$0xff] %vm808, %v6419
        %6457 = vst.msk [vmem:[#allocation3 + $0x2c0] sm:$0xff] %vm808, %v6421
        %v6458 = vld [vmem:[#allocation2 + $0x10] sm:$0x8]
        %v6459 = vld [vmem:[#allocation2 + $0x14] sm:$0xf]
        %v6460 = vld [vmem:[#allocation2 + $0x18] sm:$0xf]
        %v6461 = vld [vmem:[#allocation2 + $0x1c] sm:$0xf]
        %v6462 = vld [vmem:[#allocation2 + $0x20] sm:$0xf]
        %v6463 = vld [vmem:[#allocation2 + $0x24] sm:$0xf]
        %v6464 = vld [vmem:[#allocation2 + $0x28] sm:$0xf]
        %v6465 = vld [vmem:[#allocation2 + $0x2c] sm:$0xf]
        %v6466 = vld [vmem:[#allocation2 + $0x30] sm:$0xf]
        %v6467 = vld [vmem:[#allocation2 + $0x34] sm:$0xf]
        %v6468 = vld [vmem:[#allocation2 + $0x38] sm:$0xf]
        %v6469 = vld [vmem:[#allocation2 + $0x3c] sm:$0xf]
        %v6470 = vld [vmem:[#allocation2 + $0x40] sm:$0xf]
        %v6471 = vld [vmem:[#allocation2 + $0x44] sm:$0xf]
        %v6472 = vld [vmem:[#allocation2 + $0x48] sm:$0xf]
        %v6473 = vld [vmem:[#allocation2 + $0x4c] sm:$0xf]
        %v6474 = vld [vmem:[#allocation2 + $0x50] sm:$0xf]
        %v6475 = vld [vmem:[#allocation2 + $0x54] sm:$0xf]
        %v6476 = vld [vmem:[#allocation2 + $0x58] sm:$0xf]
        %v6477 = vld [vmem:[#allocation2 + $0x5c] sm:$0xf]
        %v6478 = vld [vmem:[#allocation2 + $0x60] sm:$0xf]
        %v6479 = vld [vmem:[#allocation2 + $0x64] sm:$0xf]
        %v6480 = vld [vmem:[#allocation2 + $0x68] sm:$0xf]
        %v6481 = vld [vmem:[#allocation2 + $0x6c] sm:$0xf]
        %v6482 = vld [vmem:[#allocation2 + $0x70] sm:$0xf]
        %v6483 = vld [vmem:[#allocation2 + $0x74] sm:$0xf]
        %v6484 = vld [vmem:[#allocation2 + $0x78] sm:$0xf]
        %v6485 = vld [vmem:[#allocation2 + $0x7c] sm:$0xf]
        %v6486 = vld [vmem:[#allocation2 + $0x80] sm:$0xf]
        %v6487 = vld [vmem:[#allocation2 + $0x84] sm:$0xf]
        %v6488 = vld [vmem:[#allocation2 + $0x88] sm:$0xf]
        %v6489 = vld [vmem:[#allocation2 + $0x8c] sm:$0xf]
        %v6490 = vld [vmem:[#allocation2 + $0x90] sm:$0xf]
        %v6491 = vld [vmem:[#allocation2 + $0x94] sm:$0xf]
        %v6492 = vld [vmem:[#allocation2 + $0x98] sm:$0xf]
        %v6493 = vld [vmem:[#allocation2 + $0x9c] sm:$0xf]
        %v6494 = vld [vmem:[#allocation2 + $0xa0] sm:$0x7]
        %v6532 = vunpack.c.l.b16 %v6458
        %v6533 = vunpack.c.l.b16 %v6459
        %v6534 = vunpack.c.l.b16 %v6460
        %v6535 = vunpack.c.l.b16 %v6461
        %v6536 = vunpack.c.l.b16 %v6462
        %v6537 = vunpack.c.l.b16 %v6463
        %v6538 = vunpack.c.l.b16 %v6464
        %v6539 = vunpack.c.l.b16 %v6465
        %v6540 = vunpack.c.l.b16 %v6466
        %v6541 = vunpack.c.l.b16 %v6467
        %v6542 = vunpack.c.l.b16 %v6468
        %v6543 = vunpack.c.l.b16 %v6469
        %v6544 = vunpack.c.l.b16 %v6470
        %v6545 = vunpack.c.l.b16 %v6471
        %v6546 = vunpack.c.l.b16 %v6472
        %v6547 = vunpack.c.l.b16 %v6473
        %v6548 = vunpack.c.l.b16 %v6474
        %v6549 = vunpack.c.l.b16 %v6475
        %v6550 = vunpack.c.l.b16 %v6476
        %v6551 = vunpack.c.l.b16 %v6477
        %v6552 = vunpack.c.l.b16 %v6478
        %v6553 = vunpack.c.l.b16 %v6479
        %v6554 = vunpack.c.l.b16 %v6480
        %v6555 = vunpack.c.l.b16 %v6481
        %v6556 = vunpack.c.l.b16 %v6482
        %v6557 = vunpack.c.l.b16 %v6483
        %v6558 = vunpack.c.l.b16 %v6484
        %v6559 = vunpack.c.l.b16 %v6485
        %v6560 = vunpack.c.l.b16 %v6486
        %v6561 = vunpack.c.l.b16 %v6487
        %v6562 = vunpack.c.l.b16 %v6488
        %v6563 = vunpack.c.l.b16 %v6489
        %v6564 = vunpack.c.l.b16 %v6490
        %v6565 = vunpack.c.l.b16 %v6491
        %v6566 = vunpack.c.l.b16 %v6492
        %v6567 = vunpack.c.l.b16 %v6493
        %v6568 = vunpack.c.l.b16 %v6494
        %v6569 = vpack.c.b16 %v6533, %v6532
        %v6570 = vpack.c.b16 %v6535, %v6534
        %v6571 = vpack.c.b16 %v6537, %v6536
        %v6572 = vpack.c.b16 %v6539, %v6538
        %v6573 = vpack.c.b16 %v6541, %v6540
        %v6574 = vpack.c.b16 %v6543, %v6542
        %v6575 = vpack.c.b16 %v6545, %v6544
        %v6576 = vpack.c.b16 %v6547, %v6546
        %v6577 = vpack.c.b16 %v6549, %v6548
        %v6578 = vpack.c.b16 %v6551, %v6550
        %v6579 = vpack.c.b16 %v6553, %v6552
        %v6580 = vpack.c.b16 %v6555, %v6554
        %v6581 = vpack.c.b16 %v6557, %v6556
        %v6582 = vpack.c.b16 %v6559, %v6558
        %v6583 = vpack.c.b16 %v6561, %v6560
        %v6584 = vpack.c.b16 %v6563, %v6562
        %v6585 = vpack.c.b16 %v6565, %v6564
        %v6586 = vpack.c.b16 %v6567, %v6566
        %v6587 = vpack.c.b16 %v6568, %v6568
        %v6588 = vrot.slane %v6569, 3
        %v6589 = vrot.slane %v6570, 3
        %v6590 = vsel %vm2553, %v6588, %v6589
        %v6591 = vrot.slane %v6571, 3
        %v6592 = vsel %vm2553, %v6589, %v6591
        %v6593 = vrot.slane %v6572, 3
        %v6594 = vsel %vm2553, %v6591, %v6593
        %v6595 = vrot.slane %v6573, 3
        %v6596 = vsel %vm2553, %v6593, %v6595
        %v6597 = vrot.slane %v6574, 3
        %v6598 = vsel %vm2553, %v6595, %v6597
        %v6599 = vrot.slane %v6575, 3
        %v6600 = vsel %vm2553, %v6597, %v6599
        %v6601 = vrot.slane %v6576, 3
        %v6602 = vsel %vm2553, %v6599, %v6601
        %v6603 = vrot.slane %v6577, 3
        %v6604 = vsel %vm2553, %v6601, %v6603
        %v6605 = vrot.slane %v6578, 3
        %v6606 = vsel %vm2553, %v6603, %v6605
        %v6607 = vrot.slane %v6579, 3
        %v6608 = vsel %vm2553, %v6605, %v6607
        %v6609 = vrot.slane %v6580, 3
        %v6610 = vsel %vm2553, %v6607, %v6609
        %v6611 = vrot.slane %v6581, 3
        %v6612 = vsel %vm2553, %v6609, %v6611
        %v6613 = vrot.slane %v6582, 3
        %v6614 = vsel %vm2553, %v6611, %v6613
        %v6615 = vrot.slane %v6583, 3
        %v6616 = vsel %vm2553, %v6613, %v6615
        %v6617 = vrot.slane %v6584, 3
        %v6618 = vsel %vm2553, %v6615, %v6617
        %v6619 = vrot.slane %v6585, 3
        %v6620 = vsel %vm2553, %v6617, %v6619
        %v6621 = vrot.slane %v6586, 3
        %v6622 = vsel %vm2553, %v6619, %v6621
        %v6623 = vrot.slane %v6587, 3
        %v6624 = vsel %vm2553, %v6621, %v6623
        %6643 = vst.msk [vmem:[#allocation3 + $0x20] sm:$0xff] %vm456, %v6590
        %6644 = vst.msk [vmem:[#allocation3 + $0x48] sm:$0xff] %vm456, %v6592
        %6645 = vst.msk [vmem:[#allocation3 + $0x70] sm:$0xff] %vm456, %v6594
        %6646 = vst.msk [vmem:[#allocation3 + $0x98] sm:$0xff] %vm456, %v6596
        %6647 = vst.msk [vmem:[#allocation3 + $0xc0] sm:$0xff] %vm456, %v6598
        %6648 = vst.msk [vmem:[#allocation3 + $0xe8] sm:$0xff] %vm456, %v6600
        %6649 = vst.msk [vmem:[#allocation3 + $0x110] sm:$0xff] %vm456, %v6602
        %6650 = vst.msk [vmem:[#allocation3 + $0x138] sm:$0xff] %vm456, %v6604
        %6651 = vst.msk [vmem:[#allocation3 + $0x160] sm:$0xff] %vm456, %v6606
        %6652 = vst.msk [vmem:[#allocation3 + $0x188] sm:$0xff] %vm456, %v6608
        %6653 = vst.msk [vmem:[#allocation3 + $0x1b0] sm:$0xff] %vm456, %v6610
        %6654 = vst.msk [vmem:[#allocation3 + $0x1d8] sm:$0xff] %vm456, %v6612
        %6655 = vst.msk [vmem:[#allocation3 + $0x200] sm:$0xff] %vm456, %v6614
        %6656 = vst.msk [vmem:[#allocation3 + $0x228] sm:$0xff] %vm456, %v6616
        %6657 = vst.msk [vmem:[#allocation3 + $0x250] sm:$0xff] %vm456, %v6618
        %6658 = vst.msk [vmem:[#allocation3 + $0x278] sm:$0xff] %vm456, %v6620
        %6659 = vst.msk [vmem:[#allocation3 + $0x2a0] sm:$0xff] %vm456, %v6622
        %6660 = vst.msk [vmem:[#allocation3 + $0x2c8] sm:$0xff] %vm456, %v6624
        %v6661 = vld [vmem:[#allocation3] sm:$0xff]
        %v6662 = vld [vmem:[#allocation3 + $0x8] sm:$0xff]
        %v6663 = vld [vmem:[#allocation3 + $0x10] sm:$0xff]
        %v6664 = vld [vmem:[#allocation3 + $0x18] sm:$0xff]
        %v6665 = vld [vmem:[#allocation3 + $0x20] sm:$0xff]
        %v6666 = vld [vmem:[#allocation3 + $0x28] sm:$0xff]
        %v6667 = vld [vmem:[#allocation3 + $0x30] sm:$0xff]
        %v6668 = vld [vmem:[#allocation3 + $0x38] sm:$0xff]
        %v6669 = vld [vmem:[#allocation3 + $0x40] sm:$0xff]
        %v6670 = vld [vmem:[#allocation3 + $0x48] sm:$0xff]
        %v6671 = vld [vmem:[#allocation3 + $0x50] sm:$0xff]
        %v6672 = vld [vmem:[#allocation3 + $0x58] sm:$0xff]
        %v6673 = vld [vmem:[#allocation3 + $0x60] sm:$0xff]
        %v6674 = vld [vmem:[#allocation3 + $0x68] sm:$0xff]
        %v6675 = vld [vmem:[#allocation3 + $0x70] sm:$0xff]
        %v6676 = vld [vmem:[#allocation3 + $0x78] sm:$0xff]
        %v6677 = vld [vmem:[#allocation3 + $0x80] sm:$0xff]
        %v6678 = vld [vmem:[#allocation3 + $0x88] sm:$0xff]
        %v6679 = vld [vmem:[#allocation3 + $0x90] sm:$0xff]
        %v6680 = vld [vmem:[#allocation3 + $0x98] sm:$0xff]
        %v6681 = vld [vmem:[#allocation3 + $0xa0] sm:$0xff]
        %v6682 = vld [vmem:[#allocation3 + $0xa8] sm:$0xff]
        %v6683 = vld [vmem:[#allocation3 + $0xb0] sm:$0xff]
        %v6684 = vld [vmem:[#allocation3 + $0xb8] sm:$0xff]
        %v6685 = vld [vmem:[#allocation3 + $0xc0] sm:$0xff]
        %v6686 = vld [vmem:[#allocation3 + $0xc8] sm:$0xff]
        %v6687 = vld [vmem:[#allocation3 + $0xd0] sm:$0xff]
        %v6688 = vld [vmem:[#allocation3 + $0xd8] sm:$0xff]
        %v6689 = vld [vmem:[#allocation3 + $0xe0] sm:$0xff]
        %v6690 = vld [vmem:[#allocation3 + $0xe8] sm:$0xff]
        %v6691 = vld [vmem:[#allocation3 + $0xf0] sm:$0xff]
        %v6692 = vld [vmem:[#allocation3 + $0xf8] sm:$0xff]
        %v6693 = vld [vmem:[#allocation3 + $0x100] sm:$0xff]
        %v6694 = vld [vmem:[#allocation3 + $0x108] sm:$0xff]
        %v6695 = vld [vmem:[#allocation3 + $0x110] sm:$0xff]
        %v6696 = vld [vmem:[#allocation3 + $0x118] sm:$0xff]
        %v6697 = vld [vmem:[#allocation3 + $0x120] sm:$0xff]
        %v6698 = vld [vmem:[#allocation3 + $0x128] sm:$0xff]
        %v6699 = vld [vmem:[#allocation3 + $0x130] sm:$0xff]
        %v6700 = vld [vmem:[#allocation3 + $0x138] sm:$0xff]
        %v6701 = vld [vmem:[#allocation3 + $0x140] sm:$0xff]
        %v6702 = vld [vmem:[#allocation3 + $0x148] sm:$0xff]
        %v6703 = vld [vmem:[#allocation3 + $0x150] sm:$0xff]
        %v6704 = vld [vmem:[#allocation3 + $0x158] sm:$0xff]
        %v6705 = vld [vmem:[#allocation3 + $0x160] sm:$0xff]
        %v6706 = vld [vmem:[#allocation3 + $0x168] sm:$0xff]
        %v6707 = vld [vmem:[#allocation3 + $0x170] sm:$0xff]
        %v6708 = vld [vmem:[#allocation3 + $0x178] sm:$0xff]
        %v6709 = vld [vmem:[#allocation3 + $0x180] sm:$0xff]
        %v6710 = vld [vmem:[#allocation3 + $0x188] sm:$0xff]
        %v6711 = vld [vmem:[#allocation3 + $0x190] sm:$0xff]
        %v6712 = vld [vmem:[#allocation3 + $0x198] sm:$0xff]
        %v6713 = vld [vmem:[#allocation3 + $0x1a0] sm:$0xff]
        %v6714 = vld [vmem:[#allocation3 + $0x1a8] sm:$0xff]
        %v6715 = vld [vmem:[#allocation3 + $0x1b0] sm:$0xff]
        %v6716 = vld [vmem:[#allocation3 + $0x1b8] sm:$0xff]
        %v6717 = vld [vmem:[#allocation3 + $0x1c0] sm:$0xff]
        %v6718 = vld [vmem:[#allocation3 + $0x1c8] sm:$0xff]
        %v6719 = vld [vmem:[#allocation3 + $0x1d0] sm:$0xff]
        %v6720 = vld [vmem:[#allocation3 + $0x1d8] sm:$0xff]
        %v6721 = vld [vmem:[#allocation3 + $0x1e0] sm:$0xff]
        %v6722 = vld [vmem:[#allocation3 + $0x1e8] sm:$0xff]
        %v6723 = vld [vmem:[#allocation3 + $0x1f0] sm:$0xff]
        %v6724 = vld [vmem:[#allocation3 + $0x1f8] sm:$0xff]
        %v6725 = vld [vmem:[#allocation3 + $0x200] sm:$0xff]
        %v6726 = vld [vmem:[#allocation3 + $0x208] sm:$0xff]
        %v6727 = vld [vmem:[#allocation3 + $0x210] sm:$0xff]
        %v6728 = vld [vmem:[#allocation3 + $0x218] sm:$0xff]
        %v6729 = vld [vmem:[#allocation3 + $0x220] sm:$0xff]
        %v6730 = vld [vmem:[#allocation3 + $0x228] sm:$0xff]
        %v6731 = vld [vmem:[#allocation3 + $0x230] sm:$0xff]
        %v6732 = vld [vmem:[#allocation3 + $0x238] sm:$0xff]
        %v6733 = vld [vmem:[#allocation3 + $0x240] sm:$0xff]
        %v6734 = vld [vmem:[#allocation3 + $0x248] sm:$0xff]
        %v6735 = vld [vmem:[#allocation3 + $0x250] sm:$0xff]
        %v6736 = vld [vmem:[#allocation3 + $0x258] sm:$0xff]
        %v6737 = vld [vmem:[#allocation3 + $0x260] sm:$0xff]
        %v6738 = vld [vmem:[#allocation3 + $0x268] sm:$0xff]
        %v6739 = vld [vmem:[#allocation3 + $0x270] sm:$0xff]
        %v6740 = vld [vmem:[#allocation3 + $0x278] sm:$0xff]
        %v6741 = vld [vmem:[#allocation3 + $0x280] sm:$0xff]
        %v6742 = vld [vmem:[#allocation3 + $0x288] sm:$0xff]
        %v6743 = vld [vmem:[#allocation3 + $0x290] sm:$0xff]
        %v6744 = vld [vmem:[#allocation3 + $0x298] sm:$0xff]
        %v6745 = vld [vmem:[#allocation3 + $0x2a0] sm:$0xff]
        %v6746 = vld [vmem:[#allocation3 + $0x2a8] sm:$0xff]
        %v6747 = vld [vmem:[#allocation3 + $0x2b0] sm:$0xff]
        %v6748 = vld [vmem:[#allocation3 + $0x2b8] sm:$0xff]
        %v6749 = vld [vmem:[#allocation3 + $0x2c0] sm:$0xff]
        %v6750 = vld [vmem:[#allocation3 + $0x2c8] sm:$0xff]
        %v6751 = vld [vmem:[%s2] sm:$0xf]
        %v6752 = vld [vmem:[%s2 + $0x4] sm:$0xf]
        %v6753 = vld [vmem:[%s2 + $0x8] sm:$0xf]
        %v6754 = vld [vmem:[%s2 + $0xc] sm:$0xf]
        %v6755 = vld [vmem:[%s2 + $0x10] sm:$0xf]
        %v6756 = vld [vmem:[%s2 + $0x14] sm:$0xf]
        %v6757 = vld [vmem:[%s2 + $0x18] sm:$0xf]
        %v6758 = vld [vmem:[%s2 + $0x1c] sm:$0xf]
        %v6759 = vld [vmem:[%s2 + $0x20] sm:$0xf]
        %v6760 = vld [vmem:[%s2 + $0x24] sm:$0xf]
        %v6761 = vld [vmem:[%s2 + $0x28] sm:$0xf]
        %v6762 = vld [vmem:[%s2 + $0x2c] sm:$0xf]
        %v6763 = vld [vmem:[%s2 + $0x30] sm:$0xf]
        %v6764 = vld [vmem:[%s2 + $0x34] sm:$0xf]
        %v6765 = vld [vmem:[%s2 + $0x38] sm:$0xf]
        %v6766 = vld [vmem:[%s2 + $0x3c] sm:$0xf]
        %v6767 = vld [vmem:[%s2 + $0x40] sm:$0xf]
        %v6768 = vld [vmem:[%s2 + $0x44] sm:$0xf]
        %v6769 = vld [vmem:[%s2 + $0x48] sm:$0xf]
        %v6770 = vld [vmem:[%s2 + $0x4c] sm:$0xf]
        %v6771 = vld [vmem:[%s2 + $0x50] sm:$0xf]
        %v6772 = vld [vmem:[%s2 + $0x54] sm:$0xf]
        %v6773 = vld [vmem:[%s2 + $0x58] sm:$0xf]
        %v6774 = vld [vmem:[%s2 + $0x5c] sm:$0xf]
        %v6775 = vld [vmem:[%s2 + $0x60] sm:$0xf]
        %v6776 = vld [vmem:[%s2 + $0x64] sm:$0xf]
        %v6777 = vld [vmem:[%s2 + $0x68] sm:$0xf]
        %v6778 = vld [vmem:[%s2 + $0x6c] sm:$0xf]
        %v6779 = vld [vmem:[%s2 + $0x70] sm:$0xf]
        %v6780 = vld [vmem:[%s2 + $0x74] sm:$0xf]
        %v6781 = vld [vmem:[%s2 + $0x78] sm:$0xf]
        %v6782 = vld [vmem:[%s2 + $0x7c] sm:$0xf]
        %v6783 = vld [vmem:[%s2 + $0x80] sm:$0xf]
        %v6784 = vld [vmem:[%s2 + $0x84] sm:$0xf]
        %v6785 = vld [vmem:[%s2 + $0x88] sm:$0xf]
        %v6786 = vld [vmem:[%s2 + $0x8c] sm:$0xf]
        %v6787 = vld [vmem:[%s2 + $0x90] sm:$0xf]
        %v6788 = vld [vmem:[%s2 + $0x94] sm:$0xf]
        %v6789 = vld [vmem:[%s2 + $0x98] sm:$0xf]
        %v6790 = vld [vmem:[%s2 + $0x9c] sm:$0xf]
        %v6791 = vld [vmem:[%s2 + $0xa0] sm:$0xf]
        %v6792 = vld [vmem:[%s2 + $0xa4] sm:$0xf]
        %v6793 = vld [vmem:[%s2 + $0xa8] sm:$0xf]
        %v6794 = vld [vmem:[%s2 + $0xac] sm:$0xf]
        %v6795 = vld [vmem:[%s2 + $0xb0] sm:$0xf]
        %v6796 = vld [vmem:[%s2 + $0xb4] sm:$0xf]
        %v6797 = vld [vmem:[%s2 + $0xb8] sm:$0xf]
        %v6798 = vld [vmem:[%s2 + $0xbc] sm:$0xf]
        %v6799 = vld [vmem:[%s2 + $0xc0] sm:$0xf]
        %v6800 = vld [vmem:[%s2 + $0xc4] sm:$0xf]
        %v6801 = vld [vmem:[%s2 + $0xc8] sm:$0xf]
        %v6802 = vld [vmem:[%s2 + $0xcc] sm:$0xf]
        %v6803 = vld [vmem:[%s2 + $0xd0] sm:$0xf]
        %v6804 = vld [vmem:[%s2 + $0xd4] sm:$0xf]
        %v6805 = vld [vmem:[%s2 + $0xd8] sm:$0xf]
        %v6806 = vld [vmem:[%s2 + $0xdc] sm:$0xf]
        %v6807 = vld [vmem:[%s2 + $0xe0] sm:$0xf]
        %v6808 = vld [vmem:[%s2 + $0xe4] sm:$0xf]
        %v6809 = vld [vmem:[%s2 + $0xe8] sm:$0xf]
        %v6810 = vld [vmem:[%s2 + $0xec] sm:$0xf]
        %v6811 = vld [vmem:[%s2 + $0xf0] sm:$0xf]
        %v6812 = vld [vmem:[%s2 + $0xf4] sm:$0xf]
        %v6813 = vld [vmem:[%s2 + $0xf8] sm:$0xf]
        %v6814 = vld [vmem:[%s2 + $0xfc] sm:$0xf]
        %v6815 = vld [vmem:[%s2 + $0x100] sm:$0xf]
        %v6816 = vld [vmem:[%s2 + $0x104] sm:$0xf]
        %v6817 = vld [vmem:[%s2 + $0x108] sm:$0xf]
        %v6818 = vld [vmem:[%s2 + $0x10c] sm:$0xf]
        %v6819 = vld [vmem:[%s2 + $0x110] sm:$0xf]
        %v6820 = vld [vmem:[%s2 + $0x114] sm:$0xf]
        %v6821 = vld [vmem:[%s2 + $0x118] sm:$0xf]
        %v6822 = vld [vmem:[%s2 + $0x11c] sm:$0xf]
        %v6895 = vunpack.c.l.b16 %v6751
        %v6896 = vunpack.c.l.b16 %v6752
        %v6897 = vunpack.c.l.b16 %v6753
        %v6898 = vunpack.c.l.b16 %v6754
        %v6899 = vunpack.c.l.b16 %v6755
        %v6900 = vunpack.c.l.b16 %v6756
        %v6901 = vunpack.c.l.b16 %v6757
        %v6902 = vunpack.c.l.b16 %v6758
        %v6903 = vunpack.c.l.b16 %v6759
        %v6904 = vunpack.c.l.b16 %v6760
        %v6905 = vunpack.c.l.b16 %v6761
        %v6906 = vunpack.c.l.b16 %v6762
        %v6907 = vunpack.c.l.b16 %v6763
        %v6908 = vunpack.c.l.b16 %v6764
        %v6909 = vunpack.c.l.b16 %v6765
        %v6910 = vunpack.c.l.b16 %v6766
        %v6911 = vunpack.c.l.b16 %v6767
        %v6912 = vunpack.c.l.b16 %v6768
        %v6913 = vunpack.c.l.b16 %v6769
        %v6914 = vunpack.c.l.b16 %v6770
        %v6915 = vunpack.c.l.b16 %v6771
        %v6916 = vunpack.c.l.b16 %v6772
        %v6917 = vunpack.c.l.b16 %v6773
        %v6918 = vunpack.c.l.b16 %v6774
        %v6919 = vunpack.c.l.b16 %v6775
        %v6920 = vunpack.c.l.b16 %v6776
        %v6921 = vunpack.c.l.b16 %v6777
        %v6922 = vunpack.c.l.b16 %v6778
        %v6923 = vunpack.c.l.b16 %v6779
        %v6924 = vunpack.c.l.b16 %v6780
        %v6925 = vunpack.c.l.b16 %v6781
        %v6926 = vunpack.c.l.b16 %v6782
        %v6927 = vunpack.c.l.b16 %v6783
        %v6928 = vunpack.c.l.b16 %v6784
        %v6929 = vunpack.c.l.b16 %v6785
        %v6930 = vunpack.c.l.b16 %v6786
        %v6931 = vunpack.c.l.b16 %v6787
        %v6932 = vunpack.c.l.b16 %v6788
        %v6933 = vunpack.c.l.b16 %v6789
        %v6934 = vunpack.c.l.b16 %v6790
        %v6935 = vunpack.c.l.b16 %v6791
        %v6936 = vunpack.c.l.b16 %v6792
        %v6937 = vunpack.c.l.b16 %v6793
        %v6938 = vunpack.c.l.b16 %v6794
        %v6939 = vunpack.c.l.b16 %v6795
        %v6940 = vunpack.c.l.b16 %v6796
        %v6941 = vunpack.c.l.b16 %v6797
        %v6942 = vunpack.c.l.b16 %v6798
        %v6943 = vunpack.c.l.b16 %v6799
        %v6944 = vunpack.c.l.b16 %v6800
        %v6945 = vunpack.c.l.b16 %v6801
        %v6946 = vunpack.c.l.b16 %v6802
        %v6947 = vunpack.c.l.b16 %v6803
        %v6948 = vunpack.c.l.b16 %v6804
        %v6949 = vunpack.c.l.b16 %v6805
        %v6950 = vunpack.c.l.b16 %v6806
        %v6951 = vunpack.c.l.b16 %v6807
        %v6952 = vunpack.c.l.b16 %v6808
        %v6953 = vunpack.c.l.b16 %v6809
        %v6954 = vunpack.c.l.b16 %v6810
        %v6955 = vunpack.c.l.b16 %v6811
        %v6956 = vunpack.c.l.b16 %v6812
        %v6957 = vunpack.c.l.b16 %v6813
        %v6958 = vunpack.c.l.b16 %v6814
        %v6959 = vunpack.c.l.b16 %v6815
        %v6960 = vunpack.c.l.b16 %v6816
        %v6961 = vunpack.c.l.b16 %v6817
        %v6962 = vunpack.c.l.b16 %v6818
        %v6963 = vunpack.c.l.b16 %v6819
        %v6964 = vunpack.c.l.b16 %v6820
        %v6965 = vunpack.c.l.b16 %v6821
        %v6966 = vunpack.c.l.b16 %v6822
        %v6967 = vpack.c.b16 %v6896, %v6895
        %v6968 = vpack.c.b16 %v6898, %v6897
        %v6969 = vpack.c.b16 %v6900, %v6899
        %v6970 = vpack.c.b16 %v6902, %v6901
        %v6971 = vpack.c.b16 %v6904, %v6903
        %v6972 = vpack.c.b16 %v6906, %v6905
        %v6973 = vpack.c.b16 %v6908, %v6907
        %v6974 = vpack.c.b16 %v6910, %v6909
        %v6975 = vpack.c.b16 %v6912, %v6911
        %v6976 = vpack.c.b16 %v6914, %v6913
        %v6977 = vpack.c.b16 %v6916, %v6915
        %v6978 = vpack.c.b16 %v6918, %v6917
        %v6979 = vpack.c.b16 %v6920, %v6919
        %v6980 = vpack.c.b16 %v6922, %v6921
        %v6981 = vpack.c.b16 %v6924, %v6923
        %v6982 = vpack.c.b16 %v6926, %v6925
        %v6983 = vpack.c.b16 %v6928, %v6927
        %v6984 = vpack.c.b16 %v6930, %v6929
        %v6985 = vpack.c.b16 %v6932, %v6931
        %v6986 = vpack.c.b16 %v6934, %v6933
        %v6987 = vpack.c.b16 %v6936, %v6935
        %v6988 = vpack.c.b16 %v6938, %v6937
        %v6989 = vpack.c.b16 %v6940, %v6939
        %v6990 = vpack.c.b16 %v6942, %v6941
        %v6991 = vpack.c.b16 %v6944, %v6943
        %v6992 = vpack.c.b16 %v6946, %v6945
        %v6993 = vpack.c.b16 %v6948, %v6947
        %v6994 = vpack.c.b16 %v6950, %v6949
        %v6995 = vpack.c.b16 %v6952, %v6951
        %v6996 = vpack.c.b16 %v6954, %v6953
        %v6997 = vpack.c.b16 %v6956, %v6955
        %v6998 = vpack.c.b16 %v6958, %v6957
        %v6999 = vpack.c.b16 %v6960, %v6959
        %v7000 = vpack.c.b16 %v6962, %v6961
        %v7001 = vpack.c.b16 %v6964, %v6963
        %v7002 = vpack.c.b16 %v6966, %v6965
        %v7040 = vsel %vm456, %v6665, 0
        %v7043 = vsel %vm456, %v6670, 0
        %v7046 = vsel %vm456, %v6675, 0
        %v7049 = vsel %vm456, %v6680, 0
        %v7052 = vsel %vm456, %v6685, 0
        %v7055 = vsel %vm456, %v6690, 0
        %v7058 = vsel %vm456, %v6695, 0
        %v7061 = vsel %vm456, %v6700, 0
        %v7064 = vsel %vm456, %v6705, 0
        %v7067 = vsel %vm456, %v6710, 0
        %v7070 = vsel %vm456, %v6715, 0
        %v7073 = vsel %vm456, %v6720, 0
        %v7076 = vsel %vm456, %v6725, 0
        %v7079 = vsel %vm456, %v6730, 0
        %v7082 = vsel %vm456, %v6735, 0
        %v7085 = vsel %vm456, %v6740, 0
        %v7088 = vsel %vm456, %v6745, 0
        %v7091 = vsel %vm456, %v6750, 0
        %7093 = vmatprep.subr.bf16.mxu0 0
        %7094 = vmatpush1.bf16.msra.mxu0 %v6967
        %7095 = vmatprep.subr.bf16.mxu0 0
        %7096 = vmatpush1.bf16.msra.mxu0 %v6968
        %7097 = vmatprep.subr.bf16.mxu0 0
        %7098 = vmatpush1.bf16.msra.mxu0 %v6969
        %7099 = vmatprep.subr.bf16.mxu0 0
        %7100 = vmatpush1.bf16.msra.mxu0 %v6970
        %7101 = vmatprep.subr.bf16.mxu0 0
        %7102 = vmatpush1.bf16.msra.mxu0 %v6971
        %7103 = vmatprep.subr.bf16.mxu0 0
        %7104 = vmatpush1.bf16.msra.mxu0 %v6972
        %7105 = vmatprep.subr.bf16.mxu0 0
        %7106 = vmatpush1.bf16.msra.mxu0 %v6973
        %7107 = vmatprep.subr.bf16.mxu0 0
        %7108 = vmatpush1.bf16.msra.mxu0 %v6974
        %7109 = vmatprep.subr.bf16.mxu0 0
        %7110 = vmatpush1.bf16.msra.mxu0 %v6975
        %7111 = vmatprep.subr.bf16.mxu0 0
        %7112 = vmatpush1.bf16.msra.mxu0 %v6976
        %7113 = vmatprep.subr.bf16.mxu0 0
        %7114 = vmatpush1.bf16.msra.mxu0 %v6977
        %7115 = vmatprep.subr.bf16.mxu0 0
        %7116 = vmatpush1.bf16.msra.mxu0 %v6978
        %7117 = vmatprep.subr.bf16.mxu0 0
        %7118 = vmatpush1.bf16.msra.mxu0 %v6979
        %7119 = vmatprep.subr.bf16.mxu0 0
        %7120 = vmatpush1.bf16.msra.mxu0 %v6980
        %7121 = vmatprep.subr.bf16.mxu0 0
        %7122 = vmatpush1.bf16.msra.mxu0 %v6981
        %7123 = vmatprep.subr.bf16.mxu0 0
        %7124 = vmatpush1.bf16.msra.mxu0 %v6982
        %7125 = vmatprep.mubr.bf16.mxu0 %v6662
        %7126 = vmatmul.mubr.bf16.gmra.mrb[0].mxu0 %v6661
        %v7127 = vpop.f32.mrb[0].mxu0
        %v7128 = vadd.f32 0.0, %v7127
        %v7129 = vpop.f32.mrb[0].mxu0
        %v7130 = vpop.f32.mrb[0].mxu0
        %v7131 = vadd.f32 0.0, %v7130
        %v7132 = vpop.f32.mrb[0].mxu0
        %7133 = vmatprep.mubr.bf16.mxu0 %v6667
        %7134 = vmatmul.mubr.bf16.gmra.mrb[0].mxu0 %v6666
        %v7135 = vpop.f32.mrb[0].mxu0
        %v7136 = vadd.f32 0.0, %v7135
        %v7137 = vpop.f32.mrb[0].mxu0
        %v7138 = vpop.f32.mrb[0].mxu0
        %v7139 = vadd.f32 0.0, %v7138
        %v7140 = vpop.f32.mrb[0].mxu0
        %7141 = vmatprep.mubr.bf16.mxu0 %v6672
        %7142 = vmatmul.mubr.bf16.gmra.mrb[0].mxu0 %v6671
        %v7143 = vpop.f32.mrb[0].mxu0
        %v7144 = vadd.f32 0.0, %v7143
        %v7145 = vpop.f32.mrb[0].mxu0
        %v7146 = vpop.f32.mrb[0].mxu0
        %v7147 = vadd.f32 0.0, %v7146
        %v7148 = vpop.f32.mrb[0].mxu0
        %7149 = vmatprep.mubr.bf16.mxu0 %v6677
        %7150 = vmatmul.mubr.bf16.gmra.mrb[0].mxu0 %v6676
        %v7151 = vpop.f32.mrb[0].mxu0
        %v7152 = vadd.f32 0.0, %v7151
        %v7153 = vpop.f32.mrb[0].mxu0
        %v7154 = vpop.f32.mrb[0].mxu0
        %v7155 = vadd.f32 0.0, %v7154
        %v7156 = vpop.f32.mrb[0].mxu0
        %7157 = vmatprep.mubr.bf16.mxu0 %v6682
        %7158 = vmatmul.mubr.bf16.gmra.mrb[0].mxu0 %v6681
        %v7159 = vpop.f32.mrb[0].mxu0
        %v7160 = vadd.f32 0.0, %v7159
        %v7161 = vpop.f32.mrb[0].mxu0
        %v7162 = vpop.f32.mrb[0].mxu0
        %v7163 = vadd.f32 0.0, %v7162
        %v7164 = vpop.f32.mrb[0].mxu0
        %7165 = vmatprep.mubr.bf16.mxu0 %v6687
        %7166 = vmatmul.mubr.bf16.gmra.mrb[0].mxu0 %v6686
        %v7167 = vpop.f32.mrb[0].mxu0
        %v7168 = vadd.f32 0.0, %v7167
        %v7169 = vpop.f32.mrb[0].mxu0
        %v7170 = vpop.f32.mrb[0].mxu0
        %v7171 = vadd.f32 0.0, %v7170
        %v7172 = vpop.f32.mrb[0].mxu0
        %7173 = vmatprep.mubr.bf16.mxu0 %v6692
        %7174 = vmatmul.mubr.bf16.gmra.mrb[0].mxu0 %v6691
        %v7175 = vpop.f32.mrb[0].mxu0
        %v7176 = vadd.f32 0.0, %v7175
        %v7177 = vpop.f32.mrb[0].mxu0
        %v7178 = vpop.f32.mrb[0].mxu0
        %v7179 = vadd.f32 0.0, %v7178
        %v7180 = vpop.f32.mrb[0].mxu0
        %7181 = vmatprep.mubr.bf16.mxu0 %v6697
        %7182 = vmatmul.mubr.bf16.gmra.mrb[0].mxu0 %v6696
        %v7183 = vpop.f32.mrb[0].mxu0
        %v7184 = vadd.f32 0.0, %v7183
        %v7185 = vpop.f32.mrb[0].mxu0
        %v7186 = vpop.f32.mrb[0].mxu0
        %v7187 = vadd.f32 0.0, %v7186
        %v7188 = vpop.f32.mrb[0].mxu0
        %7189 = vmatprep.mubr.bf16.mxu0 %v6702
        %7190 = vmatmul.mubr.bf16.gmra.mrb[0].mxu0 %v6701
        %v7191 = vpop.f32.mrb[0].mxu0
        %v7192 = vadd.f32 0.0, %v7191
        %v7193 = vpop.f32.mrb[0].mxu0
        %v7194 = vpop.f32.mrb[0].mxu0
        %v7195 = vadd.f32 0.0, %v7194
        %v7196 = vpop.f32.mrb[0].mxu0
        %7197 = vmatprep.mubr.bf16.mxu0 %v6707
        %7198 = vmatmul.mubr.bf16.gmra.mrb[0].mxu0 %v6706
        %v7199 = vpop.f32.mrb[0].mxu0
        %v7200 = vadd.f32 0.0, %v7199
        %v7201 = vpop.f32.mrb[0].mxu0
        %v7202 = vpop.f32.mrb[0].mxu0
        %v7203 = vadd.f32 0.0, %v7202
        %v7204 = vpop.f32.mrb[0].mxu0
        %7205 = vmatprep.mubr.bf16.mxu0 %v6712
        %7206 = vmatmul.mubr.bf16.gmra.mrb[0].mxu0 %v6711
        %v7207 = vpop.f32.mrb[0].mxu0
        %v7208 = vadd.f32 0.0, %v7207
        %v7209 = vpop.f32.mrb[0].mxu0
        %v7210 = vpop.f32.mrb[0].mxu0
        %v7211 = vadd.f32 0.0, %v7210
        %v7212 = vpop.f32.mrb[0].mxu0
        %7213 = vmatprep.mubr.bf16.mxu0 %v6717
        %7214 = vmatmul.mubr.bf16.gmra.mrb[0].mxu0 %v6716
        %v7215 = vpop.f32.mrb[0].mxu0
        %v7216 = vadd.f32 0.0, %v7215
        %v7217 = vpop.f32.mrb[0].mxu0
        %v7218 = vpop.f32.mrb[0].mxu0
        %v7219 = vadd.f32 0.0, %v7218
        %v7220 = vpop.f32.mrb[0].mxu0
        %7221 = vmatprep.mubr.bf16.mxu0 %v6722
        %7222 = vmatmul.mubr.bf16.gmra.mrb[0].mxu0 %v6721
        %v7223 = vpop.f32.mrb[0].mxu0
        %v7224 = vadd.f32 0.0, %v7223
        %v7225 = vpop.f32.mrb[0].mxu0
        %v7226 = vpop.f32.mrb[0].mxu0
        %v7227 = vadd.f32 0.0, %v7226
        %v7228 = vpop.f32.mrb[0].mxu0
        %7229 = vmatprep.mubr.bf16.mxu0 %v6727
        %7230 = vmatmul.mubr.bf16.gmra.mrb[0].mxu0 %v6726
        %v7231 = vpop.f32.mrb[0].mxu0
        %v7232 = vadd.f32 0.0, %v7231
        %v7233 = vpop.f32.mrb[0].mxu0
        %v7234 = vpop.f32.mrb[0].mxu0
        %v7235 = vadd.f32 0.0, %v7234
        %v7236 = vpop.f32.mrb[0].mxu0
        %7237 = vmatprep.mubr.bf16.mxu0 %v6732
        %7238 = vmatmul.mubr.bf16.gmra.mrb[0].mxu0 %v6731
        %v7239 = vpop.f32.mrb[0].mxu0
        %v7240 = vadd.f32 0.0, %v7239
        %v7241 = vpop.f32.mrb[0].mxu0
        %v7242 = vpop.f32.mrb[0].mxu0
        %v7243 = vadd.f32 0.0, %v7242
        %v7244 = vpop.f32.mrb[0].mxu0
        %7245 = vmatprep.mubr.bf16.mxu0 %v6737
        %7246 = vmatmul.mubr.bf16.gmra.mrb[0].mxu0 %v6736
        %v7247 = vpop.f32.mrb[0].mxu0
        %v7248 = vadd.f32 0.0, %v7247
        %v7249 = vpop.f32.mrb[0].mxu0
        %v7250 = vpop.f32.mrb[0].mxu0
        %v7251 = vadd.f32 0.0, %v7250
        %v7252 = vpop.f32.mrb[0].mxu0
        %7253 = vmatprep.mubr.bf16.mxu0 %v6742
        %7254 = vmatmul.mubr.bf16.gmra.mrb[0].mxu0 %v6741
        %v7255 = vpop.f32.mrb[0].mxu0
        %v7256 = vadd.f32 0.0, %v7255
        %v7257 = vpop.f32.mrb[0].mxu0
        %v7258 = vpop.f32.mrb[0].mxu0
        %v7259 = vadd.f32 0.0, %v7258
        %v7260 = vpop.f32.mrb[0].mxu0
        %7261 = vmatprep.mubr.bf16.mxu0 %v6747
        %7262 = vmatmul.mubr.bf16.gmra.mrb[0].mxu0 %v6746
        %v7263 = vpop.f32.mrb[0].mxu0
        %v7264 = vadd.f32 0.0, %v7263
        %v7265 = vpop.f32.mrb[0].mxu0
        %v7266 = vpop.f32.mrb[0].mxu0
        %v7267 = vadd.f32 0.0, %v7266
        %v7268 = vpop.f32.mrb[0].mxu0
        %7269 = vdwg.mxu0
        %7270 = vmatprep.subr.bf16.mxu0 0
        %7271 = vmatpush1.bf16.msra.mxu0 %v6983
        %7272 = vmatprep.subr.bf16.mxu0 0
        %7273 = vmatpush1.bf16.msra.mxu0 %v6984
        %7274 = vmatprep.subr.bf16.mxu0 0
        %7275 = vmatpush1.bf16.msra.mxu0 %v6985
        %7276 = vmatprep.subr.bf16.mxu0 0
        %7277 = vmatpush1.bf16.msra.mxu0 %v6986
        %7278 = vmatprep.subr.bf16.mxu0 0
        %7279 = vmatpush1.bf16.msra.mxu0 %v6987
        %7280 = vmatprep.subr.bf16.mxu0 0
        %7281 = vmatpush1.bf16.msra.mxu0 %v6988
        %7282 = vmatprep.subr.bf16.mxu0 0
        %7283 = vmatpush1.bf16.msra.mxu0 %v6989
        %7284 = vmatprep.subr.bf16.mxu0 0
        %7285 = vmatpush1.bf16.msra.mxu0 %v6990
        %7286 = vmatprep.subr.bf16.mxu0 0
        %7287 = vmatpush1.bf16.msra.mxu0 %v6991
        %7288 = vmatprep.subr.bf16.mxu0 0
        %7289 = vmatpush1.bf16.msra.mxu0 %v6992
        %7290 = vmatprep.subr.bf16.mxu0 0
        %7291 = vmatpush1.bf16.msra.mxu0 %v6993
        %7292 = vmatprep.subr.bf16.mxu0 0
        %7293 = vmatpush1.bf16.msra.mxu0 %v6994
        %7294 = vmatprep.subr.bf16.mxu0 0
        %7295 = vmatpush1.bf16.msra.mxu0 %v6995
        %7296 = vmatprep.subr.bf16.mxu0 0
        %7297 = vmatpush1.bf16.msra.mxu0 %v6996
        %7298 = vmatprep.subr.bf16.mxu0 0
        %7299 = vmatpush1.bf16.msra.mxu0 %v6997
        %7300 = vmatprep.subr.bf16.mxu0 0
        %7301 = vmatpush1.bf16.msra.mxu0 %v6998
        %7302 = vmatprep.mubr.bf16.mxu0 %v6664
        %7303 = vmatmul.mubr.bf16.gmra.mrb[0].mxu0 %v6663
        %v7304 = vpop.f32.mrb[0].mxu0
        %v7305 = vadd.f32 %v7128, %v7304
        %v7306 = vpop.f32.mrb[0].mxu0
        %v7307 = vpop.f32.mrb[0].mxu0
        %v7308 = vadd.f32 %v7131, %v7307
        %v7309 = vpop.f32.mrb[0].mxu0
        %7310 = vmatprep.mubr.bf16.mxu0 %v6669
        %7311 = vmatmul.mubr.bf16.gmra.mrb[0].mxu0 %v6668
        %v7312 = vpop.f32.mrb[0].mxu0
        %v7313 = vadd.f32 %v7136, %v7312
        %v7314 = vpop.f32.mrb[0].mxu0
        %v7315 = vpop.f32.mrb[0].mxu0
        %v7316 = vadd.f32 %v7139, %v7315
        %v7317 = vpop.f32.mrb[0].mxu0
        %7318 = vmatprep.mubr.bf16.mxu0 %v6674
        %7319 = vmatmul.mubr.bf16.gmra.mrb[0].mxu0 %v6673
        %v7320 = vpop.f32.mrb[0].mxu0
        %v7321 = vadd.f32 %v7144, %v7320
        %v7322 = vpop.f32.mrb[0].mxu0
        %v7323 = vpop.f32.mrb[0].mxu0
        %v7324 = vadd.f32 %v7147, %v7323
        %v7325 = vpop.f32.mrb[0].mxu0
        %7326 = vmatprep.mubr.bf16.mxu0 %v6679
        %7327 = vmatmul.mubr.bf16.gmra.mrb[0].mxu0 %v6678
        %v7328 = vpop.f32.mrb[0].mxu0
        %v7329 = vadd.f32 %v7152, %v7328
        %v7330 = vpop.f32.mrb[0].mxu0
        %v7331 = vpop.f32.mrb[0].mxu0
        %v7332 = vadd.f32 %v7155, %v7331
        %v7333 = vpop.f32.mrb[0].mxu0
        %7334 = vmatprep.mubr.bf16.mxu0 %v6684
        %7335 = vmatmul.mubr.bf16.gmra.mrb[0].mxu0 %v6683
        %v7336 = vpop.f32.mrb[0].mxu0
        %v7337 = vadd.f32 %v7160, %v7336
        %v7338 = vpop.f32.mrb[0].mxu0
        %v7339 = vpop.f32.mrb[0].mxu0
        %v7340 = vadd.f32 %v7163, %v7339
        %v7341 = vpop.f32.mrb[0].mxu0
        %7342 = vmatprep.mubr.bf16.mxu0 %v6689
        %7343 = vmatmul.mubr.bf16.gmra.mrb[0].mxu0 %v6688
        %v7344 = vpop.f32.mrb[0].mxu0
        %v7345 = vadd.f32 %v7168, %v7344
        %v7346 = vpop.f32.mrb[0].mxu0
        %v7347 = vpop.f32.mrb[0].mxu0
        %v7348 = vadd.f32 %v7171, %v7347
        %v7349 = vpop.f32.mrb[0].mxu0
        %7350 = vmatprep.mubr.bf16.mxu0 %v6694
        %7351 = vmatmul.mubr.bf16.gmra.mrb[0].mxu0 %v6693
        %v7352 = vpop.f32.mrb[0].mxu0
        %v7353 = vadd.f32 %v7176, %v7352
        %v7354 = vpop.f32.mrb[0].mxu0
        %v7355 = vpop.f32.mrb[0].mxu0
        %v7356 = vadd.f32 %v7179, %v7355
        %v7357 = vpop.f32.mrb[0].mxu0
        %7358 = vmatprep.mubr.bf16.mxu0 %v6699
        %7359 = vmatmul.mubr.bf16.gmra.mrb[0].mxu0 %v6698
        %v7360 = vpop.f32.mrb[0].mxu0
        %v7361 = vadd.f32 %v7184, %v7360
        %v7362 = vpop.f32.mrb[0].mxu0
        %v7363 = vpop.f32.mrb[0].mxu0
        %v7364 = vadd.f32 %v7187, %v7363
        %v7365 = vpop.f32.mrb[0].mxu0
        %7366 = vmatprep.mubr.bf16.mxu0 %v6704
        %7367 = vmatmul.mubr.bf16.gmra.mrb[0].mxu0 %v6703
        %v7368 = vpop.f32.mrb[0].mxu0
        %v7369 = vadd.f32 %v7192, %v7368
        %v7370 = vpop.f32.mrb[0].mxu0
        %v7371 = vpop.f32.mrb[0].mxu0
        %v7372 = vadd.f32 %v7195, %v7371
        %v7373 = vpop.f32.mrb[0].mxu0
        %7374 = vmatprep.mubr.bf16.mxu0 %v6709
        %7375 = vmatmul.mubr.bf16.gmra.mrb[0].mxu0 %v6708
        %v7376 = vpop.f32.mrb[0].mxu0
        %v7377 = vadd.f32 %v7200, %v7376
        %v7378 = vpop.f32.mrb[0].mxu0
        %v7379 = vpop.f32.mrb[0].mxu0
        %v7380 = vadd.f32 %v7203, %v7379
        %v7381 = vpop.f32.mrb[0].mxu0
        %7382 = vmatprep.mubr.bf16.mxu0 %v6714
        %7383 = vmatmul.mubr.bf16.gmra.mrb[0].mxu0 %v6713
        %v7384 = vpop.f32.mrb[0].mxu0
        %v7385 = vadd.f32 %v7208, %v7384
        %v7386 = vpop.f32.mrb[0].mxu0
        %v7387 = vpop.f32.mrb[0].mxu0
        %v7388 = vadd.f32 %v7211, %v7387
        %v7389 = vpop.f32.mrb[0].mxu0
        %7390 = vmatprep.mubr.bf16.mxu0 %v6719
        %7391 = vmatmul.mubr.bf16.gmra.mrb[0].mxu0 %v6718
        %v7392 = vpop.f32.mrb[0].mxu0
        %v7393 = vadd.f32 %v7216, %v7392
        %v7394 = vpop.f32.mrb[0].mxu0
        %v7395 = vpop.f32.mrb[0].mxu0
        %v7396 = vadd.f32 %v7219, %v7395
        %v7397 = vpop.f32.mrb[0].mxu0
        %7398 = vmatprep.mubr.bf16.mxu0 %v6724
        %7399 = vmatmul.mubr.bf16.gmra.mrb[0].mxu0 %v6723
        %v7400 = vpop.f32.mrb[0].mxu0
        %v7401 = vadd.f32 %v7224, %v7400
        %v7402 = vpop.f32.mrb[0].mxu0
        %v7403 = vpop.f32.mrb[0].mxu0
        %v7404 = vadd.f32 %v7227, %v7403
        %v7405 = vpop.f32.mrb[0].mxu0
        %7406 = vmatprep.mubr.bf16.mxu0 %v6729
        %7407 = vmatmul.mubr.bf16.gmra.mrb[0].mxu0 %v6728
        %v7408 = vpop.f32.mrb[0].mxu0
        %v7409 = vadd.f32 %v7232, %v7408
        %v7410 = vpop.f32.mrb[0].mxu0
        %v7411 = vpop.f32.mrb[0].mxu0
        %v7412 = vadd.f32 %v7235, %v7411
        %v7413 = vpop.f32.mrb[0].mxu0
        %7414 = vmatprep.mubr.bf16.mxu0 %v6734
        %7415 = vmatmul.mubr.bf16.gmra.mrb[0].mxu0 %v6733
        %v7416 = vpop.f32.mrb[0].mxu0
        %v7417 = vadd.f32 %v7240, %v7416
        %v7418 = vpop.f32.mrb[0].mxu0
        %v7419 = vpop.f32.mrb[0].mxu0
        %v7420 = vadd.f32 %v7243, %v7419
        %v7421 = vpop.f32.mrb[0].mxu0
        %7422 = vmatprep.mubr.bf16.mxu0 %v6739
        %7423 = vmatmul.mubr.bf16.gmra.mrb[0].mxu0 %v6738
        %v7424 = vpop.f32.mrb[0].mxu0
        %v7425 = vadd.f32 %v7248, %v7424
        %v7426 = vpop.f32.mrb[0].mxu0
        %v7427 = vpop.f32.mrb[0].mxu0
        %v7428 = vadd.f32 %v7251, %v7427
        %v7429 = vpop.f32.mrb[0].mxu0
        %7430 = vmatprep.mubr.bf16.mxu0 %v6744
        %7431 = vmatmul.mubr.bf16.gmra.mrb[0].mxu0 %v6743
        %v7432 = vpop.f32.mrb[0].mxu0
        %v7433 = vadd.f32 %v7256, %v7432
        %v7434 = vpop.f32.mrb[0].mxu0
        %v7435 = vpop.f32.mrb[0].mxu0
        %v7436 = vadd.f32 %v7259, %v7435
        %v7437 = vpop.f32.mrb[0].mxu0
        %7438 = vmatprep.mubr.bf16.mxu0 %v6749
        %7439 = vmatmul.mubr.bf16.gmra.mrb[0].mxu0 %v6748
        %v7440 = vpop.f32.mrb[0].mxu0
        %v7441 = vadd.f32 %v7264, %v7440
        %v7442 = vpop.f32.mrb[0].mxu0
        %v7443 = vpop.f32.mrb[0].mxu0
        %v7444 = vadd.f32 %v7267, %v7443
        %v7445 = vpop.f32.mrb[0].mxu0
        %7446 = vdwg.mxu0
        %7447 = vmatprep.subr.bf16.mxu0 0
        %7448 = vmatpush1.bf16.msra.mxu0 %v6999
        %7449 = vmatprep.subr.bf16.mxu0 0
        %7450 = vmatpush1.bf16.msra.mxu0 %v7000
        %7451 = vmatprep.subr.bf16.mxu0 0
        %7452 = vmatpush1.bf16.msra.mxu0 %v7001
        %7453 = vmatprep.subr.bf16.mxu0 0
        %7454 = vmatpush1.bf16.msra.mxu0 %v7002
        %7455 = vmatprep.subr.bf16.mxu0 0
        %7456 = vmatpush1.bf16.msra.mxu0 0
        %7457 = vmatprep.subr.bf16.mxu0 0
        %7458 = vmatpush1.bf16.msra.mxu0 0
        %7459 = vmatprep.subr.bf16.mxu0 0
        %7460 = vmatpush1.bf16.msra.mxu0 0
        %7461 = vmatprep.subr.bf16.mxu0 0
        %7462 = vmatpush1.bf16.msra.mxu0 0
        %7463 = vmatprep.subr.bf16.mxu0 0
        %7464 = vmatpush1.bf16.msra.mxu0 0
        %7465 = vmatprep.subr.bf16.mxu0 0
        %7466 = vmatpush1.bf16.msra.mxu0 0
        %7467 = vmatprep.subr.bf16.mxu0 0
        %7468 = vmatpush1.bf16.msra.mxu0 0
        %7469 = vmatprep.subr.bf16.mxu0 0
        %7470 = vmatpush1.bf16.msra.mxu0 0
        %7471 = vmatprep.subr.bf16.mxu0 0
        %7472 = vmatpush1.bf16.msra.mxu0 0
        %7473 = vmatprep.subr.bf16.mxu0 0
        %7474 = vmatpush1.bf16.msra.mxu0 0
        %7475 = vmatprep.subr.bf16.mxu0 0
        %7476 = vmatpush1.bf16.msra.mxu0 0
        %7477 = vmatprep.subr.bf16.mxu0 0
        %7478 = vmatpush1.bf16.msra.mxu0 0
        %7479 = vmatprep.mubr.bf16.mxu0 0
        %7480 = vmatmul.mubr.bf16.gmra.mrb[0].mxu0 %v7040
        %v7481 = vpop.f32.mrb[0].mxu0
        %v7482 = vadd.f32 %v7305, %v7481
        %v7483 = vpop.f32.mrb[0].mxu0
        %v7484 = vpop.f32.mrb[0].mxu0
        %v7485 = vadd.f32 %v7308, %v7484
        %v7486 = vpop.f32.mrb[0].mxu0
        %7487 = vmatprep.mubr.bf16.mxu0 0
        %7488 = vmatmul.mubr.bf16.gmra.mrb[0].mxu0 %v7043
        %v7489 = vpop.f32.mrb[0].mxu0
        %v7490 = vadd.f32 %v7313, %v7489
        %v7491 = vpop.f32.mrb[0].mxu0
        %v7492 = vpop.f32.mrb[0].mxu0
        %v7493 = vadd.f32 %v7316, %v7492
        %v7494 = vpop.f32.mrb[0].mxu0
        %7495 = vmatprep.mubr.bf16.mxu0 0
        %7496 = vmatmul.mubr.bf16.gmra.mrb[0].mxu0 %v7046
        %v7497 = vpop.f32.mrb[0].mxu0
        %v7498 = vadd.f32 %v7321, %v7497
        %v7499 = vpop.f32.mrb[0].mxu0
        %v7500 = vpop.f32.mrb[0].mxu0
        %v7501 = vadd.f32 %v7324, %v7500
        %v7502 = vpop.f32.mrb[0].mxu0
        %7503 = vmatprep.mubr.bf16.mxu0 0
        %7504 = vmatmul.mubr.bf16.gmra.mrb[0].mxu0 %v7049
        %v7505 = vpop.f32.mrb[0].mxu0
        %v7506 = vadd.f32 %v7329, %v7505
        %v7507 = vpop.f32.mrb[0].mxu0
        %v7508 = vpop.f32.mrb[0].mxu0
        %v7509 = vadd.f32 %v7332, %v7508
        %v7510 = vpop.f32.mrb[0].mxu0
        %7511 = vmatprep.mubr.bf16.mxu0 0
        %7512 = vmatmul.mubr.bf16.gmra.mrb[0].mxu0 %v7052
        %v7513 = vpop.f32.mrb[0].mxu0
        %v7514 = vadd.f32 %v7337, %v7513
        %v7515 = vpop.f32.mrb[0].mxu0
        %v7516 = vpop.f32.mrb[0].mxu0
        %v7517 = vadd.f32 %v7340, %v7516
        %v7518 = vpop.f32.mrb[0].mxu0
        %7519 = vmatprep.mubr.bf16.mxu0 0
        %7520 = vmatmul.mubr.bf16.gmra.mrb[0].mxu0 %v7055
        %v7521 = vpop.f32.mrb[0].mxu0
        %v7522 = vadd.f32 %v7345, %v7521
        %v7523 = vpop.f32.mrb[0].mxu0
        %v7524 = vpop.f32.mrb[0].mxu0
        %v7525 = vadd.f32 %v7348, %v7524
        %v7526 = vpop.f32.mrb[0].mxu0
        %7527 = vmatprep.mubr.bf16.mxu0 0
        %7528 = vmatmul.mubr.bf16.gmra.mrb[0].mxu0 %v7058
        %v7529 = vpop.f32.mrb[0].mxu0
        %v7530 = vadd.f32 %v7353, %v7529
        %v7531 = vpop.f32.mrb[0].mxu0
        %v7532 = vpop.f32.mrb[0].mxu0
        %v7533 = vadd.f32 %v7356, %v7532
        %v7534 = vpop.f32.mrb[0].mxu0
        %7535 = vmatprep.mubr.bf16.mxu0 0
        %7536 = vmatmul.mubr.bf16.gmra.mrb[0].mxu0 %v7061
        %v7537 = vpop.f32.mrb[0].mxu0
        %v7538 = vadd.f32 %v7361, %v7537
        %v7539 = vpop.f32.mrb[0].mxu0
        %v7540 = vpop.f32.mrb[0].mxu0
        %v7541 = vadd.f32 %v7364, %v7540
        %v7542 = vpop.f32.mrb[0].mxu0
        %7543 = vmatprep.mubr.bf16.mxu0 0
        %7544 = vmatmul.mubr.bf16.gmra.mrb[0].mxu0 %v7064
        %v7545 = vpop.f32.mrb[0].mxu0
        %v7546 = vadd.f32 %v7369, %v7545
        %v7547 = vpop.f32.mrb[0].mxu0
        %v7548 = vpop.f32.mrb[0].mxu0
        %v7549 = vadd.f32 %v7372, %v7548
        %v7550 = vpop.f32.mrb[0].mxu0
        %7551 = vmatprep.mubr.bf16.mxu0 0
        %7552 = vmatmul.mubr.bf16.gmra.mrb[0].mxu0 %v7067
        %v7553 = vpop.f32.mrb[0].mxu0
        %v7554 = vadd.f32 %v7377, %v7553
        %v7555 = vpop.f32.mrb[0].mxu0
        %v7556 = vpop.f32.mrb[0].mxu0
        %v7557 = vadd.f32 %v7380, %v7556
        %v7558 = vpop.f32.mrb[0].mxu0
        %7559 = vmatprep.mubr.bf16.mxu0 0
        %7560 = vmatmul.mubr.bf16.gmra.mrb[0].mxu0 %v7070
        %v7561 = vpop.f32.mrb[0].mxu0
        %v7562 = vadd.f32 %v7385, %v7561
        %v7563 = vpop.f32.mrb[0].mxu0
        %v7564 = vpop.f32.mrb[0].mxu0
        %v7565 = vadd.f32 %v7388, %v7564
        %v7566 = vpop.f32.mrb[0].mxu0
        %7567 = vmatprep.mubr.bf16.mxu0 0
        %7568 = vmatmul.mubr.bf16.gmra.mrb[0].mxu0 %v7073
        %v7569 = vpop.f32.mrb[0].mxu0
        %v7570 = vadd.f32 %v7393, %v7569
        %v7571 = vpop.f32.mrb[0].mxu0
        %v7572 = vpop.f32.mrb[0].mxu0
        %v7573 = vadd.f32 %v7396, %v7572
        %v7574 = vpop.f32.mrb[0].mxu0
        %7575 = vmatprep.mubr.bf16.mxu0 0
        %7576 = vmatmul.mubr.bf16.gmra.mrb[0].mxu0 %v7076
        %v7577 = vpop.f32.mrb[0].mxu0
        %v7578 = vadd.f32 %v7401, %v7577
        %v7579 = vpop.f32.mrb[0].mxu0
        %v7580 = vpop.f32.mrb[0].mxu0
        %v7581 = vadd.f32 %v7404, %v7580
        %v7582 = vpop.f32.mrb[0].mxu0
        %7583 = vmatprep.mubr.bf16.mxu0 0
        %7584 = vmatmul.mubr.bf16.gmra.mrb[0].mxu0 %v7079
        %v7585 = vpop.f32.mrb[0].mxu0
        %v7586 = vadd.f32 %v7409, %v7585
        %v7587 = vpop.f32.mrb[0].mxu0
        %v7588 = vpop.f32.mrb[0].mxu0
        %v7589 = vadd.f32 %v7412, %v7588
        %v7590 = vpop.f32.mrb[0].mxu0
        %7591 = vmatprep.mubr.bf16.mxu0 0
        %7592 = vmatmul.mubr.bf16.gmra.mrb[0].mxu0 %v7082
        %v7593 = vpop.f32.mrb[0].mxu0
        %v7594 = vadd.f32 %v7417, %v7593
        %v7595 = vpop.f32.mrb[0].mxu0
        %v7596 = vpop.f32.mrb[0].mxu0
        %v7597 = vadd.f32 %v7420, %v7596
        %v7598 = vpop.f32.mrb[0].mxu0
        %7599 = vmatprep.mubr.bf16.mxu0 0
        %7600 = vmatmul.mubr.bf16.gmra.mrb[0].mxu0 %v7085
        %v7601 = vpop.f32.mrb[0].mxu0
        %v7602 = vadd.f32 %v7425, %v7601
        %v7603 = vpop.f32.mrb[0].mxu0
        %v7604 = vpop.f32.mrb[0].mxu0
        %v7605 = vadd.f32 %v7428, %v7604
        %v7606 = vpop.f32.mrb[0].mxu0
        %7607 = vmatprep.mubr.bf16.mxu0 0
        %7608 = vmatmul.mubr.bf16.gmra.mrb[0].mxu0 %v7088
        %v7609 = vpop.f32.mrb[0].mxu0
        %v7610 = vadd.f32 %v7433, %v7609
        %v7611 = vpop.f32.mrb[0].mxu0
        %v7612 = vpop.f32.mrb[0].mxu0
        %v7613 = vadd.f32 %v7436, %v7612
        %v7614 = vpop.f32.mrb[0].mxu0
        %7615 = vmatprep.mubr.bf16.mxu0 0
        %7616 = vmatmul.mubr.bf16.gmra.mrb[0].mxu0 %v7091
        %v7617 = vpop.f32.mrb[0].mxu0
        %v7618 = vadd.f32 %v7441, %v7617
        %v7619 = vpop.f32.mrb[0].mxu0
        %v7620 = vpop.f32.mrb[0].mxu0
        %v7621 = vadd.f32 %v7444, %v7620
        %v7622 = vpop.f32.mrb[0].mxu0
        %7623 = vdwg.mxu0
        %v7624 = vld [vmem:[%s3 + $0x1] sm:$0x1]
        %v7625 = vlaneseq
        %v7626 = vshrl.u32 %v7625, 7
        %v7627 = vsub.s32 0, %v7626
        %v7628 = vrot.slane %v7624, %v7627
        %v7629 = vmul.f32 %v7482, %v7628
        %v7630 = vmul.f32 %v7485, %v7628
        %v7631 = vmul.f32 %v7490, %v7628
        %v7632 = vmul.f32 %v7493, %v7628
        %v7633 = vmul.f32 %v7498, %v7628
        %v7634 = vmul.f32 %v7501, %v7628
        %v7635 = vmul.f32 %v7506, %v7628
        %v7636 = vmul.f32 %v7509, %v7628
        %v7637 = vmul.f32 %v7514, %v7628
        %v7638 = vmul.f32 %v7517, %v7628
        %v7639 = vmul.f32 %v7522, %v7628
        %v7640 = vmul.f32 %v7525, %v7628
        %v7641 = vmul.f32 %v7530, %v7628
        %v7642 = vmul.f32 %v7533, %v7628
        %v7643 = vmul.f32 %v7538, %v7628
        %v7644 = vmul.f32 %v7541, %v7628
        %v7645 = vmul.f32 %v7546, %v7628
        %v7646 = vmul.f32 %v7549, %v7628
        %v7647 = vmul.f32 %v7554, %v7628
        %v7648 = vmul.f32 %v7557, %v7628
        %v7649 = vmul.f32 %v7562, %v7628
        %v7650 = vmul.f32 %v7565, %v7628
        %v7651 = vmul.f32 %v7570, %v7628
        %v7652 = vmul.f32 %v7573, %v7628
        %v7653 = vmul.f32 %v7578, %v7628
        %v7654 = vmul.f32 %v7581, %v7628
        %v7655 = vmul.f32 %v7586, %v7628
        %v7656 = vmul.f32 %v7589, %v7628
        %v7657 = vmul.f32 %v7594, %v7628
        %v7658 = vmul.f32 %v7597, %v7628
        %v7659 = vmul.f32 %v7602, %v7628
        %v7660 = vmul.f32 %v7605, %v7628
        %v7661 = vmul.f32 %v7610, %v7628
        %v7662 = vmul.f32 %v7613, %v7628
        %v7663 = vmul.f32 %v7618, %v7628
        %v7664 = vmul.f32 %v7621, %v7628
        %v7665 = vld [vmem:[%s4 + $0x1] sm:$0x1]
        %v7666 = vlaneseq
        %v7667 = vshrl.u32 %v7666, 7
        %v7668 = vsub.s32 0, %v7667
        %v7669 = vrot.slane %v7665, %v7668
        %v7670 = vadd.f32 %v7629, %v7669
        %v7671 = vadd.f32 %v7630, %v7669
        %v7672 = vadd.f32 %v7631, %v7669
        %v7673 = vadd.f32 %v7632, %v7669
        %v7674 = vadd.f32 %v7633, %v7669
        %v7675 = vadd.f32 %v7634, %v7669
        %v7676 = vadd.f32 %v7635, %v7669
        %v7677 = vadd.f32 %v7636, %v7669
        %v7678 = vadd.f32 %v7637, %v7669
        %v7679 = vadd.f32 %v7638, %v7669
        %v7680 = vadd.f32 %v7639, %v7669
        %v7681 = vadd.f32 %v7640, %v7669
        %v7682 = vadd.f32 %v7641, %v7669
        %v7683 = vadd.f32 %v7642, %v7669
        %v7684 = vadd.f32 %v7643, %v7669
        %v7685 = vadd.f32 %v7644, %v7669
        %v7686 = vadd.f32 %v7645, %v7669
        %v7687 = vadd.f32 %v7646, %v7669
        %v7688 = vadd.f32 %v7647, %v7669
        %v7689 = vadd.f32 %v7648, %v7669
        %v7690 = vadd.f32 %v7649, %v7669
        %v7691 = vadd.f32 %v7650, %v7669
        %v7692 = vadd.f32 %v7651, %v7669
        %v7693 = vadd.f32 %v7652, %v7669
        %v7694 = vadd.f32 %v7653, %v7669
        %v7695 = vadd.f32 %v7654, %v7669
        %v7696 = vadd.f32 %v7655, %v7669
        %v7697 = vadd.f32 %v7656, %v7669
        %v7698 = vadd.f32 %v7657, %v7669
        %v7699 = vadd.f32 %v7658, %v7669
        %v7700 = vadd.f32 %v7659, %v7669
        %v7701 = vadd.f32 %v7660, %v7669
        %v7702 = vadd.f32 %v7661, %v7669
        %v7703 = vadd.f32 %v7662, %v7669
        %v7704 = vadd.f32 %v7663, %v7669
        %v7705 = vadd.f32 %v7664, %v7669
        %v7706 = vmax.f32 %v7670, 0.0
        %v7707 = vmax.f32 %v7671, 0.0
        %v7708 = vmax.f32 %v7672, 0.0
        %v7709 = vmax.f32 %v7673, 0.0
        %v7710 = vmax.f32 %v7674, 0.0
        %v7711 = vmax.f32 %v7675, 0.0
        %v7712 = vmax.f32 %v7676, 0.0
        %v7713 = vmax.f32 %v7677, 0.0
        %v7714 = vmax.f32 %v7678, 0.0
        %v7715 = vmax.f32 %v7679, 0.0
        %v7716 = vmax.f32 %v7680, 0.0
        %v7717 = vmax.f32 %v7681, 0.0
        %v7718 = vmax.f32 %v7682, 0.0
        %v7719 = vmax.f32 %v7683, 0.0
        %v7720 = vmax.f32 %v7684, 0.0
        %v7721 = vmax.f32 %v7685, 0.0
        %v7722 = vmax.f32 %v7686, 0.0
        %v7723 = vmax.f32 %v7687, 0.0
        %v7724 = vmax.f32 %v7688, 0.0
        %v7725 = vmax.f32 %v7689, 0.0
        %v7726 = vmax.f32 %v7690, 0.0
        %v7727 = vmax.f32 %v7691, 0.0
        %v7728 = vmax.f32 %v7692, 0.0
        %v7729 = vmax.f32 %v7693, 0.0
        %v7730 = vmax.f32 %v7694, 0.0
        %v7731 = vmax.f32 %v7695, 0.0
        %v7732 = vmax.f32 %v7696, 0.0
        %v7733 = vmax.f32 %v7697, 0.0
        %v7734 = vmax.f32 %v7698, 0.0
        %v7735 = vmax.f32 %v7699, 0.0
        %v7736 = vmax.f32 %v7700, 0.0
        %v7737 = vmax.f32 %v7701, 0.0
        %v7738 = vmax.f32 %v7702, 0.0
        %v7739 = vmax.f32 %v7703, 0.0
        %v7740 = vmax.f32 %v7704, 0.0
        %v7741 = vmax.f32 %v7705, 0.0
        %7742 = vst.msk [vmem:[#allocation4] sm:$0xff] %vm456, %v7706
        %7743 = vst.msk [vmem:[#allocation4 + $0x8] sm:$0xff] %vm456, %v7707
        %7744 = vst.msk [vmem:[#allocation4 + $0x10] sm:$0xff] %vm456, %v7708
        %7745 = vst.msk [vmem:[#allocation4 + $0x18] sm:$0xff] %vm456, %v7709
        %7746 = vst.msk [vmem:[#allocation4 + $0x20] sm:$0xff] %vm456, %v7710
        %7747 = vst.msk [vmem:[#allocation4 + $0x28] sm:$0xff] %vm456, %v7711
        %7748 = vst.msk [vmem:[#allocation4 + $0x30] sm:$0xff] %vm456, %v7712
        %7749 = vst.msk [vmem:[#allocation4 + $0x38] sm:$0xff] %vm456, %v7713
        %7750 = vst.msk [vmem:[#allocation4 + $0x40] sm:$0xff] %vm456, %v7714
        %7751 = vst.msk [vmem:[#allocation4 + $0x48] sm:$0xff] %vm456, %v7715
        %7752 = vst.msk [vmem:[#allocation4 + $0x50] sm:$0xff] %vm456, %v7716
        %7753 = vst.msk [vmem:[#allocation4 + $0x58] sm:$0xff] %vm456, %v7717
        %7754 = vst.msk [vmem:[#allocation4 + $0x60] sm:$0xff] %vm456, %v7718
        %7755 = vst.msk [vmem:[#allocation4 + $0x68] sm:$0xff] %vm456, %v7719
        %7756 = vst.msk [vmem:[#allocation4 + $0x70] sm:$0xff] %vm456, %v7720
        %7757 = vst.msk [vmem:[#allocation4 + $0x78] sm:$0xff] %vm456, %v7721
        %7758 = vst.msk [vmem:[#allocation4 + $0x80] sm:$0xff] %vm456, %v7722
        %7759 = vst.msk [vmem:[#allocation4 + $0x88] sm:$0xff] %vm456, %v7723
        %7760 = vst.msk [vmem:[#allocation4 + $0x90] sm:$0xff] %vm456, %v7724
        %7761 = vst.msk [vmem:[#allocation4 + $0x98] sm:$0xff] %vm456, %v7725
        %7762 = vst.msk [vmem:[#allocation4 + $0xa0] sm:$0xff] %vm456, %v7726
        %7763 = vst.msk [vmem:[#allocation4 + $0xa8] sm:$0xff] %vm456, %v7727
        %7764 = vst.msk [vmem:[#allocation4 + $0xb0] sm:$0xff] %vm456, %v7728
        %7765 = vst.msk [vmem:[#allocation4 + $0xb8] sm:$0xff] %vm456, %v7729
        %7766 = vst.msk [vmem:[#allocation4 + $0xc0] sm:$0xff] %vm456, %v7730
        %7767 = vst.msk [vmem:[#allocation4 + $0xc8] sm:$0xff] %vm456, %v7731
        %7768 = vst.msk [vmem:[#allocation4 + $0xd0] sm:$0xff] %vm456, %v7732
        %7769 = vst.msk [vmem:[#allocation4 + $0xd8] sm:$0xff] %vm456, %v7733
        %7770 = vst.msk [vmem:[#allocation4 + $0xe0] sm:$0xff] %vm456, %v7734
        %7771 = vst.msk [vmem:[#allocation4 + $0xe8] sm:$0xff] %vm456, %v7735
        %7772 = vst.msk [vmem:[#allocation4 + $0xf0] sm:$0xff] %vm456, %v7736
        %7773 = vst.msk [vmem:[#allocation4 + $0xf8] sm:$0xff] %vm456, %v7737
        %7774 = vst.msk [vmem:[#allocation4 + $0x100] sm:$0xff] %vm456, %v7738
        %7775 = vst.msk [vmem:[#allocation4 + $0x108] sm:$0xff] %vm456, %v7739
        %7776 = vst.msk [vmem:[#allocation4 + $0x110] sm:$0xff] %vm456, %v7740
        %7777 = vst.msk [vmem:[#allocation4 + $0x118] sm:$0xff] %vm456, %v7741
        %v7778 = vlaneseq
        %v7779 = vshrl.u32 %v7778, 7
        %v7780 = vld [vmem:[#allocation4] ss:$2 sm:$0xff]
        %v7781 = vmul.u32 %v7779, 2
        %s7782 = scalar_lea.vmem [#allocation4], 1
        %v7783 = vld [vmem:[%s7782] ss:$2 sm:$0xff]
        %v7784 = vadd.s32 %v7781, 1
        %vm7785 = vcmp.gt.f32.partialorder %v7783, %v7780
        %v7786 = vsel %vm7785, %v7783, %v7780
        %v7787 = vsel %vm7785, %v7784, %v7781
        %s7788 = scalar_lea.vmem [#allocation4], 18
        %v7789 = vld [vmem:[%s7788] ss:$2 sm:$0xff]
        %v7790 = vadd.s32 %v7781, 16
        %vm7791 = vcmp.gt.f32.partialorder %v7789, %v7786
        %v7792 = vsel %vm7791, %v7789, %v7786
        %v7793 = vsel %vm7791, %v7790, %v7787
        %s7794 = scalar_lea.vmem [#allocation4], 19
        %v7795 = vld [vmem:[%s7794] ss:$2 sm:$0xff]
        %v7796 = vadd.s32 %v7790, 1
        %vm7797 = vcmp.gt.f32.partialorder %v7795, %v7792
        %v7798 = vsel %vm7797, %v7795, %v7792
        %v7799 = vsel %vm7797, %v7796, %v7793
        %v7800 = vpack.c.bf16 %v7798, %v7798
        %7801 = vst.msk [vmem:[%s248] sm:$0xf] %vm3762, %v7800
        %7802 = vst.msk [vmem:[%s255] sm:$0xff] %vm456, %v7799
        %s7803 = scalar_lea.vmem [#allocation4], 36
        %v7804 = vld [vmem:[%s7803] ss:$2 sm:$0xff]
        %v7805 = vadd.s32 %v7781, 32
        %s7806 = scalar_lea.vmem [#allocation4], 37
        %v7807 = vld [vmem:[%s7806] ss:$2 sm:$0xff]
        %v7808 = vadd.s32 %v7805, 1
        %vm7809 = vcmp.gt.f32.partialorder %v7807, %v7804
        %v7810 = vsel %vm7809, %v7807, %v7804
        %v7811 = vsel %vm7809, %v7808, %v7805
        %s7812 = scalar_lea.vmem [#allocation4], 54
        %v7813 = vld [vmem:[%s7812] ss:$2 sm:$0xff]
        %v7814 = vadd.s32 %v7781, 48
        %vm7815 = vcmp.gt.f32.partialorder %v7813, %v7810
        %v7816 = vsel %vm7815, %v7813, %v7810
        %v7817 = vsel %vm7815, %v7814, %v7811
        %s7818 = scalar_lea.vmem [#allocation4], 55
        %v7819 = vld [vmem:[%s7818] ss:$2 sm:$0xff]
        %v7820 = vadd.s32 %v7814, 1
        %vm7821 = vcmp.gt.f32.partialorder %v7819, %v7816
        %v7822 = vsel %vm7821, %v7819, %v7816
        %v7823 = vsel %vm7821, %v7820, %v7817
        %v7824 = vpack.c.bf16 %v7822, %v7822
        %s7825 = scalar_lea.vmem %s248, 4 [#allocation5]
        %7826 = vst.msk [vmem:[%s7825] sm:$0xf] %vm3762, %v7824
        %s7827 = scalar_lea.vmem %s255, 8 [#allocation7]
        %7828 = vst.msk [vmem:[%s7827] sm:$0xff] %vm456, %v7823
        %s7829 = scalar_lea.vmem [#allocation4], 72
        %v7830 = vld [vmem:[%s7829] ss:$2 sm:$0xff]
        %v7831 = vadd.s32 %v7781, 64
        %s7832 = scalar_lea.vmem [#allocation4], 73
        %v7833 = vld [vmem:[%s7832] ss:$2 sm:$0xff]
        %v7834 = vadd.s32 %v7831, 1
        %vm7835 = vcmp.gt.f32.partialorder %v7833, %v7830
        %v7836 = vsel %vm7835, %v7833, %v7830
        %v7837 = vsel %vm7835, %v7834, %v7831
        %s7838 = scalar_lea.vmem [#allocation4], 90
        %v7839 = vld [vmem:[%s7838] ss:$2 sm:$0xff]
        %v7840 = vadd.s32 %v7781, 80
        %vm7841 = vcmp.gt.f32.partialorder %v7839, %v7836
        %v7842 = vsel %vm7841, %v7839, %v7836
        %v7843 = vsel %vm7841, %v7840, %v7837
        %s7844 = scalar_lea.vmem [#allocation4], 91
        %v7845 = vld [vmem:[%s7844] ss:$2 sm:$0xff]
        %v7846 = vadd.s32 %v7840, 1
        %vm7847 = vcmp.gt.f32.partialorder %v7845, %v7842
        %v7848 = vsel %vm7847, %v7845, %v7842
        %v7849 = vsel %vm7847, %v7846, %v7843
        %v7850 = vpack.c.bf16 %v7848, %v7848
        %s7851 = scalar_lea.vmem %s248, 8 [#allocation5]
        %7852 = vst.msk [vmem:[%s7851] sm:$0xf] %vm3762, %v7850
        %s7853 = scalar_lea.vmem %s255, 16 [#allocation7]
        %7854 = vst.msk [vmem:[%s7853] sm:$0xff] %vm456, %v7849
        %s7855 = scalar_lea.vmem [#allocation4], 108
        %v7856 = vld [vmem:[%s7855] ss:$2 sm:$0xff]
        %v7857 = vadd.s32 %v7781, 96
        %s7858 = scalar_lea.vmem [#allocation4], 109
        %v7859 = vld [vmem:[%s7858] ss:$2 sm:$0xff]
        %v7860 = vadd.s32 %v7857, 1
        %vm7861 = vcmp.gt.f32.partialorder %v7859, %v7856
        %v7862 = vsel %vm7861, %v7859, %v7856
        %v7863 = vsel %vm7861, %v7860, %v7857
        %s7864 = scalar_lea.vmem [#allocation4], 126
        %v7865 = vld [vmem:[%s7864] ss:$2 sm:$0xff]
        %v7866 = vadd.s32 %v7781, 112
        %vm7867 = vcmp.gt.f32.partialorder %v7865, %v7862
        %v7868 = vsel %vm7867, %v7865, %v7862
        %v7869 = vsel %vm7867, %v7866, %v7863
        %s7870 = scalar_lea.vmem [#allocation4], 127
        %v7871 = vld [vmem:[%s7870] ss:$2 sm:$0xff]
        %v7872 = vadd.s32 %v7866, 1
        %vm7873 = vcmp.gt.f32.partialorder %v7871, %v7868
        %v7874 = vsel %vm7873, %v7871, %v7868
        %v7875 = vsel %vm7873, %v7872, %v7869
        %v7876 = vpack.c.bf16 %v7874, %v7874
        %s7877 = scalar_lea.vmem %s248, 12 [#allocation5]
        %7878 = vst.msk [vmem:[%s7877] sm:$0xf] %vm3762, %v7876
        %s7879 = scalar_lea.vmem %s255, 24 [#allocation7]
        %7880 = vst.msk [vmem:[%s7879] sm:$0xff] %vm456, %v7875
        %s7881 = scalar_lea.vmem [#allocation4], 144
        %v7882 = vld [vmem:[%s7881] ss:$2 sm:$0xff]
        %v7883 = vadd.s32 %v7781, 128
        %s7884 = scalar_lea.vmem [#allocation4], 145
        %v7885 = vld [vmem:[%s7884] ss:$2 sm:$0xff]
        %v7886 = vadd.s32 %v7883, 1
        %vm7887 = vcmp.gt.f32.partialorder %v7885, %v7882
        %v7888 = vsel %vm7887, %v7885, %v7882
        %v7889 = vsel %vm7887, %v7886, %v7883
        %s7890 = scalar_lea.vmem [#allocation4], 162
        %v7891 = vld [vmem:[%s7890] ss:$2 sm:$0xff]
        %v7892 = vadd.s32 %v7781, 144
        %vm7893 = vcmp.gt.f32.partialorder %v7891, %v7888
        %v7894 = vsel %vm7893, %v7891, %v7888
        %v7895 = vsel %vm7893, %v7892, %v7889
        %s7896 = scalar_lea.vmem [#allocation4], 163
        %v7897 = vld [vmem:[%s7896] ss:$2 sm:$0xff]
        %v7898 = vadd.s32 %v7892, 1
        %vm7899 = vcmp.gt.f32.partialorder %v7897, %v7894
        %v7900 = vsel %vm7899, %v7897, %v7894
        %v7901 = vsel %vm7899, %v7898, %v7895
        %v7902 = vpack.c.bf16 %v7900, %v7900
        %s7903 = scalar_lea.vmem %s248, 16 [#allocation5]
        %7904 = vst.msk [vmem:[%s7903] sm:$0xf] %vm3762, %v7902
        %s7905 = scalar_lea.vmem %s255, 32 [#allocation7]
        %7906 = vst.msk [vmem:[%s7905] sm:$0xff] %vm456, %v7901
        %s7907 = scalar_lea.vmem [#allocation4], 180
        %v7908 = vld [vmem:[%s7907] ss:$2 sm:$0xff]
        %v7909 = vadd.s32 %v7781, 160
        %s7910 = scalar_lea.vmem [#allocation4], 181
        %v7911 = vld [vmem:[%s7910] ss:$2 sm:$0xff]
        %v7912 = vadd.s32 %v7909, 1
        %vm7913 = vcmp.gt.f32.partialorder %v7911, %v7908
        %v7914 = vsel %vm7913, %v7911, %v7908
        %v7915 = vsel %vm7913, %v7912, %v7909
        %s7916 = scalar_lea.vmem [#allocation4], 198
        %v7917 = vld [vmem:[%s7916] ss:$2 sm:$0xff]
        %v7918 = vadd.s32 %v7781, 176
        %vm7919 = vcmp.gt.f32.partialorder %v7917, %v7914
        %v7920 = vsel %vm7919, %v7917, %v7914
        %v7921 = vsel %vm7919, %v7918, %v7915
        %s7922 = scalar_lea.vmem [#allocation4], 199
        %v7923 = vld [vmem:[%s7922] ss:$2 sm:$0xff]
        %v7924 = vadd.s32 %v7918, 1
        %vm7925 = vcmp.gt.f32.partialorder %v7923, %v7920
        %v7926 = vsel %vm7925, %v7923, %v7920
        %v7927 = vsel %vm7925, %v7924, %v7921
        %v7928 = vpack.c.bf16 %v7926, %v7926
        %s7929 = scalar_lea.vmem %s248, 20 [#allocation5]
        %7930 = vst.msk [vmem:[%s7929] sm:$0xf] %vm3762, %v7928
        %s7931 = scalar_lea.vmem %s255, 40 [#allocation7]
        %7932 = vst.msk [vmem:[%s7931] sm:$0xff] %vm456, %v7927
        %s7933 = scalar_lea.vmem [#allocation4], 216
        %v7934 = vld [vmem:[%s7933] ss:$2 sm:$0xff]
        %v7935 = vadd.s32 %v7781, 192
        %s7936 = scalar_lea.vmem [#allocation4], 217
        %v7937 = vld [vmem:[%s7936] ss:$2 sm:$0xff]
        %v7938 = vadd.s32 %v7935, 1
        %vm7939 = vcmp.gt.f32.partialorder %v7937, %v7934
        %v7940 = vsel %vm7939, %v7937, %v7934
        %v7941 = vsel %vm7939, %v7938, %v7935
        %s7942 = scalar_lea.vmem [#allocation4], 234
        %v7943 = vld [vmem:[%s7942] ss:$2 sm:$0xff]
        %v7944 = vadd.s32 %v7781, 208
        %vm7945 = vcmp.gt.f32.partialorder %v7943, %v7940
        %v7946 = vsel %vm7945, %v7943, %v7940
        %v7947 = vsel %vm7945, %v7944, %v7941
        %s7948 = scalar_lea.vmem [#allocation4], 235
        %v7949 = vld [vmem:[%s7948] ss:$2 sm:$0xff]
        %v7950 = vadd.s32 %v7944, 1
        %vm7951 = vcmp.gt.f32.partialorder %v7949, %v7946
        %v7952 = vsel %vm7951, %v7949, %v7946
        %v7953 = vsel %vm7951, %v7950, %v7947
        %v7954 = vpack.c.bf16 %v7952, %v7952
        %s7955 = scalar_lea.vmem %s248, 24 [#allocation5]
        %7956 = vst.msk [vmem:[%s7955] sm:$0xf] %vm3762, %v7954
        %s7957 = scalar_lea.vmem %s255, 48 [#allocation7]
        %7958 = vst.msk [vmem:[%s7957] sm:$0xff] %vm456, %v7953
        %s7959 = scalar_lea.vmem [#allocation4], 252
        %v7960 = vld [vmem:[%s7959] ss:$2 sm:$0xff]
        %v7961 = vadd.s32 %v7781, 224
        %s7962 = scalar_lea.vmem [#allocation4], 253
        %v7963 = vld [vmem:[%s7962] ss:$2 sm:$0xff]
        %v7964 = vadd.s32 %v7961, 1
        %vm7965 = vcmp.gt.f32.partialorder %v7963, %v7960
        %v7966 = vsel %vm7965, %v7963, %v7960
        %v7967 = vsel %vm7965, %v7964, %v7961
        %s7968 = scalar_lea.vmem [#allocation4], 270
        %v7969 = vld [vmem:[%s7968] ss:$2 sm:$0xff]
        %v7970 = vadd.s32 %v7781, 240
        %vm7971 = vcmp.gt.f32.partialorder %v7969, %v7966
        %v7972 = vsel %vm7971, %v7969, %v7966
        %v7973 = vsel %vm7971, %v7970, %v7967
        %s7974 = scalar_lea.vmem [#allocation4], 271
        %v7975 = vld [vmem:[%s7974] ss:$2 sm:$0xff]
        %v7976 = vadd.s32 %v7970, 1
        %vm7977 = vcmp.gt.f32.partialorder %v7975, %v7972
        %v7978 = vsel %vm7977, %v7975, %v7972
        %v7979 = vsel %vm7977, %v7976, %v7973
        %v7980 = vpack.c.bf16 %v7978, %v7978
        %s7981 = scalar_lea.vmem %s248, 28 [#allocation5]
        %7982 = vst.msk [vmem:[%s7981] sm:$0xf] %vm3762, %v7980
        %s7983 = scalar_lea.vmem %s255, 56 [#allocation7]
        %7984 = vst.msk [vmem:[%s7983] sm:$0xff] %vm456, %v7979
        %s7985 = sand.u32 %s142, 1
        %s7986 = scalar_lea.sflag [#allocation6], %s7985
        %s7987 = sand.u32 %s142, 1
        %s7988 = smul.addr %s7987, 32
        %s7989 = scalar_lea.vmem [#allocation5], %s7988
        %s7990 = sand.u32 %s168, 1
        %s7991 = scalar_lea.sflag [#allocation8], %s7990
        %s7992 = sand.u32 %s168, 1
        %s7993 = smul.addr %s7992, 64
        %s7994 = scalar_lea.vmem [#allocation7], %s7993
        // Predicated region
        $region45: #{tpu_custom_call.1} parent=39 // pred_check
          %p7995 = pneg %p152
        $region46: #{tpu_custom_call.1} parent=39 // pred_check_branch
          %7997 = sbr.rel (%p7995) target = $region48
        $region47: #{tpu_custom_call.1} parent=39 // pred_region
          %s7999 = ssub.s32 512, 512
          %8000 = vsyncadd %s7986, %s7999
          %s8001 = smul.addr %s24, 8
          %s8002 = smul.addr %s8001, 64
          %s8003 = scalar_lea.hbm %s5, %s8002
          %s8004 = sshll.u32 %s7989, 4
          %s8005 = int_to_ptr.vmem [resolvable:$true] %s8004
          %8010 = dma.vmem_to_hbm [thread:$0]  %s8005, 512, %s8003, %s7986, 64, 64, 4
        $region48: #{tpu_custom_call.1} parent=39 // pred_fallthru
          _
        // Predicated region
        $region49: #{tpu_custom_call.1} parent=39 // pred_check
          %p8011 = pneg %p178
        $region50: #{tpu_custom_call.1} parent=39 // pred_check_branch
          %8013 = sbr.rel (%p8011) target = $region52
        $region51: #{tpu_custom_call.1} parent=39 // pred_region
          %s8015 = ssub.s32 1024, 1024
          %8016 = vsyncadd %s7991, %s8015
          %s8017 = smul.addr %s24, 8
          %s8018 = smul.addr %s8017, 128
          %s8019 = scalar_lea.hbm %s6, %s8018
          %s8020 = sshll.u32 %s7994, 4
          %s8021 = int_to_ptr.vmem [resolvable:$true] %s8020
          %8026 = dma.vmem_to_hbm [thread:$0]  %s8021, 1024, %s8019, %s7991, 128, 128, 8
        $region52: #{tpu_custom_call.1} parent=39 // pred_fallthru
          _
      $region40: #{tpu_custom_call.1} parent=5 // pred_fallthru
        _
      %p8027 = scmp.le.s32.totalorder 2, %s19
      // Predicated region
      $region53: #{tpu_custom_call.1} parent=5 // pred_check
        %p8028 = pneg %p8027
      $region54: #{tpu_custom_call.1} parent=5 // pred_check_branch
        %8030 = sbr.rel (%p8028) target = $region56
      $region55: #{tpu_custom_call.1} parent=5 // pred_region
        %s8031 = ssub.s32 %s19, 2
        // Predicated region
        $region57: #{tpu_custom_call.1} parent=55 // pred_check
          %p8032 = pneg %p158
        $region58: #{tpu_custom_call.1} parent=55 // pred_check_branch
          %8034 = sbr.rel (%p8032) target = $region60
        $region59: #{tpu_custom_call.1} parent=55 // pred_region
          %s8035 = sand.u32 %s143, 1
          %s8036 = scalar_lea.sflag [#allocation6], %s8035
          %s8037 = sand.u32 %s143, 1
          %s8038 = smul.addr %s8037, 32
          %s8039 = scalar_lea.vmem [#allocation5], %s8038
          %8040 = dma.done %s8036, 512
        $region60: #{tpu_custom_call.1} parent=55 // pred_fallthru
          _
        // Predicated region
        $region61: #{tpu_custom_call.1} parent=55 // pred_check
          %p8041 = pneg %p184
        $region62: #{tpu_custom_call.1} parent=55 // pred_check_branch
          %8043 = sbr.rel (%p8041) target = $region64
        $region63: #{tpu_custom_call.1} parent=55 // pred_region
          %s8044 = sand.u32 %s169, 1
          %s8045 = scalar_lea.sflag [#allocation8], %s8044
          %s8046 = sand.u32 %s169, 1
          %s8047 = smul.addr %s8046, 64
          %s8048 = scalar_lea.vmem [#allocation7], %s8047
          %8049 = dma.done %s8045, 1024
        $region64: #{tpu_custom_call.1} parent=55 // pred_fallthru
          _
      $region56: #{tpu_custom_call.1} parent=5 // pred_fallthru
        _
    $region6: #{tpu_custom_call.1} parent=1 // loop_footer
      %s23 = sadd.s32 1, %s19
    $region7: #{tpu_custom_call.1} parent=1 // loop_footer_branch
      %18 = sbr.rel target = $region3
    $region8: #{tpu_custom_call.1} parent=1 // loop_exit
      _
    %8050 = vsyncpa [#allocation6], 1
    %s8051 = scalar_lea.sflag [#allocation6], 1
    %8052 = vsyncpa %s8051, 1
    %8053 = vsyncpa [#allocation8], 1
    %s8054 = scalar_lea.sflag [#allocation8], 1
    %8055 = vsyncpa %s8054, 1

</llo_original>
